<compile_context>
chip_gen: v7x
topology: tpu7x:2x2x1
jax: 0.10.0
libtpu: 0.0.40
codegen_flags: <defaults>
</compile_context>

<pallas_src>
import numpy as np
import jax
import jax.numpy as jnp
from jax.experimental import pallas as pl
from jax.experimental.pallas import tpu as pltpu

_EPS = 1e-5  # torch BatchNorm default eps

# Structural config of the three SepConv1d_v2 blocks:
#   SepConv1d_v2(ni, 32, 8, 2, 3), SepConv1d_v2(32, 64, 8, 4, 2),
#   SepConv1d_v2(64, 128, 8, 4, 2)        -> (out_channels, kernel, stride, pad)
_CONV_CFGS = ((32, 8, 2, 3), (64, 8, 4, 2), (128, 8, 4, 2))
_HIDDEN = 512  # nn.Linear(flat_in, 512)


def _conv_out_len(l_in, kern, stride, pad):
    return (l_in + 2 * pad - kern) // stride + 1


# --------------------------------------------------------------------------- #
# Kernels
# --------------------------------------------------------------------------- #
def _conv_stack_kernel(*refs):
    """Fused 3x (separable conv + folded BatchNorm + bias + ReLU).

    Activations live in VMEM as (length, batch*channels) f32 tiles.  For each
    depthwise tap k, the strided & zero-padded gather along the length axis is
    a small 0/1 unfold matrix applied on the MXU; the per-channel tap weight is
    a lane-broadcast multiply on the VPU.  The pointwise (1x1) convolution is a
    single MXU matmul whose weights already contain the eval-mode BatchNorm
    scale and all biases.  Dropout is the identity at inference time.
    """
    x_ref, out_ref = refs[0], refs[-1]
    block_refs = refs[1:-1]

    h = x_ref[...]                                        # (L0, N*C0)
    for i in range(0, len(block_refs), 4):
        sel_ref, dw_ref, pw_ref, b_ref = block_refs[i:i + 4]
        sel = sel_ref[...]                                # (K, L_out, L_in) 0/1
        dw_taps = dw_ref[...]                             # (K, N*C_in)
        acc = None
        for k in range(sel.shape[0]):                     # K = 8, unrolled
            g = jnp.dot(sel[k], h, preferred_element_type=jnp.float32)
            g = g * dw_taps[k:k + 1, :]                   # per-channel tap weight
            acc = g if acc is None else acc + g           # (L_out, N*C_in)
        z = jnp.dot(acc, pw_ref[...], preferred_element_type=jnp.float32)
        h = jnp.maximum(z + b_ref[...], 0.0)              # (L_out, N*C_out)
    out_ref[...] = h


def _fc_head_kernel(x_ref, w1_ref, b1_ref, w2_ref, b2_ref, out_ref):
    """Linear(flat, 512) + folded BatchNorm1d + ReLU + Linear(512, n_classes)."""
    h = jnp.dot(x_ref[...], w1_ref[...], preferred_element_type=jnp.float32)
    h = jnp.maximum(h + b1_ref[...], 0.0)
    out_ref[...] = (
        jnp.dot(h, w2_ref[...], preferred_element_type=jnp.float32) + b2_ref[...]
    )


# --------------------------------------------------------------------------- #
# Wrapper-side (one-time) weight preprocessing
# --------------------------------------------------------------------------- #
def _vmem_full(shape):
    nd = len(shape)
    return pl.BlockSpec(shape, lambda i, nd=nd: (0,) * nd)


def _unfold_matrices(l_in, kern, stride, pad):
    """0/1 matrices S with S[k, t, j] = 1 iff j == stride*t + k - pad (in range).

    (S[k] @ x) gathers, for every output position t, the sample read by tap k of
    a stride-`stride`, pad-`pad` conv; out-of-range taps hit all-zero rows,
    reproducing torch's zero padding exactly.
    """
    l_out = _conv_out_len(l_in, kern, stride, pad)
    t = np.arange(l_out)[:, None]
    j = np.arange(l_in)[None, :]
    mats = [(j == (stride * t + k - pad)).astype(np.float32) for k in range(kern)]
    return np.stack(mats, axis=0)                         # (kern, l_out, l_in)


def _fold_conv_block(blk, n_batch):
    """Fold depthwise bias + pointwise bias + eval BatchNorm into the pointwise
    matmul and lane-replicate per-channel vectors for the (length, N*C) layout."""
    dw_w = blk["dw_w"][:, 0, :]                           # (Ci, K)
    pw_w = blk["pw_w"][:, :, 0]                           # (Co, Ci)
    a = blk["bn_gamma"] / jnp.sqrt(blk["bn_var"] + _EPS)  # (Co,)
    w_pw = pw_w * a[:, None]                              # BN scale folded
    bias = a * (blk["pw_b"] + pw_w @ blk["dw_b"] - blk["bn_mean"]) + blk["bn_beta"]
    # lane layout is n-major (lane = n*C + c): replicate per-channel vectors N x.
    dw_lanes = jnp.tile(jnp.transpose(dw_w), (1, n_batch))              # (K, N*Ci)
    pw_kron = jnp.kron(jnp.eye(n_batch, dtype=jnp.float32), jnp.transpose(w_pw))
    b_lanes = jnp.tile(bias, n_batch)[None, :]                          # (1, N*Co)
    return dw_lanes, pw_kron, b_lanes


def _fold_fc_head(params):
    s1 = params["bn1_gamma"] / jnp.sqrt(params["bn1_var"] + _EPS)
    w1 = jnp.transpose(params["fc1_w"]) * s1[None, :]                   # (flat, 512)
    b1 = (params["fc1_b"] * s1 + params["bn1_beta"] - params["bn1_mean"] * s1)[None, :]
    w2 = jnp.transpose(params["fc2_w"])                                 # (512, no)
    b2 = params["fc2_b"][None, :]
    return w1, b1, w2, b2


# --------------------------------------------------------------------------- #
# Forward pass
# --------------------------------------------------------------------------- #
def classifier_forward(x, params):
    """Eval-mode forward of Classifier_1d_3_conv_2FC_v2.  x: (N, raw_ni, raw_size)."""
    n, c0, l0 = x.shape
    x = x.astype(jnp.float32)

    # ---- kernel A operands (weight preprocessing is tiny & one-time) ----
    conv_ops = []
    l_in, c_in = l0, c0
    for blk, (c_out, kern, stride, pad) in zip(params["blocks"], _CONV_CFGS):
        sel = jnp.asarray(_unfold_matrices(l_in, kern, stride, pad))
        dw_lanes, pw_kron, b_lanes = _fold_conv_block(blk, n)
        conv_ops += [sel, dw_lanes, pw_kron, b_lanes]
        l_in, c_in = _conv_out_len(l_in, kern, stride, pad), c_out
    l3, c3 = l_in, c_in

    # Channels-last with batch folded into the lane axis (lane-dense input):
    #   x2d[l, n*C0 + c] = x[n, c, l]
    x2d = jnp.transpose(x, (2, 0, 1)).reshape(l0, n * c0)

    operands = [x2d] + conv_ops
    conv_out = pl.pallas_call(
        _conv_stack_kernel,
        out_shape=jax.ShapeDtypeStruct((l3, n * c3), jnp.float32),
        grid=(1,),
        in_specs=[_vmem_full(op.shape) for op in operands],
        out_specs=_vmem_full((l3, n * c3)),
        compiler_params=pltpu.CompilerParams(dimension_semantics=("arbitrary",)),
    )(*operands)

    # Flatten == torch x.view(N, -1) on an (N, C, L) tensor (feature = c*L + l).
    # Pure layout plumbing on a ~16 KB intermediate; no copy kernel.
    feat = jnp.transpose(conv_out.reshape(l3, n, c3), (1, 2, 0)).reshape(n, c3 * l3)

    w1, b1, w2, b2 = _fold_fc_head(params)
    fc_ops = [feat, w1, b1, w2, b2]
    out = pl.pallas_call(
        _fc_head_kernel,
        out_shape=jax.ShapeDtypeStruct((n, w2.shape[1]), jnp.float32),
        grid=(1,),
        in_specs=[_vmem_full(op.shape) for op in fc_ops],
        out_specs=_vmem_full((n, w2.shape[1])),
        compiler_params=pltpu.CompilerParams(dimension_semantics=("arbitrary",)),
    )(*fc_ops)
    return out


# --------------------------------------------------------------------------- #
# Parameter init (torch layouts) and a literal pure-JAX reference for checking
# --------------------------------------------------------------------------- #
def init_params(key, raw_ni, n_classes, raw_size):
    keys = iter(jax.random.split(key, 64))
    f32 = jnp.float32
    blocks = []
    ci, l = raw_ni, raw_size
    for (co, kern, stride, pad) in _CONV_CFGS:
        blocks.append(dict(
            dw_w=0.3 * jax.random.normal(next(keys), (ci, 1, kern), f32),
            dw_b=0.1 * jax.random.normal(next(keys), (ci,), f32),
            pw_w=jax.random.normal(next(keys), (co, ci, 1), f32) / float(np.sqrt(ci)),
            pw_b=0.1 * jax.random.normal(next(keys), (co,), f32),
            bn_gamma=1.0 + 0.1 * jax.random.normal(next(keys), (co,), f32),
            bn_beta=0.1 * jax.random.normal(next(keys), (co,), f32),
            bn_mean=0.1 * jax.random.normal(next(keys), (co,), f32),
            bn_var=jax.random.uniform(next(keys), (co,), f32, 0.5, 1.5),
        ))
        ci, l = co, _conv_out_len(l, kern, stride, pad)
    flat_in = ci * l   # actual flatten width (see module-level note about flat_in)
    return dict(
        blocks=blocks,
        fc1_w=jax.random.normal(next(keys), (_HIDDEN, flat_in), f32) / float(np.sqrt(flat_in)),
        fc1_b=0.1 * jax.random.normal(next(keys), (_HIDDEN,), f32),
        bn1_gamma=1.0 + 0.1 * jax.random.normal(next(keys), (_HIDDEN,), f32),
        bn1_beta=0.1 * jax.random.normal(next(keys), (_HIDDEN,), f32),
        bn1_mean=0.1 * jax.random.normal(next(keys), (_HIDDEN,), f32),
        bn1_var=jax.random.uniform(next(keys), (_HIDDEN,), f32, 0.5, 1.5),
        fc2_w=jax.random.normal(next(keys), (n_classes, _HIDDEN), f32) / float(np.sqrt(_HIDDEN)),
        fc2_b=0.1 * jax.random.normal(next(keys), (n_classes,), f32),
    )


def torch_reference(x, params):
    """Literal eval-mode re-implementation of the torch module in plain JAX."""
    hp = jax.lax.Precision.HIGHEST
    h = x
    for blk, (_, kern, stride, pad) in zip(params["blocks"], _CONV_CFGS):
        n, ci, l_in = h.shape
        l_out = _conv_out_len(l_in, kern, stride, pad)
        xp = jnp.pad(h, ((0, 0), (0, 0), (pad, pad)))
        dw = jnp.zeros((n, ci, l_out), jnp.float32)
        for k in range(kern):
            dw = dw + xp[:, :, k:k + stride * l_out:stride] * blk["dw_w"][:, 0, k][None, :, None]
        dw = dw + blk["dw_b"][None, :, None]
        pw = jnp.einsum("oc,ncl->nol", blk["pw_w"][:, :, 0], dw, precision=hp)
        pw = pw + blk["pw_b"][None, :, None]
        inv = jax.lax.rsqrt(blk["bn_var"] + _EPS)
        bn = (pw - blk["bn_mean"][None, :, None]) * (blk["bn_gamma"] * inv)[None, :, None]
        h = jnp.maximum(bn + blk["bn_beta"][None, :, None], 0.0)   # dropout: identity
    flat = h.reshape(h.shape[0], -1)
    z = jnp.matmul(flat, params["fc1_w"].T, precision=hp) + params["fc1_b"]
    z = (z - params["bn1_mean"]) * (params["bn1_gamma"] * jax.lax.rsqrt(params["bn1_var"] + _EPS))
    z = jnp.maximum(z + params["bn1_beta"], 0.0)
    return jnp.matmul(z, params["fc2_w"].T, precision=hp) + params["fc2_b"]


if __name__ == "__main__":
    key = jax.random.PRNGKey(0)
    k_param, k_x = jax.random.split(key)

    batch, raw_ni, raw_size, n_classes = 8, 4, 128, 10
    params = init_params(k_param, raw_ni, n_classes, raw_size)
    x = jax.random.normal(k_x, (batch, raw_ni, raw_size), jnp.float32)

    fwd = jax.jit(classifier_forward)
    y = fwd(x, params)
    jax.block_until_ready(y)

    y_ref = torch_reference(x, params)
    assert y.shape == (batch, n_classes)
    assert jnp.allclose(y, y_ref, atol=2e-3, rtol=2e-3), float(jnp.max(jnp.abs(y - y_ref)))

    print("KERNEL_OK")
</pallas_src>

<mosaic_0001>
module attributes {stable_mosaic.version = 11 : i64} {
  func.func @_conv_stack_kernel(%arg0: i32, %arg1: memref<128x32xf32, #tpu.memory_space<vmem>>, %arg2: memref<8x64x128xf32, #tpu.memory_space<vmem>>, %arg3: memref<8x32xf32, #tpu.memory_space<vmem>>, %arg4: memref<32x256xf32, #tpu.memory_space<vmem>>, %arg5: memref<1x256xf32, #tpu.memory_space<vmem>>, %arg6: memref<8x16x64xf32, #tpu.memory_space<vmem>>, %arg7: memref<8x256xf32, #tpu.memory_space<vmem>>, %arg8: memref<256x512xf32, #tpu.memory_space<vmem>>, %arg9: memref<1x512xf32, #tpu.memory_space<vmem>>, %arg10: memref<8x4x16xf32, #tpu.memory_space<vmem>>, %arg11: memref<8x512xf32, #tpu.memory_space<vmem>>, %arg12: memref<512x1024xf32, #tpu.memory_space<vmem>>, %arg13: memref<1x1024xf32, #tpu.memory_space<vmem>>, %arg14: memref<4x1024xf32, #tpu.memory_space<vmem>>) attributes {dimension_semantics = [#tpu.dimension_semantics<arbitrary>], iteration_bounds = array<i64: 1>, scalar_prefetch = 0 : i64, scratch_operands = 0 : i64, tpu.core_type = #tpu.core_type<tc>, window_params = [{pipeline_mode = #tpu.pipeline_mode<synchronous>, transform_indices = @transform_0, window_bounds = array<i64: 128, 32>}, {pipeline_mode = #tpu.pipeline_mode<synchronous>, transform_indices = @transform_1, window_bounds = array<i64: 8, 64, 128>}, {pipeline_mode = #tpu.pipeline_mode<synchronous>, transform_indices = @transform_2, window_bounds = array<i64: 8, 32>}, {pipeline_mode = #tpu.pipeline_mode<synchronous>, transform_indices = @transform_3, window_bounds = array<i64: 32, 256>}, {pipeline_mode = #tpu.pipeline_mode<synchronous>, transform_indices = @transform_4, window_bounds = array<i64: 1, 256>}, {pipeline_mode = #tpu.pipeline_mode<synchronous>, transform_indices = @transform_5, window_bounds = array<i64: 8, 16, 64>}, {pipeline_mode = #tpu.pipeline_mode<synchronous>, transform_indices = @transform_6, window_bounds = array<i64: 8, 256>}, {pipeline_mode = #tpu.pipeline_mode<synchronous>, transform_indices = @transform_7, window_bounds = array<i64: 256, 512>}, {pipeline_mode = #tpu.pipeline_mode<synchronous>, transform_indices = @transform_8, window_bounds = array<i64: 1, 512>}, {pipeline_mode = #tpu.pipeline_mode<synchronous>, transform_indices = @transform_9, window_bounds = array<i64: 8, 4, 16>}, {pipeline_mode = #tpu.pipeline_mode<synchronous>, transform_indices = @transform_10, window_bounds = array<i64: 8, 512>}, {pipeline_mode = #tpu.pipeline_mode<synchronous>, transform_indices = @transform_11, window_bounds = array<i64: 512, 1024>}, {pipeline_mode = #tpu.pipeline_mode<synchronous>, transform_indices = @transform_12, window_bounds = array<i64: 1, 1024>}, {pipeline_mode = #tpu.pipeline_mode<synchronous>, transform_indices = @transform_13, window_bounds = array<i64: 4, 1024>}]} {
    %c0 = arith.constant 0 : index
    %c0_0 = arith.constant 0 : index
    %0 = vector.load %arg1[%c0, %c0_0] : memref<128x32xf32, #tpu.memory_space<vmem>>, vector<128x32xf32>
    %c0_1 = arith.constant 0 : index
    %c0_2 = arith.constant 0 : index
    %c0_3 = arith.constant 0 : index
    %1 = vector.load %arg2[%c0_1, %c0_2, %c0_3] : memref<8x64x128xf32, #tpu.memory_space<vmem>>, vector<8x64x128xf32>
    %c0_4 = arith.constant 0 : index
    %c0_5 = arith.constant 0 : index
    %2 = vector.load %arg3[%c0_4, %c0_5] : memref<8x32xf32, #tpu.memory_space<vmem>>, vector<8x32xf32>
    %3 = vector.extract_strided_slice %1 {offsets = [0, 0, 0], sizes = [1, 64, 128], strides = [1, 1, 1]} : vector<8x64x128xf32> to vector<1x64x128xf32>
    %4 = vector.shape_cast %3 : vector<1x64x128xf32> to vector<64x128xf32>
    %cst = arith.constant dense<0.000000e+00> : vector<64x32xf32>
    %5 = tpu.matmul %4, %0, %cst {dimension_numbers = #tpu.dot_dimension_numbers<[1], [0], [0], [1], [0, 0, 1, 1], [], []>} : vector<64x128xf32>, vector<128x32xf32>, vector<64x32xf32> -> vector<64x32xf32>
    %6 = vector.extract_strided_slice %2 {offsets = [0, 0], sizes = [1, 32], strides = [1, 1]} : vector<8x32xf32> to vector<1x32xf32>
    %7 = vector.broadcast %6 : vector<1x32xf32> to vector<64x32xf32>
    %8 = arith.mulf %5, %7 : vector<64x32xf32>
    %9 = vector.extract_strided_slice %1 {offsets = [1, 0, 0], sizes = [1, 64, 128], strides = [1, 1, 1]} : vector<8x64x128xf32> to vector<1x64x128xf32>
    %10 = vector.shape_cast %9 : vector<1x64x128xf32> to vector<64x128xf32>
    %cst_6 = arith.constant dense<0.000000e+00> : vector<64x32xf32>
    %11 = tpu.matmul %10, %0, %cst_6 {dimension_numbers = #tpu.dot_dimension_numbers<[1], [0], [0], [1], [0, 0, 1, 1], [], []>} : vector<64x128xf32>, vector<128x32xf32>, vector<64x32xf32> -> vector<64x32xf32>
    %12 = vector.extract_strided_slice %2 {offsets = [1, 0], sizes = [1, 32], strides = [1, 1]} : vector<8x32xf32> to vector<1x32xf32>
    %13 = vector.broadcast %12 : vector<1x32xf32> to vector<64x32xf32>
    %14 = arith.mulf %11, %13 : vector<64x32xf32>
    %15 = arith.addf %8, %14 : vector<64x32xf32>
    %16 = vector.extract_strided_slice %1 {offsets = [2, 0, 0], sizes = [1, 64, 128], strides = [1, 1, 1]} : vector<8x64x128xf32> to vector<1x64x128xf32>
    %17 = vector.shape_cast %16 : vector<1x64x128xf32> to vector<64x128xf32>
    %cst_7 = arith.constant dense<0.000000e+00> : vector<64x32xf32>
    %18 = tpu.matmul %17, %0, %cst_7 {dimension_numbers = #tpu.dot_dimension_numbers<[1], [0], [0], [1], [0, 0, 1, 1], [], []>} : vector<64x128xf32>, vector<128x32xf32>, vector<64x32xf32> -> vector<64x32xf32>
    %19 = vector.extract_strided_slice %2 {offsets = [2, 0], sizes = [1, 32], strides = [1, 1]} : vector<8x32xf32> to vector<1x32xf32>
    %20 = vector.broadcast %19 : vector<1x32xf32> to vector<64x32xf32>
    %21 = arith.mulf %18, %20 : vector<64x32xf32>
    %22 = arith.addf %15, %21 : vector<64x32xf32>
    %23 = vector.extract_strided_slice %1 {offsets = [3, 0, 0], sizes = [1, 64, 128], strides = [1, 1, 1]} : vector<8x64x128xf32> to vector<1x64x128xf32>
    %24 = vector.shape_cast %23 : vector<1x64x128xf32> to vector<64x128xf32>
    %cst_8 = arith.constant dense<0.000000e+00> : vector<64x32xf32>
    %25 = tpu.matmul %24, %0, %cst_8 {dimension_numbers = #tpu.dot_dimension_numbers<[1], [0], [0], [1], [0, 0, 1, 1], [], []>} : vector<64x128xf32>, vector<128x32xf32>, vector<64x32xf32> -> vector<64x32xf32>
    %26 = vector.extract_strided_slice %2 {offsets = [3, 0], sizes = [1, 32], strides = [1, 1]} : vector<8x32xf32> to vector<1x32xf32>
    %27 = vector.broadcast %26 : vector<1x32xf32> to vector<64x32xf32>
    %28 = arith.mulf %25, %27 : vector<64x32xf32>
    %29 = arith.addf %22, %28 : vector<64x32xf32>
    %30 = vector.extract_strided_slice %1 {offsets = [4, 0, 0], sizes = [1, 64, 128], strides = [1, 1, 1]} : vector<8x64x128xf32> to vector<1x64x128xf32>
    %31 = vector.shape_cast %30 : vector<1x64x128xf32> to vector<64x128xf32>
    %cst_9 = arith.constant dense<0.000000e+00> : vector<64x32xf32>
    %32 = tpu.matmul %31, %0, %cst_9 {dimension_numbers = #tpu.dot_dimension_numbers<[1], [0], [0], [1], [0, 0, 1, 1], [], []>} : vector<64x128xf32>, vector<128x32xf32>, vector<64x32xf32> -> vector<64x32xf32>
    %33 = vector.extract_strided_slice %2 {offsets = [4, 0], sizes = [1, 32], strides = [1, 1]} : vector<8x32xf32> to vector<1x32xf32>
    %34 = vector.broadcast %33 : vector<1x32xf32> to vector<64x32xf32>
    %35 = arith.mulf %32, %34 : vector<64x32xf32>
    %36 = arith.addf %29, %35 : vector<64x32xf32>
    %37 = vector.extract_strided_slice %1 {offsets = [5, 0, 0], sizes = [1, 64, 128], strides = [1, 1, 1]} : vector<8x64x128xf32> to vector<1x64x128xf32>
    %38 = vector.shape_cast %37 : vector<1x64x128xf32> to vector<64x128xf32>
    %cst_10 = arith.constant dense<0.000000e+00> : vector<64x32xf32>
    %39 = tpu.matmul %38, %0, %cst_10 {dimension_numbers = #tpu.dot_dimension_numbers<[1], [0], [0], [1], [0, 0, 1, 1], [], []>} : vector<64x128xf32>, vector<128x32xf32>, vector<64x32xf32> -> vector<64x32xf32>
    %40 = vector.extract_strided_slice %2 {offsets = [5, 0], sizes = [1, 32], strides = [1, 1]} : vector<8x32xf32> to vector<1x32xf32>
    %41 = vector.broadcast %40 : vector<1x32xf32> to vector<64x32xf32>
    %42 = arith.mulf %39, %41 : vector<64x32xf32>
    %43 = arith.addf %36, %42 : vector<64x32xf32>
    %44 = vector.extract_strided_slice %1 {offsets = [6, 0, 0], sizes = [1, 64, 128], strides = [1, 1, 1]} : vector<8x64x128xf32> to vector<1x64x128xf32>
    %45 = vector.shape_cast %44 : vector<1x64x128xf32> to vector<64x128xf32>
    %cst_11 = arith.constant dense<0.000000e+00> : vector<64x32xf32>
    %46 = tpu.matmul %45, %0, %cst_11 {dimension_numbers = #tpu.dot_dimension_numbers<[1], [0], [0], [1], [0, 0, 1, 1], [], []>} : vector<64x128xf32>, vector<128x32xf32>, vector<64x32xf32> -> vector<64x32xf32>
    %47 = vector.extract_strided_slice %2 {offsets = [6, 0], sizes = [1, 32], strides = [1, 1]} : vector<8x32xf32> to vector<1x32xf32>
    %48 = vector.broadcast %47 : vector<1x32xf32> to vector<64x32xf32>
    %49 = arith.mulf %46, %48 : vector<64x32xf32>
    %50 = arith.addf %43, %49 : vector<64x32xf32>
    %51 = vector.extract_strided_slice %1 {offsets = [7, 0, 0], sizes = [1, 64, 128], strides = [1, 1, 1]} : vector<8x64x128xf32> to vector<1x64x128xf32>
    %52 = vector.shape_cast %51 : vector<1x64x128xf32> to vector<64x128xf32>
    %cst_12 = arith.constant dense<0.000000e+00> : vector<64x32xf32>
    %53 = tpu.matmul %52, %0, %cst_12 {dimension_numbers = #tpu.dot_dimension_numbers<[1], [0], [0], [1], [0, 0, 1, 1], [], []>} : vector<64x128xf32>, vector<128x32xf32>, vector<64x32xf32> -> vector<64x32xf32>
    %54 = vector.extract_strided_slice %2 {offsets = [7, 0], sizes = [1, 32], strides = [1, 1]} : vector<8x32xf32> to vector<1x32xf32>
    %55 = vector.broadcast %54 : vector<1x32xf32> to vector<64x32xf32>
    %56 = arith.mulf %53, %55 : vector<64x32xf32>
    %57 = arith.addf %50, %56 : vector<64x32xf32>
    %c0_13 = arith.constant 0 : index
    %c0_14 = arith.constant 0 : index
    %58 = vector.load %arg4[%c0_13, %c0_14] : memref<32x256xf32, #tpu.memory_space<vmem>>, vector<32x256xf32>
    %cst_15 = arith.constant dense<0.000000e+00> : vector<64x256xf32>
    %59 = tpu.matmul %57, %58, %cst_15 {dimension_numbers = #tpu.dot_dimension_numbers<[1], [0], [0], [1], [0, 0, 1, 1], [], []>} : vector<64x32xf32>, vector<32x256xf32>, vector<64x256xf32> -> vector<64x256xf32>
    %c0_16 = arith.constant 0 : index
    %c0_17 = arith.constant 0 : index
    %60 = vector.load %arg5[%c0_16, %c0_17] : memref<1x256xf32, #tpu.memory_space<vmem>>, vector<1x256xf32>
    %61 = vector.broadcast %60 : vector<1x256xf32> to vector<64x256xf32>
    %62 = arith.addf %59, %61 : vector<64x256xf32>
    %cst_18 = arith.constant 0.000000e+00 : f32
    %63 = vector.broadcast %cst_18 : f32 to vector<64x256xf32>
    %64 = arith.maximumf %62, %63 : vector<64x256xf32>
    %c0_19 = arith.constant 0 : index
    %c0_20 = arith.constant 0 : index
    %c0_21 = arith.constant 0 : index
    %65 = vector.load %arg6[%c0_19, %c0_20, %c0_21] : memref<8x16x64xf32, #tpu.memory_space<vmem>>, vector<8x16x64xf32>
    %c0_22 = arith.constant 0 : index
    %c0_23 = arith.constant 0 : index
    %66 = vector.load %arg7[%c0_22, %c0_23] : memref<8x256xf32, #tpu.memory_space<vmem>>, vector<8x256xf32>
    %67 = vector.extract_strided_slice %65 {offsets = [0, 0, 0], sizes = [1, 16, 64], strides = [1, 1, 1]} : vector<8x16x64xf32> to vector<1x16x64xf32>
    %68 = vector.shape_cast %67 : vector<1x16x64xf32> to vector<16x64xf32>
    %cst_24 = arith.constant dense<0.000000e+00> : vector<16x256xf32>
    %69 = tpu.matmul %68, %64, %cst_24 {dimension_numbers = #tpu.dot_dimension_numbers<[1], [0], [0], [1], [0, 0, 1, 1], [], []>} : vector<16x64xf32>, vector<64x256xf32>, vector<16x256xf32> -> vector<16x256xf32>
    %70 = vector.extract_strided_slice %66 {offsets = [0, 0], sizes = [1, 256], strides = [1, 1]} : vector<8x256xf32> to vector<1x256xf32>
    %71 = vector.broadcast %70 : vector<1x256xf32> to vector<16x256xf32>
    %72 = arith.mulf %69, %71 : vector<16x256xf32>
    %73 = vector.extract_strided_slice %65 {offsets = [1, 0, 0], sizes = [1, 16, 64], strides = [1, 1, 1]} : vector<8x16x64xf32> to vector<1x16x64xf32>
    %74 = vector.shape_cast %73 : vector<1x16x64xf32> to vector<16x64xf32>
    %cst_25 = arith.constant dense<0.000000e+00> : vector<16x256xf32>
    %75 = tpu.matmul %74, %64, %cst_25 {dimension_numbers = #tpu.dot_dimension_numbers<[1], [0], [0], [1], [0, 0, 1, 1], [], []>} : vector<16x64xf32>, vector<64x256xf32>, vector<16x256xf32> -> vector<16x256xf32>
    %76 = vector.extract_strided_slice %66 {offsets = [1, 0], sizes = [1, 256], strides = [1, 1]} : vector<8x256xf32> to vector<1x256xf32>
    %77 = vector.broadcast %76 : vector<1x256xf32> to vector<16x256xf32>
    %78 = arith.mulf %75, %77 : vector<16x256xf32>
    %79 = arith.addf %72, %78 : vector<16x256xf32>
    %80 = vector.extract_strided_slice %65 {offsets = [2, 0, 0], sizes = [1, 16, 64], strides = [1, 1, 1]} : vector<8x16x64xf32> to vector<1x16x64xf32>
    %81 = vector.shape_cast %80 : vector<1x16x64xf32> to vector<16x64xf32>
    %cst_26 = arith.constant dense<0.000000e+00> : vector<16x256xf32>
    %82 = tpu.matmul %81, %64, %cst_26 {dimension_numbers = #tpu.dot_dimension_numbers<[1], [0], [0], [1], [0, 0, 1, 1], [], []>} : vector<16x64xf32>, vector<64x256xf32>, vector<16x256xf32> -> vector<16x256xf32>
    %83 = vector.extract_strided_slice %66 {offsets = [2, 0], sizes = [1, 256], strides = [1, 1]} : vector<8x256xf32> to vector<1x256xf32>
    %84 = vector.broadcast %83 : vector<1x256xf32> to vector<16x256xf32>
    %85 = arith.mulf %82, %84 : vector<16x256xf32>
    %86 = arith.addf %79, %85 : vector<16x256xf32>
    %87 = vector.extract_strided_slice %65 {offsets = [3, 0, 0], sizes = [1, 16, 64], strides = [1, 1, 1]} : vector<8x16x64xf32> to vector<1x16x64xf32>
    %88 = vector.shape_cast %87 : vector<1x16x64xf32> to vector<16x64xf32>
    %cst_27 = arith.constant dense<0.000000e+00> : vector<16x256xf32>
    %89 = tpu.matmul %88, %64, %cst_27 {dimension_numbers = #tpu.dot_dimension_numbers<[1], [0], [0], [1], [0, 0, 1, 1], [], []>} : vector<16x64xf32>, vector<64x256xf32>, vector<16x256xf32> -> vector<16x256xf32>
    %90 = vector.extract_strided_slice %66 {offsets = [3, 0], sizes = [1, 256], strides = [1, 1]} : vector<8x256xf32> to vector<1x256xf32>
    %91 = vector.broadcast %90 : vector<1x256xf32> to vector<16x256xf32>
    %92 = arith.mulf %89, %91 : vector<16x256xf32>
    %93 = arith.addf %86, %92 : vector<16x256xf32>
    %94 = vector.extract_strided_slice %65 {offsets = [4, 0, 0], sizes = [1, 16, 64], strides = [1, 1, 1]} : vector<8x16x64xf32> to vector<1x16x64xf32>
    %95 = vector.shape_cast %94 : vector<1x16x64xf32> to vector<16x64xf32>
    %cst_28 = arith.constant dense<0.000000e+00> : vector<16x256xf32>
    %96 = tpu.matmul %95, %64, %cst_28 {dimension_numbers = #tpu.dot_dimension_numbers<[1], [0], [0], [1], [0, 0, 1, 1], [], []>} : vector<16x64xf32>, vector<64x256xf32>, vector<16x256xf32> -> vector<16x256xf32>
    %97 = vector.extract_strided_slice %66 {offsets = [4, 0], sizes = [1, 256], strides = [1, 1]} : vector<8x256xf32> to vector<1x256xf32>
    %98 = vector.broadcast %97 : vector<1x256xf32> to vector<16x256xf32>
    %99 = arith.mulf %96, %98 : vector<16x256xf32>
    %100 = arith.addf %93, %99 : vector<16x256xf32>
    %101 = vector.extract_strided_slice %65 {offsets = [5, 0, 0], sizes = [1, 16, 64], strides = [1, 1, 1]} : vector<8x16x64xf32> to vector<1x16x64xf32>
    %102 = vector.shape_cast %101 : vector<1x16x64xf32> to vector<16x64xf32>
    %cst_29 = arith.constant dense<0.000000e+00> : vector<16x256xf32>
    %103 = tpu.matmul %102, %64, %cst_29 {dimension_numbers = #tpu.dot_dimension_numbers<[1], [0], [0], [1], [0, 0, 1, 1], [], []>} : vector<16x64xf32>, vector<64x256xf32>, vector<16x256xf32> -> vector<16x256xf32>
    %104 = vector.extract_strided_slice %66 {offsets = [5, 0], sizes = [1, 256], strides = [1, 1]} : vector<8x256xf32> to vector<1x256xf32>
    %105 = vector.broadcast %104 : vector<1x256xf32> to vector<16x256xf32>
    %106 = arith.mulf %103, %105 : vector<16x256xf32>
    %107 = arith.addf %100, %106 : vector<16x256xf32>
    %108 = vector.extract_strided_slice %65 {offsets = [6, 0, 0], sizes = [1, 16, 64], strides = [1, 1, 1]} : vector<8x16x64xf32> to vector<1x16x64xf32>
    %109 = vector.shape_cast %108 : vector<1x16x64xf32> to vector<16x64xf32>
    %cst_30 = arith.constant dense<0.000000e+00> : vector<16x256xf32>
    %110 = tpu.matmul %109, %64, %cst_30 {dimension_numbers = #tpu.dot_dimension_numbers<[1], [0], [0], [1], [0, 0, 1, 1], [], []>} : vector<16x64xf32>, vector<64x256xf32>, vector<16x256xf32> -> vector<16x256xf32>
    %111 = vector.extract_strided_slice %66 {offsets = [6, 0], sizes = [1, 256], strides = [1, 1]} : vector<8x256xf32> to vector<1x256xf32>
    %112 = vector.broadcast %111 : vector<1x256xf32> to vector<16x256xf32>
    %113 = arith.mulf %110, %112 : vector<16x256xf32>
    %114 = arith.addf %107, %113 : vector<16x256xf32>
    %115 = vector.extract_strided_slice %65 {offsets = [7, 0, 0], sizes = [1, 16, 64], strides = [1, 1, 1]} : vector<8x16x64xf32> to vector<1x16x64xf32>
    %116 = vector.shape_cast %115 : vector<1x16x64xf32> to vector<16x64xf32>
    %cst_31 = arith.constant dense<0.000000e+00> : vector<16x256xf32>
    %117 = tpu.matmul %116, %64, %cst_31 {dimension_numbers = #tpu.dot_dimension_numbers<[1], [0], [0], [1], [0, 0, 1, 1], [], []>} : vector<16x64xf32>, vector<64x256xf32>, vector<16x256xf32> -> vector<16x256xf32>
    %118 = vector.extract_strided_slice %66 {offsets = [7, 0], sizes = [1, 256], strides = [1, 1]} : vector<8x256xf32> to vector<1x256xf32>
    %119 = vector.broadcast %118 : vector<1x256xf32> to vector<16x256xf32>
    %120 = arith.mulf %117, %119 : vector<16x256xf32>
    %121 = arith.addf %114, %120 : vector<16x256xf32>
    %c0_32 = arith.constant 0 : index
    %c0_33 = arith.constant 0 : index
    %122 = vector.load %arg8[%c0_32, %c0_33] : memref<256x512xf32, #tpu.memory_space<vmem>>, vector<256x512xf32>
    %cst_34 = arith.constant dense<0.000000e+00> : vector<16x512xf32>
    %123 = tpu.matmul %121, %122, %cst_34 {dimension_numbers = #tpu.dot_dimension_numbers<[1], [0], [0], [1], [0, 0, 1, 1], [], []>} : vector<16x256xf32>, vector<256x512xf32>, vector<16x512xf32> -> vector<16x512xf32>
    %c0_35 = arith.constant 0 : index
    %c0_36 = arith.constant 0 : index
    %124 = vector.load %arg9[%c0_35, %c0_36] : memref<1x512xf32, #tpu.memory_space<vmem>>, vector<1x512xf32>
    %125 = vector.broadcast %124 : vector<1x512xf32> to vector<16x512xf32>
    %126 = arith.addf %123, %125 : vector<16x512xf32>
    %cst_37 = arith.constant 0.000000e+00 : f32
    %127 = vector.broadcast %cst_37 : f32 to vector<16x512xf32>
    %128 = arith.maximumf %126, %127 : vector<16x512xf32>
    %c0_38 = arith.constant 0 : index
    %c0_39 = arith.constant 0 : index
    %c0_40 = arith.constant 0 : index
    %129 = vector.load %arg10[%c0_38, %c0_39, %c0_40] : memref<8x4x16xf32, #tpu.memory_space<vmem>>, vector<8x4x16xf32>
    %c0_41 = arith.constant 0 : index
    %c0_42 = arith.constant 0 : index
    %130 = vector.load %arg11[%c0_41, %c0_42] : memref<8x512xf32, #tpu.memory_space<vmem>>, vector<8x512xf32>
    %131 = vector.extract_strided_slice %129 {offsets = [0, 0, 0], sizes = [1, 4, 16], strides = [1, 1, 1]} : vector<8x4x16xf32> to vector<1x4x16xf32>
    %132 = vector.shape_cast %131 : vector<1x4x16xf32> to vector<4x16xf32>
    %cst_43 = arith.constant dense<0.000000e+00> : vector<4x512xf32>
    %133 = tpu.matmul %132, %128, %cst_43 {dimension_numbers = #tpu.dot_dimension_numbers<[1], [0], [0], [1], [0, 0, 1, 1], [], []>} : vector<4x16xf32>, vector<16x512xf32>, vector<4x512xf32> -> vector<4x512xf32>
    %134 = vector.extract_strided_slice %130 {offsets = [0, 0], sizes = [1, 512], strides = [1, 1]} : vector<8x512xf32> to vector<1x512xf32>
    %135 = vector.broadcast %134 : vector<1x512xf32> to vector<4x512xf32>
    %136 = arith.mulf %133, %135 : vector<4x512xf32>
    %137 = vector.extract_strided_slice %129 {offsets = [1, 0, 0], sizes = [1, 4, 16], strides = [1, 1, 1]} : vector<8x4x16xf32> to vector<1x4x16xf32>
    %138 = vector.shape_cast %137 : vector<1x4x16xf32> to vector<4x16xf32>
    %cst_44 = arith.constant dense<0.000000e+00> : vector<4x512xf32>
    %139 = tpu.matmul %138, %128, %cst_44 {dimension_numbers = #tpu.dot_dimension_numbers<[1], [0], [0], [1], [0, 0, 1, 1], [], []>} : vector<4x16xf32>, vector<16x512xf32>, vector<4x512xf32> -> vector<4x512xf32>
    %140 = vector.extract_strided_slice %130 {offsets = [1, 0], sizes = [1, 512], strides = [1, 1]} : vector<8x512xf32> to vector<1x512xf32>
    %141 = vector.broadcast %140 : vector<1x512xf32> to vector<4x512xf32>
    %142 = arith.mulf %139, %141 : vector<4x512xf32>
    %143 = arith.addf %136, %142 : vector<4x512xf32>
    %144 = vector.extract_strided_slice %129 {offsets = [2, 0, 0], sizes = [1, 4, 16], strides = [1, 1, 1]} : vector<8x4x16xf32> to vector<1x4x16xf32>
    %145 = vector.shape_cast %144 : vector<1x4x16xf32> to vector<4x16xf32>
    %cst_45 = arith.constant dense<0.000000e+00> : vector<4x512xf32>
    %146 = tpu.matmul %145, %128, %cst_45 {dimension_numbers = #tpu.dot_dimension_numbers<[1], [0], [0], [1], [0, 0, 1, 1], [], []>} : vector<4x16xf32>, vector<16x512xf32>, vector<4x512xf32> -> vector<4x512xf32>
    %147 = vector.extract_strided_slice %130 {offsets = [2, 0], sizes = [1, 512], strides = [1, 1]} : vector<8x512xf32> to vector<1x512xf32>
    %148 = vector.broadcast %147 : vector<1x512xf32> to vector<4x512xf32>
    %149 = arith.mulf %146, %148 : vector<4x512xf32>
    %150 = arith.addf %143, %149 : vector<4x512xf32>
    %151 = vector.extract_strided_slice %129 {offsets = [3, 0, 0], sizes = [1, 4, 16], strides = [1, 1, 1]} : vector<8x4x16xf32> to vector<1x4x16xf32>
    %152 = vector.shape_cast %151 : vector<1x4x16xf32> to vector<4x16xf32>
    %cst_46 = arith.constant dense<0.000000e+00> : vector<4x512xf32>
    %153 = tpu.matmul %152, %128, %cst_46 {dimension_numbers = #tpu.dot_dimension_numbers<[1], [0], [0], [1], [0, 0, 1, 1], [], []>} : vector<4x16xf32>, vector<16x512xf32>, vector<4x512xf32> -> vector<4x512xf32>
    %154 = vector.extract_strided_slice %130 {offsets = [3, 0], sizes = [1, 512], strides = [1, 1]} : vector<8x512xf32> to vector<1x512xf32>
    %155 = vector.broadcast %154 : vector<1x512xf32> to vector<4x512xf32>
    %156 = arith.mulf %153, %155 : vector<4x512xf32>
    %157 = arith.addf %150, %156 : vector<4x512xf32>
    %158 = vector.extract_strided_slice %129 {offsets = [4, 0, 0], sizes = [1, 4, 16], strides = [1, 1, 1]} : vector<8x4x16xf32> to vector<1x4x16xf32>
    %159 = vector.shape_cast %158 : vector<1x4x16xf32> to vector<4x16xf32>
    %cst_47 = arith.constant dense<0.000000e+00> : vector<4x512xf32>
    %160 = tpu.matmul %159, %128, %cst_47 {dimension_numbers = #tpu.dot_dimension_numbers<[1], [0], [0], [1], [0, 0, 1, 1], [], []>} : vector<4x16xf32>, vector<16x512xf32>, vector<4x512xf32> -> vector<4x512xf32>
    %161 = vector.extract_strided_slice %130 {offsets = [4, 0], sizes = [1, 512], strides = [1, 1]} : vector<8x512xf32> to vector<1x512xf32>
    %162 = vector.broadcast %161 : vector<1x512xf32> to vector<4x512xf32>
    %163 = arith.mulf %160, %162 : vector<4x512xf32>
    %164 = arith.addf %157, %163 : vector<4x512xf32>
    %165 = vector.extract_strided_slice %129 {offsets = [5, 0, 0], sizes = [1, 4, 16], strides = [1, 1, 1]} : vector<8x4x16xf32> to vector<1x4x16xf32>
    %166 = vector.shape_cast %165 : vector<1x4x16xf32> to vector<4x16xf32>
    %cst_48 = arith.constant dense<0.000000e+00> : vector<4x512xf32>
    %167 = tpu.matmul %166, %128, %cst_48 {dimension_numbers = #tpu.dot_dimension_numbers<[1], [0], [0], [1], [0, 0, 1, 1], [], []>} : vector<4x16xf32>, vector<16x512xf32>, vector<4x512xf32> -> vector<4x512xf32>
    %168 = vector.extract_strided_slice %130 {offsets = [5, 0], sizes = [1, 512], strides = [1, 1]} : vector<8x512xf32> to vector<1x512xf32>
    %169 = vector.broadcast %168 : vector<1x512xf32> to vector<4x512xf32>
    %170 = arith.mulf %167, %169 : vector<4x512xf32>
    %171 = arith.addf %164, %170 : vector<4x512xf32>
    %172 = vector.extract_strided_slice %129 {offsets = [6, 0, 0], sizes = [1, 4, 16], strides = [1, 1, 1]} : vector<8x4x16xf32> to vector<1x4x16xf32>
    %173 = vector.shape_cast %172 : vector<1x4x16xf32> to vector<4x16xf32>
    %cst_49 = arith.constant dense<0.000000e+00> : vector<4x512xf32>
    %174 = tpu.matmul %173, %128, %cst_49 {dimension_numbers = #tpu.dot_dimension_numbers<[1], [0], [0], [1], [0, 0, 1, 1], [], []>} : vector<4x16xf32>, vector<16x512xf32>, vector<4x512xf32> -> vector<4x512xf32>
    %175 = vector.extract_strided_slice %130 {offsets = [6, 0], sizes = [1, 512], strides = [1, 1]} : vector<8x512xf32> to vector<1x512xf32>
    %176 = vector.broadcast %175 : vector<1x512xf32> to vector<4x512xf32>
    %177 = arith.mulf %174, %176 : vector<4x512xf32>
    %178 = arith.addf %171, %177 : vector<4x512xf32>
    %179 = vector.extract_strided_slice %129 {offsets = [7, 0, 0], sizes = [1, 4, 16], strides = [1, 1, 1]} : vector<8x4x16xf32> to vector<1x4x16xf32>
    %180 = vector.shape_cast %179 : vector<1x4x16xf32> to vector<4x16xf32>
    %cst_50 = arith.constant dense<0.000000e+00> : vector<4x512xf32>
    %181 = tpu.matmul %180, %128, %cst_50 {dimension_numbers = #tpu.dot_dimension_numbers<[1], [0], [0], [1], [0, 0, 1, 1], [], []>} : vector<4x16xf32>, vector<16x512xf32>, vector<4x512xf32> -> vector<4x512xf32>
    %182 = vector.extract_strided_slice %130 {offsets = [7, 0], sizes = [1, 512], strides = [1, 1]} : vector<8x512xf32> to vector<1x512xf32>
    %183 = vector.broadcast %182 : vector<1x512xf32> to vector<4x512xf32>
    %184 = arith.mulf %181, %183 : vector<4x512xf32>
    %185 = arith.addf %178, %184 : vector<4x512xf32>
    %c0_51 = arith.constant 0 : index
    %c0_52 = arith.constant 0 : index
    %186 = vector.load %arg12[%c0_51, %c0_52] : memref<512x1024xf32, #tpu.memory_space<vmem>>, vector<512x1024xf32>
    %cst_53 = arith.constant dense<0.000000e+00> : vector<4x1024xf32>
    %187 = tpu.matmul %185, %186, %cst_53 {dimension_numbers = #tpu.dot_dimension_numbers<[1], [0], [0], [1], [0, 0, 1, 1], [], []>} : vector<4x512xf32>, vector<512x1024xf32>, vector<4x1024xf32> -> vector<4x1024xf32>
    %c0_54 = arith.constant 0 : index
    %c0_55 = arith.constant 0 : index
    %188 = vector.load %arg13[%c0_54, %c0_55] : memref<1x1024xf32, #tpu.memory_space<vmem>>, vector<1x1024xf32>
    %189 = vector.broadcast %188 : vector<1x1024xf32> to vector<4x1024xf32>
    %190 = arith.addf %187, %189 : vector<4x1024xf32>
    %cst_56 = arith.constant 0.000000e+00 : f32
    %191 = vector.broadcast %cst_56 : f32 to vector<4x1024xf32>
    %192 = arith.maximumf %190, %191 : vector<4x1024xf32>
    %c0_57 = arith.constant 0 : index
    %c0_58 = arith.constant 0 : index
    %193 = vector.load %arg14[%c0_57, %c0_58] : memref<4x1024xf32, #tpu.memory_space<vmem>>, vector<4x1024xf32>
    tpu.vector_store %arg14[%c0_57, %c0_58], %192 {strides = array<i32>} : memref<4x1024xf32, #tpu.memory_space<vmem>>, vector<4x1024xf32>,
    return
  }
  func.func @transform_0(%arg0: i32) -> (i32, i32) {
    %c0_i32 = arith.constant 0 : i32
    %c0_i32_0 = arith.constant 0 : i32
    %c0_i32_1 = arith.constant 0 : i32
    return %c0_i32, %c0_i32_0 : i32, i32
  }
  func.func @transform_1(%arg0: i32) -> (i32, i32, i32) {
    %c0_i32 = arith.constant 0 : i32
    %c0_i32_0 = arith.constant 0 : i32
    %c0_i32_1 = arith.constant 0 : i32
    %c0_i32_2 = arith.constant 0 : i32
    return %c0_i32, %c0_i32_0, %c0_i32_1 : i32, i32, i32
  }
  func.func @transform_2(%arg0: i32) -> (i32, i32) {
    %c0_i32 = arith.constant 0 : i32
    %c0_i32_0 = arith.constant 0 : i32
    %c0_i32_1 = arith.constant 0 : i32
    return %c0_i32, %c0_i32_0 : i32, i32
  }
  func.func @transform_3(%arg0: i32) -> (i32, i32) {
    %c0_i32 = arith.constant 0 : i32
    %c0_i32_0 = arith.constant 0 : i32
    %c0_i32_1 = arith.constant 0 : i32
    return %c0_i32, %c0_i32_0 : i32, i32
  }
  func.func @transform_4(%arg0: i32) -> (i32, i32) {
    %c0_i32 = arith.constant 0 : i32
    %c0_i32_0 = arith.constant 0 : i32
    %c0_i32_1 = arith.constant 0 : i32
    return %c0_i32, %c0_i32_0 : i32, i32
  }
  func.func @transform_5(%arg0: i32) -> (i32, i32, i32) {
    %c0_i32 = arith.constant 0 : i32
    %c0_i32_0 = arith.constant 0 : i32
    %c0_i32_1 = arith.constant 0 : i32
    %c0_i32_2 = arith.constant 0 : i32
    return %c0_i32, %c0_i32_0, %c0_i32_1 : i32, i32, i32
  }
  func.func @transform_6(%arg0: i32) -> (i32, i32) {
    %c0_i32 = arith.constant 0 : i32
    %c0_i32_0 = arith.constant 0 : i32
    %c0_i32_1 = arith.constant 0 : i32
    return %c0_i32, %c0_i32_0 : i32, i32
  }
  func.func @transform_7(%arg0: i32) -> (i32, i32) {
    %c0_i32 = arith.constant 0 : i32
    %c0_i32_0 = arith.constant 0 : i32
    %c0_i32_1 = arith.constant 0 : i32
    return %c0_i32, %c0_i32_0 : i32, i32
  }
  func.func @transform_8(%arg0: i32) -> (i32, i32) {
    %c0_i32 = arith.constant 0 : i32
    %c0_i32_0 = arith.constant 0 : i32
    %c0_i32_1 = arith.constant 0 : i32
    return %c0_i32, %c0_i32_0 : i32, i32
  }
  func.func @transform_9(%arg0: i32) -> (i32, i32, i32) {
    %c0_i32 = arith.constant 0 : i32
    %c0_i32_0 = arith.constant 0 : i32
    %c0_i32_1 = arith.constant 0 : i32
    %c0_i32_2 = arith.constant 0 : i32
    return %c0_i32, %c0_i32_0, %c0_i32_1 : i32, i32, i32
  }
  func.func @transform_10(%arg0: i32) -> (i32, i32) {
    %c0_i32 = arith.constant 0 : i32
    %c0_i32_0 = arith.constant 0 : i32
    %c0_i32_1 = arith.constant 0 : i32
    return %c0_i32, %c0_i32_0 : i32, i32
  }
  func.func @transform_11(%arg0: i32) -> (i32, i32) {
    %c0_i32 = arith.constant 0 : i32
    %c0_i32_0 = arith.constant 0 : i32
    %c0_i32_1 = arith.constant 0 : i32
    return %c0_i32, %c0_i32_0 : i32, i32
  }
  func.func @transform_12(%arg0: i32) -> (i32, i32) {
    %c0_i32 = arith.constant 0 : i32
    %c0_i32_0 = arith.constant 0 : i32
    %c0_i32_1 = arith.constant 0 : i32
    return %c0_i32, %c0_i32_0 : i32, i32
  }
  func.func @transform_13(%arg0: i32) -> (i32, i32) {
    %c0_i32 = arith.constant 0 : i32
    %c0_i32_0 = arith.constant 0 : i32
    %c0_i32_1 = arith.constant 0 : i32
    return %c0_i32, %c0_i32_0 : i32, i32
  }
}

module attributes {stable_mosaic.version = 11 : i64} {
  func.func @_fc_head_kernel(%arg0: i32, %arg1: memref<8x512xf32, #tpu.memory_space<vmem>>, %arg2: memref<512x512xf32, #tpu.memory_space<vmem>>, %arg3: memref<1x512xf32, #tpu.memory_space<vmem>>, %arg4: memref<512x10xf32, #tpu.memory_space<vmem>>, %arg5: memref<1x10xf32, #tpu.memory_space<vmem>>, %arg6: memref<8x10xf32, #tpu.memory_space<vmem>>) attributes {dimension_semantics = [#tpu.dimension_semantics<arbitrary>], iteration_bounds = array<i64: 1>, scalar_prefetch = 0 : i64, scratch_operands = 0 : i64, tpu.core_type = #tpu.core_type<tc>, window_params = [{pipeline_mode = #tpu.pipeline_mode<synchronous>, transform_indices = @transform_0, window_bounds = array<i64: 8, 512>}, {pipeline_mode = #tpu.pipeline_mode<synchronous>, transform_indices = @transform_1, window_bounds = array<i64: 512, 512>}, {pipeline_mode = #tpu.pipeline_mode<synchronous>, transform_indices = @transform_2, window_bounds = array<i64: 1, 512>}, {pipeline_mode = #tpu.pipeline_mode<synchronous>, transform_indices = @transform_3, window_bounds = array<i64: 512, 10>}, {pipeline_mode = #tpu.pipeline_mode<synchronous>, transform_indices = @transform_4, window_bounds = array<i64: 1, 10>}, {pipeline_mode = #tpu.pipeline_mode<synchronous>, transform_indices = @transform_5, window_bounds = array<i64: 8, 10>}]} {
    %c0 = arith.constant 0 : index
    %c0_0 = arith.constant 0 : index
    %0 = vector.load %arg1[%c0, %c0_0] : memref<8x512xf32, #tpu.memory_space<vmem>>, vector<8x512xf32>
    %c0_1 = arith.constant 0 : index
    %c0_2 = arith.constant 0 : index
    %1 = vector.load %arg2[%c0_1, %c0_2] : memref<512x512xf32, #tpu.memory_space<vmem>>, vector<512x512xf32>
    %cst = arith.constant dense<0.000000e+00> : vector<8x512xf32>
    %2 = tpu.matmul %0, %1, %cst {dimension_numbers = #tpu.dot_dimension_numbers<[1], [0], [0], [1], [0, 0, 1, 1], [], []>} : vector<8x512xf32>, vector<512x512xf32>, vector<8x512xf32> -> vector<8x512xf32>
    %c0_3 = arith.constant 0 : index
    %c0_4 = arith.constant 0 : index
    %3 = vector.load %arg3[%c0_3, %c0_4] : memref<1x512xf32, #tpu.memory_space<vmem>>, vector<1x512xf32>
    %4 = vector.broadcast %3 : vector<1x512xf32> to vector<8x512xf32>
    %5 = arith.addf %2, %4 : vector<8x512xf32>
    %cst_5 = arith.constant 0.000000e+00 : f32
    %6 = vector.broadcast %cst_5 : f32 to vector<8x512xf32>
    %7 = arith.maximumf %5, %6 : vector<8x512xf32>
    %c0_6 = arith.constant 0 : index
    %c0_7 = arith.constant 0 : index
    %8 = vector.load %arg4[%c0_6, %c0_7] : memref<512x10xf32, #tpu.memory_space<vmem>>, vector<512x10xf32>
    %cst_8 = arith.constant dense<0.000000e+00> : vector<8x10xf32>
    %9 = tpu.matmul %7, %8, %cst_8 {dimension_numbers = #tpu.dot_dimension_numbers<[1], [0], [0], [1], [0, 0, 1, 1], [], []>} : vector<8x512xf32>, vector<512x10xf32>, vector<8x10xf32> -> vector<8x10xf32>
    %c0_9 = arith.constant 0 : index
    %c0_10 = arith.constant 0 : index
    %10 = vector.load %arg5[%c0_9, %c0_10] : memref<1x10xf32, #tpu.memory_space<vmem>>, vector<1x10xf32>
    %11 = vector.broadcast %10 : vector<1x10xf32> to vector<8x10xf32>
    %12 = arith.addf %9, %11 : vector<8x10xf32>
    %c0_11 = arith.constant 0 : index
    %c0_12 = arith.constant 0 : index
    %13 = vector.load %arg6[%c0_11, %c0_12] : memref<8x10xf32, #tpu.memory_space<vmem>>, vector<8x10xf32>
    tpu.vector_store %arg6[%c0_11, %c0_12], %12 {strides = array<i32>} : memref<8x10xf32, #tpu.memory_space<vmem>>, vector<8x10xf32>,
    return
  }
  func.func @transform_0(%arg0: i32) -> (i32, i32) {
    %c0_i32 = arith.constant 0 : i32
    %c0_i32_0 = arith.constant 0 : i32
    %c0_i32_1 = arith.constant 0 : i32
    return %c0_i32, %c0_i32_0 : i32, i32
  }
  func.func @transform_1(%arg0: i32) -> (i32, i32) {
    %c0_i32 = arith.constant 0 : i32
    %c0_i32_0 = arith.constant 0 : i32
    %c0_i32_1 = arith.constant 0 : i32
    return %c0_i32, %c0_i32_0 : i32, i32
  }
  func.func @transform_2(%arg0: i32) -> (i32, i32) {
    %c0_i32 = arith.constant 0 : i32
    %c0_i32_0 = arith.constant 0 : i32
    %c0_i32_1 = arith.constant 0 : i32
    return %c0_i32, %c0_i32_0 : i32, i32
  }
  func.func @transform_3(%arg0: i32) -> (i32, i32) {
    %c0_i32 = arith.constant 0 : i32
    %c0_i32_0 = arith.constant 0 : i32
    %c0_i32_1 = arith.constant 0 : i32
    return %c0_i32, %c0_i32_0 : i32, i32
  }
  func.func @transform_4(%arg0: i32) -> (i32, i32) {
    %c0_i32 = arith.constant 0 : i32
    %c0_i32_0 = arith.constant 0 : i32
    %c0_i32_1 = arith.constant 0 : i32
    return %c0_i32, %c0_i32_0 : i32, i32
  }
  func.func @transform_5(%arg0: i32) -> (i32, i32) {
    %c0_i32 = arith.constant 0 : i32
    %c0_i32_0 = arith.constant 0 : i32
    %c0_i32_1 = arith.constant 0 : i32
    return %c0_i32, %c0_i32_0 : i32, i32
  }
}

</mosaic_0001>

<llo_original>
// kernel: tile.48
$region0: #{tile.48}
  #allocation0 [shape = 's32[1]{0}', space=sflag, size = 0x4, scoped, tag = 'scoped memory for tile.48']
  %s0 = inlined_call_operand.vmem [shape: f32[64], index: 0, kind: input, shape index: {}]
  %s1 = inlined_call_operand.vmem [shape: f32[8,64], index: 1, kind: output, shape index: {}]
  // Predicated region
  $region2: #{tile.48} parent=0 // pred_check
    _
  $region3: #{tile.48} parent=0 // pred_check_branch
    %3 = sbr.rel (0) target = $region5
  $region4: #{tile.48} parent=0 // pred_region
    _
  $region5: #{tile.48} parent=0 // pred_fallthru
    _
  %v4 = vld [vmem:[%s0] ss:$0 sm:$0xff]
  %5 = vst [vmem:[%s1] sm:$0xff] %v4

// kernel: tile.49
$region0: #{tile.49}
  %s0 = inlined_call_operand.vmem [shape: f32[8,64], index: 0, kind: input, shape index: {}]
  %s1 = inlined_call_operand.vmem [shape: f32[1,512], index: 1, kind: output, shape index: {}]
  $region1: #{tile.49} parent=0
    #allocation0 [shape = 'u8[16384]{0}', space=vmem, size = 0x4000, scoped, tag = 'scoped mem for output reshape']
    %v2 = vld [vmem:[%s0] ss:$2 sm:$0xf]
    %vm3 = vcmask 523264
    %4 = vst.msk [vmem:[#allocation0] ss:$8 sm:$0xf] %vm3, %v2
    %s5 = scalar_lea.vmem %s0, 1
    %v6 = vld [vmem:[%s5] ss:$2 sm:$0xf]
    %7 = vrot.lane.b32.xlu0 %v6, 64
    %v8 = vpop.permute.xlu0 %7
    %vm9 = vcmask 1048064
    %10 = vst.msk [vmem:[#allocation0] ss:$8 sm:$0xf] %vm9, %v8
    %s12 = sshllo.u32 0, 1
    %v14 = vld [vmem:[#allocation0] sm:%s12]
    %s15 = sshllo.u32 0, 1
    %16 = vst [vmem:[%s1] sm:%s15] %v14
    %s17 = scalar_lea.vmem [#allocation0], 8
    %v18 = vld [vmem:[%s17] sm:%s12]
    %s19 = sshllo.u32 0, 1
    %s20 = scalar_lea.vmem %s1, 1
    %21 = vst [vmem:[%s20] sm:%s19] %v18
    %s22 = scalar_lea.vmem [#allocation0], 16
    %v23 = vld [vmem:[%s22] sm:%s12]
    %s24 = sshllo.u32 0, 1
    %s25 = smul.addr 1, 2
    %s26 = scalar_lea.vmem %s1, %s25
    %27 = vst [vmem:[%s26] sm:%s24] %v23
    %s28 = scalar_lea.vmem [#allocation0], 24
    %v29 = vld [vmem:[%s28] sm:%s12]
    %s30 = sshllo.u32 0, 1
    %s31 = smul.addr 1, 3
    %s32 = scalar_lea.vmem %s1, %s31
    %33 = vst [vmem:[%s32] sm:%s30] %v29

// kernel: tile.38
$region0: #{tile.38}
  #allocation0 [shape = 's32[1]{0}', space=sflag, size = 0x4, scoped, tag = 'scoped memory for tile.38']
  %s0 = inlined_call_operand.vmem [shape: f32[32], index: 0, kind: input, shape index: {}]
  %s1 = inlined_call_operand.vmem [shape: f32[8,32], index: 1, kind: output, shape index: {}]
  // Predicated region
  $region2: #{tile.38} parent=0 // pred_check
    _
  $region3: #{tile.38} parent=0 // pred_check_branch
    %3 = sbr.rel (0) target = $region5
  $region4: #{tile.38} parent=0 // pred_region
    _
  $region5: #{tile.38} parent=0 // pred_fallthru
    _
  %v4 = vld [vmem:[%s0] ss:$0 sm:$0xff]
  %5 = vst [vmem:[%s1] sm:$0xff] %v4

// kernel: tile.39
$region0: #{tile.39}
  %s0 = inlined_call_operand.vmem [shape: f32[8,32], index: 0, kind: input, shape index: {}]
  %s1 = inlined_call_operand.vmem [shape: f32[1,256], index: 1, kind: output, shape index: {}]
  $region1: #{tile.39} parent=0
    #allocation0 [shape = 'u8[8192]{0}', space=vmem, size = 0x2000, scoped, tag = 'scoped mem for output reshape']
    %s2 = smov 3
    %v3 = vld [vmem:[%s0] ss:$4 sm:%s2]
    %vm4 = vcmask 261120
    %5 = vst.msk [vmem:[#allocation0] ss:$8 sm:$0x3] %vm4, %v3
    %s6 = scalar_lea.vmem %s0, 3
    %s7 = smov 3
    %v8 = vld [vmem:[%s6] ss:$4 sm:%s7]
    %9 = vrot.lane.b32.xlu0 %v8, 96
    %v10 = vpop.permute.xlu0 %9
    %vm11 = vcmask 1048320
    %12 = vst.msk [vmem:[#allocation0] ss:$8 sm:$0x3] %vm11, %v10
    %s13 = scalar_lea.vmem %s0, 2
    %s14 = smov 3
    %v15 = vld [vmem:[%s13] ss:$4 sm:%s14]
    %16 = vrot.lane.b32.xlu0 %v15, 64
    %v17 = vpop.permute.xlu0 %16
    %vm18 = vcmask 785920
    %19 = vst.msk [vmem:[#allocation0] ss:$8 sm:$0x3] %vm18, %v17
    %s20 = scalar_lea.vmem %s0, 1
    %s21 = smov 3
    %v22 = vld [vmem:[%s20] ss:$4 sm:%s21]
    %23 = vrot.lane.b32.xlu0 %v22, 32
    %v24 = vpop.permute.xlu0 %23
    %vm25 = vcmask 523520
    %26 = vst.msk [vmem:[#allocation0] ss:$8 sm:$0x3] %vm25, %v24
    %s28 = sshllo.u32 0, 1
    %v30 = vld [vmem:[#allocation0] sm:%s28]
    %s31 = sshllo.u32 0, 1
    %32 = vst [vmem:[%s1] sm:%s31] %v30
    %s33 = scalar_lea.vmem [#allocation0], 8
    %v34 = vld [vmem:[%s33] sm:%s28]
    %s35 = sshllo.u32 0, 1
    %s36 = scalar_lea.vmem %s1, 1
    %37 = vst [vmem:[%s36] sm:%s35] %v34

// kernel: tile.58
$region0: #{tile.58}
  #allocation0 [shape = 's32[1]{0}', space=sflag, size = 0x4, scoped, tag = 'scoped memory for tile.58']
  %s0 = inlined_call_operand.vmem [shape: f32[128], index: 0, kind: input, shape index: {}]
  %s1 = inlined_call_operand.vmem [shape: f32[8,128], index: 1, kind: output, shape index: {}]
  // Predicated region
  $region2: #{tile.58} parent=0 // pred_check
    _
  $region3: #{tile.58} parent=0 // pred_check_branch
    %3 = sbr.rel (0) target = $region5
  $region4: #{tile.58} parent=0 // pred_region
    _
  $region5: #{tile.58} parent=0 // pred_fallthru
    _
  %v4 = vld [vmem:[%s0] ss:$0 sm:$0xff]
  %5 = vst [vmem:[%s1] sm:$0xff] %v4

// kernel: tile.54
$region0: #{tile.54}
  %s0 = inlined_call_operand.vmem [shape: f32[8,8,64], index: 0, kind: input, shape index: {}]
  %s1 = inlined_call_operand.vmem [shape: f32[8,512], index: 1, kind: output, shape index: {}]
  %v2 = vld [vmem:[%s0] ss:$2 sm:$0xff]
  %vm3 = vcmask 523264
  %4 = vst.msk [vmem:[%s1] ss:$8 sm:$0xf] %vm3, %v2
  %s5 = scalar_lea.vmem %s1, 4294967265
  %6 = vst.msk [vmem:[%s5] ss:$8 sm:$0xf0] %vm3, %v2
  %s7 = scalar_lea.vmem %s0, 16
  %v8 = vld [vmem:[%s7] ss:$2 sm:$0xff]
  %vm9 = vcmask 523264
  %s10 = scalar_lea.vmem %s1, 2
  %11 = vst.msk [vmem:[%s10] ss:$8 sm:$0xf] %vm9, %v8
  %s12 = scalar_lea.vmem %s1, 4294967267
  %13 = vst.msk [vmem:[%s12] ss:$8 sm:$0xf0] %vm9, %v8
  %s14 = scalar_lea.vmem %s0, 32
  %v15 = vld [vmem:[%s14] ss:$2 sm:$0xff]
  %vm16 = vcmask 523264
  %s17 = scalar_lea.vmem %s1, 4
  %18 = vst.msk [vmem:[%s17] ss:$8 sm:$0xf] %vm16, %v15
  %s19 = scalar_lea.vmem %s1, 4294967269
  %20 = vst.msk [vmem:[%s19] ss:$8 sm:$0xf0] %vm16, %v15
  %s21 = scalar_lea.vmem %s0, 48
  %v22 = vld [vmem:[%s21] ss:$2 sm:$0xff]
  %vm23 = vcmask 523264
  %s24 = scalar_lea.vmem %s1, 6
  %25 = vst.msk [vmem:[%s24] ss:$8 sm:$0xf] %vm23, %v22
  %s26 = scalar_lea.vmem %s1, 4294967271
  %27 = vst.msk [vmem:[%s26] ss:$8 sm:$0xf0] %vm23, %v22
  %s28 = scalar_lea.vmem %s0, 1
  %v29 = vld [vmem:[%s28] ss:$8 sm:$0xf]
  %s30 = scalar_lea.vmem %s0, 1
  %v31 = vld [vmem:[%s30] ss:$8 sm:$0xf0]
  %vm32 = vcmask 1047556
  %v33 = vsel %vm32, %v31, %v29
  %34 = vrot.lane.b32.xlu0 %v33, 64
  %v35 = vpop.permute.xlu0 %34
  %vm36 = vcmask 1048064
  %37 = vst.msk [vmem:[%s1] sm:$0xff] %vm36, %v35
  %s38 = scalar_lea.vmem %s0, 3
  %v39 = vld [vmem:[%s38] ss:$8 sm:$0xf]
  %s40 = scalar_lea.vmem %s0, 3
  %v41 = vld [vmem:[%s40] ss:$8 sm:$0xf0]
  %vm42 = vcmask 1047556
  %v43 = vsel %vm42, %v41, %v39
  %44 = vrot.lane.b32.xlu0 %v43, 64
  %v45 = vpop.permute.xlu0 %44
  %vm46 = vcmask 1048064
  %s47 = scalar_lea.vmem %s1, 8
  %48 = vst.msk [vmem:[%s47] sm:$0xff] %vm46, %v45
  %s49 = scalar_lea.vmem %s0, 5
  %v50 = vld [vmem:[%s49] ss:$8 sm:$0xf]
  %s51 = scalar_lea.vmem %s0, 5
  %v52 = vld [vmem:[%s51] ss:$8 sm:$0xf0]
  %vm53 = vcmask 1047556
  %v54 = vsel %vm53, %v52, %v50
  %55 = vrot.lane.b32.xlu0 %v54, 64
  %v56 = vpop.permute.xlu0 %55
  %vm57 = vcmask 1048064
  %s58 = scalar_lea.vmem %s1, 16
  %59 = vst.msk [vmem:[%s58] sm:$0xff] %vm57, %v56
  %s60 = scalar_lea.vmem %s0, 7
  %v61 = vld [vmem:[%s60] ss:$8 sm:$0xf]
  %s62 = scalar_lea.vmem %s0, 7
  %v63 = vld [vmem:[%s62] ss:$8 sm:$0xf0]
  %vm64 = vcmask 1047556
  %v65 = vsel %vm64, %v63, %v61
  %66 = vrot.lane.b32.xlu0 %v65, 64
  %v67 = vpop.permute.xlu0 %66
  %vm68 = vcmask 1048064
  %s69 = scalar_lea.vmem %s1, 24
  %70 = vst.msk [vmem:[%s69] sm:$0xff] %vm68, %v67

// kernel: tile.44
$region0: #{tile.44}
  %s0 = inlined_call_operand.vmem [shape: f32[8,8,32], index: 0, kind: input, shape index: {}]
  %s1 = inlined_call_operand.vmem [shape: f32[8,256], index: 1, kind: output, shape index: {}]
  %v2 = vld [vmem:[%s0] ss:$4 sm:$0xff]
  %vm3 = vcmask 261120
  %4 = vst.msk [vmem:[%s1] ss:$8 sm:$0x3] %vm3, %v2
  %s5 = scalar_lea.vmem %s1, 4294967281
  %6 = vst.msk [vmem:[%s5] ss:$8 sm:$0xc] %vm3, %v2
  %s7 = scalar_lea.vmem %s1, 4294967266
  %8 = vst.msk [vmem:[%s7] ss:$8 sm:$0x30] %vm3, %v2
  %s9 = scalar_lea.vmem %s1, 4294967251
  %10 = vst.msk [vmem:[%s9] ss:$8 sm:$0xc0] %vm3, %v2
  %s11 = scalar_lea.vmem %s0, 32
  %v12 = vld [vmem:[%s11] ss:$4 sm:$0xff]
  %vm13 = vcmask 261120
  %s14 = scalar_lea.vmem %s1, 4
  %15 = vst.msk [vmem:[%s14] ss:$8 sm:$0x3] %vm13, %v12
  %s16 = scalar_lea.vmem %s1, 4294967285
  %17 = vst.msk [vmem:[%s16] ss:$8 sm:$0xc] %vm13, %v12
  %s18 = scalar_lea.vmem %s1, 4294967270
  %19 = vst.msk [vmem:[%s18] ss:$8 sm:$0x30] %vm13, %v12
  %s20 = scalar_lea.vmem %s1, 4294967255
  %21 = vst.msk [vmem:[%s20] ss:$8 sm:$0xc0] %vm13, %v12
  %s22 = scalar_lea.vmem %s0, 3
  %v23 = vld [vmem:[%s22] ss:$8 sm:$0xf]
  %s24 = scalar_lea.vmem %s0, 3
  %v25 = vld [vmem:[%s24] ss:$8 sm:$0xf0]
  %vm26 = vcmask 1047556
  %v27 = vsel %vm26, %v25, %v23
  %28 = vrot.lane.b32.xlu0 %v27, 96
  %v29 = vpop.permute.xlu0 %28
  %vm30 = vcmask 1048320
  %31 = vst.msk [vmem:[%s1] sm:$0xff] %vm30, %v29
  %s32 = scalar_lea.vmem %s0, 7
  %v33 = vld [vmem:[%s32] ss:$8 sm:$0xf]
  %s34 = scalar_lea.vmem %s0, 7
  %v35 = vld [vmem:[%s34] ss:$8 sm:$0xf0]
  %vm36 = vcmask 1047556
  %v37 = vsel %vm36, %v35, %v33
  %38 = vrot.lane.b32.xlu0 %v37, 96
  %v39 = vpop.permute.xlu0 %38
  %vm40 = vcmask 1048320
  %s41 = scalar_lea.vmem %s1, 8
  %42 = vst.msk [vmem:[%s41] sm:$0xff] %vm40, %v39
  %s43 = scalar_lea.vmem %s0, 2
  %v44 = vld [vmem:[%s43] ss:$8 sm:$0xf]
  %s45 = scalar_lea.vmem %s0, 2
  %v46 = vld [vmem:[%s45] ss:$8 sm:$0xf0]
  %vm47 = vcmask 1047556
  %v48 = vsel %vm47, %v46, %v44
  %49 = vrot.lane.b32.xlu0 %v48, 64
  %v50 = vpop.permute.xlu0 %49
  %vm51 = vcmask 785920
  %52 = vst.msk [vmem:[%s1] sm:$0xff] %vm51, %v50
  %s53 = scalar_lea.vmem %s0, 6
  %v54 = vld [vmem:[%s53] ss:$8 sm:$0xf]
  %s55 = scalar_lea.vmem %s0, 6
  %v56 = vld [vmem:[%s55] ss:$8 sm:$0xf0]
  %vm57 = vcmask 1047556
  %v58 = vsel %vm57, %v56, %v54
  %59 = vrot.lane.b32.xlu0 %v58, 64
  %v60 = vpop.permute.xlu0 %59
  %vm61 = vcmask 785920
  %s62 = scalar_lea.vmem %s1, 8
  %63 = vst.msk [vmem:[%s62] sm:$0xff] %vm61, %v60
  %s64 = scalar_lea.vmem %s0, 1
  %v65 = vld [vmem:[%s64] ss:$8 sm:$0xf]
  %s66 = scalar_lea.vmem %s0, 1
  %v67 = vld [vmem:[%s66] ss:$8 sm:$0xf0]
  %vm68 = vcmask 1047556
  %v69 = vsel %vm68, %v67, %v65
  %70 = vrot.lane.b32.xlu0 %v69, 32
  %v71 = vpop.permute.xlu0 %70
  %vm72 = vcmask 523520
  %73 = vst.msk [vmem:[%s1] sm:$0xff] %vm72, %v71
  %s74 = scalar_lea.vmem %s0, 5
  %v75 = vld [vmem:[%s74] ss:$8 sm:$0xf]
  %s76 = scalar_lea.vmem %s0, 5
  %v77 = vld [vmem:[%s76] ss:$8 sm:$0xf0]
  %vm78 = vcmask 1047556
  %v79 = vsel %vm78, %v77, %v75
  %80 = vrot.lane.b32.xlu0 %v79, 32
  %v81 = vpop.permute.xlu0 %80
  %vm82 = vcmask 523520
  %s83 = scalar_lea.vmem %s1, 8
  %84 = vst.msk [vmem:[%s83] sm:$0xff] %vm82, %v81

// kernel: classifier_forward.3
$region0: #{classifier_forward.3}
  #allocation0 [shape = 'u32[]', space=smem, size = 0x4, offset = 0x4, fixed_abs, tag = 'smem constant byte address 0x4 - core index']
  #allocation1 [shape = 'u32[144,128]{1,0:T(1,128)}', space=vmem, size = 0x12000, scoped, tag = 'internal scratch']
  %s0 = inlined_call_operand.vmem [shape: f32[8,512], index: 0, kind: input, shape index: {}]
  %s1 = inlined_call_operand.vmem [shape: f32[512,512], index: 1, kind: input, shape index: {}]
  %s2 = inlined_call_operand.vmem [shape: f32[1,512], index: 2, kind: input, shape index: {}]
  %s3 = inlined_call_operand.vmem [shape: f32[512,10], index: 3, kind: input, shape index: {}]
  %s4 = inlined_call_operand.vmem [shape: f32[1,10], index: 4, kind: input, shape index: {}]
  %s5 = inlined_call_operand.hbm [shape: f32[8,10], index: 5, kind: output, shape index: {}]
  %s6 = sld [smem:[#allocation0]]
  $region30: #{classifier_forward.3} parent=0
    _
  %s8 = ssub.s32 1, %s6
  %s9 = scalar_select 0, %s8, %s6
  $region1: #{classifier_forward.3} parent=0
    #allocation2 [shape = 'u8[4096]{0}', space=vmem, size = 0x1000, scoped, tag = 'output window, operand 0, single buffered']
    #allocation3 [shape = 's32[1]{0}', space=sflag, size = 0x4, scoped, tag = 'scoped memory for classifier_forward.3']
    %10 = vsyncpa [#allocation3], 0
    // Predicated region
    $region2: #{classifier_forward.3} parent=1 // pred_check
      _
    $region3: #{classifier_forward.3} parent=1 // pred_check_branch
      %12 = sbr.rel (0) target = $region5
    $region4: #{classifier_forward.3} parent=1 // pred_region
      _
    $region5: #{classifier_forward.3} parent=1 // pred_fallthru
      _
    // Predicated region
    $region6: #{classifier_forward.3} parent=1 // pred_check
      _
    $region7: #{classifier_forward.3} parent=1 // pred_check_branch
      %14 = sbr.rel (0) target = $region9
    $region8: #{classifier_forward.3} parent=1 // pred_region
      _
    $region9: #{classifier_forward.3} parent=1 // pred_fallthru
      _
    // Predicated region
    $region10: #{classifier_forward.3} parent=1 // pred_check
      _
    $region11: #{classifier_forward.3} parent=1 // pred_check_branch
      %16 = sbr.rel (0) target = $region13
    $region12: #{classifier_forward.3} parent=1 // pred_region
      _
    $region13: #{classifier_forward.3} parent=1 // pred_fallthru
      _
    // Predicated region
    $region14: #{classifier_forward.3} parent=1 // pred_check
      _
    $region15: #{classifier_forward.3} parent=1 // pred_check_branch
      %18 = sbr.rel (0) target = $region17
    $region16: #{classifier_forward.3} parent=1 // pred_region
      _
    $region17: #{classifier_forward.3} parent=1 // pred_fallthru
      _
    // Predicated region
    $region18: #{classifier_forward.3} parent=1 // pred_check
      _
    $region19: #{classifier_forward.3} parent=1 // pred_check_branch
      %20 = sbr.rel (0) target = $region21
    $region20: #{classifier_forward.3} parent=1 // pred_region
      _
    $region21: #{classifier_forward.3} parent=1 // pred_fallthru
      _
    %v21 = vld [vmem:[%s0] sm:$0xff]
    %v22 = vld [vmem:[%s0 + $0x8] sm:$0xff]
    %v23 = vld [vmem:[%s0 + $0x10] sm:$0xff]
    %v24 = vld [vmem:[%s0 + $0x18] sm:$0xff]
    %v25 = vld [vmem:[%s1] sm:$0xff]
    %v26 = vld [vmem:[%s1 + $0x8] sm:$0xff]
    %v27 = vld [vmem:[%s1 + $0x10] sm:$0xff]
    %v28 = vld [vmem:[%s1 + $0x18] sm:$0xff]
    %v29 = vld [vmem:[%s1 + $0x20] sm:$0xff]
    %v30 = vld [vmem:[%s1 + $0x28] sm:$0xff]
    %v31 = vld [vmem:[%s1 + $0x30] sm:$0xff]
    %v32 = vld [vmem:[%s1 + $0x38] sm:$0xff]
    %v33 = vld [vmem:[%s1 + $0x40] sm:$0xff]
    %v34 = vld [vmem:[%s1 + $0x48] sm:$0xff]
    %v35 = vld [vmem:[%s1 + $0x50] sm:$0xff]
    %v36 = vld [vmem:[%s1 + $0x58] sm:$0xff]
    %v37 = vld [vmem:[%s1 + $0x60] sm:$0xff]
    %v38 = vld [vmem:[%s1 + $0x68] sm:$0xff]
    %v39 = vld [vmem:[%s1 + $0x70] sm:$0xff]
    %v40 = vld [vmem:[%s1 + $0x78] sm:$0xff]
    %v41 = vld [vmem:[%s1 + $0x80] sm:$0xff]
    %v42 = vld [vmem:[%s1 + $0x88] sm:$0xff]
    %v43 = vld [vmem:[%s1 + $0x90] sm:$0xff]
    %v44 = vld [vmem:[%s1 + $0x98] sm:$0xff]
    %v45 = vld [vmem:[%s1 + $0xa0] sm:$0xff]
    %v46 = vld [vmem:[%s1 + $0xa8] sm:$0xff]
    %v47 = vld [vmem:[%s1 + $0xb0] sm:$0xff]
    %v48 = vld [vmem:[%s1 + $0xb8] sm:$0xff]
    %v49 = vld [vmem:[%s1 + $0xc0] sm:$0xff]
    %v50 = vld [vmem:[%s1 + $0xc8] sm:$0xff]
    %v51 = vld [vmem:[%s1 + $0xd0] sm:$0xff]
    %v52 = vld [vmem:[%s1 + $0xd8] sm:$0xff]
    %v53 = vld [vmem:[%s1 + $0xe0] sm:$0xff]
    %v54 = vld [vmem:[%s1 + $0xe8] sm:$0xff]
    %v55 = vld [vmem:[%s1 + $0xf0] sm:$0xff]
    %v56 = vld [vmem:[%s1 + $0xf8] sm:$0xff]
    %v57 = vld [vmem:[%s1 + $0x100] sm:$0xff]
    %v58 = vld [vmem:[%s1 + $0x108] sm:$0xff]
    %v59 = vld [vmem:[%s1 + $0x110] sm:$0xff]
    %v60 = vld [vmem:[%s1 + $0x118] sm:$0xff]
    %v61 = vld [vmem:[%s1 + $0x120] sm:$0xff]
    %v62 = vld [vmem:[%s1 + $0x128] sm:$0xff]
    %v63 = vld [vmem:[%s1 + $0x130] sm:$0xff]
    %v64 = vld [vmem:[%s1 + $0x138] sm:$0xff]
    %v65 = vld [vmem:[%s1 + $0x140] sm:$0xff]
    %v66 = vld [vmem:[%s1 + $0x148] sm:$0xff]
    %v67 = vld [vmem:[%s1 + $0x150] sm:$0xff]
    %v68 = vld [vmem:[%s1 + $0x158] sm:$0xff]
    %v69 = vld [vmem:[%s1 + $0x160] sm:$0xff]
    %v70 = vld [vmem:[%s1 + $0x168] sm:$0xff]
    %v71 = vld [vmem:[%s1 + $0x170] sm:$0xff]
    %v72 = vld [vmem:[%s1 + $0x178] sm:$0xff]
    %v73 = vld [vmem:[%s1 + $0x180] sm:$0xff]
    %v74 = vld [vmem:[%s1 + $0x188] sm:$0xff]
    %v75 = vld [vmem:[%s1 + $0x190] sm:$0xff]
    %v76 = vld [vmem:[%s1 + $0x198] sm:$0xff]
    %v77 = vld [vmem:[%s1 + $0x1a0] sm:$0xff]
    %v78 = vld [vmem:[%s1 + $0x1a8] sm:$0xff]
    %v79 = vld [vmem:[%s1 + $0x1b0] sm:$0xff]
    %v80 = vld [vmem:[%s1 + $0x1b8] sm:$0xff]
    %v81 = vld [vmem:[%s1 + $0x1c0] sm:$0xff]
    %v82 = vld [vmem:[%s1 + $0x1c8] sm:$0xff]
    %v83 = vld [vmem:[%s1 + $0x1d0] sm:$0xff]
    %v84 = vld [vmem:[%s1 + $0x1d8] sm:$0xff]
    %v85 = vld [vmem:[%s1 + $0x1e0] sm:$0xff]
    %v86 = vld [vmem:[%s1 + $0x1e8] sm:$0xff]
    %v87 = vld [vmem:[%s1 + $0x1f0] sm:$0xff]
    %v88 = vld [vmem:[%s1 + $0x1f8] sm:$0xff]
    %v89 = vld [vmem:[%s1 + $0x200] sm:$0xff]
    %v90 = vld [vmem:[%s1 + $0x208] sm:$0xff]
    %v91 = vld [vmem:[%s1 + $0x210] sm:$0xff]
    %v92 = vld [vmem:[%s1 + $0x218] sm:$0xff]
    %v93 = vld [vmem:[%s1 + $0x220] sm:$0xff]
    %v94 = vld [vmem:[%s1 + $0x228] sm:$0xff]
    %v95 = vld [vmem:[%s1 + $0x230] sm:$0xff]
    %v96 = vld [vmem:[%s1 + $0x238] sm:$0xff]
    %v97 = vld [vmem:[%s1 + $0x240] sm:$0xff]
    %v98 = vld [vmem:[%s1 + $0x248] sm:$0xff]
    %v99 = vld [vmem:[%s1 + $0x250] sm:$0xff]
    %v100 = vld [vmem:[%s1 + $0x258] sm:$0xff]
    %v101 = vld [vmem:[%s1 + $0x260] sm:$0xff]
    %v102 = vld [vmem:[%s1 + $0x268] sm:$0xff]
    %v103 = vld [vmem:[%s1 + $0x270] sm:$0xff]
    %v104 = vld [vmem:[%s1 + $0x278] sm:$0xff]
    %v105 = vld [vmem:[%s1 + $0x280] sm:$0xff]
    %v106 = vld [vmem:[%s1 + $0x288] sm:$0xff]
    %v107 = vld [vmem:[%s1 + $0x290] sm:$0xff]
    %v108 = vld [vmem:[%s1 + $0x298] sm:$0xff]
    %v109 = vld [vmem:[%s1 + $0x2a0] sm:$0xff]
    %v110 = vld [vmem:[%s1 + $0x2a8] sm:$0xff]
    %v111 = vld [vmem:[%s1 + $0x2b0] sm:$0xff]
    %v112 = vld [vmem:[%s1 + $0x2b8] sm:$0xff]
    %v113 = vld [vmem:[%s1 + $0x2c0] sm:$0xff]
    %v114 = vld [vmem:[%s1 + $0x2c8] sm:$0xff]
    %v115 = vld [vmem:[%s1 + $0x2d0] sm:$0xff]
    %v116 = vld [vmem:[%s1 + $0x2d8] sm:$0xff]
    %v117 = vld [vmem:[%s1 + $0x2e0] sm:$0xff]
    %v118 = vld [vmem:[%s1 + $0x2e8] sm:$0xff]
    %v119 = vld [vmem:[%s1 + $0x2f0] sm:$0xff]
    %v120 = vld [vmem:[%s1 + $0x2f8] sm:$0xff]
    %v121 = vld [vmem:[%s1 + $0x300] sm:$0xff]
    %v122 = vld [vmem:[%s1 + $0x308] sm:$0xff]
    %v123 = vld [vmem:[%s1 + $0x310] sm:$0xff]
    %v124 = vld [vmem:[%s1 + $0x318] sm:$0xff]
    %v125 = vld [vmem:[%s1 + $0x320] sm:$0xff]
    %v126 = vld [vmem:[%s1 + $0x328] sm:$0xff]
    %v127 = vld [vmem:[%s1 + $0x330] sm:$0xff]
    %v128 = vld [vmem:[%s1 + $0x338] sm:$0xff]
    %v129 = vld [vmem:[%s1 + $0x340] sm:$0xff]
    %v130 = vld [vmem:[%s1 + $0x348] sm:$0xff]
    %v131 = vld [vmem:[%s1 + $0x350] sm:$0xff]
    %v132 = vld [vmem:[%s1 + $0x358] sm:$0xff]
    %v133 = vld [vmem:[%s1 + $0x360] sm:$0xff]
    %v134 = vld [vmem:[%s1 + $0x368] sm:$0xff]
    %v135 = vld [vmem:[%s1 + $0x370] sm:$0xff]
    %v136 = vld [vmem:[%s1 + $0x378] sm:$0xff]
    %v137 = vld [vmem:[%s1 + $0x380] sm:$0xff]
    %v138 = vld [vmem:[%s1 + $0x388] sm:$0xff]
    %v139 = vld [vmem:[%s1 + $0x390] sm:$0xff]
    %v140 = vld [vmem:[%s1 + $0x398] sm:$0xff]
    %v141 = vld [vmem:[%s1 + $0x3a0] sm:$0xff]
    %v142 = vld [vmem:[%s1 + $0x3a8] sm:$0xff]
    %v143 = vld [vmem:[%s1 + $0x3b0] sm:$0xff]
    %v144 = vld [vmem:[%s1 + $0x3b8] sm:$0xff]
    %v145 = vld [vmem:[%s1 + $0x3c0] sm:$0xff]
    %v146 = vld [vmem:[%s1 + $0x3c8] sm:$0xff]
    %v147 = vld [vmem:[%s1 + $0x3d0] sm:$0xff]
    %v148 = vld [vmem:[%s1 + $0x3d8] sm:$0xff]
    %v149 = vld [vmem:[%s1 + $0x3e0] sm:$0xff]
    %v150 = vld [vmem:[%s1 + $0x3e8] sm:$0xff]
    %v151 = vld [vmem:[%s1 + $0x3f0] sm:$0xff]
    %v152 = vld [vmem:[%s1 + $0x3f8] sm:$0xff]
    %v153 = vld [vmem:[%s1 + $0x400] sm:$0xff]
    %v154 = vld [vmem:[%s1 + $0x408] sm:$0xff]
    %v155 = vld [vmem:[%s1 + $0x410] sm:$0xff]
    %v156 = vld [vmem:[%s1 + $0x418] sm:$0xff]
    %v157 = vld [vmem:[%s1 + $0x420] sm:$0xff]
    %v158 = vld [vmem:[%s1 + $0x428] sm:$0xff]
    %v159 = vld [vmem:[%s1 + $0x430] sm:$0xff]
    %v160 = vld [vmem:[%s1 + $0x438] sm:$0xff]
    %v161 = vld [vmem:[%s1 + $0x440] sm:$0xff]
    %v162 = vld [vmem:[%s1 + $0x448] sm:$0xff]
    %v163 = vld [vmem:[%s1 + $0x450] sm:$0xff]
    %v164 = vld [vmem:[%s1 + $0x458] sm:$0xff]
    %v165 = vld [vmem:[%s1 + $0x460] sm:$0xff]
    %v166 = vld [vmem:[%s1 + $0x468] sm:$0xff]
    %v167 = vld [vmem:[%s1 + $0x470] sm:$0xff]
    %v168 = vld [vmem:[%s1 + $0x478] sm:$0xff]
    %v169 = vld [vmem:[%s1 + $0x480] sm:$0xff]
    %v170 = vld [vmem:[%s1 + $0x488] sm:$0xff]
    %v171 = vld [vmem:[%s1 + $0x490] sm:$0xff]
    %v172 = vld [vmem:[%s1 + $0x498] sm:$0xff]
    %v173 = vld [vmem:[%s1 + $0x4a0] sm:$0xff]
    %v174 = vld [vmem:[%s1 + $0x4a8] sm:$0xff]
    %v175 = vld [vmem:[%s1 + $0x4b0] sm:$0xff]
    %v176 = vld [vmem:[%s1 + $0x4b8] sm:$0xff]
    %v177 = vld [vmem:[%s1 + $0x4c0] sm:$0xff]
    %v178 = vld [vmem:[%s1 + $0x4c8] sm:$0xff]
    %v179 = vld [vmem:[%s1 + $0x4d0] sm:$0xff]
    %v180 = vld [vmem:[%s1 + $0x4d8] sm:$0xff]
    %v181 = vld [vmem:[%s1 + $0x4e0] sm:$0xff]
    %v182 = vld [vmem:[%s1 + $0x4e8] sm:$0xff]
    %v183 = vld [vmem:[%s1 + $0x4f0] sm:$0xff]
    %v184 = vld [vmem:[%s1 + $0x4f8] sm:$0xff]
    %v185 = vld [vmem:[%s1 + $0x500] sm:$0xff]
    %v186 = vld [vmem:[%s1 + $0x508] sm:$0xff]
    %v187 = vld [vmem:[%s1 + $0x510] sm:$0xff]
    %v188 = vld [vmem:[%s1 + $0x518] sm:$0xff]
    %v189 = vld [vmem:[%s1 + $0x520] sm:$0xff]
    %v190 = vld [vmem:[%s1 + $0x528] sm:$0xff]
    %v191 = vld [vmem:[%s1 + $0x530] sm:$0xff]
    %v192 = vld [vmem:[%s1 + $0x538] sm:$0xff]
    %v193 = vld [vmem:[%s1 + $0x540] sm:$0xff]
    %v194 = vld [vmem:[%s1 + $0x548] sm:$0xff]
    %v195 = vld [vmem:[%s1 + $0x550] sm:$0xff]
    %v196 = vld [vmem:[%s1 + $0x558] sm:$0xff]
    %v197 = vld [vmem:[%s1 + $0x560] sm:$0xff]
    %v198 = vld [vmem:[%s1 + $0x568] sm:$0xff]
    %v199 = vld [vmem:[%s1 + $0x570] sm:$0xff]
    %v200 = vld [vmem:[%s1 + $0x578] sm:$0xff]
    %v201 = vld [vmem:[%s1 + $0x580] sm:$0xff]
    %v202 = vld [vmem:[%s1 + $0x588] sm:$0xff]
    %v203 = vld [vmem:[%s1 + $0x590] sm:$0xff]
    %v204 = vld [vmem:[%s1 + $0x598] sm:$0xff]
    %v205 = vld [vmem:[%s1 + $0x5a0] sm:$0xff]
    %v206 = vld [vmem:[%s1 + $0x5a8] sm:$0xff]
    %v207 = vld [vmem:[%s1 + $0x5b0] sm:$0xff]
    %v208 = vld [vmem:[%s1 + $0x5b8] sm:$0xff]
    %v209 = vld [vmem:[%s1 + $0x5c0] sm:$0xff]
    %v210 = vld [vmem:[%s1 + $0x5c8] sm:$0xff]
    %v211 = vld [vmem:[%s1 + $0x5d0] sm:$0xff]
    %v212 = vld [vmem:[%s1 + $0x5d8] sm:$0xff]
    %v213 = vld [vmem:[%s1 + $0x5e0] sm:$0xff]
    %v214 = vld [vmem:[%s1 + $0x5e8] sm:$0xff]
    %v215 = vld [vmem:[%s1 + $0x5f0] sm:$0xff]
    %v216 = vld [vmem:[%s1 + $0x5f8] sm:$0xff]
    %v217 = vld [vmem:[%s1 + $0x600] sm:$0xff]
    %v218 = vld [vmem:[%s1 + $0x608] sm:$0xff]
    %v219 = vld [vmem:[%s1 + $0x610] sm:$0xff]
    %v220 = vld [vmem:[%s1 + $0x618] sm:$0xff]
    %v221 = vld [vmem:[%s1 + $0x620] sm:$0xff]
    %v222 = vld [vmem:[%s1 + $0x628] sm:$0xff]
    %v223 = vld [vmem:[%s1 + $0x630] sm:$0xff]
    %v224 = vld [vmem:[%s1 + $0x638] sm:$0xff]
    %v225 = vld [vmem:[%s1 + $0x640] sm:$0xff]
    %v226 = vld [vmem:[%s1 + $0x648] sm:$0xff]
    %v227 = vld [vmem:[%s1 + $0x650] sm:$0xff]
    %v228 = vld [vmem:[%s1 + $0x658] sm:$0xff]
    %v229 = vld [vmem:[%s1 + $0x660] sm:$0xff]
    %v230 = vld [vmem:[%s1 + $0x668] sm:$0xff]
    %v231 = vld [vmem:[%s1 + $0x670] sm:$0xff]
    %v232 = vld [vmem:[%s1 + $0x678] sm:$0xff]
    %v233 = vld [vmem:[%s1 + $0x680] sm:$0xff]
    %v234 = vld [vmem:[%s1 + $0x688] sm:$0xff]
    %v235 = vld [vmem:[%s1 + $0x690] sm:$0xff]
    %v236 = vld [vmem:[%s1 + $0x698] sm:$0xff]
    %v237 = vld [vmem:[%s1 + $0x6a0] sm:$0xff]
    %v238 = vld [vmem:[%s1 + $0x6a8] sm:$0xff]
    %v239 = vld [vmem:[%s1 + $0x6b0] sm:$0xff]
    %v240 = vld [vmem:[%s1 + $0x6b8] sm:$0xff]
    %v241 = vld [vmem:[%s1 + $0x6c0] sm:$0xff]
    %v242 = vld [vmem:[%s1 + $0x6c8] sm:$0xff]
    %v243 = vld [vmem:[%s1 + $0x6d0] sm:$0xff]
    %v244 = vld [vmem:[%s1 + $0x6d8] sm:$0xff]
    %v245 = vld [vmem:[%s1 + $0x6e0] sm:$0xff]
    %v246 = vld [vmem:[%s1 + $0x6e8] sm:$0xff]
    %v247 = vld [vmem:[%s1 + $0x6f0] sm:$0xff]
    %v248 = vld [vmem:[%s1 + $0x6f8] sm:$0xff]
    %v249 = vld [vmem:[%s1 + $0x700] sm:$0xff]
    %v250 = vld [vmem:[%s1 + $0x708] sm:$0xff]
    %v251 = vld [vmem:[%s1 + $0x710] sm:$0xff]
    %v252 = vld [vmem:[%s1 + $0x718] sm:$0xff]
    %v253 = vld [vmem:[%s1 + $0x720] sm:$0xff]
    %v254 = vld [vmem:[%s1 + $0x728] sm:$0xff]
    %v255 = vld [vmem:[%s1 + $0x730] sm:$0xff]
    %v256 = vld [vmem:[%s1 + $0x738] sm:$0xff]
    %v257 = vld [vmem:[%s1 + $0x740] sm:$0xff]
    %v258 = vld [vmem:[%s1 + $0x748] sm:$0xff]
    %v259 = vld [vmem:[%s1 + $0x750] sm:$0xff]
    %v260 = vld [vmem:[%s1 + $0x758] sm:$0xff]
    %v261 = vld [vmem:[%s1 + $0x760] sm:$0xff]
    %v262 = vld [vmem:[%s1 + $0x768] sm:$0xff]
    %v263 = vld [vmem:[%s1 + $0x770] sm:$0xff]
    %v264 = vld [vmem:[%s1 + $0x778] sm:$0xff]
    %v265 = vld [vmem:[%s1 + $0x780] sm:$0xff]
    %v266 = vld [vmem:[%s1 + $0x788] sm:$0xff]
    %v267 = vld [vmem:[%s1 + $0x790] sm:$0xff]
    %v268 = vld [vmem:[%s1 + $0x798] sm:$0xff]
    %v269 = vld [vmem:[%s1 + $0x7a0] sm:$0xff]
    %v270 = vld [vmem:[%s1 + $0x7a8] sm:$0xff]
    %v271 = vld [vmem:[%s1 + $0x7b0] sm:$0xff]
    %v272 = vld [vmem:[%s1 + $0x7b8] sm:$0xff]
    %v273 = vld [vmem:[%s1 + $0x7c0] sm:$0xff]
    %v274 = vld [vmem:[%s1 + $0x7c8] sm:$0xff]
    %v275 = vld [vmem:[%s1 + $0x7d0] sm:$0xff]
    %v276 = vld [vmem:[%s1 + $0x7d8] sm:$0xff]
    %v277 = vld [vmem:[%s1 + $0x7e0] sm:$0xff]
    %v278 = vld [vmem:[%s1 + $0x7e8] sm:$0xff]
    %v279 = vld [vmem:[%s1 + $0x7f0] sm:$0xff]
    %v280 = vld [vmem:[%s1 + $0x7f8] sm:$0xff]
    %v281 = vld [vmem:[%s2] sm:$0xf]
    %v283 = vlaneseq
    %v284 = vshrl.u32 %v283, 7
    %v285 = vsub.s32 0, %v284
    %v286 = vrot.slane %v281, %v285
    %v287 = vlaneseq
    %v288 = vshrl.u32 %v287, 7
    %v289 = vsub.s32 1, %v288
    %v290 = vrot.slane %v281, %v289
    %v291 = vlaneseq
    %v292 = vshrl.u32 %v291, 7
    %v293 = vsub.s32 2, %v292
    %v294 = vrot.slane %v281, %v293
    %v295 = vlaneseq
    %v296 = vshrl.u32 %v295, 7
    %v297 = vsub.s32 3, %v296
    %v298 = vrot.slane %v281, %v297
    %303 = vmatprep.subr.mxu0 %v26
    %304 = vmatpush1.msra.mxu0 %v25
    %305 = vmatprep.subr.mxu0 %v30
    %306 = vmatpush1.msra.mxu0 %v29
    %307 = vmatprep.subr.mxu0 %v34
    %308 = vmatpush1.msra.mxu0 %v33
    %309 = vmatprep.subr.mxu0 %v38
    %310 = vmatpush1.msra.mxu0 %v37
    %311 = vmatprep.subr.mxu0 %v42
    %312 = vmatpush1.msra.mxu0 %v41
    %313 = vmatprep.subr.mxu0 %v46
    %314 = vmatpush1.msra.mxu0 %v45
    %315 = vmatprep.subr.mxu0 %v50
    %316 = vmatpush1.msra.mxu0 %v49
    %317 = vmatprep.subr.mxu0 %v54
    %318 = vmatpush1.msra.mxu0 %v53
    %319 = vmatprep.subr.mxu0 %v58
    %320 = vmatpush1.msra.mxu0 %v57
    %321 = vmatprep.subr.mxu0 %v62
    %322 = vmatpush1.msra.mxu0 %v61
    %323 = vmatprep.subr.mxu0 %v66
    %324 = vmatpush1.msra.mxu0 %v65
    %325 = vmatprep.subr.mxu0 %v70
    %326 = vmatpush1.msra.mxu0 %v69
    %327 = vmatprep.subr.mxu0 %v74
    %328 = vmatpush1.msra.mxu0 %v73
    %329 = vmatprep.subr.mxu0 %v78
    %330 = vmatpush1.msra.mxu0 %v77
    %331 = vmatprep.subr.mxu0 %v82
    %332 = vmatpush1.msra.mxu0 %v81
    %333 = vmatprep.subr.mxu0 %v86
    %334 = vmatpush1.msra.mxu0 %v85
    %335 = vmatprep.subr.mxu0 %v90
    %336 = vmatpush1.msra.mxu0 %v89
    %337 = vmatprep.subr.mxu0 %v94
    %338 = vmatpush1.msra.mxu0 %v93
    %339 = vmatprep.subr.mxu0 %v98
    %340 = vmatpush1.msra.mxu0 %v97
    %341 = vmatprep.subr.mxu0 %v102
    %342 = vmatpush1.msra.mxu0 %v101
    %343 = vmatprep.subr.mxu0 %v106
    %344 = vmatpush1.msra.mxu0 %v105
    %345 = vmatprep.subr.mxu0 %v110
    %346 = vmatpush1.msra.mxu0 %v109
    %347 = vmatprep.subr.mxu0 %v114
    %348 = vmatpush1.msra.mxu0 %v113
    %349 = vmatprep.subr.mxu0 %v118
    %350 = vmatpush1.msra.mxu0 %v117
    %351 = vmatprep.subr.mxu0 %v122
    %352 = vmatpush1.msra.mxu0 %v121
    %353 = vmatprep.subr.mxu0 %v126
    %354 = vmatpush1.msra.mxu0 %v125
    %355 = vmatprep.subr.mxu0 %v130
    %356 = vmatpush1.msra.mxu0 %v129
    %357 = vmatprep.subr.mxu0 %v134
    %358 = vmatpush1.msra.mxu0 %v133
    %359 = vmatprep.subr.mxu0 %v138
    %360 = vmatpush1.msra.mxu0 %v137
    %361 = vmatprep.subr.mxu0 %v142
    %362 = vmatpush1.msra.mxu0 %v141
    %363 = vmatprep.subr.mxu0 %v146
    %364 = vmatpush1.msra.mxu0 %v145
    %365 = vmatprep.subr.mxu0 %v150
    %366 = vmatpush1.msra.mxu0 %v149
    %367 = vmatprep.mubr.f32.mxu0 %v22
    %368 = vmatmul.mubr.f32.gmra.mrb[0].mxu0 %v21
    %v369 = vpop.f32.mrb[0].mxu0
    %v370 = vadd.f32 %v286, %v369
    %v371 = vpop.f32.mrb[0].mxu0
    %v372 = vadd.f32 %v290, %v371
    %373 = vdwg.mxu0
    %374 = vmatprep.subr.mxu0 %v154
    %375 = vmatpush1.msra.mxu0 %v153
    %376 = vmatprep.subr.mxu0 %v158
    %377 = vmatpush1.msra.mxu0 %v157
    %378 = vmatprep.subr.mxu0 %v162
    %379 = vmatpush1.msra.mxu0 %v161
    %380 = vmatprep.subr.mxu0 %v166
    %381 = vmatpush1.msra.mxu0 %v165
    %382 = vmatprep.subr.mxu0 %v170
    %383 = vmatpush1.msra.mxu0 %v169
    %384 = vmatprep.subr.mxu0 %v174
    %385 = vmatpush1.msra.mxu0 %v173
    %386 = vmatprep.subr.mxu0 %v178
    %387 = vmatpush1.msra.mxu0 %v177
    %388 = vmatprep.subr.mxu0 %v182
    %389 = vmatpush1.msra.mxu0 %v181
    %390 = vmatprep.subr.mxu0 %v186
    %391 = vmatpush1.msra.mxu0 %v185
    %392 = vmatprep.subr.mxu0 %v190
    %393 = vmatpush1.msra.mxu0 %v189
    %394 = vmatprep.subr.mxu0 %v194
    %395 = vmatpush1.msra.mxu0 %v193
    %396 = vmatprep.subr.mxu0 %v198
    %397 = vmatpush1.msra.mxu0 %v197
    %398 = vmatprep.subr.mxu0 %v202
    %399 = vmatpush1.msra.mxu0 %v201
    %400 = vmatprep.subr.mxu0 %v206
    %401 = vmatpush1.msra.mxu0 %v205
    %402 = vmatprep.subr.mxu0 %v210
    %403 = vmatpush1.msra.mxu0 %v209
    %404 = vmatprep.subr.mxu0 %v214
    %405 = vmatpush1.msra.mxu0 %v213
    %406 = vmatprep.subr.mxu0 %v218
    %407 = vmatpush1.msra.mxu0 %v217
    %408 = vmatprep.subr.mxu0 %v222
    %409 = vmatpush1.msra.mxu0 %v221
    %410 = vmatprep.subr.mxu0 %v226
    %411 = vmatpush1.msra.mxu0 %v225
    %412 = vmatprep.subr.mxu0 %v230
    %413 = vmatpush1.msra.mxu0 %v229
    %414 = vmatprep.subr.mxu0 %v234
    %415 = vmatpush1.msra.mxu0 %v233
    %416 = vmatprep.subr.mxu0 %v238
    %417 = vmatpush1.msra.mxu0 %v237
    %418 = vmatprep.subr.mxu0 %v242
    %419 = vmatpush1.msra.mxu0 %v241
    %420 = vmatprep.subr.mxu0 %v246
    %421 = vmatpush1.msra.mxu0 %v245
    %422 = vmatprep.subr.mxu0 %v250
    %423 = vmatpush1.msra.mxu0 %v249
    %424 = vmatprep.subr.mxu0 %v254
    %425 = vmatpush1.msra.mxu0 %v253
    %426 = vmatprep.subr.mxu0 %v258
    %427 = vmatpush1.msra.mxu0 %v257
    %428 = vmatprep.subr.mxu0 %v262
    %429 = vmatpush1.msra.mxu0 %v261
    %430 = vmatprep.subr.mxu0 %v266
    %431 = vmatpush1.msra.mxu0 %v265
    %432 = vmatprep.subr.mxu0 %v270
    %433 = vmatpush1.msra.mxu0 %v269
    %434 = vmatprep.subr.mxu0 %v274
    %435 = vmatpush1.msra.mxu0 %v273
    %436 = vmatprep.subr.mxu0 %v278
    %437 = vmatpush1.msra.mxu0 %v277
    %438 = vmatprep.mubr.f32.mxu0 %v24
    %439 = vmatmul.mubr.f32.gmra.mrb[0].mxu0 %v23
    %v440 = vpop.f32.mrb[0].mxu0
    %v441 = vadd.f32 %v370, %v440
    %v442 = vpop.f32.mrb[0].mxu0
    %v443 = vadd.f32 %v372, %v442
    %444 = vdwg.mxu0
    %445 = vmatprep.subr.mxu0 %v28
    %446 = vmatpush1.msra.mxu0 %v27
    %447 = vmatprep.subr.mxu0 %v32
    %448 = vmatpush1.msra.mxu0 %v31
    %449 = vmatprep.subr.mxu0 %v36
    %450 = vmatpush1.msra.mxu0 %v35
    %451 = vmatprep.subr.mxu0 %v40
    %452 = vmatpush1.msra.mxu0 %v39
    %453 = vmatprep.subr.mxu0 %v44
    %454 = vmatpush1.msra.mxu0 %v43
    %455 = vmatprep.subr.mxu0 %v48
    %456 = vmatpush1.msra.mxu0 %v47
    %457 = vmatprep.subr.mxu0 %v52
    %458 = vmatpush1.msra.mxu0 %v51
    %459 = vmatprep.subr.mxu0 %v56
    %460 = vmatpush1.msra.mxu0 %v55
    %461 = vmatprep.subr.mxu0 %v60
    %462 = vmatpush1.msra.mxu0 %v59
    %463 = vmatprep.subr.mxu0 %v64
    %464 = vmatpush1.msra.mxu0 %v63
    %465 = vmatprep.subr.mxu0 %v68
    %466 = vmatpush1.msra.mxu0 %v67
    %467 = vmatprep.subr.mxu0 %v72
    %468 = vmatpush1.msra.mxu0 %v71
    %469 = vmatprep.subr.mxu0 %v76
    %470 = vmatpush1.msra.mxu0 %v75
    %471 = vmatprep.subr.mxu0 %v80
    %472 = vmatpush1.msra.mxu0 %v79
    %473 = vmatprep.subr.mxu0 %v84
    %474 = vmatpush1.msra.mxu0 %v83
    %475 = vmatprep.subr.mxu0 %v88
    %476 = vmatpush1.msra.mxu0 %v87
    %477 = vmatprep.subr.mxu0 %v92
    %478 = vmatpush1.msra.mxu0 %v91
    %479 = vmatprep.subr.mxu0 %v96
    %480 = vmatpush1.msra.mxu0 %v95
    %481 = vmatprep.subr.mxu0 %v100
    %482 = vmatpush1.msra.mxu0 %v99
    %483 = vmatprep.subr.mxu0 %v104
    %484 = vmatpush1.msra.mxu0 %v103
    %485 = vmatprep.subr.mxu0 %v108
    %486 = vmatpush1.msra.mxu0 %v107
    %487 = vmatprep.subr.mxu0 %v112
    %488 = vmatpush1.msra.mxu0 %v111
    %489 = vmatprep.subr.mxu0 %v116
    %490 = vmatpush1.msra.mxu0 %v115
    %491 = vmatprep.subr.mxu0 %v120
    %492 = vmatpush1.msra.mxu0 %v119
    %493 = vmatprep.subr.mxu0 %v124
    %494 = vmatpush1.msra.mxu0 %v123
    %495 = vmatprep.subr.mxu0 %v128
    %496 = vmatpush1.msra.mxu0 %v127
    %497 = vmatprep.subr.mxu0 %v132
    %498 = vmatpush1.msra.mxu0 %v131
    %499 = vmatprep.subr.mxu0 %v136
    %500 = vmatpush1.msra.mxu0 %v135
    %501 = vmatprep.subr.mxu0 %v140
    %502 = vmatpush1.msra.mxu0 %v139
    %503 = vmatprep.subr.mxu0 %v144
    %504 = vmatpush1.msra.mxu0 %v143
    %505 = vmatprep.subr.mxu0 %v148
    %506 = vmatpush1.msra.mxu0 %v147
    %507 = vmatprep.subr.mxu0 %v152
    %508 = vmatpush1.msra.mxu0 %v151
    %509 = vmatprep.mubr.f32.mxu0 %v22
    %510 = vmatmul.mubr.f32.gmra.mrb[0].mxu0 %v21
    %v511 = vpop.f32.mrb[0].mxu0
    %v512 = vadd.f32 %v294, %v511
    %v513 = vpop.f32.mrb[0].mxu0
    %v514 = vadd.f32 %v298, %v513
    %515 = vdwg.mxu0
    %516 = vmatprep.subr.mxu0 %v156
    %517 = vmatpush1.msra.mxu0 %v155
    %518 = vmatprep.subr.mxu0 %v160
    %519 = vmatpush1.msra.mxu0 %v159
    %520 = vmatprep.subr.mxu0 %v164
    %521 = vmatpush1.msra.mxu0 %v163
    %522 = vmatprep.subr.mxu0 %v168
    %523 = vmatpush1.msra.mxu0 %v167
    %524 = vmatprep.subr.mxu0 %v172
    %525 = vmatpush1.msra.mxu0 %v171
    %526 = vmatprep.subr.mxu0 %v176
    %527 = vmatpush1.msra.mxu0 %v175
    %528 = vmatprep.subr.mxu0 %v180
    %529 = vmatpush1.msra.mxu0 %v179
    %530 = vmatprep.subr.mxu0 %v184
    %531 = vmatpush1.msra.mxu0 %v183
    %532 = vmatprep.subr.mxu0 %v188
    %533 = vmatpush1.msra.mxu0 %v187
    %534 = vmatprep.subr.mxu0 %v192
    %535 = vmatpush1.msra.mxu0 %v191
    %536 = vmatprep.subr.mxu0 %v196
    %537 = vmatpush1.msra.mxu0 %v195
    %538 = vmatprep.subr.mxu0 %v200
    %539 = vmatpush1.msra.mxu0 %v199
    %540 = vmatprep.subr.mxu0 %v204
    %541 = vmatpush1.msra.mxu0 %v203
    %542 = vmatprep.subr.mxu0 %v208
    %543 = vmatpush1.msra.mxu0 %v207
    %544 = vmatprep.subr.mxu0 %v212
    %545 = vmatpush1.msra.mxu0 %v211
    %546 = vmatprep.subr.mxu0 %v216
    %547 = vmatpush1.msra.mxu0 %v215
    %548 = vmatprep.subr.mxu0 %v220
    %549 = vmatpush1.msra.mxu0 %v219
    %550 = vmatprep.subr.mxu0 %v224
    %551 = vmatpush1.msra.mxu0 %v223
    %552 = vmatprep.subr.mxu0 %v228
    %553 = vmatpush1.msra.mxu0 %v227
    %554 = vmatprep.subr.mxu0 %v232
    %555 = vmatpush1.msra.mxu0 %v231
    %556 = vmatprep.subr.mxu0 %v236
    %557 = vmatpush1.msra.mxu0 %v235
    %558 = vmatprep.subr.mxu0 %v240
    %559 = vmatpush1.msra.mxu0 %v239
    %560 = vmatprep.subr.mxu0 %v244
    %561 = vmatpush1.msra.mxu0 %v243
    %562 = vmatprep.subr.mxu0 %v248
    %563 = vmatpush1.msra.mxu0 %v247
    %564 = vmatprep.subr.mxu0 %v252
    %565 = vmatpush1.msra.mxu0 %v251
    %566 = vmatprep.subr.mxu0 %v256
    %567 = vmatpush1.msra.mxu0 %v255
    %568 = vmatprep.subr.mxu0 %v260
    %569 = vmatpush1.msra.mxu0 %v259
    %570 = vmatprep.subr.mxu0 %v264
    %571 = vmatpush1.msra.mxu0 %v263
    %572 = vmatprep.subr.mxu0 %v268
    %573 = vmatpush1.msra.mxu0 %v267
    %574 = vmatprep.subr.mxu0 %v272
    %575 = vmatpush1.msra.mxu0 %v271
    %576 = vmatprep.subr.mxu0 %v276
    %577 = vmatpush1.msra.mxu0 %v275
    %578 = vmatprep.subr.mxu0 %v280
    %579 = vmatpush1.msra.mxu0 %v279
    %580 = vmatprep.mubr.f32.mxu0 %v24
    %581 = vmatmul.mubr.f32.gmra.mrb[0].mxu0 %v23
    %v582 = vpop.f32.mrb[0].mxu0
    %v583 = vadd.f32 %v512, %v582
    %v584 = vpop.f32.mrb[0].mxu0
    %v585 = vadd.f32 %v514, %v584
    %586 = vdwg.mxu0
    %v587 = vmax.f32 %v441, 0.0
    %v588 = vmax.f32 %v443, 0.0
    %v589 = vmax.f32 %v583, 0.0
    %v590 = vmax.f32 %v585, 0.0
    %v591 = vld [vmem:[%s3] sm:$0xff]
    %v592 = vld [vmem:[%s3 + $0x8] sm:$0xff]
    %v593 = vld [vmem:[%s3 + $0x10] sm:$0xff]
    %v594 = vld [vmem:[%s3 + $0x18] sm:$0xff]
    %v595 = vld [vmem:[%s3 + $0x20] sm:$0xff]
    %v596 = vld [vmem:[%s3 + $0x28] sm:$0xff]
    %v597 = vld [vmem:[%s3 + $0x30] sm:$0xff]
    %v598 = vld [vmem:[%s3 + $0x38] sm:$0xff]
    %v599 = vld [vmem:[%s3 + $0x40] sm:$0xff]
    %v600 = vld [vmem:[%s3 + $0x48] sm:$0xff]
    %v601 = vld [vmem:[%s3 + $0x50] sm:$0xff]
    %v602 = vld [vmem:[%s3 + $0x58] sm:$0xff]
    %v603 = vld [vmem:[%s3 + $0x60] sm:$0xff]
    %v604 = vld [vmem:[%s3 + $0x68] sm:$0xff]
    %v605 = vld [vmem:[%s3 + $0x70] sm:$0xff]
    %v606 = vld [vmem:[%s3 + $0x78] sm:$0xff]
    %v607 = vld [vmem:[%s3 + $0x80] sm:$0xff]
    %v608 = vld [vmem:[%s3 + $0x88] sm:$0xff]
    %v609 = vld [vmem:[%s3 + $0x90] sm:$0xff]
    %v610 = vld [vmem:[%s3 + $0x98] sm:$0xff]
    %v611 = vld [vmem:[%s3 + $0xa0] sm:$0xff]
    %v612 = vld [vmem:[%s3 + $0xa8] sm:$0xff]
    %v613 = vld [vmem:[%s3 + $0xb0] sm:$0xff]
    %v614 = vld [vmem:[%s3 + $0xb8] sm:$0xff]
    %v615 = vld [vmem:[%s3 + $0xc0] sm:$0xff]
    %v616 = vld [vmem:[%s3 + $0xc8] sm:$0xff]
    %v617 = vld [vmem:[%s3 + $0xd0] sm:$0xff]
    %v618 = vld [vmem:[%s3 + $0xd8] sm:$0xff]
    %v619 = vld [vmem:[%s3 + $0xe0] sm:$0xff]
    %v620 = vld [vmem:[%s3 + $0xe8] sm:$0xff]
    %v621 = vld [vmem:[%s3 + $0xf0] sm:$0xff]
    %v622 = vld [vmem:[%s3 + $0xf8] sm:$0xff]
    %v623 = vld [vmem:[%s3 + $0x100] sm:$0xff]
    %v624 = vld [vmem:[%s3 + $0x108] sm:$0xff]
    %v625 = vld [vmem:[%s3 + $0x110] sm:$0xff]
    %v626 = vld [vmem:[%s3 + $0x118] sm:$0xff]
    %v627 = vld [vmem:[%s3 + $0x120] sm:$0xff]
    %v628 = vld [vmem:[%s3 + $0x128] sm:$0xff]
    %v629 = vld [vmem:[%s3 + $0x130] sm:$0xff]
    %v630 = vld [vmem:[%s3 + $0x138] sm:$0xff]
    %v631 = vld [vmem:[%s3 + $0x140] sm:$0xff]
    %v632 = vld [vmem:[%s3 + $0x148] sm:$0xff]
    %v633 = vld [vmem:[%s3 + $0x150] sm:$0xff]
    %v634 = vld [vmem:[%s3 + $0x158] sm:$0xff]
    %v635 = vld [vmem:[%s3 + $0x160] sm:$0xff]
    %v636 = vld [vmem:[%s3 + $0x168] sm:$0xff]
    %v637 = vld [vmem:[%s3 + $0x170] sm:$0xff]
    %v638 = vld [vmem:[%s3 + $0x178] sm:$0xff]
    %v639 = vld [vmem:[%s3 + $0x180] sm:$0xff]
    %v640 = vld [vmem:[%s3 + $0x188] sm:$0xff]
    %v641 = vld [vmem:[%s3 + $0x190] sm:$0xff]
    %v642 = vld [vmem:[%s3 + $0x198] sm:$0xff]
    %v643 = vld [vmem:[%s3 + $0x1a0] sm:$0xff]
    %v644 = vld [vmem:[%s3 + $0x1a8] sm:$0xff]
    %v645 = vld [vmem:[%s3 + $0x1b0] sm:$0xff]
    %v646 = vld [vmem:[%s3 + $0x1b8] sm:$0xff]
    %v647 = vld [vmem:[%s3 + $0x1c0] sm:$0xff]
    %v648 = vld [vmem:[%s3 + $0x1c8] sm:$0xff]
    %v649 = vld [vmem:[%s3 + $0x1d0] sm:$0xff]
    %v650 = vld [vmem:[%s3 + $0x1d8] sm:$0xff]
    %v651 = vld [vmem:[%s3 + $0x1e0] sm:$0xff]
    %v652 = vld [vmem:[%s3 + $0x1e8] sm:$0xff]
    %v653 = vld [vmem:[%s3 + $0x1f0] sm:$0xff]
    %v654 = vld [vmem:[%s3 + $0x1f8] sm:$0xff]
    %v655 = vld [vmem:[%s4] sm:$0x1]
    %v657 = vlaneseq
    %v658 = vshrl.u32 %v657, 7
    %v659 = vsub.s32 0, %v658
    %v660 = vrot.slane %v655, %v659
    %662 = vmatprep.subr.mxu0 0.0
    %663 = vmatpush1.msra.mxu0 %v591
    %664 = vmatprep.subr.mxu0 0.0
    %665 = vmatpush1.msra.mxu0 %v592
    %666 = vmatprep.subr.mxu0 0.0
    %667 = vmatpush1.msra.mxu0 %v593
    %668 = vmatprep.subr.mxu0 0.0
    %669 = vmatpush1.msra.mxu0 %v594
    %670 = vmatprep.subr.mxu0 0.0
    %671 = vmatpush1.msra.mxu0 %v595
    %672 = vmatprep.subr.mxu0 0.0
    %673 = vmatpush1.msra.mxu0 %v596
    %674 = vmatprep.subr.mxu0 0.0
    %675 = vmatpush1.msra.mxu0 %v597
    %676 = vmatprep.subr.mxu0 0.0
    %677 = vmatpush1.msra.mxu0 %v598
    %678 = vmatprep.subr.mxu0 0.0
    %679 = vmatpush1.msra.mxu0 %v599
    %680 = vmatprep.subr.mxu0 0.0
    %681 = vmatpush1.msra.mxu0 %v600
    %682 = vmatprep.subr.mxu0 0.0
    %683 = vmatpush1.msra.mxu0 %v601
    %684 = vmatprep.subr.mxu0 0.0
    %685 = vmatpush1.msra.mxu0 %v602
    %686 = vmatprep.subr.mxu0 0.0
    %687 = vmatpush1.msra.mxu0 %v603
    %688 = vmatprep.subr.mxu0 0.0
    %689 = vmatpush1.msra.mxu0 %v604
    %690 = vmatprep.subr.mxu0 0.0
    %691 = vmatpush1.msra.mxu0 %v605
    %692 = vmatprep.subr.mxu0 0.0
    %693 = vmatpush1.msra.mxu0 %v606
    %694 = vmatprep.subr.mxu0 0.0
    %695 = vmatpush1.msra.mxu0 %v607
    %696 = vmatprep.subr.mxu0 0.0
    %697 = vmatpush1.msra.mxu0 %v608
    %698 = vmatprep.subr.mxu0 0.0
    %699 = vmatpush1.msra.mxu0 %v609
    %700 = vmatprep.subr.mxu0 0.0
    %701 = vmatpush1.msra.mxu0 %v610
    %702 = vmatprep.subr.mxu0 0.0
    %703 = vmatpush1.msra.mxu0 %v611
    %704 = vmatprep.subr.mxu0 0.0
    %705 = vmatpush1.msra.mxu0 %v612
    %706 = vmatprep.subr.mxu0 0.0
    %707 = vmatpush1.msra.mxu0 %v613
    %708 = vmatprep.subr.mxu0 0.0
    %709 = vmatpush1.msra.mxu0 %v614
    %710 = vmatprep.subr.mxu0 0.0
    %711 = vmatpush1.msra.mxu0 %v615
    %712 = vmatprep.subr.mxu0 0.0
    %713 = vmatpush1.msra.mxu0 %v616
    %714 = vmatprep.subr.mxu0 0.0
    %715 = vmatpush1.msra.mxu0 %v617
    %716 = vmatprep.subr.mxu0 0.0
    %717 = vmatpush1.msra.mxu0 %v618
    %718 = vmatprep.subr.mxu0 0.0
    %719 = vmatpush1.msra.mxu0 %v619
    %720 = vmatprep.subr.mxu0 0.0
    %721 = vmatpush1.msra.mxu0 %v620
    %722 = vmatprep.subr.mxu0 0.0
    %723 = vmatpush1.msra.mxu0 %v621
    %724 = vmatprep.subr.mxu0 0.0
    %725 = vmatpush1.msra.mxu0 %v622
    %726 = vmatprep.mubr.f32.mxu0 %v588
    %727 = vmatmul.mubr.f32.gmra.mrb[0].mxu0 %v587
    %v728 = vpop.f32.mrb[0].mxu0
    %v729 = vadd.f32 %v660, %v728
    %v730 = vpop.f32.mrb[0].mxu0
    %731 = vdwg.mxu0
    %732 = vmatprep.subr.mxu0 0.0
    %733 = vmatpush1.msra.mxu0 %v623
    %734 = vmatprep.subr.mxu0 0.0
    %735 = vmatpush1.msra.mxu0 %v624
    %736 = vmatprep.subr.mxu0 0.0
    %737 = vmatpush1.msra.mxu0 %v625
    %738 = vmatprep.subr.mxu0 0.0
    %739 = vmatpush1.msra.mxu0 %v626
    %740 = vmatprep.subr.mxu0 0.0
    %741 = vmatpush1.msra.mxu0 %v627
    %742 = vmatprep.subr.mxu0 0.0
    %743 = vmatpush1.msra.mxu0 %v628
    %744 = vmatprep.subr.mxu0 0.0
    %745 = vmatpush1.msra.mxu0 %v629
    %746 = vmatprep.subr.mxu0 0.0
    %747 = vmatpush1.msra.mxu0 %v630
    %748 = vmatprep.subr.mxu0 0.0
    %749 = vmatpush1.msra.mxu0 %v631
    %750 = vmatprep.subr.mxu0 0.0
    %751 = vmatpush1.msra.mxu0 %v632
    %752 = vmatprep.subr.mxu0 0.0
    %753 = vmatpush1.msra.mxu0 %v633
    %754 = vmatprep.subr.mxu0 0.0
    %755 = vmatpush1.msra.mxu0 %v634
    %756 = vmatprep.subr.mxu0 0.0
    %757 = vmatpush1.msra.mxu0 %v635
    %758 = vmatprep.subr.mxu0 0.0
    %759 = vmatpush1.msra.mxu0 %v636
    %760 = vmatprep.subr.mxu0 0.0
    %761 = vmatpush1.msra.mxu0 %v637
    %762 = vmatprep.subr.mxu0 0.0
    %763 = vmatpush1.msra.mxu0 %v638
    %764 = vmatprep.subr.mxu0 0.0
    %765 = vmatpush1.msra.mxu0 %v639
    %766 = vmatprep.subr.mxu0 0.0
    %767 = vmatpush1.msra.mxu0 %v640
    %768 = vmatprep.subr.mxu0 0.0
    %769 = vmatpush1.msra.mxu0 %v641
    %770 = vmatprep.subr.mxu0 0.0
    %771 = vmatpush1.msra.mxu0 %v642
    %772 = vmatprep.subr.mxu0 0.0
    %773 = vmatpush1.msra.mxu0 %v643
    %774 = vmatprep.subr.mxu0 0.0
    %775 = vmatpush1.msra.mxu0 %v644
    %776 = vmatprep.subr.mxu0 0.0
    %777 = vmatpush1.msra.mxu0 %v645
    %778 = vmatprep.subr.mxu0 0.0
    %779 = vmatpush1.msra.mxu0 %v646
    %780 = vmatprep.subr.mxu0 0.0
    %781 = vmatpush1.msra.mxu0 %v647
    %782 = vmatprep.subr.mxu0 0.0
    %783 = vmatpush1.msra.mxu0 %v648
    %784 = vmatprep.subr.mxu0 0.0
    %785 = vmatpush1.msra.mxu0 %v649
    %786 = vmatprep.subr.mxu0 0.0
    %787 = vmatpush1.msra.mxu0 %v650
    %788 = vmatprep.subr.mxu0 0.0
    %789 = vmatpush1.msra.mxu0 %v651
    %790 = vmatprep.subr.mxu0 0.0
    %791 = vmatpush1.msra.mxu0 %v652
    %792 = vmatprep.subr.mxu0 0.0
    %793 = vmatpush1.msra.mxu0 %v653
    %794 = vmatprep.subr.mxu0 0.0
    %795 = vmatpush1.msra.mxu0 %v654
    %796 = vmatprep.mubr.f32.mxu0 %v590
    %797 = vmatmul.mubr.f32.gmra.mrb[0].mxu0 %v589
    %v798 = vpop.f32.mrb[0].mxu0
    %v799 = vadd.f32 %v729, %v798
    %v800 = vpop.f32.mrb[0].mxu0
    %801 = vdwg.mxu0
    %vm802 = vcmask 80896
    %803 = vst.msk [vmem:[#allocation2] sm:$0xff] %vm802, %v799
    // Predicated region
    $region22: #{classifier_forward.3} parent=1 // pred_check
      _
    $region23: #{classifier_forward.3} parent=1 // pred_check_branch
      %805 = sbr.rel (0) target = $region25
    $region24: #{classifier_forward.3} parent=1 // pred_region
      %s807 = ssub.s32 128, 128
      %808 = vsyncadd [#allocation3], %s807
      %s810 = sshll.u32 [#allocation2], 4
      %s811 = int_to_ptr.vmem [resolvable:$true] %s810
      %813 = dma.vmem_to_hbm [thread:$0]  %s811, 128, %s5, [#allocation3]
    $region25: #{classifier_forward.3} parent=1 // pred_fallthru
      _
    // Predicated region
    $region26: #{classifier_forward.3} parent=1 // pred_check
      _
    $region27: #{classifier_forward.3} parent=1 // pred_check_branch
      %815 = sbr.rel (0) target = $region29
    $region28: #{classifier_forward.3} parent=1 // pred_region
      %816 = dma.done [#allocation3], 128
    $region29: #{classifier_forward.3} parent=1 // pred_fallthru
      _
    %817 = vsyncpa [#allocation3], 1

// kernel: classifier_forward.2
$region0: #{classifier_forward.2}
  #allocation0 [shape = 'u32[]', space=smem, size = 0x4, offset = 0x4, fixed_abs, tag = 'smem constant byte address 0x4 - core index']
  #allocation1 [shape = 'u32[144,128]{1,0:T(1,128)}', space=vmem, size = 0x12000, scoped, tag = 'internal scratch']
  %s0 = inlined_call_operand.vmem [shape: f32[128,32], index: 0, kind: input, shape index: {}]
  %s1 = inlined_call_operand.vmem [shape: f32[8,64,128], index: 1, kind: input, shape index: {}]
  %s2 = inlined_call_operand.vmem [shape: f32[8,32], index: 2, kind: input, shape index: {}]
  %s3 = inlined_call_operand.vmem [shape: f32[32,256], index: 3, kind: input, shape index: {}]
  %s4 = inlined_call_operand.vmem [shape: f32[1,256], index: 4, kind: input, shape index: {}]
  %s5 = inlined_call_operand.vmem [shape: f32[8,16,64], index: 5, kind: input, shape index: {}]
  %s6 = inlined_call_operand.vmem [shape: f32[8,256], index: 6, kind: input, shape index: {}]
  %s7 = inlined_call_operand.vmem [shape: f32[256,512], index: 7, kind: input, shape index: {}]
  %s8 = inlined_call_operand.vmem [shape: f32[1,512], index: 8, kind: input, shape index: {}]
  %s9 = inlined_call_operand.vmem [shape: f32[8,4,16], index: 9, kind: input, shape index: {}]
  %s10 = inlined_call_operand.vmem [shape: f32[8,512], index: 10, kind: input, shape index: {}]
  %s11 = inlined_call_operand.vmem [shape: f32[512,1024], index: 11, kind: input, shape index: {}]
  %s12 = inlined_call_operand.vmem [shape: f32[1,1024], index: 12, kind: input, shape index: {}]
  %s13 = inlined_call_operand.vmem [shape: f32[4,1024], index: 13, kind: output, shape index: {}]
  %s14 = sld [smem:[#allocation0]]
  $region62: #{classifier_forward.2} parent=0
    _
  %s16 = ssub.s32 1, %s14
  %s17 = scalar_select 0, %s16, %s14
  // Predicated region
  $region2: #{classifier_forward.2} parent=0 // pred_check
    _
  $region3: #{classifier_forward.2} parent=0 // pred_check_branch
    %19 = sbr.rel (0) target = $region5
  $region4: #{classifier_forward.2} parent=0 // pred_region
    _
  $region5: #{classifier_forward.2} parent=0 // pred_fallthru
    _
  // Predicated region
  $region6: #{classifier_forward.2} parent=0 // pred_check
    _
  $region7: #{classifier_forward.2} parent=0 // pred_check_branch
    %21 = sbr.rel (0) target = $region9
  $region8: #{classifier_forward.2} parent=0 // pred_region
    _
  $region9: #{classifier_forward.2} parent=0 // pred_fallthru
    _
  // Predicated region
  $region10: #{classifier_forward.2} parent=0 // pred_check
    _
  $region11: #{classifier_forward.2} parent=0 // pred_check_branch
    %23 = sbr.rel (0) target = $region13
  $region12: #{classifier_forward.2} parent=0 // pred_region
    _
  $region13: #{classifier_forward.2} parent=0 // pred_fallthru
    _
  // Predicated region
  $region14: #{classifier_forward.2} parent=0 // pred_check
    _
  $region15: #{classifier_forward.2} parent=0 // pred_check_branch
    %25 = sbr.rel (0) target = $region17
  $region16: #{classifier_forward.2} parent=0 // pred_region
    _
  $region17: #{classifier_forward.2} parent=0 // pred_fallthru
    _
  // Predicated region
  $region18: #{classifier_forward.2} parent=0 // pred_check
    _
  $region19: #{classifier_forward.2} parent=0 // pred_check_branch
    %27 = sbr.rel (0) target = $region21
  $region20: #{classifier_forward.2} parent=0 // pred_region
    _
  $region21: #{classifier_forward.2} parent=0 // pred_fallthru
    _
  // Predicated region
  $region22: #{classifier_forward.2} parent=0 // pred_check
    _
  $region23: #{classifier_forward.2} parent=0 // pred_check_branch
    %29 = sbr.rel (0) target = $region25
  $region24: #{classifier_forward.2} parent=0 // pred_region
    _
  $region25: #{classifier_forward.2} parent=0 // pred_fallthru
    _
  // Predicated region
  $region26: #{classifier_forward.2} parent=0 // pred_check
    _
  $region27: #{classifier_forward.2} parent=0 // pred_check_branch
    %31 = sbr.rel (0) target = $region29
  $region28: #{classifier_forward.2} parent=0 // pred_region
    _
  $region29: #{classifier_forward.2} parent=0 // pred_fallthru
    _
  // Predicated region
  $region30: #{classifier_forward.2} parent=0 // pred_check
    _
  $region31: #{classifier_forward.2} parent=0 // pred_check_branch
    %33 = sbr.rel (0) target = $region33
  $region32: #{classifier_forward.2} parent=0 // pred_region
    _
  $region33: #{classifier_forward.2} parent=0 // pred_fallthru
    _
  // Predicated region
  $region34: #{classifier_forward.2} parent=0 // pred_check
    _
  $region35: #{classifier_forward.2} parent=0 // pred_check_branch
    %35 = sbr.rel (0) target = $region37
  $region36: #{classifier_forward.2} parent=0 // pred_region
    _
  $region37: #{classifier_forward.2} parent=0 // pred_fallthru
    _
  // Predicated region
  $region38: #{classifier_forward.2} parent=0 // pred_check
    _
  $region39: #{classifier_forward.2} parent=0 // pred_check_branch
    %37 = sbr.rel (0) target = $region41
  $region40: #{classifier_forward.2} parent=0 // pred_region
    _
  $region41: #{classifier_forward.2} parent=0 // pred_fallthru
    _
  // Predicated region
  $region42: #{classifier_forward.2} parent=0 // pred_check
    _
  $region43: #{classifier_forward.2} parent=0 // pred_check_branch
    %39 = sbr.rel (0) target = $region45
  $region44: #{classifier_forward.2} parent=0 // pred_region
    _
  $region45: #{classifier_forward.2} parent=0 // pred_fallthru
    _
  // Predicated region
  $region46: #{classifier_forward.2} parent=0 // pred_check
    _
  $region47: #{classifier_forward.2} parent=0 // pred_check_branch
    %41 = sbr.rel (0) target = $region49
  $region48: #{classifier_forward.2} parent=0 // pred_region
    _
  $region49: #{classifier_forward.2} parent=0 // pred_fallthru
    _
  // Predicated region
  $region50: #{classifier_forward.2} parent=0 // pred_check
    _
  $region51: #{classifier_forward.2} parent=0 // pred_check_branch
    %43 = sbr.rel (0) target = $region53
  $region52: #{classifier_forward.2} parent=0 // pred_region
    _
  $region53: #{classifier_forward.2} parent=0 // pred_fallthru
    _
  %v44 = vld [vmem:[%s0] sm:$0xff]
  %v45 = vld [vmem:[%s0 + $0x8] sm:$0xff]
  %v46 = vld [vmem:[%s0 + $0x10] sm:$0xff]
  %v47 = vld [vmem:[%s0 + $0x18] sm:$0xff]
  %v48 = vld [vmem:[%s0 + $0x20] sm:$0xff]
  %v49 = vld [vmem:[%s0 + $0x28] sm:$0xff]
  %v50 = vld [vmem:[%s0 + $0x30] sm:$0xff]
  %v51 = vld [vmem:[%s0 + $0x38] sm:$0xff]
  %v52 = vld [vmem:[%s0 + $0x40] sm:$0xff]
  %v53 = vld [vmem:[%s0 + $0x48] sm:$0xff]
  %v54 = vld [vmem:[%s0 + $0x50] sm:$0xff]
  %v55 = vld [vmem:[%s0 + $0x58] sm:$0xff]
  %v56 = vld [vmem:[%s0 + $0x60] sm:$0xff]
  %v57 = vld [vmem:[%s0 + $0x68] sm:$0xff]
  %v58 = vld [vmem:[%s0 + $0x70] sm:$0xff]
  %v59 = vld [vmem:[%s0 + $0x78] sm:$0xff]
  %v60 = vld [vmem:[%s1] sm:$0xff]
  %v61 = vld [vmem:[%s1 + $0x8] sm:$0xff]
  %v62 = vld [vmem:[%s1 + $0x10] sm:$0xff]
  %v63 = vld [vmem:[%s1 + $0x18] sm:$0xff]
  %v64 = vld [vmem:[%s1 + $0x20] sm:$0xff]
  %v65 = vld [vmem:[%s1 + $0x28] sm:$0xff]
  %v66 = vld [vmem:[%s1 + $0x30] sm:$0xff]
  %v67 = vld [vmem:[%s1 + $0x38] sm:$0xff]
  %v68 = vld [vmem:[%s1 + $0x40] sm:$0xff]
  %v69 = vld [vmem:[%s1 + $0x48] sm:$0xff]
  %v70 = vld [vmem:[%s1 + $0x50] sm:$0xff]
  %v71 = vld [vmem:[%s1 + $0x58] sm:$0xff]
  %v72 = vld [vmem:[%s1 + $0x60] sm:$0xff]
  %v73 = vld [vmem:[%s1 + $0x68] sm:$0xff]
  %v74 = vld [vmem:[%s1 + $0x70] sm:$0xff]
  %v75 = vld [vmem:[%s1 + $0x78] sm:$0xff]
  %v76 = vld [vmem:[%s1 + $0x80] sm:$0xff]
  %v77 = vld [vmem:[%s1 + $0x88] sm:$0xff]
  %v78 = vld [vmem:[%s1 + $0x90] sm:$0xff]
  %v79 = vld [vmem:[%s1 + $0x98] sm:$0xff]
  %v80 = vld [vmem:[%s1 + $0xa0] sm:$0xff]
  %v81 = vld [vmem:[%s1 + $0xa8] sm:$0xff]
  %v82 = vld [vmem:[%s1 + $0xb0] sm:$0xff]
  %v83 = vld [vmem:[%s1 + $0xb8] sm:$0xff]
  %v84 = vld [vmem:[%s1 + $0xc0] sm:$0xff]
  %v85 = vld [vmem:[%s1 + $0xc8] sm:$0xff]
  %v86 = vld [vmem:[%s1 + $0xd0] sm:$0xff]
  %v87 = vld [vmem:[%s1 + $0xd8] sm:$0xff]
  %v88 = vld [vmem:[%s1 + $0xe0] sm:$0xff]
  %v89 = vld [vmem:[%s1 + $0xe8] sm:$0xff]
  %v90 = vld [vmem:[%s1 + $0xf0] sm:$0xff]
  %v91 = vld [vmem:[%s1 + $0xf8] sm:$0xff]
  %v92 = vld [vmem:[%s1 + $0x100] sm:$0xff]
  %v93 = vld [vmem:[%s1 + $0x108] sm:$0xff]
  %v94 = vld [vmem:[%s1 + $0x110] sm:$0xff]
  %v95 = vld [vmem:[%s1 + $0x118] sm:$0xff]
  %v96 = vld [vmem:[%s1 + $0x120] sm:$0xff]
  %v97 = vld [vmem:[%s1 + $0x128] sm:$0xff]
  %v98 = vld [vmem:[%s1 + $0x130] sm:$0xff]
  %v99 = vld [vmem:[%s1 + $0x138] sm:$0xff]
  %v100 = vld [vmem:[%s1 + $0x140] sm:$0xff]
  %v101 = vld [vmem:[%s1 + $0x148] sm:$0xff]
  %v102 = vld [vmem:[%s1 + $0x150] sm:$0xff]
  %v103 = vld [vmem:[%s1 + $0x158] sm:$0xff]
  %v104 = vld [vmem:[%s1 + $0x160] sm:$0xff]
  %v105 = vld [vmem:[%s1 + $0x168] sm:$0xff]
  %v106 = vld [vmem:[%s1 + $0x170] sm:$0xff]
  %v107 = vld [vmem:[%s1 + $0x178] sm:$0xff]
  %v108 = vld [vmem:[%s1 + $0x180] sm:$0xff]
  %v109 = vld [vmem:[%s1 + $0x188] sm:$0xff]
  %v110 = vld [vmem:[%s1 + $0x190] sm:$0xff]
  %v111 = vld [vmem:[%s1 + $0x198] sm:$0xff]
  %v112 = vld [vmem:[%s1 + $0x1a0] sm:$0xff]
  %v113 = vld [vmem:[%s1 + $0x1a8] sm:$0xff]
  %v114 = vld [vmem:[%s1 + $0x1b0] sm:$0xff]
  %v115 = vld [vmem:[%s1 + $0x1b8] sm:$0xff]
  %v116 = vld [vmem:[%s1 + $0x1c0] sm:$0xff]
  %v117 = vld [vmem:[%s1 + $0x1c8] sm:$0xff]
  %v118 = vld [vmem:[%s1 + $0x1d0] sm:$0xff]
  %v119 = vld [vmem:[%s1 + $0x1d8] sm:$0xff]
  %v120 = vld [vmem:[%s1 + $0x1e0] sm:$0xff]
  %v121 = vld [vmem:[%s1 + $0x1e8] sm:$0xff]
  %v122 = vld [vmem:[%s1 + $0x1f0] sm:$0xff]
  %v123 = vld [vmem:[%s1 + $0x1f8] sm:$0xff]
  %v124 = vld [vmem:[%s2] sm:$0xff]
  %125 = vmatprep.subr.mxu0 0.0
  %126 = vmatpush1.msra.mxu0 %v44
  %127 = vmatprep.subr.mxu0 0.0
  %128 = vmatpush1.msra.mxu0 %v45
  %129 = vmatprep.subr.mxu0 0.0
  %130 = vmatpush1.msra.mxu0 %v46
  %131 = vmatprep.subr.mxu0 0.0
  %132 = vmatpush1.msra.mxu0 %v47
  %133 = vmatprep.subr.mxu0 0.0
  %134 = vmatpush1.msra.mxu0 %v48
  %135 = vmatprep.subr.mxu0 0.0
  %136 = vmatpush1.msra.mxu0 %v49
  %137 = vmatprep.subr.mxu0 0.0
  %138 = vmatpush1.msra.mxu0 %v50
  %139 = vmatprep.subr.mxu0 0.0
  %140 = vmatpush1.msra.mxu0 %v51
  %141 = vmatprep.subr.mxu0 0.0
  %142 = vmatpush1.msra.mxu0 %v52
  %143 = vmatprep.subr.mxu0 0.0
  %144 = vmatpush1.msra.mxu0 %v53
  %145 = vmatprep.subr.mxu0 0.0
  %146 = vmatpush1.msra.mxu0 %v54
  %147 = vmatprep.subr.mxu0 0.0
  %148 = vmatpush1.msra.mxu0 %v55
  %149 = vmatprep.subr.mxu0 0.0
  %150 = vmatpush1.msra.mxu0 %v56
  %151 = vmatprep.subr.mxu0 0.0
  %152 = vmatpush1.msra.mxu0 %v57
  %153 = vmatprep.subr.mxu0 0.0
  %154 = vmatpush1.msra.mxu0 %v58
  %155 = vmatprep.subr.mxu0 0.0
  %156 = vmatpush1.msra.mxu0 %v59
  %157 = vmatprep.subr.mxu0 0.0
  %158 = vmatpush1.msra.mxu0 0.0
  %159 = vmatprep.subr.mxu0 0.0
  %160 = vmatpush1.msra.mxu0 0.0
  %161 = vmatprep.subr.mxu0 0.0
  %162 = vmatpush1.msra.mxu0 0.0
  %163 = vmatprep.subr.mxu0 0.0
  %164 = vmatpush1.msra.mxu0 0.0
  %165 = vmatprep.subr.mxu0 0.0
  %166 = vmatpush1.msra.mxu0 0.0
  %167 = vmatprep.subr.mxu0 0.0
  %168 = vmatpush1.msra.mxu0 0.0
  %169 = vmatprep.subr.mxu0 0.0
  %170 = vmatpush1.msra.mxu0 0.0
  %171 = vmatprep.subr.mxu0 0.0
  %172 = vmatpush1.msra.mxu0 0.0
  %173 = vmatprep.subr.mxu0 0.0
  %174 = vmatpush1.msra.mxu0 0.0
  %175 = vmatprep.subr.mxu0 0.0
  %176 = vmatpush1.msra.mxu0 0.0
  %177 = vmatprep.subr.mxu0 0.0
  %178 = vmatpush1.msra.mxu0 0.0
  %179 = vmatprep.subr.mxu0 0.0
  %180 = vmatpush1.msra.mxu0 0.0
  %181 = vmatprep.subr.mxu0 0.0
  %182 = vmatpush1.msra.mxu0 0.0
  %183 = vmatprep.subr.mxu0 0.0
  %184 = vmatpush1.msra.mxu0 0.0
  %185 = vmatprep.subr.mxu0 0.0
  %186 = vmatpush1.msra.mxu0 0.0
  %187 = vmatprep.subr.mxu0 0.0
  %188 = vmatpush1.msra.mxu0 0.0
  %189 = vmatprep.mubr.f32.mxu0 0.0
  %190 = vmatmul.mubr.f32.gmra.mrb[0].mxu0 %v60
  %v191 = vpop.f32.mrb[0].mxu0
  %v192 = vadd.f32 0.0, %v191
  %v193 = vpop.f32.mrb[0].mxu0
  %194 = vmatprep.mubr.f32.mxu0 0.0
  %195 = vmatmul.mubr.f32.gmra.mrb[0].mxu0 %v61
  %v196 = vpop.f32.mrb[0].mxu0
  %v197 = vadd.f32 0.0, %v196
  %v198 = vpop.f32.mrb[0].mxu0
  %199 = vmatprep.mubr.f32.mxu0 0.0
  %200 = vmatmul.mubr.f32.gmra.mrb[0].mxu0 %v62
  %v201 = vpop.f32.mrb[0].mxu0
  %v202 = vadd.f32 0.0, %v201
  %v203 = vpop.f32.mrb[0].mxu0
  %204 = vmatprep.mubr.f32.mxu0 0.0
  %205 = vmatmul.mubr.f32.gmra.mrb[0].mxu0 %v63
  %v206 = vpop.f32.mrb[0].mxu0
  %v207 = vadd.f32 0.0, %v206
  %v208 = vpop.f32.mrb[0].mxu0
  %209 = vmatprep.mubr.f32.mxu0 0.0
  %210 = vmatmul.mubr.f32.gmra.mrb[0].mxu0 %v64
  %v211 = vpop.f32.mrb[0].mxu0
  %v212 = vadd.f32 0.0, %v211
  %v213 = vpop.f32.mrb[0].mxu0
  %214 = vmatprep.mubr.f32.mxu0 0.0
  %215 = vmatmul.mubr.f32.gmra.mrb[0].mxu0 %v65
  %v216 = vpop.f32.mrb[0].mxu0
  %v217 = vadd.f32 0.0, %v216
  %v218 = vpop.f32.mrb[0].mxu0
  %219 = vmatprep.mubr.f32.mxu0 0.0
  %220 = vmatmul.mubr.f32.gmra.mrb[0].mxu0 %v66
  %v221 = vpop.f32.mrb[0].mxu0
  %v222 = vadd.f32 0.0, %v221
  %v223 = vpop.f32.mrb[0].mxu0
  %224 = vmatprep.mubr.f32.mxu0 0.0
  %225 = vmatmul.mubr.f32.gmra.mrb[0].mxu0 %v67
  %v226 = vpop.f32.mrb[0].mxu0
  %v227 = vadd.f32 0.0, %v226
  %v228 = vpop.f32.mrb[0].mxu0
  %229 = vdwg.mxu0
  %v230 = vlaneseq
  %v231 = vshrl.u32 %v230, 7
  %v232 = vsub.s32 0, %v231
  %v233 = vrot.slane %v124, %v232
  %v234 = vmul.f32 %v192, %v233
  %v235 = vmul.f32 %v197, %v233
  %v236 = vmul.f32 %v202, %v233
  %v237 = vmul.f32 %v207, %v233
  %v238 = vmul.f32 %v212, %v233
  %v239 = vmul.f32 %v217, %v233
  %v240 = vmul.f32 %v222, %v233
  %v241 = vmul.f32 %v227, %v233
  %242 = vmatprep.subr.mxu0 0.0
  %243 = vmatpush1.msra.mxu0 %v44
  %244 = vmatprep.subr.mxu0 0.0
  %245 = vmatpush1.msra.mxu0 %v45
  %246 = vmatprep.subr.mxu0 0.0
  %247 = vmatpush1.msra.mxu0 %v46
  %248 = vmatprep.subr.mxu0 0.0
  %249 = vmatpush1.msra.mxu0 %v47
  %250 = vmatprep.subr.mxu0 0.0
  %251 = vmatpush1.msra.mxu0 %v48
  %252 = vmatprep.subr.mxu0 0.0
  %253 = vmatpush1.msra.mxu0 %v49
  %254 = vmatprep.subr.mxu0 0.0
  %255 = vmatpush1.msra.mxu0 %v50
  %256 = vmatprep.subr.mxu0 0.0
  %257 = vmatpush1.msra.mxu0 %v51
  %258 = vmatprep.subr.mxu0 0.0
  %259 = vmatpush1.msra.mxu0 %v52
  %260 = vmatprep.subr.mxu0 0.0
  %261 = vmatpush1.msra.mxu0 %v53
  %262 = vmatprep.subr.mxu0 0.0
  %263 = vmatpush1.msra.mxu0 %v54
  %264 = vmatprep.subr.mxu0 0.0
  %265 = vmatpush1.msra.mxu0 %v55
  %266 = vmatprep.subr.mxu0 0.0
  %267 = vmatpush1.msra.mxu0 %v56
  %268 = vmatprep.subr.mxu0 0.0
  %269 = vmatpush1.msra.mxu0 %v57
  %270 = vmatprep.subr.mxu0 0.0
  %271 = vmatpush1.msra.mxu0 %v58
  %272 = vmatprep.subr.mxu0 0.0
  %273 = vmatpush1.msra.mxu0 %v59
  %274 = vmatprep.subr.mxu0 0.0
  %275 = vmatpush1.msra.mxu0 0.0
  %276 = vmatprep.subr.mxu0 0.0
  %277 = vmatpush1.msra.mxu0 0.0
  %278 = vmatprep.subr.mxu0 0.0
  %279 = vmatpush1.msra.mxu0 0.0
  %280 = vmatprep.subr.mxu0 0.0
  %281 = vmatpush1.msra.mxu0 0.0
  %282 = vmatprep.subr.mxu0 0.0
  %283 = vmatpush1.msra.mxu0 0.0
  %284 = vmatprep.subr.mxu0 0.0
  %285 = vmatpush1.msra.mxu0 0.0
  %286 = vmatprep.subr.mxu0 0.0
  %287 = vmatpush1.msra.mxu0 0.0
  %288 = vmatprep.subr.mxu0 0.0
  %289 = vmatpush1.msra.mxu0 0.0
  %290 = vmatprep.subr.mxu0 0.0
  %291 = vmatpush1.msra.mxu0 0.0
  %292 = vmatprep.subr.mxu0 0.0
  %293 = vmatpush1.msra.mxu0 0.0
  %294 = vmatprep.subr.mxu0 0.0
  %295 = vmatpush1.msra.mxu0 0.0
  %296 = vmatprep.subr.mxu0 0.0
  %297 = vmatpush1.msra.mxu0 0.0
  %298 = vmatprep.subr.mxu0 0.0
  %299 = vmatpush1.msra.mxu0 0.0
  %300 = vmatprep.subr.mxu0 0.0
  %301 = vmatpush1.msra.mxu0 0.0
  %302 = vmatprep.subr.mxu0 0.0
  %303 = vmatpush1.msra.mxu0 0.0
  %304 = vmatprep.subr.mxu0 0.0
  %305 = vmatpush1.msra.mxu0 0.0
  %306 = vmatprep.mubr.f32.mxu0 0.0
  %307 = vmatmul.mubr.f32.gmra.mrb[0].mxu0 %v68
  %v308 = vpop.f32.mrb[0].mxu0
  %v309 = vadd.f32 0.0, %v308
  %v310 = vpop.f32.mrb[0].mxu0
  %311 = vmatprep.mubr.f32.mxu0 0.0
  %312 = vmatmul.mubr.f32.gmra.mrb[0].mxu0 %v69
  %v313 = vpop.f32.mrb[0].mxu0
  %v314 = vadd.f32 0.0, %v313
  %v315 = vpop.f32.mrb[0].mxu0
  %316 = vmatprep.mubr.f32.mxu0 0.0
  %317 = vmatmul.mubr.f32.gmra.mrb[0].mxu0 %v70
  %v318 = vpop.f32.mrb[0].mxu0
  %v319 = vadd.f32 0.0, %v318
  %v320 = vpop.f32.mrb[0].mxu0
  %321 = vmatprep.mubr.f32.mxu0 0.0
  %322 = vmatmul.mubr.f32.gmra.mrb[0].mxu0 %v71
  %v323 = vpop.f32.mrb[0].mxu0
  %v324 = vadd.f32 0.0, %v323
  %v325 = vpop.f32.mrb[0].mxu0
  %326 = vmatprep.mubr.f32.mxu0 0.0
  %327 = vmatmul.mubr.f32.gmra.mrb[0].mxu0 %v72
  %v328 = vpop.f32.mrb[0].mxu0
  %v329 = vadd.f32 0.0, %v328
  %v330 = vpop.f32.mrb[0].mxu0
  %331 = vmatprep.mubr.f32.mxu0 0.0
  %332 = vmatmul.mubr.f32.gmra.mrb[0].mxu0 %v73
  %v333 = vpop.f32.mrb[0].mxu0
  %v334 = vadd.f32 0.0, %v333
  %v335 = vpop.f32.mrb[0].mxu0
  %336 = vmatprep.mubr.f32.mxu0 0.0
  %337 = vmatmul.mubr.f32.gmra.mrb[0].mxu0 %v74
  %v338 = vpop.f32.mrb[0].mxu0
  %v339 = vadd.f32 0.0, %v338
  %v340 = vpop.f32.mrb[0].mxu0
  %341 = vmatprep.mubr.f32.mxu0 0.0
  %342 = vmatmul.mubr.f32.gmra.mrb[0].mxu0 %v75
  %v343 = vpop.f32.mrb[0].mxu0
  %v344 = vadd.f32 0.0, %v343
  %v345 = vpop.f32.mrb[0].mxu0
  %346 = vdwg.mxu0
  %v347 = vlaneseq
  %v348 = vshrl.u32 %v347, 7
  %v349 = vsub.s32 1, %v348
  %v350 = vrot.slane %v124, %v349
  %v351 = vmul.f32 %v309, %v350
  %v352 = vmul.f32 %v314, %v350
  %v353 = vmul.f32 %v319, %v350
  %v354 = vmul.f32 %v324, %v350
  %v355 = vmul.f32 %v329, %v350
  %v356 = vmul.f32 %v334, %v350
  %v357 = vmul.f32 %v339, %v350
  %v358 = vmul.f32 %v344, %v350
  %v359 = vadd.f32 %v234, %v351
  %v360 = vadd.f32 %v235, %v352
  %v361 = vadd.f32 %v236, %v353
  %v362 = vadd.f32 %v237, %v354
  %v363 = vadd.f32 %v238, %v355
  %v364 = vadd.f32 %v239, %v356
  %v365 = vadd.f32 %v240, %v357
  %v366 = vadd.f32 %v241, %v358
  %367 = vmatprep.subr.mxu0 0.0
  %368 = vmatpush1.msra.mxu0 %v44
  %369 = vmatprep.subr.mxu0 0.0
  %370 = vmatpush1.msra.mxu0 %v45
  %371 = vmatprep.subr.mxu0 0.0
  %372 = vmatpush1.msra.mxu0 %v46
  %373 = vmatprep.subr.mxu0 0.0
  %374 = vmatpush1.msra.mxu0 %v47
  %375 = vmatprep.subr.mxu0 0.0
  %376 = vmatpush1.msra.mxu0 %v48
  %377 = vmatprep.subr.mxu0 0.0
  %378 = vmatpush1.msra.mxu0 %v49
  %379 = vmatprep.subr.mxu0 0.0
  %380 = vmatpush1.msra.mxu0 %v50
  %381 = vmatprep.subr.mxu0 0.0
  %382 = vmatpush1.msra.mxu0 %v51
  %383 = vmatprep.subr.mxu0 0.0
  %384 = vmatpush1.msra.mxu0 %v52
  %385 = vmatprep.subr.mxu0 0.0
  %386 = vmatpush1.msra.mxu0 %v53
  %387 = vmatprep.subr.mxu0 0.0
  %388 = vmatpush1.msra.mxu0 %v54
  %389 = vmatprep.subr.mxu0 0.0
  %390 = vmatpush1.msra.mxu0 %v55
  %391 = vmatprep.subr.mxu0 0.0
  %392 = vmatpush1.msra.mxu0 %v56
  %393 = vmatprep.subr.mxu0 0.0
  %394 = vmatpush1.msra.mxu0 %v57
  %395 = vmatprep.subr.mxu0 0.0
  %396 = vmatpush1.msra.mxu0 %v58
  %397 = vmatprep.subr.mxu0 0.0
  %398 = vmatpush1.msra.mxu0 %v59
  %399 = vmatprep.subr.mxu0 0.0
  %400 = vmatpush1.msra.mxu0 0.0
  %401 = vmatprep.subr.mxu0 0.0
  %402 = vmatpush1.msra.mxu0 0.0
  %403 = vmatprep.subr.mxu0 0.0
  %404 = vmatpush1.msra.mxu0 0.0
  %405 = vmatprep.subr.mxu0 0.0
  %406 = vmatpush1.msra.mxu0 0.0
  %407 = vmatprep.subr.mxu0 0.0
  %408 = vmatpush1.msra.mxu0 0.0
  %409 = vmatprep.subr.mxu0 0.0
  %410 = vmatpush1.msra.mxu0 0.0
  %411 = vmatprep.subr.mxu0 0.0
  %412 = vmatpush1.msra.mxu0 0.0
  %413 = vmatprep.subr.mxu0 0.0
  %414 = vmatpush1.msra.mxu0 0.0
  %415 = vmatprep.subr.mxu0 0.0
  %416 = vmatpush1.msra.mxu0 0.0
  %417 = vmatprep.subr.mxu0 0.0
  %418 = vmatpush1.msra.mxu0 0.0
  %419 = vmatprep.subr.mxu0 0.0
  %420 = vmatpush1.msra.mxu0 0.0
  %421 = vmatprep.subr.mxu0 0.0
  %422 = vmatpush1.msra.mxu0 0.0
  %423 = vmatprep.subr.mxu0 0.0
  %424 = vmatpush1.msra.mxu0 0.0
  %425 = vmatprep.subr.mxu0 0.0
  %426 = vmatpush1.msra.mxu0 0.0
  %427 = vmatprep.subr.mxu0 0.0
  %428 = vmatpush1.msra.mxu0 0.0
  %429 = vmatprep.subr.mxu0 0.0
  %430 = vmatpush1.msra.mxu0 0.0
  %431 = vmatprep.mubr.f32.mxu0 0.0
  %432 = vmatmul.mubr.f32.gmra.mrb[0].mxu0 %v76
  %v433 = vpop.f32.mrb[0].mxu0
  %v434 = vadd.f32 0.0, %v433
  %v435 = vpop.f32.mrb[0].mxu0
  %436 = vmatprep.mubr.f32.mxu0 0.0
  %437 = vmatmul.mubr.f32.gmra.mrb[0].mxu0 %v77
  %v438 = vpop.f32.mrb[0].mxu0
  %v439 = vadd.f32 0.0, %v438
  %v440 = vpop.f32.mrb[0].mxu0
  %441 = vmatprep.mubr.f32.mxu0 0.0
  %442 = vmatmul.mubr.f32.gmra.mrb[0].mxu0 %v78
  %v443 = vpop.f32.mrb[0].mxu0
  %v444 = vadd.f32 0.0, %v443
  %v445 = vpop.f32.mrb[0].mxu0
  %446 = vmatprep.mubr.f32.mxu0 0.0
  %447 = vmatmul.mubr.f32.gmra.mrb[0].mxu0 %v79
  %v448 = vpop.f32.mrb[0].mxu0
  %v449 = vadd.f32 0.0, %v448
  %v450 = vpop.f32.mrb[0].mxu0
  %451 = vmatprep.mubr.f32.mxu0 0.0
  %452 = vmatmul.mubr.f32.gmra.mrb[0].mxu0 %v80
  %v453 = vpop.f32.mrb[0].mxu0
  %v454 = vadd.f32 0.0, %v453
  %v455 = vpop.f32.mrb[0].mxu0
  %456 = vmatprep.mubr.f32.mxu0 0.0
  %457 = vmatmul.mubr.f32.gmra.mrb[0].mxu0 %v81
  %v458 = vpop.f32.mrb[0].mxu0
  %v459 = vadd.f32 0.0, %v458
  %v460 = vpop.f32.mrb[0].mxu0
  %461 = vmatprep.mubr.f32.mxu0 0.0
  %462 = vmatmul.mubr.f32.gmra.mrb[0].mxu0 %v82
  %v463 = vpop.f32.mrb[0].mxu0
  %v464 = vadd.f32 0.0, %v463
  %v465 = vpop.f32.mrb[0].mxu0
  %466 = vmatprep.mubr.f32.mxu0 0.0
  %467 = vmatmul.mubr.f32.gmra.mrb[0].mxu0 %v83
  %v468 = vpop.f32.mrb[0].mxu0
  %v469 = vadd.f32 0.0, %v468
  %v470 = vpop.f32.mrb[0].mxu0
  %471 = vdwg.mxu0
  %v472 = vlaneseq
  %v473 = vshrl.u32 %v472, 7
  %v474 = vsub.s32 2, %v473
  %v475 = vrot.slane %v124, %v474
  %v476 = vmul.f32 %v434, %v475
  %v477 = vmul.f32 %v439, %v475
  %v478 = vmul.f32 %v444, %v475
  %v479 = vmul.f32 %v449, %v475
  %v480 = vmul.f32 %v454, %v475
  %v481 = vmul.f32 %v459, %v475
  %v482 = vmul.f32 %v464, %v475
  %v483 = vmul.f32 %v469, %v475
  %v484 = vadd.f32 %v359, %v476
  %v485 = vadd.f32 %v360, %v477
  %v486 = vadd.f32 %v361, %v478
  %v487 = vadd.f32 %v362, %v479
  %v488 = vadd.f32 %v363, %v480
  %v489 = vadd.f32 %v364, %v481
  %v490 = vadd.f32 %v365, %v482
  %v491 = vadd.f32 %v366, %v483
  %492 = vmatprep.subr.mxu0 0.0
  %493 = vmatpush1.msra.mxu0 %v44
  %494 = vmatprep.subr.mxu0 0.0
  %495 = vmatpush1.msra.mxu0 %v45
  %496 = vmatprep.subr.mxu0 0.0
  %497 = vmatpush1.msra.mxu0 %v46
  %498 = vmatprep.subr.mxu0 0.0
  %499 = vmatpush1.msra.mxu0 %v47
  %500 = vmatprep.subr.mxu0 0.0
  %501 = vmatpush1.msra.mxu0 %v48
  %502 = vmatprep.subr.mxu0 0.0
  %503 = vmatpush1.msra.mxu0 %v49
  %504 = vmatprep.subr.mxu0 0.0
  %505 = vmatpush1.msra.mxu0 %v50
  %506 = vmatprep.subr.mxu0 0.0
  %507 = vmatpush1.msra.mxu0 %v51
  %508 = vmatprep.subr.mxu0 0.0
  %509 = vmatpush1.msra.mxu0 %v52
  %510 = vmatprep.subr.mxu0 0.0
  %511 = vmatpush1.msra.mxu0 %v53
  %512 = vmatprep.subr.mxu0 0.0
  %513 = vmatpush1.msra.mxu0 %v54
  %514 = vmatprep.subr.mxu0 0.0
  %515 = vmatpush1.msra.mxu0 %v55
  %516 = vmatprep.subr.mxu0 0.0
  %517 = vmatpush1.msra.mxu0 %v56
  %518 = vmatprep.subr.mxu0 0.0
  %519 = vmatpush1.msra.mxu0 %v57
  %520 = vmatprep.subr.mxu0 0.0
  %521 = vmatpush1.msra.mxu0 %v58
  %522 = vmatprep.subr.mxu0 0.0
  %523 = vmatpush1.msra.mxu0 %v59
  %524 = vmatprep.subr.mxu0 0.0
  %525 = vmatpush1.msra.mxu0 0.0
  %526 = vmatprep.subr.mxu0 0.0
  %527 = vmatpush1.msra.mxu0 0.0
  %528 = vmatprep.subr.mxu0 0.0
  %529 = vmatpush1.msra.mxu0 0.0
  %530 = vmatprep.subr.mxu0 0.0
  %531 = vmatpush1.msra.mxu0 0.0
  %532 = vmatprep.subr.mxu0 0.0
  %533 = vmatpush1.msra.mxu0 0.0
  %534 = vmatprep.subr.mxu0 0.0
  %535 = vmatpush1.msra.mxu0 0.0
  %536 = vmatprep.subr.mxu0 0.0
  %537 = vmatpush1.msra.mxu0 0.0
  %538 = vmatprep.subr.mxu0 0.0
  %539 = vmatpush1.msra.mxu0 0.0
  %540 = vmatprep.subr.mxu0 0.0
  %541 = vmatpush1.msra.mxu0 0.0
  %542 = vmatprep.subr.mxu0 0.0
  %543 = vmatpush1.msra.mxu0 0.0
  %544 = vmatprep.subr.mxu0 0.0
  %545 = vmatpush1.msra.mxu0 0.0
  %546 = vmatprep.subr.mxu0 0.0
  %547 = vmatpush1.msra.mxu0 0.0
  %548 = vmatprep.subr.mxu0 0.0
  %549 = vmatpush1.msra.mxu0 0.0
  %550 = vmatprep.subr.mxu0 0.0
  %551 = vmatpush1.msra.mxu0 0.0
  %552 = vmatprep.subr.mxu0 0.0
  %553 = vmatpush1.msra.mxu0 0.0
  %554 = vmatprep.subr.mxu0 0.0
  %555 = vmatpush1.msra.mxu0 0.0
  %556 = vmatprep.mubr.f32.mxu0 0.0
  %557 = vmatmul.mubr.f32.gmra.mrb[0].mxu0 %v84
  %v558 = vpop.f32.mrb[0].mxu0
  %v559 = vadd.f32 0.0, %v558
  %v560 = vpop.f32.mrb[0].mxu0
  %561 = vmatprep.mubr.f32.mxu0 0.0
  %562 = vmatmul.mubr.f32.gmra.mrb[0].mxu0 %v85
  %v563 = vpop.f32.mrb[0].mxu0
  %v564 = vadd.f32 0.0, %v563
  %v565 = vpop.f32.mrb[0].mxu0
  %566 = vmatprep.mubr.f32.mxu0 0.0
  %567 = vmatmul.mubr.f32.gmra.mrb[0].mxu0 %v86
  %v568 = vpop.f32.mrb[0].mxu0
  %v569 = vadd.f32 0.0, %v568
  %v570 = vpop.f32.mrb[0].mxu0
  %571 = vmatprep.mubr.f32.mxu0 0.0
  %572 = vmatmul.mubr.f32.gmra.mrb[0].mxu0 %v87
  %v573 = vpop.f32.mrb[0].mxu0
  %v574 = vadd.f32 0.0, %v573
  %v575 = vpop.f32.mrb[0].mxu0
  %576 = vmatprep.mubr.f32.mxu0 0.0
  %577 = vmatmul.mubr.f32.gmra.mrb[0].mxu0 %v88
  %v578 = vpop.f32.mrb[0].mxu0
  %v579 = vadd.f32 0.0, %v578
  %v580 = vpop.f32.mrb[0].mxu0
  %581 = vmatprep.mubr.f32.mxu0 0.0
  %582 = vmatmul.mubr.f32.gmra.mrb[0].mxu0 %v89
  %v583 = vpop.f32.mrb[0].mxu0
  %v584 = vadd.f32 0.0, %v583
  %v585 = vpop.f32.mrb[0].mxu0
  %586 = vmatprep.mubr.f32.mxu0 0.0
  %587 = vmatmul.mubr.f32.gmra.mrb[0].mxu0 %v90
  %v588 = vpop.f32.mrb[0].mxu0
  %v589 = vadd.f32 0.0, %v588
  %v590 = vpop.f32.mrb[0].mxu0
  %591 = vmatprep.mubr.f32.mxu0 0.0
  %592 = vmatmul.mubr.f32.gmra.mrb[0].mxu0 %v91
  %v593 = vpop.f32.mrb[0].mxu0
  %v594 = vadd.f32 0.0, %v593
  %v595 = vpop.f32.mrb[0].mxu0
  %596 = vdwg.mxu0
  %v597 = vlaneseq
  %v598 = vshrl.u32 %v597, 7
  %v599 = vsub.s32 3, %v598
  %v600 = vrot.slane %v124, %v599
  %v601 = vmul.f32 %v559, %v600
  %v602 = vmul.f32 %v564, %v600
  %v603 = vmul.f32 %v569, %v600
  %v604 = vmul.f32 %v574, %v600
  %v605 = vmul.f32 %v579, %v600
  %v606 = vmul.f32 %v584, %v600
  %v607 = vmul.f32 %v589, %v600
  %v608 = vmul.f32 %v594, %v600
  %v609 = vadd.f32 %v484, %v601
  %v610 = vadd.f32 %v485, %v602
  %v611 = vadd.f32 %v486, %v603
  %v612 = vadd.f32 %v487, %v604
  %v613 = vadd.f32 %v488, %v605
  %v614 = vadd.f32 %v489, %v606
  %v615 = vadd.f32 %v490, %v607
  %v616 = vadd.f32 %v491, %v608
  %617 = vmatprep.subr.mxu0 0.0
  %618 = vmatpush1.msra.mxu0 %v44
  %619 = vmatprep.subr.mxu0 0.0
  %620 = vmatpush1.msra.mxu0 %v45
  %621 = vmatprep.subr.mxu0 0.0
  %622 = vmatpush1.msra.mxu0 %v46
  %623 = vmatprep.subr.mxu0 0.0
  %624 = vmatpush1.msra.mxu0 %v47
  %625 = vmatprep.subr.mxu0 0.0
  %626 = vmatpush1.msra.mxu0 %v48
  %627 = vmatprep.subr.mxu0 0.0
  %628 = vmatpush1.msra.mxu0 %v49
  %629 = vmatprep.subr.mxu0 0.0
  %630 = vmatpush1.msra.mxu0 %v50
  %631 = vmatprep.subr.mxu0 0.0
  %632 = vmatpush1.msra.mxu0 %v51
  %633 = vmatprep.subr.mxu0 0.0
  %634 = vmatpush1.msra.mxu0 %v52
  %635 = vmatprep.subr.mxu0 0.0
  %636 = vmatpush1.msra.mxu0 %v53
  %637 = vmatprep.subr.mxu0 0.0
  %638 = vmatpush1.msra.mxu0 %v54
  %639 = vmatprep.subr.mxu0 0.0
  %640 = vmatpush1.msra.mxu0 %v55
  %641 = vmatprep.subr.mxu0 0.0
  %642 = vmatpush1.msra.mxu0 %v56
  %643 = vmatprep.subr.mxu0 0.0
  %644 = vmatpush1.msra.mxu0 %v57
  %645 = vmatprep.subr.mxu0 0.0
  %646 = vmatpush1.msra.mxu0 %v58
  %647 = vmatprep.subr.mxu0 0.0
  %648 = vmatpush1.msra.mxu0 %v59
  %649 = vmatprep.subr.mxu0 0.0
  %650 = vmatpush1.msra.mxu0 0.0
  %651 = vmatprep.subr.mxu0 0.0
  %652 = vmatpush1.msra.mxu0 0.0
  %653 = vmatprep.subr.mxu0 0.0
  %654 = vmatpush1.msra.mxu0 0.0
  %655 = vmatprep.subr.mxu0 0.0
  %656 = vmatpush1.msra.mxu0 0.0
  %657 = vmatprep.subr.mxu0 0.0
  %658 = vmatpush1.msra.mxu0 0.0
  %659 = vmatprep.subr.mxu0 0.0
  %660 = vmatpush1.msra.mxu0 0.0
  %661 = vmatprep.subr.mxu0 0.0
  %662 = vmatpush1.msra.mxu0 0.0
  %663 = vmatprep.subr.mxu0 0.0
  %664 = vmatpush1.msra.mxu0 0.0
  %665 = vmatprep.subr.mxu0 0.0
  %666 = vmatpush1.msra.mxu0 0.0
  %667 = vmatprep.subr.mxu0 0.0
  %668 = vmatpush1.msra.mxu0 0.0
  %669 = vmatprep.subr.mxu0 0.0
  %670 = vmatpush1.msra.mxu0 0.0
  %671 = vmatprep.subr.mxu0 0.0
  %672 = vmatpush1.msra.mxu0 0.0
  %673 = vmatprep.subr.mxu0 0.0
  %674 = vmatpush1.msra.mxu0 0.0
  %675 = vmatprep.subr.mxu0 0.0
  %676 = vmatpush1.msra.mxu0 0.0
  %677 = vmatprep.subr.mxu0 0.0
  %678 = vmatpush1.msra.mxu0 0.0
  %679 = vmatprep.subr.mxu0 0.0
  %680 = vmatpush1.msra.mxu0 0.0
  %681 = vmatprep.mubr.f32.mxu0 0.0
  %682 = vmatmul.mubr.f32.gmra.mrb[0].mxu0 %v92
  %v683 = vpop.f32.mrb[0].mxu0
  %v684 = vadd.f32 0.0, %v683
  %v685 = vpop.f32.mrb[0].mxu0
  %686 = vmatprep.mubr.f32.mxu0 0.0
  %687 = vmatmul.mubr.f32.gmra.mrb[0].mxu0 %v93
  %v688 = vpop.f32.mrb[0].mxu0
  %v689 = vadd.f32 0.0, %v688
  %v690 = vpop.f32.mrb[0].mxu0
  %691 = vmatprep.mubr.f32.mxu0 0.0
  %692 = vmatmul.mubr.f32.gmra.mrb[0].mxu0 %v94
  %v693 = vpop.f32.mrb[0].mxu0
  %v694 = vadd.f32 0.0, %v693
  %v695 = vpop.f32.mrb[0].mxu0
  %696 = vmatprep.mubr.f32.mxu0 0.0
  %697 = vmatmul.mubr.f32.gmra.mrb[0].mxu0 %v95
  %v698 = vpop.f32.mrb[0].mxu0
  %v699 = vadd.f32 0.0, %v698
  %v700 = vpop.f32.mrb[0].mxu0
  %701 = vmatprep.mubr.f32.mxu0 0.0
  %702 = vmatmul.mubr.f32.gmra.mrb[0].mxu0 %v96
  %v703 = vpop.f32.mrb[0].mxu0
  %v704 = vadd.f32 0.0, %v703
  %v705 = vpop.f32.mrb[0].mxu0
  %706 = vmatprep.mubr.f32.mxu0 0.0
  %707 = vmatmul.mubr.f32.gmra.mrb[0].mxu0 %v97
  %v708 = vpop.f32.mrb[0].mxu0
  %v709 = vadd.f32 0.0, %v708
  %v710 = vpop.f32.mrb[0].mxu0
  %711 = vmatprep.mubr.f32.mxu0 0.0
  %712 = vmatmul.mubr.f32.gmra.mrb[0].mxu0 %v98
  %v713 = vpop.f32.mrb[0].mxu0
  %v714 = vadd.f32 0.0, %v713
  %v715 = vpop.f32.mrb[0].mxu0
  %716 = vmatprep.mubr.f32.mxu0 0.0
  %717 = vmatmul.mubr.f32.gmra.mrb[0].mxu0 %v99
  %v718 = vpop.f32.mrb[0].mxu0
  %v719 = vadd.f32 0.0, %v718
  %v720 = vpop.f32.mrb[0].mxu0
  %721 = vdwg.mxu0
  %v722 = vlaneseq
  %v723 = vshrl.u32 %v722, 7
  %v724 = vsub.s32 4, %v723
  %v725 = vrot.slane %v124, %v724
  %v726 = vmul.f32 %v684, %v725
  %v727 = vmul.f32 %v689, %v725
  %v728 = vmul.f32 %v694, %v725
  %v729 = vmul.f32 %v699, %v725
  %v730 = vmul.f32 %v704, %v725
  %v731 = vmul.f32 %v709, %v725
  %v732 = vmul.f32 %v714, %v725
  %v733 = vmul.f32 %v719, %v725
  %v734 = vadd.f32 %v609, %v726
  %v735 = vadd.f32 %v610, %v727
  %v736 = vadd.f32 %v611, %v728
  %v737 = vadd.f32 %v612, %v729
  %v738 = vadd.f32 %v613, %v730
  %v739 = vadd.f32 %v614, %v731
  %v740 = vadd.f32 %v615, %v732
  %v741 = vadd.f32 %v616, %v733
  %742 = vmatprep.subr.mxu0 0.0
  %743 = vmatpush1.msra.mxu0 %v44
  %744 = vmatprep.subr.mxu0 0.0
  %745 = vmatpush1.msra.mxu0 %v45
  %746 = vmatprep.subr.mxu0 0.0
  %747 = vmatpush1.msra.mxu0 %v46
  %748 = vmatprep.subr.mxu0 0.0
  %749 = vmatpush1.msra.mxu0 %v47
  %750 = vmatprep.subr.mxu0 0.0
  %751 = vmatpush1.msra.mxu0 %v48
  %752 = vmatprep.subr.mxu0 0.0
  %753 = vmatpush1.msra.mxu0 %v49
  %754 = vmatprep.subr.mxu0 0.0
  %755 = vmatpush1.msra.mxu0 %v50
  %756 = vmatprep.subr.mxu0 0.0
  %757 = vmatpush1.msra.mxu0 %v51
  %758 = vmatprep.subr.mxu0 0.0
  %759 = vmatpush1.msra.mxu0 %v52
  %760 = vmatprep.subr.mxu0 0.0
  %761 = vmatpush1.msra.mxu0 %v53
  %762 = vmatprep.subr.mxu0 0.0
  %763 = vmatpush1.msra.mxu0 %v54
  %764 = vmatprep.subr.mxu0 0.0
  %765 = vmatpush1.msra.mxu0 %v55
  %766 = vmatprep.subr.mxu0 0.0
  %767 = vmatpush1.msra.mxu0 %v56
  %768 = vmatprep.subr.mxu0 0.0
  %769 = vmatpush1.msra.mxu0 %v57
  %770 = vmatprep.subr.mxu0 0.0
  %771 = vmatpush1.msra.mxu0 %v58
  %772 = vmatprep.subr.mxu0 0.0
  %773 = vmatpush1.msra.mxu0 %v59
  %774 = vmatprep.subr.mxu0 0.0
  %775 = vmatpush1.msra.mxu0 0.0
  %776 = vmatprep.subr.mxu0 0.0
  %777 = vmatpush1.msra.mxu0 0.0
  %778 = vmatprep.subr.mxu0 0.0
  %779 = vmatpush1.msra.mxu0 0.0
  %780 = vmatprep.subr.mxu0 0.0
  %781 = vmatpush1.msra.mxu0 0.0
  %782 = vmatprep.subr.mxu0 0.0
  %783 = vmatpush1.msra.mxu0 0.0
  %784 = vmatprep.subr.mxu0 0.0
  %785 = vmatpush1.msra.mxu0 0.0
  %786 = vmatprep.subr.mxu0 0.0
  %787 = vmatpush1.msra.mxu0 0.0
  %788 = vmatprep.subr.mxu0 0.0
  %789 = vmatpush1.msra.mxu0 0.0
  %790 = vmatprep.subr.mxu0 0.0
  %791 = vmatpush1.msra.mxu0 0.0
  %792 = vmatprep.subr.mxu0 0.0
  %793 = vmatpush1.msra.mxu0 0.0
  %794 = vmatprep.subr.mxu0 0.0
  %795 = vmatpush1.msra.mxu0 0.0
  %796 = vmatprep.subr.mxu0 0.0
  %797 = vmatpush1.msra.mxu0 0.0
  %798 = vmatprep.subr.mxu0 0.0
  %799 = vmatpush1.msra.mxu0 0.0
  %800 = vmatprep.subr.mxu0 0.0
  %801 = vmatpush1.msra.mxu0 0.0
  %802 = vmatprep.subr.mxu0 0.0
  %803 = vmatpush1.msra.mxu0 0.0
  %804 = vmatprep.subr.mxu0 0.0
  %805 = vmatpush1.msra.mxu0 0.0
  %806 = vmatprep.mubr.f32.mxu0 0.0
  %807 = vmatmul.mubr.f32.gmra.mrb[0].mxu0 %v100
  %v808 = vpop.f32.mrb[0].mxu0
  %v809 = vadd.f32 0.0, %v808
  %v810 = vpop.f32.mrb[0].mxu0
  %811 = vmatprep.mubr.f32.mxu0 0.0
  %812 = vmatmul.mubr.f32.gmra.mrb[0].mxu0 %v101
  %v813 = vpop.f32.mrb[0].mxu0
  %v814 = vadd.f32 0.0, %v813
  %v815 = vpop.f32.mrb[0].mxu0
  %816 = vmatprep.mubr.f32.mxu0 0.0
  %817 = vmatmul.mubr.f32.gmra.mrb[0].mxu0 %v102
  %v818 = vpop.f32.mrb[0].mxu0
  %v819 = vadd.f32 0.0, %v818
  %v820 = vpop.f32.mrb[0].mxu0
  %821 = vmatprep.mubr.f32.mxu0 0.0
  %822 = vmatmul.mubr.f32.gmra.mrb[0].mxu0 %v103
  %v823 = vpop.f32.mrb[0].mxu0
  %v824 = vadd.f32 0.0, %v823
  %v825 = vpop.f32.mrb[0].mxu0
  %826 = vmatprep.mubr.f32.mxu0 0.0
  %827 = vmatmul.mubr.f32.gmra.mrb[0].mxu0 %v104
  %v828 = vpop.f32.mrb[0].mxu0
  %v829 = vadd.f32 0.0, %v828
  %v830 = vpop.f32.mrb[0].mxu0
  %831 = vmatprep.mubr.f32.mxu0 0.0
  %832 = vmatmul.mubr.f32.gmra.mrb[0].mxu0 %v105
  %v833 = vpop.f32.mrb[0].mxu0
  %v834 = vadd.f32 0.0, %v833
  %v835 = vpop.f32.mrb[0].mxu0
  %836 = vmatprep.mubr.f32.mxu0 0.0
  %837 = vmatmul.mubr.f32.gmra.mrb[0].mxu0 %v106
  %v838 = vpop.f32.mrb[0].mxu0
  %v839 = vadd.f32 0.0, %v838
  %v840 = vpop.f32.mrb[0].mxu0
  %841 = vmatprep.mubr.f32.mxu0 0.0
  %842 = vmatmul.mubr.f32.gmra.mrb[0].mxu0 %v107
  %v843 = vpop.f32.mrb[0].mxu0
  %v844 = vadd.f32 0.0, %v843
  %v845 = vpop.f32.mrb[0].mxu0
  %846 = vdwg.mxu0
  %v847 = vlaneseq
  %v848 = vshrl.u32 %v847, 7
  %v849 = vsub.s32 5, %v848
  %v850 = vrot.slane %v124, %v849
  %v851 = vmul.f32 %v809, %v850
  %v852 = vmul.f32 %v814, %v850
  %v853 = vmul.f32 %v819, %v850
  %v854 = vmul.f32 %v824, %v850
  %v855 = vmul.f32 %v829, %v850
  %v856 = vmul.f32 %v834, %v850
  %v857 = vmul.f32 %v839, %v850
  %v858 = vmul.f32 %v844, %v850
  %v859 = vadd.f32 %v734, %v851
  %v860 = vadd.f32 %v735, %v852
  %v861 = vadd.f32 %v736, %v853
  %v862 = vadd.f32 %v737, %v854
  %v863 = vadd.f32 %v738, %v855
  %v864 = vadd.f32 %v739, %v856
  %v865 = vadd.f32 %v740, %v857
  %v866 = vadd.f32 %v741, %v858
  %867 = vmatprep.subr.mxu0 0.0
  %868 = vmatpush1.msra.mxu0 %v44
  %869 = vmatprep.subr.mxu0 0.0
  %870 = vmatpush1.msra.mxu0 %v45
  %871 = vmatprep.subr.mxu0 0.0
  %872 = vmatpush1.msra.mxu0 %v46
  %873 = vmatprep.subr.mxu0 0.0
  %874 = vmatpush1.msra.mxu0 %v47
  %875 = vmatprep.subr.mxu0 0.0
  %876 = vmatpush1.msra.mxu0 %v48
  %877 = vmatprep.subr.mxu0 0.0
  %878 = vmatpush1.msra.mxu0 %v49
  %879 = vmatprep.subr.mxu0 0.0
  %880 = vmatpush1.msra.mxu0 %v50
  %881 = vmatprep.subr.mxu0 0.0
  %882 = vmatpush1.msra.mxu0 %v51
  %883 = vmatprep.subr.mxu0 0.0
  %884 = vmatpush1.msra.mxu0 %v52
  %885 = vmatprep.subr.mxu0 0.0
  %886 = vmatpush1.msra.mxu0 %v53
  %887 = vmatprep.subr.mxu0 0.0
  %888 = vmatpush1.msra.mxu0 %v54
  %889 = vmatprep.subr.mxu0 0.0
  %890 = vmatpush1.msra.mxu0 %v55
  %891 = vmatprep.subr.mxu0 0.0
  %892 = vmatpush1.msra.mxu0 %v56
  %893 = vmatprep.subr.mxu0 0.0
  %894 = vmatpush1.msra.mxu0 %v57
  %895 = vmatprep.subr.mxu0 0.0
  %896 = vmatpush1.msra.mxu0 %v58
  %897 = vmatprep.subr.mxu0 0.0
  %898 = vmatpush1.msra.mxu0 %v59
  %899 = vmatprep.subr.mxu0 0.0
  %900 = vmatpush1.msra.mxu0 0.0
  %901 = vmatprep.subr.mxu0 0.0
  %902 = vmatpush1.msra.mxu0 0.0
  %903 = vmatprep.subr.mxu0 0.0
  %904 = vmatpush1.msra.mxu0 0.0
  %905 = vmatprep.subr.mxu0 0.0
  %906 = vmatpush1.msra.mxu0 0.0
  %907 = vmatprep.subr.mxu0 0.0
  %908 = vmatpush1.msra.mxu0 0.0
  %909 = vmatprep.subr.mxu0 0.0
  %910 = vmatpush1.msra.mxu0 0.0
  %911 = vmatprep.subr.mxu0 0.0
  %912 = vmatpush1.msra.mxu0 0.0
  %913 = vmatprep.subr.mxu0 0.0
  %914 = vmatpush1.msra.mxu0 0.0
  %915 = vmatprep.subr.mxu0 0.0
  %916 = vmatpush1.msra.mxu0 0.0
  %917 = vmatprep.subr.mxu0 0.0
  %918 = vmatpush1.msra.mxu0 0.0
  %919 = vmatprep.subr.mxu0 0.0
  %920 = vmatpush1.msra.mxu0 0.0
  %921 = vmatprep.subr.mxu0 0.0
  %922 = vmatpush1.msra.mxu0 0.0
  %923 = vmatprep.subr.mxu0 0.0
  %924 = vmatpush1.msra.mxu0 0.0
  %925 = vmatprep.subr.mxu0 0.0
  %926 = vmatpush1.msra.mxu0 0.0
  %927 = vmatprep.subr.mxu0 0.0
  %928 = vmatpush1.msra.mxu0 0.0
  %929 = vmatprep.subr.mxu0 0.0
  %930 = vmatpush1.msra.mxu0 0.0
  %931 = vmatprep.mubr.f32.mxu0 0.0
  %932 = vmatmul.mubr.f32.gmra.mrb[0].mxu0 %v108
  %v933 = vpop.f32.mrb[0].mxu0
  %v934 = vadd.f32 0.0, %v933
  %v935 = vpop.f32.mrb[0].mxu0
  %936 = vmatprep.mubr.f32.mxu0 0.0
  %937 = vmatmul.mubr.f32.gmra.mrb[0].mxu0 %v109
  %v938 = vpop.f32.mrb[0].mxu0
  %v939 = vadd.f32 0.0, %v938
  %v940 = vpop.f32.mrb[0].mxu0
  %941 = vmatprep.mubr.f32.mxu0 0.0
  %942 = vmatmul.mubr.f32.gmra.mrb[0].mxu0 %v110
  %v943 = vpop.f32.mrb[0].mxu0
  %v944 = vadd.f32 0.0, %v943
  %v945 = vpop.f32.mrb[0].mxu0
  %946 = vmatprep.mubr.f32.mxu0 0.0
  %947 = vmatmul.mubr.f32.gmra.mrb[0].mxu0 %v111
  %v948 = vpop.f32.mrb[0].mxu0
  %v949 = vadd.f32 0.0, %v948
  %v950 = vpop.f32.mrb[0].mxu0
  %951 = vmatprep.mubr.f32.mxu0 0.0
  %952 = vmatmul.mubr.f32.gmra.mrb[0].mxu0 %v112
  %v953 = vpop.f32.mrb[0].mxu0
  %v954 = vadd.f32 0.0, %v953
  %v955 = vpop.f32.mrb[0].mxu0
  %956 = vmatprep.mubr.f32.mxu0 0.0
  %957 = vmatmul.mubr.f32.gmra.mrb[0].mxu0 %v113
  %v958 = vpop.f32.mrb[0].mxu0
  %v959 = vadd.f32 0.0, %v958
  %v960 = vpop.f32.mrb[0].mxu0
  %961 = vmatprep.mubr.f32.mxu0 0.0
  %962 = vmatmul.mubr.f32.gmra.mrb[0].mxu0 %v114
  %v963 = vpop.f32.mrb[0].mxu0
  %v964 = vadd.f32 0.0, %v963
  %v965 = vpop.f32.mrb[0].mxu0
  %966 = vmatprep.mubr.f32.mxu0 0.0
  %967 = vmatmul.mubr.f32.gmra.mrb[0].mxu0 %v115
  %v968 = vpop.f32.mrb[0].mxu0
  %v969 = vadd.f32 0.0, %v968
  %v970 = vpop.f32.mrb[0].mxu0
  %971 = vdwg.mxu0
  %v972 = vlaneseq
  %v973 = vshrl.u32 %v972, 7
  %v974 = vsub.s32 6, %v973
  %v975 = vrot.slane %v124, %v974
  %v976 = vmul.f32 %v934, %v975
  %v977 = vmul.f32 %v939, %v975
  %v978 = vmul.f32 %v944, %v975
  %v979 = vmul.f32 %v949, %v975
  %v980 = vmul.f32 %v954, %v975
  %v981 = vmul.f32 %v959, %v975
  %v982 = vmul.f32 %v964, %v975
  %v983 = vmul.f32 %v969, %v975
  %v984 = vadd.f32 %v859, %v976
  %v985 = vadd.f32 %v860, %v977
  %v986 = vadd.f32 %v861, %v978
  %v987 = vadd.f32 %v862, %v979
  %v988 = vadd.f32 %v863, %v980
  %v989 = vadd.f32 %v864, %v981
  %v990 = vadd.f32 %v865, %v982
  %v991 = vadd.f32 %v866, %v983
  %992 = vmatprep.subr.mxu0 0.0
  %993 = vmatpush1.msra.mxu0 %v44
  %994 = vmatprep.subr.mxu0 0.0
  %995 = vmatpush1.msra.mxu0 %v45
  %996 = vmatprep.subr.mxu0 0.0
  %997 = vmatpush1.msra.mxu0 %v46
  %998 = vmatprep.subr.mxu0 0.0
  %999 = vmatpush1.msra.mxu0 %v47
  %1000 = vmatprep.subr.mxu0 0.0
  %1001 = vmatpush1.msra.mxu0 %v48
  %1002 = vmatprep.subr.mxu0 0.0
  %1003 = vmatpush1.msra.mxu0 %v49
  %1004 = vmatprep.subr.mxu0 0.0
  %1005 = vmatpush1.msra.mxu0 %v50
  %1006 = vmatprep.subr.mxu0 0.0
  %1007 = vmatpush1.msra.mxu0 %v51
  %1008 = vmatprep.subr.mxu0 0.0
  %1009 = vmatpush1.msra.mxu0 %v52
  %1010 = vmatprep.subr.mxu0 0.0
  %1011 = vmatpush1.msra.mxu0 %v53
  %1012 = vmatprep.subr.mxu0 0.0
  %1013 = vmatpush1.msra.mxu0 %v54
  %1014 = vmatprep.subr.mxu0 0.0
  %1015 = vmatpush1.msra.mxu0 %v55
  %1016 = vmatprep.subr.mxu0 0.0
  %1017 = vmatpush1.msra.mxu0 %v56
  %1018 = vmatprep.subr.mxu0 0.0
  %1019 = vmatpush1.msra.mxu0 %v57
  %1020 = vmatprep.subr.mxu0 0.0
  %1021 = vmatpush1.msra.mxu0 %v58
  %1022 = vmatprep.subr.mxu0 0.0
  %1023 = vmatpush1.msra.mxu0 %v59
  %1024 = vmatprep.subr.mxu0 0.0
  %1025 = vmatpush1.msra.mxu0 0.0
  %1026 = vmatprep.subr.mxu0 0.0
  %1027 = vmatpush1.msra.mxu0 0.0
  %1028 = vmatprep.subr.mxu0 0.0
  %1029 = vmatpush1.msra.mxu0 0.0
  %1030 = vmatprep.subr.mxu0 0.0
  %1031 = vmatpush1.msra.mxu0 0.0
  %1032 = vmatprep.subr.mxu0 0.0
  %1033 = vmatpush1.msra.mxu0 0.0
  %1034 = vmatprep.subr.mxu0 0.0
  %1035 = vmatpush1.msra.mxu0 0.0
  %1036 = vmatprep.subr.mxu0 0.0
  %1037 = vmatpush1.msra.mxu0 0.0
  %1038 = vmatprep.subr.mxu0 0.0
  %1039 = vmatpush1.msra.mxu0 0.0
  %1040 = vmatprep.subr.mxu0 0.0
  %1041 = vmatpush1.msra.mxu0 0.0
  %1042 = vmatprep.subr.mxu0 0.0
  %1043 = vmatpush1.msra.mxu0 0.0
  %1044 = vmatprep.subr.mxu0 0.0
  %1045 = vmatpush1.msra.mxu0 0.0
  %1046 = vmatprep.subr.mxu0 0.0
  %1047 = vmatpush1.msra.mxu0 0.0
  %1048 = vmatprep.subr.mxu0 0.0
  %1049 = vmatpush1.msra.mxu0 0.0
  %1050 = vmatprep.subr.mxu0 0.0
  %1051 = vmatpush1.msra.mxu0 0.0
  %1052 = vmatprep.subr.mxu0 0.0
  %1053 = vmatpush1.msra.mxu0 0.0
  %1054 = vmatprep.subr.mxu0 0.0
  %1055 = vmatpush1.msra.mxu0 0.0
  %1056 = vmatprep.mubr.f32.mxu0 0.0
  %1057 = vmatmul.mubr.f32.gmra.mrb[0].mxu0 %v116
  %v1058 = vpop.f32.mrb[0].mxu0
  %v1059 = vadd.f32 0.0, %v1058
  %v1060 = vpop.f32.mrb[0].mxu0
  %1061 = vmatprep.mubr.f32.mxu0 0.0
  %1062 = vmatmul.mubr.f32.gmra.mrb[0].mxu0 %v117
  %v1063 = vpop.f32.mrb[0].mxu0
  %v1064 = vadd.f32 0.0, %v1063
  %v1065 = vpop.f32.mrb[0].mxu0
  %1066 = vmatprep.mubr.f32.mxu0 0.0
  %1067 = vmatmul.mubr.f32.gmra.mrb[0].mxu0 %v118
  %v1068 = vpop.f32.mrb[0].mxu0
  %v1069 = vadd.f32 0.0, %v1068
  %v1070 = vpop.f32.mrb[0].mxu0
  %1071 = vmatprep.mubr.f32.mxu0 0.0
  %1072 = vmatmul.mubr.f32.gmra.mrb[0].mxu0 %v119
  %v1073 = vpop.f32.mrb[0].mxu0
  %v1074 = vadd.f32 0.0, %v1073
  %v1075 = vpop.f32.mrb[0].mxu0
  %1076 = vmatprep.mubr.f32.mxu0 0.0
  %1077 = vmatmul.mubr.f32.gmra.mrb[0].mxu0 %v120
  %v1078 = vpop.f32.mrb[0].mxu0
  %v1079 = vadd.f32 0.0, %v1078
  %v1080 = vpop.f32.mrb[0].mxu0
  %1081 = vmatprep.mubr.f32.mxu0 0.0
  %1082 = vmatmul.mubr.f32.gmra.mrb[0].mxu0 %v121
  %v1083 = vpop.f32.mrb[0].mxu0
  %v1084 = vadd.f32 0.0, %v1083
  %v1085 = vpop.f32.mrb[0].mxu0
  %1086 = vmatprep.mubr.f32.mxu0 0.0
  %1087 = vmatmul.mubr.f32.gmra.mrb[0].mxu0 %v122
  %v1088 = vpop.f32.mrb[0].mxu0
  %v1089 = vadd.f32 0.0, %v1088
  %v1090 = vpop.f32.mrb[0].mxu0
  %1091 = vmatprep.mubr.f32.mxu0 0.0
  %1092 = vmatmul.mubr.f32.gmra.mrb[0].mxu0 %v123
  %v1093 = vpop.f32.mrb[0].mxu0
  %v1094 = vadd.f32 0.0, %v1093
  %v1095 = vpop.f32.mrb[0].mxu0
  %1096 = vdwg.mxu0
  %v1097 = vlaneseq
  %v1098 = vshrl.u32 %v1097, 7
  %v1099 = vsub.s32 7, %v1098
  %v1100 = vrot.slane %v124, %v1099
  %v1101 = vmul.f32 %v1059, %v1100
  %v1102 = vmul.f32 %v1064, %v1100
  %v1103 = vmul.f32 %v1069, %v1100
  %v1104 = vmul.f32 %v1074, %v1100
  %v1105 = vmul.f32 %v1079, %v1100
  %v1106 = vmul.f32 %v1084, %v1100
  %v1107 = vmul.f32 %v1089, %v1100
  %v1108 = vmul.f32 %v1094, %v1100
  %v1109 = vadd.f32 %v984, %v1101
  %v1110 = vadd.f32 %v985, %v1102
  %v1111 = vadd.f32 %v986, %v1103
  %v1112 = vadd.f32 %v987, %v1104
  %v1113 = vadd.f32 %v988, %v1105
  %v1114 = vadd.f32 %v989, %v1106
  %v1115 = vadd.f32 %v990, %v1107
  %v1116 = vadd.f32 %v991, %v1108
  %v1117 = vld [vmem:[%s3] sm:$0xff]
  %v1118 = vld [vmem:[%s3 + $0x8] sm:$0xff]
  %v1119 = vld [vmem:[%s3 + $0x10] sm:$0xff]
  %v1120 = vld [vmem:[%s3 + $0x18] sm:$0xff]
  %v1121 = vld [vmem:[%s3 + $0x20] sm:$0xff]
  %v1122 = vld [vmem:[%s3 + $0x28] sm:$0xff]
  %v1123 = vld [vmem:[%s3 + $0x30] sm:$0xff]
  %v1124 = vld [vmem:[%s3 + $0x38] sm:$0xff]
  %v1125 = vld [vmem:[%s4] sm:$0x3]
  %v1127 = vlaneseq
  %v1128 = vshrl.u32 %v1127, 7
  %v1129 = vsub.s32 0, %v1128
  %v1130 = vrot.slane %v1125, %v1129
  %v1131 = vlaneseq
  %v1132 = vshrl.u32 %v1131, 7
  %v1133 = vsub.s32 1, %v1132
  %v1134 = vrot.slane %v1125, %v1133
  %vm1137 = vcmask 261120
  %v1139 = vsel %vm1137, %v1109, 0
  %v1142 = vsel %vm1137, %v1110, 0
  %v1145 = vsel %vm1137, %v1111, 0
  %v1148 = vsel %vm1137, %v1112, 0
  %v1151 = vsel %vm1137, %v1113, 0
  %v1154 = vsel %vm1137, %v1114, 0
  %v1157 = vsel %vm1137, %v1115, 0
  %v1160 = vsel %vm1137, %v1116, 0
  %1162 = vmatprep.subr.mxu0 %v1118
  %1163 = vmatpush1.msra.mxu0 %v1117
  %1164 = vmatprep.subr.mxu0 %v1120
  %1165 = vmatpush1.msra.mxu0 %v1119
  %1166 = vmatprep.subr.mxu0 %v1122
  %1167 = vmatpush1.msra.mxu0 %v1121
  %1168 = vmatprep.subr.mxu0 %v1124
  %1169 = vmatpush1.msra.mxu0 %v1123
  %1170 = vmatprep.subr.mxu0 0.0
  %1171 = vmatpush1.msra.mxu0 0.0
  %1172 = vmatprep.subr.mxu0 0.0
  %1173 = vmatpush1.msra.mxu0 0.0
  %1174 = vmatprep.subr.mxu0 0.0
  %1175 = vmatpush1.msra.mxu0 0.0
  %1176 = vmatprep.subr.mxu0 0.0
  %1177 = vmatpush1.msra.mxu0 0.0
  %1178 = vmatprep.subr.mxu0 0.0
  %1179 = vmatpush1.msra.mxu0 0.0
  %1180 = vmatprep.subr.mxu0 0.0
  %1181 = vmatpush1.msra.mxu0 0.0
  %1182 = vmatprep.subr.mxu0 0.0
  %1183 = vmatpush1.msra.mxu0 0.0
  %1184 = vmatprep.subr.mxu0 0.0
  %1185 = vmatpush1.msra.mxu0 0.0
  %1186 = vmatprep.subr.mxu0 0.0
  %1187 = vmatpush1.msra.mxu0 0.0
  %1188 = vmatprep.subr.mxu0 0.0
  %1189 = vmatpush1.msra.mxu0 0.0
  %1190 = vmatprep.subr.mxu0 0.0
  %1191 = vmatpush1.msra.mxu0 0.0
  %1192 = vmatprep.subr.mxu0 0.0
  %1193 = vmatpush1.msra.mxu0 0.0
  %1194 = vmatprep.subr.mxu0 0.0
  %1195 = vmatpush1.msra.mxu0 0.0
  %1196 = vmatprep.subr.mxu0 0.0
  %1197 = vmatpush1.msra.mxu0 0.0
  %1198 = vmatprep.subr.mxu0 0.0
  %1199 = vmatpush1.msra.mxu0 0.0
  %1200 = vmatprep.subr.mxu0 0.0
  %1201 = vmatpush1.msra.mxu0 0.0
  %1202 = vmatprep.subr.mxu0 0.0
  %1203 = vmatpush1.msra.mxu0 0.0
  %1204 = vmatprep.subr.mxu0 0.0
  %1205 = vmatpush1.msra.mxu0 0.0
  %1206 = vmatprep.subr.mxu0 0.0
  %1207 = vmatpush1.msra.mxu0 0.0
  %1208 = vmatprep.subr.mxu0 0.0
  %1209 = vmatpush1.msra.mxu0 0.0
  %1210 = vmatprep.subr.mxu0 0.0
  %1211 = vmatpush1.msra.mxu0 0.0
  %1212 = vmatprep.subr.mxu0 0.0
  %1213 = vmatpush1.msra.mxu0 0.0
  %1214 = vmatprep.subr.mxu0 0.0
  %1215 = vmatpush1.msra.mxu0 0.0
  %1216 = vmatprep.subr.mxu0 0.0
  %1217 = vmatpush1.msra.mxu0 0.0
  %1218 = vmatprep.subr.mxu0 0.0
  %1219 = vmatpush1.msra.mxu0 0.0
  %1220 = vmatprep.subr.mxu0 0.0
  %1221 = vmatpush1.msra.mxu0 0.0
  %1222 = vmatprep.subr.mxu0 0.0
  %1223 = vmatpush1.msra.mxu0 0.0
  %1224 = vmatprep.subr.mxu0 0.0
  %1225 = vmatpush1.msra.mxu0 0.0
  %1226 = vmatprep.mubr.f32.mxu0 0.0
  %1227 = vmatmul.mubr.f32.gmra.mrb[0].mxu0 %v1139
  %v1228 = vpop.f32.mrb[0].mxu0
  %v1229 = vadd.f32 %v1130, %v1228
  %v1230 = vpop.f32.mrb[0].mxu0
  %v1231 = vadd.f32 %v1134, %v1230
  %1232 = vmatprep.mubr.f32.mxu0 0.0
  %1233 = vmatmul.mubr.f32.gmra.mrb[0].mxu0 %v1142
  %v1234 = vpop.f32.mrb[0].mxu0
  %v1235 = vadd.f32 %v1130, %v1234
  %v1236 = vpop.f32.mrb[0].mxu0
  %v1237 = vadd.f32 %v1134, %v1236
  %1238 = vmatprep.mubr.f32.mxu0 0.0
  %1239 = vmatmul.mubr.f32.gmra.mrb[0].mxu0 %v1145
  %v1240 = vpop.f32.mrb[0].mxu0
  %v1241 = vadd.f32 %v1130, %v1240
  %v1242 = vpop.f32.mrb[0].mxu0
  %v1243 = vadd.f32 %v1134, %v1242
  %1244 = vmatprep.mubr.f32.mxu0 0.0
  %1245 = vmatmul.mubr.f32.gmra.mrb[0].mxu0 %v1148
  %v1246 = vpop.f32.mrb[0].mxu0
  %v1247 = vadd.f32 %v1130, %v1246
  %v1248 = vpop.f32.mrb[0].mxu0
  %v1249 = vadd.f32 %v1134, %v1248
  %1250 = vmatprep.mubr.f32.mxu0 0.0
  %1251 = vmatmul.mubr.f32.gmra.mrb[0].mxu0 %v1151
  %v1252 = vpop.f32.mrb[0].mxu0
  %v1253 = vadd.f32 %v1130, %v1252
  %v1254 = vpop.f32.mrb[0].mxu0
  %v1255 = vadd.f32 %v1134, %v1254
  %1256 = vmatprep.mubr.f32.mxu0 0.0
  %1257 = vmatmul.mubr.f32.gmra.mrb[0].mxu0 %v1154
  %v1258 = vpop.f32.mrb[0].mxu0
  %v1259 = vadd.f32 %v1130, %v1258
  %v1260 = vpop.f32.mrb[0].mxu0
  %v1261 = vadd.f32 %v1134, %v1260
  %1262 = vmatprep.mubr.f32.mxu0 0.0
  %1263 = vmatmul.mubr.f32.gmra.mrb[0].mxu0 %v1157
  %v1264 = vpop.f32.mrb[0].mxu0
  %v1265 = vadd.f32 %v1130, %v1264
  %v1266 = vpop.f32.mrb[0].mxu0
  %v1267 = vadd.f32 %v1134, %v1266
  %1268 = vmatprep.mubr.f32.mxu0 0.0
  %1269 = vmatmul.mubr.f32.gmra.mrb[0].mxu0 %v1160
  %v1270 = vpop.f32.mrb[0].mxu0
  %v1271 = vadd.f32 %v1130, %v1270
  %v1272 = vpop.f32.mrb[0].mxu0
  %v1273 = vadd.f32 %v1134, %v1272
  %1274 = vdwg.mxu0
  %v1275 = vmax.f32 %v1229, 0.0
  %v1276 = vmax.f32 %v1231, 0.0
  %v1277 = vmax.f32 %v1235, 0.0
  %v1278 = vmax.f32 %v1237, 0.0
  %v1279 = vmax.f32 %v1241, 0.0
  %v1280 = vmax.f32 %v1243, 0.0
  %v1281 = vmax.f32 %v1247, 0.0
  %v1282 = vmax.f32 %v1249, 0.0
  %v1283 = vmax.f32 %v1253, 0.0
  %v1284 = vmax.f32 %v1255, 0.0
  %v1285 = vmax.f32 %v1259, 0.0
  %v1286 = vmax.f32 %v1261, 0.0
  %v1287 = vmax.f32 %v1265, 0.0
  %v1288 = vmax.f32 %v1267, 0.0
  %v1289 = vmax.f32 %v1271, 0.0
  %v1290 = vmax.f32 %v1273, 0.0
  %v1291 = vld [vmem:[%s5] sm:$0xff]
  %v1292 = vld [vmem:[%s5 + $0x8] sm:$0xff]
  %v1293 = vld [vmem:[%s5 + $0x10] sm:$0xff]
  %v1294 = vld [vmem:[%s5 + $0x18] sm:$0xff]
  %v1295 = vld [vmem:[%s5 + $0x20] sm:$0xff]
  %v1296 = vld [vmem:[%s5 + $0x28] sm:$0xff]
  %v1297 = vld [vmem:[%s5 + $0x30] sm:$0xff]
  %v1298 = vld [vmem:[%s5 + $0x38] sm:$0xff]
  %v1299 = vld [vmem:[%s5 + $0x40] sm:$0xff]
  %v1300 = vld [vmem:[%s5 + $0x48] sm:$0xff]
  %v1301 = vld [vmem:[%s5 + $0x50] sm:$0xff]
  %v1302 = vld [vmem:[%s5 + $0x58] sm:$0xff]
  %v1303 = vld [vmem:[%s5 + $0x60] sm:$0xff]
  %v1304 = vld [vmem:[%s5 + $0x68] sm:$0xff]
  %v1305 = vld [vmem:[%s5 + $0x70] sm:$0xff]
  %v1306 = vld [vmem:[%s5 + $0x78] sm:$0xff]
  %v1307 = vld [vmem:[%s6] sm:$0xff]
  %v1308 = vld [vmem:[%s6 + $0x8] sm:$0xff]
  %vm1309 = vcmask 523264
  %v1311 = vsel %vm1309, %v1291, 0
  %v1314 = vsel %vm1309, %v1292, 0
  %1316 = vmatprep.subr.mxu0 %v1276
  %1317 = vmatpush1.msra.mxu0 %v1275
  %1318 = vmatprep.subr.mxu0 %v1278
  %1319 = vmatpush1.msra.mxu0 %v1277
  %1320 = vmatprep.subr.mxu0 %v1280
  %1321 = vmatpush1.msra.mxu0 %v1279
  %1322 = vmatprep.subr.mxu0 %v1282
  %1323 = vmatpush1.msra.mxu0 %v1281
  %1324 = vmatprep.subr.mxu0 %v1284
  %1325 = vmatpush1.msra.mxu0 %v1283
  %1326 = vmatprep.subr.mxu0 %v1286
  %1327 = vmatpush1.msra.mxu0 %v1285
  %1328 = vmatprep.subr.mxu0 %v1288
  %1329 = vmatpush1.msra.mxu0 %v1287
  %1330 = vmatprep.subr.mxu0 %v1290
  %1331 = vmatpush1.msra.mxu0 %v1289
  %1332 = vmatprep.subr.mxu0 0.0
  %1333 = vmatpush1.msra.mxu0 0.0
  %1334 = vmatprep.subr.mxu0 0.0
  %1335 = vmatpush1.msra.mxu0 0.0
  %1336 = vmatprep.subr.mxu0 0.0
  %1337 = vmatpush1.msra.mxu0 0.0
  %1338 = vmatprep.subr.mxu0 0.0
  %1339 = vmatpush1.msra.mxu0 0.0
  %1340 = vmatprep.subr.mxu0 0.0
  %1341 = vmatpush1.msra.mxu0 0.0
  %1342 = vmatprep.subr.mxu0 0.0
  %1343 = vmatpush1.msra.mxu0 0.0
  %1344 = vmatprep.subr.mxu0 0.0
  %1345 = vmatpush1.msra.mxu0 0.0
  %1346 = vmatprep.subr.mxu0 0.0
  %1347 = vmatpush1.msra.mxu0 0.0
  %1348 = vmatprep.subr.mxu0 0.0
  %1349 = vmatpush1.msra.mxu0 0.0
  %1350 = vmatprep.subr.mxu0 0.0
  %1351 = vmatpush1.msra.mxu0 0.0
  %1352 = vmatprep.subr.mxu0 0.0
  %1353 = vmatpush1.msra.mxu0 0.0
  %1354 = vmatprep.subr.mxu0 0.0
  %1355 = vmatpush1.msra.mxu0 0.0
  %1356 = vmatprep.subr.mxu0 0.0
  %1357 = vmatpush1.msra.mxu0 0.0
  %1358 = vmatprep.subr.mxu0 0.0
  %1359 = vmatpush1.msra.mxu0 0.0
  %1360 = vmatprep.subr.mxu0 0.0
  %1361 = vmatpush1.msra.mxu0 0.0
  %1362 = vmatprep.subr.mxu0 0.0
  %1363 = vmatpush1.msra.mxu0 0.0
  %1364 = vmatprep.subr.mxu0 0.0
  %1365 = vmatpush1.msra.mxu0 0.0
  %1366 = vmatprep.subr.mxu0 0.0
  %1367 = vmatpush1.msra.mxu0 0.0
  %1368 = vmatprep.subr.mxu0 0.0
  %1369 = vmatpush1.msra.mxu0 0.0
  %1370 = vmatprep.subr.mxu0 0.0
  %1371 = vmatpush1.msra.mxu0 0.0
  %1372 = vmatprep.subr.mxu0 0.0
  %1373 = vmatpush1.msra.mxu0 0.0
  %1374 = vmatprep.subr.mxu0 0.0
  %1375 = vmatpush1.msra.mxu0 0.0
  %1376 = vmatprep.subr.mxu0 0.0
  %1377 = vmatpush1.msra.mxu0 0.0
  %1378 = vmatprep.subr.mxu0 0.0
  %1379 = vmatpush1.msra.mxu0 0.0
  %1380 = vmatprep.mubr.f32.mxu0 0.0
  %1381 = vmatmul.mubr.f32.gmra.mrb[0].mxu0 %v1311
  %v1382 = vpop.f32.mrb[0].mxu0
  %v1383 = vadd.f32 0.0, %v1382
  %v1384 = vpop.f32.mrb[0].mxu0
  %v1385 = vadd.f32 0.0, %v1384
  %1386 = vmatprep.mubr.f32.mxu0 0.0
  %1387 = vmatmul.mubr.f32.gmra.mrb[0].mxu0 %v1314
  %v1388 = vpop.f32.mrb[0].mxu0
  %v1389 = vadd.f32 0.0, %v1388
  %v1390 = vpop.f32.mrb[0].mxu0
  %v1391 = vadd.f32 0.0, %v1390
  %1392 = vdwg.mxu0
  %v1393 = vlaneseq
  %v1394 = vshrl.u32 %v1393, 7
  %v1395 = vsub.s32 0, %v1394
  %v1396 = vrot.slane %v1307, %v1395
  %v1397 = vlaneseq
  %v1398 = vshrl.u32 %v1397, 7
  %v1399 = vsub.s32 0, %v1398
  %v1400 = vrot.slane %v1308, %v1399
  %v1401 = vmul.f32 %v1383, %v1396
  %v1402 = vmul.f32 %v1385, %v1400
  %v1403 = vmul.f32 %v1389, %v1396
  %v1404 = vmul.f32 %v1391, %v1400
  %v1406 = vsel %vm1309, %v1293, 0
  %v1409 = vsel %vm1309, %v1294, 0
  %1411 = vmatprep.subr.mxu0 %v1276
  %1412 = vmatpush1.msra.mxu0 %v1275
  %1413 = vmatprep.subr.mxu0 %v1278
  %1414 = vmatpush1.msra.mxu0 %v1277
  %1415 = vmatprep.subr.mxu0 %v1280
  %1416 = vmatpush1.msra.mxu0 %v1279
  %1417 = vmatprep.subr.mxu0 %v1282
  %1418 = vmatpush1.msra.mxu0 %v1281
  %1419 = vmatprep.subr.mxu0 %v1284
  %1420 = vmatpush1.msra.mxu0 %v1283
  %1421 = vmatprep.subr.mxu0 %v1286
  %1422 = vmatpush1.msra.mxu0 %v1285
  %1423 = vmatprep.subr.mxu0 %v1288
  %1424 = vmatpush1.msra.mxu0 %v1287
  %1425 = vmatprep.subr.mxu0 %v1290
  %1426 = vmatpush1.msra.mxu0 %v1289
  %1427 = vmatprep.subr.mxu0 0.0
  %1428 = vmatpush1.msra.mxu0 0.0
  %1429 = vmatprep.subr.mxu0 0.0
  %1430 = vmatpush1.msra.mxu0 0.0
  %1431 = vmatprep.subr.mxu0 0.0
  %1432 = vmatpush1.msra.mxu0 0.0
  %1433 = vmatprep.subr.mxu0 0.0
  %1434 = vmatpush1.msra.mxu0 0.0
  %1435 = vmatprep.subr.mxu0 0.0
  %1436 = vmatpush1.msra.mxu0 0.0
  %1437 = vmatprep.subr.mxu0 0.0
  %1438 = vmatpush1.msra.mxu0 0.0
  %1439 = vmatprep.subr.mxu0 0.0
  %1440 = vmatpush1.msra.mxu0 0.0
  %1441 = vmatprep.subr.mxu0 0.0
  %1442 = vmatpush1.msra.mxu0 0.0
  %1443 = vmatprep.subr.mxu0 0.0
  %1444 = vmatpush1.msra.mxu0 0.0
  %1445 = vmatprep.subr.mxu0 0.0
  %1446 = vmatpush1.msra.mxu0 0.0
  %1447 = vmatprep.subr.mxu0 0.0
  %1448 = vmatpush1.msra.mxu0 0.0
  %1449 = vmatprep.subr.mxu0 0.0
  %1450 = vmatpush1.msra.mxu0 0.0
  %1451 = vmatprep.subr.mxu0 0.0
  %1452 = vmatpush1.msra.mxu0 0.0
  %1453 = vmatprep.subr.mxu0 0.0
  %1454 = vmatpush1.msra.mxu0 0.0
  %1455 = vmatprep.subr.mxu0 0.0
  %1456 = vmatpush1.msra.mxu0 0.0
  %1457 = vmatprep.subr.mxu0 0.0
  %1458 = vmatpush1.msra.mxu0 0.0
  %1459 = vmatprep.subr.mxu0 0.0
  %1460 = vmatpush1.msra.mxu0 0.0
  %1461 = vmatprep.subr.mxu0 0.0
  %1462 = vmatpush1.msra.mxu0 0.0
  %1463 = vmatprep.subr.mxu0 0.0
  %1464 = vmatpush1.msra.mxu0 0.0
  %1465 = vmatprep.subr.mxu0 0.0
  %1466 = vmatpush1.msra.mxu0 0.0
  %1467 = vmatprep.subr.mxu0 0.0
  %1468 = vmatpush1.msra.mxu0 0.0
  %1469 = vmatprep.subr.mxu0 0.0
  %1470 = vmatpush1.msra.mxu0 0.0
  %1471 = vmatprep.subr.mxu0 0.0
  %1472 = vmatpush1.msra.mxu0 0.0
  %1473 = vmatprep.subr.mxu0 0.0
  %1474 = vmatpush1.msra.mxu0 0.0
  %1475 = vmatprep.mubr.f32.mxu0 0.0
  %1476 = vmatmul.mubr.f32.gmra.mrb[0].mxu0 %v1406
  %v1477 = vpop.f32.mrb[0].mxu0
  %v1478 = vadd.f32 0.0, %v1477
  %v1479 = vpop.f32.mrb[0].mxu0
  %v1480 = vadd.f32 0.0, %v1479
  %1481 = vmatprep.mubr.f32.mxu0 0.0
  %1482 = vmatmul.mubr.f32.gmra.mrb[0].mxu0 %v1409
  %v1483 = vpop.f32.mrb[0].mxu0
  %v1484 = vadd.f32 0.0, %v1483
  %v1485 = vpop.f32.mrb[0].mxu0
  %v1486 = vadd.f32 0.0, %v1485
  %1487 = vdwg.mxu0
  %v1488 = vlaneseq
  %v1489 = vshrl.u32 %v1488, 7
  %v1490 = vsub.s32 1, %v1489
  %v1491 = vrot.slane %v1307, %v1490
  %v1492 = vlaneseq
  %v1493 = vshrl.u32 %v1492, 7
  %v1494 = vsub.s32 1, %v1493
  %v1495 = vrot.slane %v1308, %v1494
  %v1496 = vmul.f32 %v1478, %v1491
  %v1497 = vmul.f32 %v1480, %v1495
  %v1498 = vmul.f32 %v1484, %v1491
  %v1499 = vmul.f32 %v1486, %v1495
  %v1500 = vadd.f32 %v1401, %v1496
  %v1501 = vadd.f32 %v1402, %v1497
  %v1502 = vadd.f32 %v1403, %v1498
  %v1503 = vadd.f32 %v1404, %v1499
  %v1505 = vsel %vm1309, %v1295, 0
  %v1508 = vsel %vm1309, %v1296, 0
  %1510 = vmatprep.subr.mxu0 %v1276
  %1511 = vmatpush1.msra.mxu0 %v1275
  %1512 = vmatprep.subr.mxu0 %v1278
  %1513 = vmatpush1.msra.mxu0 %v1277
  %1514 = vmatprep.subr.mxu0 %v1280
  %1515 = vmatpush1.msra.mxu0 %v1279
  %1516 = vmatprep.subr.mxu0 %v1282
  %1517 = vmatpush1.msra.mxu0 %v1281
  %1518 = vmatprep.subr.mxu0 %v1284
  %1519 = vmatpush1.msra.mxu0 %v1283
  %1520 = vmatprep.subr.mxu0 %v1286
  %1521 = vmatpush1.msra.mxu0 %v1285
  %1522 = vmatprep.subr.mxu0 %v1288
  %1523 = vmatpush1.msra.mxu0 %v1287
  %1524 = vmatprep.subr.mxu0 %v1290
  %1525 = vmatpush1.msra.mxu0 %v1289
  %1526 = vmatprep.subr.mxu0 0.0
  %1527 = vmatpush1.msra.mxu0 0.0
  %1528 = vmatprep.subr.mxu0 0.0
  %1529 = vmatpush1.msra.mxu0 0.0
  %1530 = vmatprep.subr.mxu0 0.0
  %1531 = vmatpush1.msra.mxu0 0.0
  %1532 = vmatprep.subr.mxu0 0.0
  %1533 = vmatpush1.msra.mxu0 0.0
  %1534 = vmatprep.subr.mxu0 0.0
  %1535 = vmatpush1.msra.mxu0 0.0
  %1536 = vmatprep.subr.mxu0 0.0
  %1537 = vmatpush1.msra.mxu0 0.0
  %1538 = vmatprep.subr.mxu0 0.0
  %1539 = vmatpush1.msra.mxu0 0.0
  %1540 = vmatprep.subr.mxu0 0.0
  %1541 = vmatpush1.msra.mxu0 0.0
  %1542 = vmatprep.subr.mxu0 0.0
  %1543 = vmatpush1.msra.mxu0 0.0
  %1544 = vmatprep.subr.mxu0 0.0
  %1545 = vmatpush1.msra.mxu0 0.0
  %1546 = vmatprep.subr.mxu0 0.0
  %1547 = vmatpush1.msra.mxu0 0.0
  %1548 = vmatprep.subr.mxu0 0.0
  %1549 = vmatpush1.msra.mxu0 0.0
  %1550 = vmatprep.subr.mxu0 0.0
  %1551 = vmatpush1.msra.mxu0 0.0
  %1552 = vmatprep.subr.mxu0 0.0
  %1553 = vmatpush1.msra.mxu0 0.0
  %1554 = vmatprep.subr.mxu0 0.0
  %1555 = vmatpush1.msra.mxu0 0.0
  %1556 = vmatprep.subr.mxu0 0.0
  %1557 = vmatpush1.msra.mxu0 0.0
  %1558 = vmatprep.subr.mxu0 0.0
  %1559 = vmatpush1.msra.mxu0 0.0
  %1560 = vmatprep.subr.mxu0 0.0
  %1561 = vmatpush1.msra.mxu0 0.0
  %1562 = vmatprep.subr.mxu0 0.0
  %1563 = vmatpush1.msra.mxu0 0.0
  %1564 = vmatprep.subr.mxu0 0.0
  %1565 = vmatpush1.msra.mxu0 0.0
  %1566 = vmatprep.subr.mxu0 0.0
  %1567 = vmatpush1.msra.mxu0 0.0
  %1568 = vmatprep.subr.mxu0 0.0
  %1569 = vmatpush1.msra.mxu0 0.0
  %1570 = vmatprep.subr.mxu0 0.0
  %1571 = vmatpush1.msra.mxu0 0.0
  %1572 = vmatprep.subr.mxu0 0.0
  %1573 = vmatpush1.msra.mxu0 0.0
  %1574 = vmatprep.mubr.f32.mxu0 0.0
  %1575 = vmatmul.mubr.f32.gmra.mrb[0].mxu0 %v1505
  %v1576 = vpop.f32.mrb[0].mxu0
  %v1577 = vadd.f32 0.0, %v1576
  %v1578 = vpop.f32.mrb[0].mxu0
  %v1579 = vadd.f32 0.0, %v1578
  %1580 = vmatprep.mubr.f32.mxu0 0.0
  %1581 = vmatmul.mubr.f32.gmra.mrb[0].mxu0 %v1508
  %v1582 = vpop.f32.mrb[0].mxu0
  %v1583 = vadd.f32 0.0, %v1582
  %v1584 = vpop.f32.mrb[0].mxu0
  %v1585 = vadd.f32 0.0, %v1584
  %1586 = vdwg.mxu0
  %v1587 = vlaneseq
  %v1588 = vshrl.u32 %v1587, 7
  %v1589 = vsub.s32 2, %v1588
  %v1590 = vrot.slane %v1307, %v1589
  %v1591 = vlaneseq
  %v1592 = vshrl.u32 %v1591, 7
  %v1593 = vsub.s32 2, %v1592
  %v1594 = vrot.slane %v1308, %v1593
  %v1595 = vmul.f32 %v1577, %v1590
  %v1596 = vmul.f32 %v1579, %v1594
  %v1597 = vmul.f32 %v1583, %v1590
  %v1598 = vmul.f32 %v1585, %v1594
  %v1599 = vadd.f32 %v1500, %v1595
  %v1600 = vadd.f32 %v1501, %v1596
  %v1601 = vadd.f32 %v1502, %v1597
  %v1602 = vadd.f32 %v1503, %v1598
  %v1604 = vsel %vm1309, %v1297, 0
  %v1607 = vsel %vm1309, %v1298, 0
  %1609 = vmatprep.subr.mxu0 %v1276
  %1610 = vmatpush1.msra.mxu0 %v1275
  %1611 = vmatprep.subr.mxu0 %v1278
  %1612 = vmatpush1.msra.mxu0 %v1277
  %1613 = vmatprep.subr.mxu0 %v1280
  %1614 = vmatpush1.msra.mxu0 %v1279
  %1615 = vmatprep.subr.mxu0 %v1282
  %1616 = vmatpush1.msra.mxu0 %v1281
  %1617 = vmatprep.subr.mxu0 %v1284
  %1618 = vmatpush1.msra.mxu0 %v1283
  %1619 = vmatprep.subr.mxu0 %v1286
  %1620 = vmatpush1.msra.mxu0 %v1285
  %1621 = vmatprep.subr.mxu0 %v1288
  %1622 = vmatpush1.msra.mxu0 %v1287
  %1623 = vmatprep.subr.mxu0 %v1290
  %1624 = vmatpush1.msra.mxu0 %v1289
  %1625 = vmatprep.subr.mxu0 0.0
  %1626 = vmatpush1.msra.mxu0 0.0
  %1627 = vmatprep.subr.mxu0 0.0
  %1628 = vmatpush1.msra.mxu0 0.0
  %1629 = vmatprep.subr.mxu0 0.0
  %1630 = vmatpush1.msra.mxu0 0.0
  %1631 = vmatprep.subr.mxu0 0.0
  %1632 = vmatpush1.msra.mxu0 0.0
  %1633 = vmatprep.subr.mxu0 0.0
  %1634 = vmatpush1.msra.mxu0 0.0
  %1635 = vmatprep.subr.mxu0 0.0
  %1636 = vmatpush1.msra.mxu0 0.0
  %1637 = vmatprep.subr.mxu0 0.0
  %1638 = vmatpush1.msra.mxu0 0.0
  %1639 = vmatprep.subr.mxu0 0.0
  %1640 = vmatpush1.msra.mxu0 0.0
  %1641 = vmatprep.subr.mxu0 0.0
  %1642 = vmatpush1.msra.mxu0 0.0
  %1643 = vmatprep.subr.mxu0 0.0
  %1644 = vmatpush1.msra.mxu0 0.0
  %1645 = vmatprep.subr.mxu0 0.0
  %1646 = vmatpush1.msra.mxu0 0.0
  %1647 = vmatprep.subr.mxu0 0.0
  %1648 = vmatpush1.msra.mxu0 0.0
  %1649 = vmatprep.subr.mxu0 0.0
  %1650 = vmatpush1.msra.mxu0 0.0
  %1651 = vmatprep.subr.mxu0 0.0
  %1652 = vmatpush1.msra.mxu0 0.0
  %1653 = vmatprep.subr.mxu0 0.0
  %1654 = vmatpush1.msra.mxu0 0.0
  %1655 = vmatprep.subr.mxu0 0.0
  %1656 = vmatpush1.msra.mxu0 0.0
  %1657 = vmatprep.subr.mxu0 0.0
  %1658 = vmatpush1.msra.mxu0 0.0
  %1659 = vmatprep.subr.mxu0 0.0
  %1660 = vmatpush1.msra.mxu0 0.0
  %1661 = vmatprep.subr.mxu0 0.0
  %1662 = vmatpush1.msra.mxu0 0.0
  %1663 = vmatprep.subr.mxu0 0.0
  %1664 = vmatpush1.msra.mxu0 0.0
  %1665 = vmatprep.subr.mxu0 0.0
  %1666 = vmatpush1.msra.mxu0 0.0
  %1667 = vmatprep.subr.mxu0 0.0
  %1668 = vmatpush1.msra.mxu0 0.0
  %1669 = vmatprep.subr.mxu0 0.0
  %1670 = vmatpush1.msra.mxu0 0.0
  %1671 = vmatprep.subr.mxu0 0.0
  %1672 = vmatpush1.msra.mxu0 0.0
  %1673 = vmatprep.mubr.f32.mxu0 0.0
  %1674 = vmatmul.mubr.f32.gmra.mrb[0].mxu0 %v1604
  %v1675 = vpop.f32.mrb[0].mxu0
  %v1676 = vadd.f32 0.0, %v1675
  %v1677 = vpop.f32.mrb[0].mxu0
  %v1678 = vadd.f32 0.0, %v1677
  %1679 = vmatprep.mubr.f32.mxu0 0.0
  %1680 = vmatmul.mubr.f32.gmra.mrb[0].mxu0 %v1607
  %v1681 = vpop.f32.mrb[0].mxu0
  %v1682 = vadd.f32 0.0, %v1681
  %v1683 = vpop.f32.mrb[0].mxu0
  %v1684 = vadd.f32 0.0, %v1683
  %1685 = vdwg.mxu0
  %v1686 = vlaneseq
  %v1687 = vshrl.u32 %v1686, 7
  %v1688 = vsub.s32 3, %v1687
  %v1689 = vrot.slane %v1307, %v1688
  %v1690 = vlaneseq
  %v1691 = vshrl.u32 %v1690, 7
  %v1692 = vsub.s32 3, %v1691
  %v1693 = vrot.slane %v1308, %v1692
  %v1694 = vmul.f32 %v1676, %v1689
  %v1695 = vmul.f32 %v1678, %v1693
  %v1696 = vmul.f32 %v1682, %v1689
  %v1697 = vmul.f32 %v1684, %v1693
  %v1698 = vadd.f32 %v1599, %v1694
  %v1699 = vadd.f32 %v1600, %v1695
  %v1700 = vadd.f32 %v1601, %v1696
  %v1701 = vadd.f32 %v1602, %v1697
  %v1703 = vsel %vm1309, %v1299, 0
  %v1706 = vsel %vm1309, %v1300, 0
  %1708 = vmatprep.subr.mxu0 %v1276
  %1709 = vmatpush1.msra.mxu0 %v1275
  %1710 = vmatprep.subr.mxu0 %v1278
  %1711 = vmatpush1.msra.mxu0 %v1277
  %1712 = vmatprep.subr.mxu0 %v1280
  %1713 = vmatpush1.msra.mxu0 %v1279
  %1714 = vmatprep.subr.mxu0 %v1282
  %1715 = vmatpush1.msra.mxu0 %v1281
  %1716 = vmatprep.subr.mxu0 %v1284
  %1717 = vmatpush1.msra.mxu0 %v1283
  %1718 = vmatprep.subr.mxu0 %v1286
  %1719 = vmatpush1.msra.mxu0 %v1285
  %1720 = vmatprep.subr.mxu0 %v1288
  %1721 = vmatpush1.msra.mxu0 %v1287
  %1722 = vmatprep.subr.mxu0 %v1290
  %1723 = vmatpush1.msra.mxu0 %v1289
  %1724 = vmatprep.subr.mxu0 0.0
  %1725 = vmatpush1.msra.mxu0 0.0
  %1726 = vmatprep.subr.mxu0 0.0
  %1727 = vmatpush1.msra.mxu0 0.0
  %1728 = vmatprep.subr.mxu0 0.0
  %1729 = vmatpush1.msra.mxu0 0.0
  %1730 = vmatprep.subr.mxu0 0.0
  %1731 = vmatpush1.msra.mxu0 0.0
  %1732 = vmatprep.subr.mxu0 0.0
  %1733 = vmatpush1.msra.mxu0 0.0
  %1734 = vmatprep.subr.mxu0 0.0
  %1735 = vmatpush1.msra.mxu0 0.0
  %1736 = vmatprep.subr.mxu0 0.0
  %1737 = vmatpush1.msra.mxu0 0.0
  %1738 = vmatprep.subr.mxu0 0.0
  %1739 = vmatpush1.msra.mxu0 0.0
  %1740 = vmatprep.subr.mxu0 0.0
  %1741 = vmatpush1.msra.mxu0 0.0
  %1742 = vmatprep.subr.mxu0 0.0
  %1743 = vmatpush1.msra.mxu0 0.0
  %1744 = vmatprep.subr.mxu0 0.0
  %1745 = vmatpush1.msra.mxu0 0.0
  %1746 = vmatprep.subr.mxu0 0.0
  %1747 = vmatpush1.msra.mxu0 0.0
  %1748 = vmatprep.subr.mxu0 0.0
  %1749 = vmatpush1.msra.mxu0 0.0
  %1750 = vmatprep.subr.mxu0 0.0
  %1751 = vmatpush1.msra.mxu0 0.0
  %1752 = vmatprep.subr.mxu0 0.0
  %1753 = vmatpush1.msra.mxu0 0.0
  %1754 = vmatprep.subr.mxu0 0.0
  %1755 = vmatpush1.msra.mxu0 0.0
  %1756 = vmatprep.subr.mxu0 0.0
  %1757 = vmatpush1.msra.mxu0 0.0
  %1758 = vmatprep.subr.mxu0 0.0
  %1759 = vmatpush1.msra.mxu0 0.0
  %1760 = vmatprep.subr.mxu0 0.0
  %1761 = vmatpush1.msra.mxu0 0.0
  %1762 = vmatprep.subr.mxu0 0.0
  %1763 = vmatpush1.msra.mxu0 0.0
  %1764 = vmatprep.subr.mxu0 0.0
  %1765 = vmatpush1.msra.mxu0 0.0
  %1766 = vmatprep.subr.mxu0 0.0
  %1767 = vmatpush1.msra.mxu0 0.0
  %1768 = vmatprep.subr.mxu0 0.0
  %1769 = vmatpush1.msra.mxu0 0.0
  %1770 = vmatprep.subr.mxu0 0.0
  %1771 = vmatpush1.msra.mxu0 0.0
  %1772 = vmatprep.mubr.f32.mxu0 0.0
  %1773 = vmatmul.mubr.f32.gmra.mrb[0].mxu0 %v1703
  %v1774 = vpop.f32.mrb[0].mxu0
  %v1775 = vadd.f32 0.0, %v1774
  %v1776 = vpop.f32.mrb[0].mxu0
  %v1777 = vadd.f32 0.0, %v1776
  %1778 = vmatprep.mubr.f32.mxu0 0.0
  %1779 = vmatmul.mubr.f32.gmra.mrb[0].mxu0 %v1706
  %v1780 = vpop.f32.mrb[0].mxu0
  %v1781 = vadd.f32 0.0, %v1780
  %v1782 = vpop.f32.mrb[0].mxu0
  %v1783 = vadd.f32 0.0, %v1782
  %1784 = vdwg.mxu0
  %v1785 = vlaneseq
  %v1786 = vshrl.u32 %v1785, 7
  %v1787 = vsub.s32 4, %v1786
  %v1788 = vrot.slane %v1307, %v1787
  %v1789 = vlaneseq
  %v1790 = vshrl.u32 %v1789, 7
  %v1791 = vsub.s32 4, %v1790
  %v1792 = vrot.slane %v1308, %v1791
  %v1793 = vmul.f32 %v1775, %v1788
  %v1794 = vmul.f32 %v1777, %v1792
  %v1795 = vmul.f32 %v1781, %v1788
  %v1796 = vmul.f32 %v1783, %v1792
  %v1797 = vadd.f32 %v1698, %v1793
  %v1798 = vadd.f32 %v1699, %v1794
  %v1799 = vadd.f32 %v1700, %v1795
  %v1800 = vadd.f32 %v1701, %v1796
  %v1802 = vsel %vm1309, %v1301, 0
  %v1805 = vsel %vm1309, %v1302, 0
  %1807 = vmatprep.subr.mxu0 %v1276
  %1808 = vmatpush1.msra.mxu0 %v1275
  %1809 = vmatprep.subr.mxu0 %v1278
  %1810 = vmatpush1.msra.mxu0 %v1277
  %1811 = vmatprep.subr.mxu0 %v1280
  %1812 = vmatpush1.msra.mxu0 %v1279
  %1813 = vmatprep.subr.mxu0 %v1282
  %1814 = vmatpush1.msra.mxu0 %v1281
  %1815 = vmatprep.subr.mxu0 %v1284
  %1816 = vmatpush1.msra.mxu0 %v1283
  %1817 = vmatprep.subr.mxu0 %v1286
  %1818 = vmatpush1.msra.mxu0 %v1285
  %1819 = vmatprep.subr.mxu0 %v1288
  %1820 = vmatpush1.msra.mxu0 %v1287
  %1821 = vmatprep.subr.mxu0 %v1290
  %1822 = vmatpush1.msra.mxu0 %v1289
  %1823 = vmatprep.subr.mxu0 0.0
  %1824 = vmatpush1.msra.mxu0 0.0
  %1825 = vmatprep.subr.mxu0 0.0
  %1826 = vmatpush1.msra.mxu0 0.0
  %1827 = vmatprep.subr.mxu0 0.0
  %1828 = vmatpush1.msra.mxu0 0.0
  %1829 = vmatprep.subr.mxu0 0.0
  %1830 = vmatpush1.msra.mxu0 0.0
  %1831 = vmatprep.subr.mxu0 0.0
  %1832 = vmatpush1.msra.mxu0 0.0
  %1833 = vmatprep.subr.mxu0 0.0
  %1834 = vmatpush1.msra.mxu0 0.0
  %1835 = vmatprep.subr.mxu0 0.0
  %1836 = vmatpush1.msra.mxu0 0.0
  %1837 = vmatprep.subr.mxu0 0.0
  %1838 = vmatpush1.msra.mxu0 0.0
  %1839 = vmatprep.subr.mxu0 0.0
  %1840 = vmatpush1.msra.mxu0 0.0
  %1841 = vmatprep.subr.mxu0 0.0
  %1842 = vmatpush1.msra.mxu0 0.0
  %1843 = vmatprep.subr.mxu0 0.0
  %1844 = vmatpush1.msra.mxu0 0.0
  %1845 = vmatprep.subr.mxu0 0.0
  %1846 = vmatpush1.msra.mxu0 0.0
  %1847 = vmatprep.subr.mxu0 0.0
  %1848 = vmatpush1.msra.mxu0 0.0
  %1849 = vmatprep.subr.mxu0 0.0
  %1850 = vmatpush1.msra.mxu0 0.0
  %1851 = vmatprep.subr.mxu0 0.0
  %1852 = vmatpush1.msra.mxu0 0.0
  %1853 = vmatprep.subr.mxu0 0.0
  %1854 = vmatpush1.msra.mxu0 0.0
  %1855 = vmatprep.subr.mxu0 0.0
  %1856 = vmatpush1.msra.mxu0 0.0
  %1857 = vmatprep.subr.mxu0 0.0
  %1858 = vmatpush1.msra.mxu0 0.0
  %1859 = vmatprep.subr.mxu0 0.0
  %1860 = vmatpush1.msra.mxu0 0.0
  %1861 = vmatprep.subr.mxu0 0.0
  %1862 = vmatpush1.msra.mxu0 0.0
  %1863 = vmatprep.subr.mxu0 0.0
  %1864 = vmatpush1.msra.mxu0 0.0
  %1865 = vmatprep.subr.mxu0 0.0
  %1866 = vmatpush1.msra.mxu0 0.0
  %1867 = vmatprep.subr.mxu0 0.0
  %1868 = vmatpush1.msra.mxu0 0.0
  %1869 = vmatprep.subr.mxu0 0.0
  %1870 = vmatpush1.msra.mxu0 0.0
  %1871 = vmatprep.mubr.f32.mxu0 0.0
  %1872 = vmatmul.mubr.f32.gmra.mrb[0].mxu0 %v1802
  %v1873 = vpop.f32.mrb[0].mxu0
  %v1874 = vadd.f32 0.0, %v1873
  %v1875 = vpop.f32.mrb[0].mxu0
  %v1876 = vadd.f32 0.0, %v1875
  %1877 = vmatprep.mubr.f32.mxu0 0.0
  %1878 = vmatmul.mubr.f32.gmra.mrb[0].mxu0 %v1805
  %v1879 = vpop.f32.mrb[0].mxu0
  %v1880 = vadd.f32 0.0, %v1879
  %v1881 = vpop.f32.mrb[0].mxu0
  %v1882 = vadd.f32 0.0, %v1881
  %1883 = vdwg.mxu0
  %v1884 = vlaneseq
  %v1885 = vshrl.u32 %v1884, 7
  %v1886 = vsub.s32 5, %v1885
  %v1887 = vrot.slane %v1307, %v1886
  %v1888 = vlaneseq
  %v1889 = vshrl.u32 %v1888, 7
  %v1890 = vsub.s32 5, %v1889
  %v1891 = vrot.slane %v1308, %v1890
  %v1892 = vmul.f32 %v1874, %v1887
  %v1893 = vmul.f32 %v1876, %v1891
  %v1894 = vmul.f32 %v1880, %v1887
  %v1895 = vmul.f32 %v1882, %v1891
  %v1896 = vadd.f32 %v1797, %v1892
  %v1897 = vadd.f32 %v1798, %v1893
  %v1898 = vadd.f32 %v1799, %v1894
  %v1899 = vadd.f32 %v1800, %v1895
  %v1901 = vsel %vm1309, %v1303, 0
  %v1904 = vsel %vm1309, %v1304, 0
  %1906 = vmatprep.subr.mxu0 %v1276
  %1907 = vmatpush1.msra.mxu0 %v1275
  %1908 = vmatprep.subr.mxu0 %v1278
  %1909 = vmatpush1.msra.mxu0 %v1277
  %1910 = vmatprep.subr.mxu0 %v1280
  %1911 = vmatpush1.msra.mxu0 %v1279
  %1912 = vmatprep.subr.mxu0 %v1282
  %1913 = vmatpush1.msra.mxu0 %v1281
  %1914 = vmatprep.subr.mxu0 %v1284
  %1915 = vmatpush1.msra.mxu0 %v1283
  %1916 = vmatprep.subr.mxu0 %v1286
  %1917 = vmatpush1.msra.mxu0 %v1285
  %1918 = vmatprep.subr.mxu0 %v1288
  %1919 = vmatpush1.msra.mxu0 %v1287
  %1920 = vmatprep.subr.mxu0 %v1290
  %1921 = vmatpush1.msra.mxu0 %v1289
  %1922 = vmatprep.subr.mxu0 0.0
  %1923 = vmatpush1.msra.mxu0 0.0
  %1924 = vmatprep.subr.mxu0 0.0
  %1925 = vmatpush1.msra.mxu0 0.0
  %1926 = vmatprep.subr.mxu0 0.0
  %1927 = vmatpush1.msra.mxu0 0.0
  %1928 = vmatprep.subr.mxu0 0.0
  %1929 = vmatpush1.msra.mxu0 0.0
  %1930 = vmatprep.subr.mxu0 0.0
  %1931 = vmatpush1.msra.mxu0 0.0
  %1932 = vmatprep.subr.mxu0 0.0
  %1933 = vmatpush1.msra.mxu0 0.0
  %1934 = vmatprep.subr.mxu0 0.0
  %1935 = vmatpush1.msra.mxu0 0.0
  %1936 = vmatprep.subr.mxu0 0.0
  %1937 = vmatpush1.msra.mxu0 0.0
  %1938 = vmatprep.subr.mxu0 0.0
  %1939 = vmatpush1.msra.mxu0 0.0
  %1940 = vmatprep.subr.mxu0 0.0
  %1941 = vmatpush1.msra.mxu0 0.0
  %1942 = vmatprep.subr.mxu0 0.0
  %1943 = vmatpush1.msra.mxu0 0.0
  %1944 = vmatprep.subr.mxu0 0.0
  %1945 = vmatpush1.msra.mxu0 0.0
  %1946 = vmatprep.subr.mxu0 0.0
  %1947 = vmatpush1.msra.mxu0 0.0
  %1948 = vmatprep.subr.mxu0 0.0
  %1949 = vmatpush1.msra.mxu0 0.0
  %1950 = vmatprep.subr.mxu0 0.0
  %1951 = vmatpush1.msra.mxu0 0.0
  %1952 = vmatprep.subr.mxu0 0.0
  %1953 = vmatpush1.msra.mxu0 0.0
  %1954 = vmatprep.subr.mxu0 0.0
  %1955 = vmatpush1.msra.mxu0 0.0
  %1956 = vmatprep.subr.mxu0 0.0
  %1957 = vmatpush1.msra.mxu0 0.0
  %1958 = vmatprep.subr.mxu0 0.0
  %1959 = vmatpush1.msra.mxu0 0.0
  %1960 = vmatprep.subr.mxu0 0.0
  %1961 = vmatpush1.msra.mxu0 0.0
  %1962 = vmatprep.subr.mxu0 0.0
  %1963 = vmatpush1.msra.mxu0 0.0
  %1964 = vmatprep.subr.mxu0 0.0
  %1965 = vmatpush1.msra.mxu0 0.0
  %1966 = vmatprep.subr.mxu0 0.0
  %1967 = vmatpush1.msra.mxu0 0.0
  %1968 = vmatprep.subr.mxu0 0.0
  %1969 = vmatpush1.msra.mxu0 0.0
  %1970 = vmatprep.mubr.f32.mxu0 0.0
  %1971 = vmatmul.mubr.f32.gmra.mrb[0].mxu0 %v1901
  %v1972 = vpop.f32.mrb[0].mxu0
  %v1973 = vadd.f32 0.0, %v1972
  %v1974 = vpop.f32.mrb[0].mxu0
  %v1975 = vadd.f32 0.0, %v1974
  %1976 = vmatprep.mubr.f32.mxu0 0.0
  %1977 = vmatmul.mubr.f32.gmra.mrb[0].mxu0 %v1904
  %v1978 = vpop.f32.mrb[0].mxu0
  %v1979 = vadd.f32 0.0, %v1978
  %v1980 = vpop.f32.mrb[0].mxu0
  %v1981 = vadd.f32 0.0, %v1980
  %1982 = vdwg.mxu0
  %v1983 = vlaneseq
  %v1984 = vshrl.u32 %v1983, 7
  %v1985 = vsub.s32 6, %v1984
  %v1986 = vrot.slane %v1307, %v1985
  %v1987 = vlaneseq
  %v1988 = vshrl.u32 %v1987, 7
  %v1989 = vsub.s32 6, %v1988
  %v1990 = vrot.slane %v1308, %v1989
  %v1991 = vmul.f32 %v1973, %v1986
  %v1992 = vmul.f32 %v1975, %v1990
  %v1993 = vmul.f32 %v1979, %v1986
  %v1994 = vmul.f32 %v1981, %v1990
  %v1995 = vadd.f32 %v1896, %v1991
  %v1996 = vadd.f32 %v1897, %v1992
  %v1997 = vadd.f32 %v1898, %v1993
  %v1998 = vadd.f32 %v1899, %v1994
  %v2000 = vsel %vm1309, %v1305, 0
  %v2003 = vsel %vm1309, %v1306, 0
  %2005 = vmatprep.subr.mxu0 %v1276
  %2006 = vmatpush1.msra.mxu0 %v1275
  %2007 = vmatprep.subr.mxu0 %v1278
  %2008 = vmatpush1.msra.mxu0 %v1277
  %2009 = vmatprep.subr.mxu0 %v1280
  %2010 = vmatpush1.msra.mxu0 %v1279
  %2011 = vmatprep.subr.mxu0 %v1282
  %2012 = vmatpush1.msra.mxu0 %v1281
  %2013 = vmatprep.subr.mxu0 %v1284
  %2014 = vmatpush1.msra.mxu0 %v1283
  %2015 = vmatprep.subr.mxu0 %v1286
  %2016 = vmatpush1.msra.mxu0 %v1285
  %2017 = vmatprep.subr.mxu0 %v1288
  %2018 = vmatpush1.msra.mxu0 %v1287
  %2019 = vmatprep.subr.mxu0 %v1290
  %2020 = vmatpush1.msra.mxu0 %v1289
  %2021 = vmatprep.subr.mxu0 0.0
  %2022 = vmatpush1.msra.mxu0 0.0
  %2023 = vmatprep.subr.mxu0 0.0
  %2024 = vmatpush1.msra.mxu0 0.0
  %2025 = vmatprep.subr.mxu0 0.0
  %2026 = vmatpush1.msra.mxu0 0.0
  %2027 = vmatprep.subr.mxu0 0.0
  %2028 = vmatpush1.msra.mxu0 0.0
  %2029 = vmatprep.subr.mxu0 0.0
  %2030 = vmatpush1.msra.mxu0 0.0
  %2031 = vmatprep.subr.mxu0 0.0
  %2032 = vmatpush1.msra.mxu0 0.0
  %2033 = vmatprep.subr.mxu0 0.0
  %2034 = vmatpush1.msra.mxu0 0.0
  %2035 = vmatprep.subr.mxu0 0.0
  %2036 = vmatpush1.msra.mxu0 0.0
  %2037 = vmatprep.subr.mxu0 0.0
  %2038 = vmatpush1.msra.mxu0 0.0
  %2039 = vmatprep.subr.mxu0 0.0
  %2040 = vmatpush1.msra.mxu0 0.0
  %2041 = vmatprep.subr.mxu0 0.0
  %2042 = vmatpush1.msra.mxu0 0.0
  %2043 = vmatprep.subr.mxu0 0.0
  %2044 = vmatpush1.msra.mxu0 0.0
  %2045 = vmatprep.subr.mxu0 0.0
  %2046 = vmatpush1.msra.mxu0 0.0
  %2047 = vmatprep.subr.mxu0 0.0
  %2048 = vmatpush1.msra.mxu0 0.0
  %2049 = vmatprep.subr.mxu0 0.0
  %2050 = vmatpush1.msra.mxu0 0.0
  %2051 = vmatprep.subr.mxu0 0.0
  %2052 = vmatpush1.msra.mxu0 0.0
  %2053 = vmatprep.subr.mxu0 0.0
  %2054 = vmatpush1.msra.mxu0 0.0
  %2055 = vmatprep.subr.mxu0 0.0
  %2056 = vmatpush1.msra.mxu0 0.0
  %2057 = vmatprep.subr.mxu0 0.0
  %2058 = vmatpush1.msra.mxu0 0.0
  %2059 = vmatprep.subr.mxu0 0.0
  %2060 = vmatpush1.msra.mxu0 0.0
  %2061 = vmatprep.subr.mxu0 0.0
  %2062 = vmatpush1.msra.mxu0 0.0
  %2063 = vmatprep.subr.mxu0 0.0
  %2064 = vmatpush1.msra.mxu0 0.0
  %2065 = vmatprep.subr.mxu0 0.0
  %2066 = vmatpush1.msra.mxu0 0.0
  %2067 = vmatprep.subr.mxu0 0.0
  %2068 = vmatpush1.msra.mxu0 0.0
  %2069 = vmatprep.mubr.f32.mxu0 0.0
  %2070 = vmatmul.mubr.f32.gmra.mrb[0].mxu0 %v2000
  %v2071 = vpop.f32.mrb[0].mxu0
  %v2072 = vadd.f32 0.0, %v2071
  %v2073 = vpop.f32.mrb[0].mxu0
  %v2074 = vadd.f32 0.0, %v2073
  %2075 = vmatprep.mubr.f32.mxu0 0.0
  %2076 = vmatmul.mubr.f32.gmra.mrb[0].mxu0 %v2003
  %v2077 = vpop.f32.mrb[0].mxu0
  %v2078 = vadd.f32 0.0, %v2077
  %v2079 = vpop.f32.mrb[0].mxu0
  %v2080 = vadd.f32 0.0, %v2079
  %2081 = vdwg.mxu0
  %v2082 = vlaneseq
  %v2083 = vshrl.u32 %v2082, 7
  %v2084 = vsub.s32 7, %v2083
  %v2085 = vrot.slane %v1307, %v2084
  %v2086 = vlaneseq
  %v2087 = vshrl.u32 %v2086, 7
  %v2088 = vsub.s32 7, %v2087
  %v2089 = vrot.slane %v1308, %v2088
  %v2090 = vmul.f32 %v2072, %v2085
  %v2091 = vmul.f32 %v2074, %v2089
  %v2092 = vmul.f32 %v2078, %v2085
  %v2093 = vmul.f32 %v2080, %v2089
  %v2094 = vadd.f32 %v1995, %v2090
  %v2095 = vadd.f32 %v1996, %v2091
  %v2096 = vadd.f32 %v1997, %v2092
  %v2097 = vadd.f32 %v1998, %v2093
  %v2098 = vld [vmem:[%s7] sm:$0xff]
  %v2099 = vld [vmem:[%s7 + $0x8] sm:$0xff]
  %v2100 = vld [vmem:[%s7 + $0x10] sm:$0xff]
  %v2101 = vld [vmem:[%s7 + $0x18] sm:$0xff]
  %v2102 = vld [vmem:[%s7 + $0x20] sm:$0xff]
  %v2103 = vld [vmem:[%s7 + $0x28] sm:$0xff]
  %v2104 = vld [vmem:[%s7 + $0x30] sm:$0xff]
  %v2105 = vld [vmem:[%s7 + $0x38] sm:$0xff]
  %v2106 = vld [vmem:[%s7 + $0x40] sm:$0xff]
  %v2107 = vld [vmem:[%s7 + $0x48] sm:$0xff]
  %v2108 = vld [vmem:[%s7 + $0x50] sm:$0xff]
  %v2109 = vld [vmem:[%s7 + $0x58] sm:$0xff]
  %v2110 = vld [vmem:[%s7 + $0x60] sm:$0xff]
  %v2111 = vld [vmem:[%s7 + $0x68] sm:$0xff]
  %v2112 = vld [vmem:[%s7 + $0x70] sm:$0xff]
  %v2113 = vld [vmem:[%s7 + $0x78] sm:$0xff]
  %v2114 = vld [vmem:[%s7 + $0x80] sm:$0xff]
  %v2115 = vld [vmem:[%s7 + $0x88] sm:$0xff]
  %v2116 = vld [vmem:[%s7 + $0x90] sm:$0xff]
  %v2117 = vld [vmem:[%s7 + $0x98] sm:$0xff]
  %v2118 = vld [vmem:[%s7 + $0xa0] sm:$0xff]
  %v2119 = vld [vmem:[%s7 + $0xa8] sm:$0xff]
  %v2120 = vld [vmem:[%s7 + $0xb0] sm:$0xff]
  %v2121 = vld [vmem:[%s7 + $0xb8] sm:$0xff]
  %v2122 = vld [vmem:[%s7 + $0xc0] sm:$0xff]
  %v2123 = vld [vmem:[%s7 + $0xc8] sm:$0xff]
  %v2124 = vld [vmem:[%s7 + $0xd0] sm:$0xff]
  %v2125 = vld [vmem:[%s7 + $0xd8] sm:$0xff]
  %v2126 = vld [vmem:[%s7 + $0xe0] sm:$0xff]
  %v2127 = vld [vmem:[%s7 + $0xe8] sm:$0xff]
  %v2128 = vld [vmem:[%s7 + $0xf0] sm:$0xff]
  %v2129 = vld [vmem:[%s7 + $0xf8] sm:$0xff]
  %v2130 = vld [vmem:[%s7 + $0x100] sm:$0xff]
  %v2131 = vld [vmem:[%s7 + $0x108] sm:$0xff]
  %v2132 = vld [vmem:[%s7 + $0x110] sm:$0xff]
  %v2133 = vld [vmem:[%s7 + $0x118] sm:$0xff]
  %v2134 = vld [vmem:[%s7 + $0x120] sm:$0xff]
  %v2135 = vld [vmem:[%s7 + $0x128] sm:$0xff]
  %v2136 = vld [vmem:[%s7 + $0x130] sm:$0xff]
  %v2137 = vld [vmem:[%s7 + $0x138] sm:$0xff]
  %v2138 = vld [vmem:[%s7 + $0x140] sm:$0xff]
  %v2139 = vld [vmem:[%s7 + $0x148] sm:$0xff]
  %v2140 = vld [vmem:[%s7 + $0x150] sm:$0xff]
  %v2141 = vld [vmem:[%s7 + $0x158] sm:$0xff]
  %v2142 = vld [vmem:[%s7 + $0x160] sm:$0xff]
  %v2143 = vld [vmem:[%s7 + $0x168] sm:$0xff]
  %v2144 = vld [vmem:[%s7 + $0x170] sm:$0xff]
  %v2145 = vld [vmem:[%s7 + $0x178] sm:$0xff]
  %v2146 = vld [vmem:[%s7 + $0x180] sm:$0xff]
  %v2147 = vld [vmem:[%s7 + $0x188] sm:$0xff]
  %v2148 = vld [vmem:[%s7 + $0x190] sm:$0xff]
  %v2149 = vld [vmem:[%s7 + $0x198] sm:$0xff]
  %v2150 = vld [vmem:[%s7 + $0x1a0] sm:$0xff]
  %v2151 = vld [vmem:[%s7 + $0x1a8] sm:$0xff]
  %v2152 = vld [vmem:[%s7 + $0x1b0] sm:$0xff]
  %v2153 = vld [vmem:[%s7 + $0x1b8] sm:$0xff]
  %v2154 = vld [vmem:[%s7 + $0x1c0] sm:$0xff]
  %v2155 = vld [vmem:[%s7 + $0x1c8] sm:$0xff]
  %v2156 = vld [vmem:[%s7 + $0x1d0] sm:$0xff]
  %v2157 = vld [vmem:[%s7 + $0x1d8] sm:$0xff]
  %v2158 = vld [vmem:[%s7 + $0x1e0] sm:$0xff]
  %v2159 = vld [vmem:[%s7 + $0x1e8] sm:$0xff]
  %v2160 = vld [vmem:[%s7 + $0x1f0] sm:$0xff]
  %v2161 = vld [vmem:[%s7 + $0x1f8] sm:$0xff]
  %v2162 = vld [vmem:[%s7 + $0x200] sm:$0xff]
  %v2163 = vld [vmem:[%s7 + $0x208] sm:$0xff]
  %v2164 = vld [vmem:[%s7 + $0x210] sm:$0xff]
  %v2165 = vld [vmem:[%s7 + $0x218] sm:$0xff]
  %v2166 = vld [vmem:[%s7 + $0x220] sm:$0xff]
  %v2167 = vld [vmem:[%s7 + $0x228] sm:$0xff]
  %v2168 = vld [vmem:[%s7 + $0x230] sm:$0xff]
  %v2169 = vld [vmem:[%s7 + $0x238] sm:$0xff]
  %v2170 = vld [vmem:[%s7 + $0x240] sm:$0xff]
  %v2171 = vld [vmem:[%s7 + $0x248] sm:$0xff]
  %v2172 = vld [vmem:[%s7 + $0x250] sm:$0xff]
  %v2173 = vld [vmem:[%s7 + $0x258] sm:$0xff]
  %v2174 = vld [vmem:[%s7 + $0x260] sm:$0xff]
  %v2175 = vld [vmem:[%s7 + $0x268] sm:$0xff]
  %v2176 = vld [vmem:[%s7 + $0x270] sm:$0xff]
  %v2177 = vld [vmem:[%s7 + $0x278] sm:$0xff]
  %v2178 = vld [vmem:[%s7 + $0x280] sm:$0xff]
  %v2179 = vld [vmem:[%s7 + $0x288] sm:$0xff]
  %v2180 = vld [vmem:[%s7 + $0x290] sm:$0xff]
  %v2181 = vld [vmem:[%s7 + $0x298] sm:$0xff]
  %v2182 = vld [vmem:[%s7 + $0x2a0] sm:$0xff]
  %v2183 = vld [vmem:[%s7 + $0x2a8] sm:$0xff]
  %v2184 = vld [vmem:[%s7 + $0x2b0] sm:$0xff]
  %v2185 = vld [vmem:[%s7 + $0x2b8] sm:$0xff]
  %v2186 = vld [vmem:[%s7 + $0x2c0] sm:$0xff]
  %v2187 = vld [vmem:[%s7 + $0x2c8] sm:$0xff]
  %v2188 = vld [vmem:[%s7 + $0x2d0] sm:$0xff]
  %v2189 = vld [vmem:[%s7 + $0x2d8] sm:$0xff]
  %v2190 = vld [vmem:[%s7 + $0x2e0] sm:$0xff]
  %v2191 = vld [vmem:[%s7 + $0x2e8] sm:$0xff]
  %v2192 = vld [vmem:[%s7 + $0x2f0] sm:$0xff]
  %v2193 = vld [vmem:[%s7 + $0x2f8] sm:$0xff]
  %v2194 = vld [vmem:[%s7 + $0x300] sm:$0xff]
  %v2195 = vld [vmem:[%s7 + $0x308] sm:$0xff]
  %v2196 = vld [vmem:[%s7 + $0x310] sm:$0xff]
  %v2197 = vld [vmem:[%s7 + $0x318] sm:$0xff]
  %v2198 = vld [vmem:[%s7 + $0x320] sm:$0xff]
  %v2199 = vld [vmem:[%s7 + $0x328] sm:$0xff]
  %v2200 = vld [vmem:[%s7 + $0x330] sm:$0xff]
  %v2201 = vld [vmem:[%s7 + $0x338] sm:$0xff]
  %v2202 = vld [vmem:[%s7 + $0x340] sm:$0xff]
  %v2203 = vld [vmem:[%s7 + $0x348] sm:$0xff]
  %v2204 = vld [vmem:[%s7 + $0x350] sm:$0xff]
  %v2205 = vld [vmem:[%s7 + $0x358] sm:$0xff]
  %v2206 = vld [vmem:[%s7 + $0x360] sm:$0xff]
  %v2207 = vld [vmem:[%s7 + $0x368] sm:$0xff]
  %v2208 = vld [vmem:[%s7 + $0x370] sm:$0xff]
  %v2209 = vld [vmem:[%s7 + $0x378] sm:$0xff]
  %v2210 = vld [vmem:[%s7 + $0x380] sm:$0xff]
  %v2211 = vld [vmem:[%s7 + $0x388] sm:$0xff]
  %v2212 = vld [vmem:[%s7 + $0x390] sm:$0xff]
  %v2213 = vld [vmem:[%s7 + $0x398] sm:$0xff]
  %v2214 = vld [vmem:[%s7 + $0x3a0] sm:$0xff]
  %v2215 = vld [vmem:[%s7 + $0x3a8] sm:$0xff]
  %v2216 = vld [vmem:[%s7 + $0x3b0] sm:$0xff]
  %v2217 = vld [vmem:[%s7 + $0x3b8] sm:$0xff]
  %v2218 = vld [vmem:[%s7 + $0x3c0] sm:$0xff]
  %v2219 = vld [vmem:[%s7 + $0x3c8] sm:$0xff]
  %v2220 = vld [vmem:[%s7 + $0x3d0] sm:$0xff]
  %v2221 = vld [vmem:[%s7 + $0x3d8] sm:$0xff]
  %v2222 = vld [vmem:[%s7 + $0x3e0] sm:$0xff]
  %v2223 = vld [vmem:[%s7 + $0x3e8] sm:$0xff]
  %v2224 = vld [vmem:[%s7 + $0x3f0] sm:$0xff]
  %v2225 = vld [vmem:[%s7 + $0x3f8] sm:$0xff]
  %v2226 = vld [vmem:[%s8] sm:$0xf]
  %v2228 = vlaneseq
  %v2229 = vshrl.u32 %v2228, 7
  %v2230 = vsub.s32 0, %v2229
  %v2231 = vrot.slane %v2226, %v2230
  %v2232 = vlaneseq
  %v2233 = vshrl.u32 %v2232, 7
  %v2234 = vsub.s32 1, %v2233
  %v2235 = vrot.slane %v2226, %v2234
  %v2236 = vlaneseq
  %v2237 = vshrl.u32 %v2236, 7
  %v2238 = vsub.s32 2, %v2237
  %v2239 = vrot.slane %v2226, %v2238
  %v2240 = vlaneseq
  %v2241 = vshrl.u32 %v2240, 7
  %v2242 = vsub.s32 3, %v2241
  %v2243 = vrot.slane %v2226, %v2242
  %2248 = vmatprep.subr.mxu0 %v2099
  %2249 = vmatpush1.msra.mxu0 %v2098
  %2250 = vmatprep.subr.mxu0 %v2103
  %2251 = vmatpush1.msra.mxu0 %v2102
  %2252 = vmatprep.subr.mxu0 %v2107
  %2253 = vmatpush1.msra.mxu0 %v2106
  %2254 = vmatprep.subr.mxu0 %v2111
  %2255 = vmatpush1.msra.mxu0 %v2110
  %2256 = vmatprep.subr.mxu0 %v2115
  %2257 = vmatpush1.msra.mxu0 %v2114
  %2258 = vmatprep.subr.mxu0 %v2119
  %2259 = vmatpush1.msra.mxu0 %v2118
  %2260 = vmatprep.subr.mxu0 %v2123
  %2261 = vmatpush1.msra.mxu0 %v2122
  %2262 = vmatprep.subr.mxu0 %v2127
  %2263 = vmatpush1.msra.mxu0 %v2126
  %2264 = vmatprep.subr.mxu0 %v2131
  %2265 = vmatpush1.msra.mxu0 %v2130
  %2266 = vmatprep.subr.mxu0 %v2135
  %2267 = vmatpush1.msra.mxu0 %v2134
  %2268 = vmatprep.subr.mxu0 %v2139
  %2269 = vmatpush1.msra.mxu0 %v2138
  %2270 = vmatprep.subr.mxu0 %v2143
  %2271 = vmatpush1.msra.mxu0 %v2142
  %2272 = vmatprep.subr.mxu0 %v2147
  %2273 = vmatpush1.msra.mxu0 %v2146
  %2274 = vmatprep.subr.mxu0 %v2151
  %2275 = vmatpush1.msra.mxu0 %v2150
  %2276 = vmatprep.subr.mxu0 %v2155
  %2277 = vmatpush1.msra.mxu0 %v2154
  %2278 = vmatprep.subr.mxu0 %v2159
  %2279 = vmatpush1.msra.mxu0 %v2158
  %2280 = vmatprep.subr.mxu0 %v2163
  %2281 = vmatpush1.msra.mxu0 %v2162
  %2282 = vmatprep.subr.mxu0 %v2167
  %2283 = vmatpush1.msra.mxu0 %v2166
  %2284 = vmatprep.subr.mxu0 %v2171
  %2285 = vmatpush1.msra.mxu0 %v2170
  %2286 = vmatprep.subr.mxu0 %v2175
  %2287 = vmatpush1.msra.mxu0 %v2174
  %2288 = vmatprep.subr.mxu0 %v2179
  %2289 = vmatpush1.msra.mxu0 %v2178
  %2290 = vmatprep.subr.mxu0 %v2183
  %2291 = vmatpush1.msra.mxu0 %v2182
  %2292 = vmatprep.subr.mxu0 %v2187
  %2293 = vmatpush1.msra.mxu0 %v2186
  %2294 = vmatprep.subr.mxu0 %v2191
  %2295 = vmatpush1.msra.mxu0 %v2190
  %2296 = vmatprep.subr.mxu0 %v2195
  %2297 = vmatpush1.msra.mxu0 %v2194
  %2298 = vmatprep.subr.mxu0 %v2199
  %2299 = vmatpush1.msra.mxu0 %v2198
  %2300 = vmatprep.subr.mxu0 %v2203
  %2301 = vmatpush1.msra.mxu0 %v2202
  %2302 = vmatprep.subr.mxu0 %v2207
  %2303 = vmatpush1.msra.mxu0 %v2206
  %2304 = vmatprep.subr.mxu0 %v2211
  %2305 = vmatpush1.msra.mxu0 %v2210
  %2306 = vmatprep.subr.mxu0 %v2215
  %2307 = vmatpush1.msra.mxu0 %v2214
  %2308 = vmatprep.subr.mxu0 %v2219
  %2309 = vmatpush1.msra.mxu0 %v2218
  %2310 = vmatprep.subr.mxu0 %v2223
  %2311 = vmatpush1.msra.mxu0 %v2222
  %2312 = vmatprep.mubr.f32.mxu0 %v2095
  %2313 = vmatmul.mubr.f32.gmra.mrb[0].mxu0 %v2094
  %v2314 = vpop.f32.mrb[0].mxu0
  %v2315 = vadd.f32 %v2231, %v2314
  %v2316 = vpop.f32.mrb[0].mxu0
  %v2317 = vadd.f32 %v2235, %v2316
  %2318 = vmatprep.mubr.f32.mxu0 %v2097
  %2319 = vmatmul.mubr.f32.gmra.mrb[0].mxu0 %v2096
  %v2320 = vpop.f32.mrb[0].mxu0
  %v2321 = vadd.f32 %v2231, %v2320
  %v2322 = vpop.f32.mrb[0].mxu0
  %v2323 = vadd.f32 %v2235, %v2322
  %2324 = vdwg.mxu0
  %2325 = vmatprep.subr.mxu0 %v2101
  %2326 = vmatpush1.msra.mxu0 %v2100
  %2327 = vmatprep.subr.mxu0 %v2105
  %2328 = vmatpush1.msra.mxu0 %v2104
  %2329 = vmatprep.subr.mxu0 %v2109
  %2330 = vmatpush1.msra.mxu0 %v2108
  %2331 = vmatprep.subr.mxu0 %v2113
  %2332 = vmatpush1.msra.mxu0 %v2112
  %2333 = vmatprep.subr.mxu0 %v2117
  %2334 = vmatpush1.msra.mxu0 %v2116
  %2335 = vmatprep.subr.mxu0 %v2121
  %2336 = vmatpush1.msra.mxu0 %v2120
  %2337 = vmatprep.subr.mxu0 %v2125
  %2338 = vmatpush1.msra.mxu0 %v2124
  %2339 = vmatprep.subr.mxu0 %v2129
  %2340 = vmatpush1.msra.mxu0 %v2128
  %2341 = vmatprep.subr.mxu0 %v2133
  %2342 = vmatpush1.msra.mxu0 %v2132
  %2343 = vmatprep.subr.mxu0 %v2137
  %2344 = vmatpush1.msra.mxu0 %v2136
  %2345 = vmatprep.subr.mxu0 %v2141
  %2346 = vmatpush1.msra.mxu0 %v2140
  %2347 = vmatprep.subr.mxu0 %v2145
  %2348 = vmatpush1.msra.mxu0 %v2144
  %2349 = vmatprep.subr.mxu0 %v2149
  %2350 = vmatpush1.msra.mxu0 %v2148
  %2351 = vmatprep.subr.mxu0 %v2153
  %2352 = vmatpush1.msra.mxu0 %v2152
  %2353 = vmatprep.subr.mxu0 %v2157
  %2354 = vmatpush1.msra.mxu0 %v2156
  %2355 = vmatprep.subr.mxu0 %v2161
  %2356 = vmatpush1.msra.mxu0 %v2160
  %2357 = vmatprep.subr.mxu0 %v2165
  %2358 = vmatpush1.msra.mxu0 %v2164
  %2359 = vmatprep.subr.mxu0 %v2169
  %2360 = vmatpush1.msra.mxu0 %v2168
  %2361 = vmatprep.subr.mxu0 %v2173
  %2362 = vmatpush1.msra.mxu0 %v2172
  %2363 = vmatprep.subr.mxu0 %v2177
  %2364 = vmatpush1.msra.mxu0 %v2176
  %2365 = vmatprep.subr.mxu0 %v2181
  %2366 = vmatpush1.msra.mxu0 %v2180
  %2367 = vmatprep.subr.mxu0 %v2185
  %2368 = vmatpush1.msra.mxu0 %v2184
  %2369 = vmatprep.subr.mxu0 %v2189
  %2370 = vmatpush1.msra.mxu0 %v2188
  %2371 = vmatprep.subr.mxu0 %v2193
  %2372 = vmatpush1.msra.mxu0 %v2192
  %2373 = vmatprep.subr.mxu0 %v2197
  %2374 = vmatpush1.msra.mxu0 %v2196
  %2375 = vmatprep.subr.mxu0 %v2201
  %2376 = vmatpush1.msra.mxu0 %v2200
  %2377 = vmatprep.subr.mxu0 %v2205
  %2378 = vmatpush1.msra.mxu0 %v2204
  %2379 = vmatprep.subr.mxu0 %v2209
  %2380 = vmatpush1.msra.mxu0 %v2208
  %2381 = vmatprep.subr.mxu0 %v2213
  %2382 = vmatpush1.msra.mxu0 %v2212
  %2383 = vmatprep.subr.mxu0 %v2217
  %2384 = vmatpush1.msra.mxu0 %v2216
  %2385 = vmatprep.subr.mxu0 %v2221
  %2386 = vmatpush1.msra.mxu0 %v2220
  %2387 = vmatprep.subr.mxu0 %v2225
  %2388 = vmatpush1.msra.mxu0 %v2224
  %2389 = vmatprep.mubr.f32.mxu0 %v2095
  %2390 = vmatmul.mubr.f32.gmra.mrb[0].mxu0 %v2094
  %v2391 = vpop.f32.mrb[0].mxu0
  %v2392 = vadd.f32 %v2239, %v2391
  %v2393 = vpop.f32.mrb[0].mxu0
  %v2394 = vadd.f32 %v2243, %v2393
  %2395 = vmatprep.mubr.f32.mxu0 %v2097
  %2396 = vmatmul.mubr.f32.gmra.mrb[0].mxu0 %v2096
  %v2397 = vpop.f32.mrb[0].mxu0
  %v2398 = vadd.f32 %v2239, %v2397
  %v2399 = vpop.f32.mrb[0].mxu0
  %v2400 = vadd.f32 %v2243, %v2399
  %2401 = vdwg.mxu0
  %v2402 = vmax.f32 %v2315, 0.0
  %v2403 = vmax.f32 %v2317, 0.0
  %v2404 = vmax.f32 %v2392, 0.0
  %v2405 = vmax.f32 %v2394, 0.0
  %v2406 = vmax.f32 %v2321, 0.0
  %v2407 = vmax.f32 %v2323, 0.0
  %v2408 = vmax.f32 %v2398, 0.0
  %v2409 = vmax.f32 %v2400, 0.0
  %v2410 = vld [vmem:[%s9] sm:$0xf]
  %v2411 = vld [vmem:[%s9 + $0x4] sm:$0xf]
  %v2412 = vld [vmem:[%s9 + $0x8] sm:$0xf]
  %v2413 = vld [vmem:[%s9 + $0xc] sm:$0xf]
  %v2414 = vld [vmem:[%s9 + $0x10] sm:$0xf]
  %v2415 = vld [vmem:[%s9 + $0x14] sm:$0xf]
  %v2416 = vld [vmem:[%s9 + $0x18] sm:$0xf]
  %v2417 = vld [vmem:[%s9 + $0x1c] sm:$0xf]
  %v2418 = vld [vmem:[%s10] sm:$0xff]
  %v2419 = vld [vmem:[%s10 + $0x8] sm:$0xff]
  %v2420 = vld [vmem:[%s10 + $0x10] sm:$0xff]
  %v2421 = vld [vmem:[%s10 + $0x18] sm:$0xff]
  %vm2422 = vcmask 130048
  %v2424 = vsel %vm2422, %v2410, 0
  %2426 = vmatprep.subr.mxu0 %v2403
  %2427 = vmatpush1.msra.mxu0 %v2402
  %2428 = vmatprep.subr.mxu0 %v2407
  %2429 = vmatpush1.msra.mxu0 %v2406
  %2430 = vmatprep.subr.mxu0 0.0
  %2431 = vmatpush1.msra.mxu0 0.0
  %2432 = vmatprep.subr.mxu0 0.0
  %2433 = vmatpush1.msra.mxu0 0.0
  %2434 = vmatprep.subr.mxu0 0.0
  %2435 = vmatpush1.msra.mxu0 0.0
  %2436 = vmatprep.subr.mxu0 0.0
  %2437 = vmatpush1.msra.mxu0 0.0
  %2438 = vmatprep.subr.mxu0 0.0
  %2439 = vmatpush1.msra.mxu0 0.0
  %2440 = vmatprep.subr.mxu0 0.0
  %2441 = vmatpush1.msra.mxu0 0.0
  %2442 = vmatprep.subr.mxu0 0.0
  %2443 = vmatpush1.msra.mxu0 0.0
  %2444 = vmatprep.subr.mxu0 0.0
  %2445 = vmatpush1.msra.mxu0 0.0
  %2446 = vmatprep.subr.mxu0 0.0
  %2447 = vmatpush1.msra.mxu0 0.0
  %2448 = vmatprep.subr.mxu0 0.0
  %2449 = vmatpush1.msra.mxu0 0.0
  %2450 = vmatprep.subr.mxu0 0.0
  %2451 = vmatpush1.msra.mxu0 0.0
  %2452 = vmatprep.subr.mxu0 0.0
  %2453 = vmatpush1.msra.mxu0 0.0
  %2454 = vmatprep.subr.mxu0 0.0
  %2455 = vmatpush1.msra.mxu0 0.0
  %2456 = vmatprep.subr.mxu0 0.0
  %2457 = vmatpush1.msra.mxu0 0.0
  %2458 = vmatprep.subr.mxu0 0.0
  %2459 = vmatpush1.msra.mxu0 0.0
  %2460 = vmatprep.subr.mxu0 0.0
  %2461 = vmatpush1.msra.mxu0 0.0
  %2462 = vmatprep.subr.mxu0 0.0
  %2463 = vmatpush1.msra.mxu0 0.0
  %2464 = vmatprep.subr.mxu0 0.0
  %2465 = vmatpush1.msra.mxu0 0.0
  %2466 = vmatprep.subr.mxu0 0.0
  %2467 = vmatpush1.msra.mxu0 0.0
  %2468 = vmatprep.subr.mxu0 0.0
  %2469 = vmatpush1.msra.mxu0 0.0
  %2470 = vmatprep.subr.mxu0 0.0
  %2471 = vmatpush1.msra.mxu0 0.0
  %2472 = vmatprep.subr.mxu0 0.0
  %2473 = vmatpush1.msra.mxu0 0.0
  %2474 = vmatprep.subr.mxu0 0.0
  %2475 = vmatpush1.msra.mxu0 0.0
  %2476 = vmatprep.subr.mxu0 0.0
  %2477 = vmatpush1.msra.mxu0 0.0
  %2478 = vmatprep.subr.mxu0 0.0
  %2479 = vmatpush1.msra.mxu0 0.0
  %2480 = vmatprep.subr.mxu0 0.0
  %2481 = vmatpush1.msra.mxu0 0.0
  %2482 = vmatprep.subr.mxu0 0.0
  %2483 = vmatpush1.msra.mxu0 0.0
  %2484 = vmatprep.subr.mxu0 0.0
  %2485 = vmatpush1.msra.mxu0 0.0
  %2486 = vmatprep.subr.mxu0 0.0
  %2487 = vmatpush1.msra.mxu0 0.0
  %2488 = vmatprep.subr.mxu0 0.0
  %2489 = vmatpush1.msra.mxu0 0.0
  %2490 = vmatprep.mubr.f32.mxu0 0.0
  %2491 = vmatmul.mubr.f32.gmra.mrb[0].mxu0 %v2424
  %v2492 = vpop.f32.mrb[0].mxu0
  %v2493 = vadd.f32 0.0, %v2492
  %v2494 = vpop.f32.mrb[0].mxu0
  %v2495 = vadd.f32 0.0, %v2494
  %2496 = vdwg.mxu0
  %2497 = vmatprep.subr.mxu0 %v2405
  %2498 = vmatpush1.msra.mxu0 %v2404
  %2499 = vmatprep.subr.mxu0 %v2409
  %2500 = vmatpush1.msra.mxu0 %v2408
  %2501 = vmatprep.subr.mxu0 0.0
  %2502 = vmatpush1.msra.mxu0 0.0
  %2503 = vmatprep.subr.mxu0 0.0
  %2504 = vmatpush1.msra.mxu0 0.0
  %2505 = vmatprep.subr.mxu0 0.0
  %2506 = vmatpush1.msra.mxu0 0.0
  %2507 = vmatprep.subr.mxu0 0.0
  %2508 = vmatpush1.msra.mxu0 0.0
  %2509 = vmatprep.subr.mxu0 0.0
  %2510 = vmatpush1.msra.mxu0 0.0
  %2511 = vmatprep.subr.mxu0 0.0
  %2512 = vmatpush1.msra.mxu0 0.0
  %2513 = vmatprep.subr.mxu0 0.0
  %2514 = vmatpush1.msra.mxu0 0.0
  %2515 = vmatprep.subr.mxu0 0.0
  %2516 = vmatpush1.msra.mxu0 0.0
  %2517 = vmatprep.subr.mxu0 0.0
  %2518 = vmatpush1.msra.mxu0 0.0
  %2519 = vmatprep.subr.mxu0 0.0
  %2520 = vmatpush1.msra.mxu0 0.0
  %2521 = vmatprep.subr.mxu0 0.0
  %2522 = vmatpush1.msra.mxu0 0.0
  %2523 = vmatprep.subr.mxu0 0.0
  %2524 = vmatpush1.msra.mxu0 0.0
  %2525 = vmatprep.subr.mxu0 0.0
  %2526 = vmatpush1.msra.mxu0 0.0
  %2527 = vmatprep.subr.mxu0 0.0
  %2528 = vmatpush1.msra.mxu0 0.0
  %2529 = vmatprep.subr.mxu0 0.0
  %2530 = vmatpush1.msra.mxu0 0.0
  %2531 = vmatprep.subr.mxu0 0.0
  %2532 = vmatpush1.msra.mxu0 0.0
  %2533 = vmatprep.subr.mxu0 0.0
  %2534 = vmatpush1.msra.mxu0 0.0
  %2535 = vmatprep.subr.mxu0 0.0
  %2536 = vmatpush1.msra.mxu0 0.0
  %2537 = vmatprep.subr.mxu0 0.0
  %2538 = vmatpush1.msra.mxu0 0.0
  %2539 = vmatprep.subr.mxu0 0.0
  %2540 = vmatpush1.msra.mxu0 0.0
  %2541 = vmatprep.subr.mxu0 0.0
  %2542 = vmatpush1.msra.mxu0 0.0
  %2543 = vmatprep.subr.mxu0 0.0
  %2544 = vmatpush1.msra.mxu0 0.0
  %2545 = vmatprep.subr.mxu0 0.0
  %2546 = vmatpush1.msra.mxu0 0.0
  %2547 = vmatprep.subr.mxu0 0.0
  %2548 = vmatpush1.msra.mxu0 0.0
  %2549 = vmatprep.subr.mxu0 0.0
  %2550 = vmatpush1.msra.mxu0 0.0
  %2551 = vmatprep.subr.mxu0 0.0
  %2552 = vmatpush1.msra.mxu0 0.0
  %2553 = vmatprep.subr.mxu0 0.0
  %2554 = vmatpush1.msra.mxu0 0.0
  %2555 = vmatprep.subr.mxu0 0.0
  %2556 = vmatpush1.msra.mxu0 0.0
  %2557 = vmatprep.subr.mxu0 0.0
  %2558 = vmatpush1.msra.mxu0 0.0
  %2559 = vmatprep.subr.mxu0 0.0
  %2560 = vmatpush1.msra.mxu0 0.0
  %2561 = vmatprep.mubr.f32.mxu0 0.0
  %2562 = vmatmul.mubr.f32.gmra.mrb[0].mxu0 %v2424
  %v2563 = vpop.f32.mrb[0].mxu0
  %v2564 = vadd.f32 0.0, %v2563
  %v2565 = vpop.f32.mrb[0].mxu0
  %v2566 = vadd.f32 0.0, %v2565
  %2567 = vdwg.mxu0
  %v2568 = vlaneseq
  %v2569 = vshrl.u32 %v2568, 7
  %v2570 = vsub.s32 0, %v2569
  %v2571 = vrot.slane %v2418, %v2570
  %v2572 = vlaneseq
  %v2573 = vshrl.u32 %v2572, 7
  %v2574 = vsub.s32 0, %v2573
  %v2575 = vrot.slane %v2419, %v2574
  %v2576 = vlaneseq
  %v2577 = vshrl.u32 %v2576, 7
  %v2578 = vsub.s32 0, %v2577
  %v2579 = vrot.slane %v2420, %v2578
  %v2580 = vlaneseq
  %v2581 = vshrl.u32 %v2580, 7
  %v2582 = vsub.s32 0, %v2581
  %v2583 = vrot.slane %v2421, %v2582
  %v2584 = vmul.f32 %v2493, %v2571
  %v2585 = vmul.f32 %v2495, %v2575
  %v2586 = vmul.f32 %v2564, %v2579
  %v2587 = vmul.f32 %v2566, %v2583
  %v2589 = vsel %vm2422, %v2411, 0
  %2591 = vmatprep.subr.mxu0 %v2403
  %2592 = vmatpush1.msra.mxu0 %v2402
  %2593 = vmatprep.subr.mxu0 %v2407
  %2594 = vmatpush1.msra.mxu0 %v2406
  %2595 = vmatprep.subr.mxu0 0.0
  %2596 = vmatpush1.msra.mxu0 0.0
  %2597 = vmatprep.subr.mxu0 0.0
  %2598 = vmatpush1.msra.mxu0 0.0
  %2599 = vmatprep.subr.mxu0 0.0
  %2600 = vmatpush1.msra.mxu0 0.0
  %2601 = vmatprep.subr.mxu0 0.0
  %2602 = vmatpush1.msra.mxu0 0.0
  %2603 = vmatprep.subr.mxu0 0.0
  %2604 = vmatpush1.msra.mxu0 0.0
  %2605 = vmatprep.subr.mxu0 0.0
  %2606 = vmatpush1.msra.mxu0 0.0
  %2607 = vmatprep.subr.mxu0 0.0
  %2608 = vmatpush1.msra.mxu0 0.0
  %2609 = vmatprep.subr.mxu0 0.0
  %2610 = vmatpush1.msra.mxu0 0.0
  %2611 = vmatprep.subr.mxu0 0.0
  %2612 = vmatpush1.msra.mxu0 0.0
  %2613 = vmatprep.subr.mxu0 0.0
  %2614 = vmatpush1.msra.mxu0 0.0
  %2615 = vmatprep.subr.mxu0 0.0
  %2616 = vmatpush1.msra.mxu0 0.0
  %2617 = vmatprep.subr.mxu0 0.0
  %2618 = vmatpush1.msra.mxu0 0.0
  %2619 = vmatprep.subr.mxu0 0.0
  %2620 = vmatpush1.msra.mxu0 0.0
  %2621 = vmatprep.subr.mxu0 0.0
  %2622 = vmatpush1.msra.mxu0 0.0
  %2623 = vmatprep.subr.mxu0 0.0
  %2624 = vmatpush1.msra.mxu0 0.0
  %2625 = vmatprep.subr.mxu0 0.0
  %2626 = vmatpush1.msra.mxu0 0.0
  %2627 = vmatprep.subr.mxu0 0.0
  %2628 = vmatpush1.msra.mxu0 0.0
  %2629 = vmatprep.subr.mxu0 0.0
  %2630 = vmatpush1.msra.mxu0 0.0
  %2631 = vmatprep.subr.mxu0 0.0
  %2632 = vmatpush1.msra.mxu0 0.0
  %2633 = vmatprep.subr.mxu0 0.0
  %2634 = vmatpush1.msra.mxu0 0.0
  %2635 = vmatprep.subr.mxu0 0.0
  %2636 = vmatpush1.msra.mxu0 0.0
  %2637 = vmatprep.subr.mxu0 0.0
  %2638 = vmatpush1.msra.mxu0 0.0
  %2639 = vmatprep.subr.mxu0 0.0
  %2640 = vmatpush1.msra.mxu0 0.0
  %2641 = vmatprep.subr.mxu0 0.0
  %2642 = vmatpush1.msra.mxu0 0.0
  %2643 = vmatprep.subr.mxu0 0.0
  %2644 = vmatpush1.msra.mxu0 0.0
  %2645 = vmatprep.subr.mxu0 0.0
  %2646 = vmatpush1.msra.mxu0 0.0
  %2647 = vmatprep.subr.mxu0 0.0
  %2648 = vmatpush1.msra.mxu0 0.0
  %2649 = vmatprep.subr.mxu0 0.0
  %2650 = vmatpush1.msra.mxu0 0.0
  %2651 = vmatprep.subr.mxu0 0.0
  %2652 = vmatpush1.msra.mxu0 0.0
  %2653 = vmatprep.subr.mxu0 0.0
  %2654 = vmatpush1.msra.mxu0 0.0
  %2655 = vmatprep.mubr.f32.mxu0 0.0
  %2656 = vmatmul.mubr.f32.gmra.mrb[0].mxu0 %v2589
  %v2657 = vpop.f32.mrb[0].mxu0
  %v2658 = vadd.f32 0.0, %v2657
  %v2659 = vpop.f32.mrb[0].mxu0
  %v2660 = vadd.f32 0.0, %v2659
  %2661 = vdwg.mxu0
  %2662 = vmatprep.subr.mxu0 %v2405
  %2663 = vmatpush1.msra.mxu0 %v2404
  %2664 = vmatprep.subr.mxu0 %v2409
  %2665 = vmatpush1.msra.mxu0 %v2408
  %2666 = vmatprep.subr.mxu0 0.0
  %2667 = vmatpush1.msra.mxu0 0.0
  %2668 = vmatprep.subr.mxu0 0.0
  %2669 = vmatpush1.msra.mxu0 0.0
  %2670 = vmatprep.subr.mxu0 0.0
  %2671 = vmatpush1.msra.mxu0 0.0
  %2672 = vmatprep.subr.mxu0 0.0
  %2673 = vmatpush1.msra.mxu0 0.0
  %2674 = vmatprep.subr.mxu0 0.0
  %2675 = vmatpush1.msra.mxu0 0.0
  %2676 = vmatprep.subr.mxu0 0.0
  %2677 = vmatpush1.msra.mxu0 0.0
  %2678 = vmatprep.subr.mxu0 0.0
  %2679 = vmatpush1.msra.mxu0 0.0
  %2680 = vmatprep.subr.mxu0 0.0
  %2681 = vmatpush1.msra.mxu0 0.0
  %2682 = vmatprep.subr.mxu0 0.0
  %2683 = vmatpush1.msra.mxu0 0.0
  %2684 = vmatprep.subr.mxu0 0.0
  %2685 = vmatpush1.msra.mxu0 0.0
  %2686 = vmatprep.subr.mxu0 0.0
  %2687 = vmatpush1.msra.mxu0 0.0
  %2688 = vmatprep.subr.mxu0 0.0
  %2689 = vmatpush1.msra.mxu0 0.0
  %2690 = vmatprep.subr.mxu0 0.0
  %2691 = vmatpush1.msra.mxu0 0.0
  %2692 = vmatprep.subr.mxu0 0.0
  %2693 = vmatpush1.msra.mxu0 0.0
  %2694 = vmatprep.subr.mxu0 0.0
  %2695 = vmatpush1.msra.mxu0 0.0
  %2696 = vmatprep.subr.mxu0 0.0
  %2697 = vmatpush1.msra.mxu0 0.0
  %2698 = vmatprep.subr.mxu0 0.0
  %2699 = vmatpush1.msra.mxu0 0.0
  %2700 = vmatprep.subr.mxu0 0.0
  %2701 = vmatpush1.msra.mxu0 0.0
  %2702 = vmatprep.subr.mxu0 0.0
  %2703 = vmatpush1.msra.mxu0 0.0
  %2704 = vmatprep.subr.mxu0 0.0
  %2705 = vmatpush1.msra.mxu0 0.0
  %2706 = vmatprep.subr.mxu0 0.0
  %2707 = vmatpush1.msra.mxu0 0.0
  %2708 = vmatprep.subr.mxu0 0.0
  %2709 = vmatpush1.msra.mxu0 0.0
  %2710 = vmatprep.subr.mxu0 0.0
  %2711 = vmatpush1.msra.mxu0 0.0
  %2712 = vmatprep.subr.mxu0 0.0
  %2713 = vmatpush1.msra.mxu0 0.0
  %2714 = vmatprep.subr.mxu0 0.0
  %2715 = vmatpush1.msra.mxu0 0.0
  %2716 = vmatprep.subr.mxu0 0.0
  %2717 = vmatpush1.msra.mxu0 0.0
  %2718 = vmatprep.subr.mxu0 0.0
  %2719 = vmatpush1.msra.mxu0 0.0
  %2720 = vmatprep.subr.mxu0 0.0
  %2721 = vmatpush1.msra.mxu0 0.0
  %2722 = vmatprep.subr.mxu0 0.0
  %2723 = vmatpush1.msra.mxu0 0.0
  %2724 = vmatprep.subr.mxu0 0.0
  %2725 = vmatpush1.msra.mxu0 0.0
  %2726 = vmatprep.mubr.f32.mxu0 0.0
  %2727 = vmatmul.mubr.f32.gmra.mrb[0].mxu0 %v2589
  %v2728 = vpop.f32.mrb[0].mxu0
  %v2729 = vadd.f32 0.0, %v2728
  %v2730 = vpop.f32.mrb[0].mxu0
  %v2731 = vadd.f32 0.0, %v2730
  %2732 = vdwg.mxu0
  %v2733 = vlaneseq
  %v2734 = vshrl.u32 %v2733, 7
  %v2735 = vsub.s32 1, %v2734
  %v2736 = vrot.slane %v2418, %v2735
  %v2737 = vlaneseq
  %v2738 = vshrl.u32 %v2737, 7
  %v2739 = vsub.s32 1, %v2738
  %v2740 = vrot.slane %v2419, %v2739
  %v2741 = vlaneseq
  %v2742 = vshrl.u32 %v2741, 7
  %v2743 = vsub.s32 1, %v2742
  %v2744 = vrot.slane %v2420, %v2743
  %v2745 = vlaneseq
  %v2746 = vshrl.u32 %v2745, 7
  %v2747 = vsub.s32 1, %v2746
  %v2748 = vrot.slane %v2421, %v2747
  %v2749 = vmul.f32 %v2658, %v2736
  %v2750 = vmul.f32 %v2660, %v2740
  %v2751 = vmul.f32 %v2729, %v2744
  %v2752 = vmul.f32 %v2731, %v2748
  %v2753 = vadd.f32 %v2584, %v2749
  %v2754 = vadd.f32 %v2585, %v2750
  %v2755 = vadd.f32 %v2586, %v2751
  %v2756 = vadd.f32 %v2587, %v2752
  %v2758 = vsel %vm2422, %v2412, 0
  %2760 = vmatprep.subr.mxu0 %v2403
  %2761 = vmatpush1.msra.mxu0 %v2402
  %2762 = vmatprep.subr.mxu0 %v2407
  %2763 = vmatpush1.msra.mxu0 %v2406
  %2764 = vmatprep.subr.mxu0 0.0
  %2765 = vmatpush1.msra.mxu0 0.0
  %2766 = vmatprep.subr.mxu0 0.0
  %2767 = vmatpush1.msra.mxu0 0.0
  %2768 = vmatprep.subr.mxu0 0.0
  %2769 = vmatpush1.msra.mxu0 0.0
  %2770 = vmatprep.subr.mxu0 0.0
  %2771 = vmatpush1.msra.mxu0 0.0
  %2772 = vmatprep.subr.mxu0 0.0
  %2773 = vmatpush1.msra.mxu0 0.0
  %2774 = vmatprep.subr.mxu0 0.0
  %2775 = vmatpush1.msra.mxu0 0.0
  %2776 = vmatprep.subr.mxu0 0.0
  %2777 = vmatpush1.msra.mxu0 0.0
  %2778 = vmatprep.subr.mxu0 0.0
  %2779 = vmatpush1.msra.mxu0 0.0
  %2780 = vmatprep.subr.mxu0 0.0
  %2781 = vmatpush1.msra.mxu0 0.0
  %2782 = vmatprep.subr.mxu0 0.0
  %2783 = vmatpush1.msra.mxu0 0.0
  %2784 = vmatprep.subr.mxu0 0.0
  %2785 = vmatpush1.msra.mxu0 0.0
  %2786 = vmatprep.subr.mxu0 0.0
  %2787 = vmatpush1.msra.mxu0 0.0
  %2788 = vmatprep.subr.mxu0 0.0
  %2789 = vmatpush1.msra.mxu0 0.0
  %2790 = vmatprep.subr.mxu0 0.0
  %2791 = vmatpush1.msra.mxu0 0.0
  %2792 = vmatprep.subr.mxu0 0.0
  %2793 = vmatpush1.msra.mxu0 0.0
  %2794 = vmatprep.subr.mxu0 0.0
  %2795 = vmatpush1.msra.mxu0 0.0
  %2796 = vmatprep.subr.mxu0 0.0
  %2797 = vmatpush1.msra.mxu0 0.0
  %2798 = vmatprep.subr.mxu0 0.0
  %2799 = vmatpush1.msra.mxu0 0.0
  %2800 = vmatprep.subr.mxu0 0.0
  %2801 = vmatpush1.msra.mxu0 0.0
  %2802 = vmatprep.subr.mxu0 0.0
  %2803 = vmatpush1.msra.mxu0 0.0
  %2804 = vmatprep.subr.mxu0 0.0
  %2805 = vmatpush1.msra.mxu0 0.0
  %2806 = vmatprep.subr.mxu0 0.0
  %2807 = vmatpush1.msra.mxu0 0.0
  %2808 = vmatprep.subr.mxu0 0.0
  %2809 = vmatpush1.msra.mxu0 0.0
  %2810 = vmatprep.subr.mxu0 0.0
  %2811 = vmatpush1.msra.mxu0 0.0
  %2812 = vmatprep.subr.mxu0 0.0
  %2813 = vmatpush1.msra.mxu0 0.0
  %2814 = vmatprep.subr.mxu0 0.0
  %2815 = vmatpush1.msra.mxu0 0.0
  %2816 = vmatprep.subr.mxu0 0.0
  %2817 = vmatpush1.msra.mxu0 0.0
  %2818 = vmatprep.subr.mxu0 0.0
  %2819 = vmatpush1.msra.mxu0 0.0
  %2820 = vmatprep.subr.mxu0 0.0
  %2821 = vmatpush1.msra.mxu0 0.0
  %2822 = vmatprep.subr.mxu0 0.0
  %2823 = vmatpush1.msra.mxu0 0.0
  %2824 = vmatprep.mubr.f32.mxu0 0.0
  %2825 = vmatmul.mubr.f32.gmra.mrb[0].mxu0 %v2758
  %v2826 = vpop.f32.mrb[0].mxu0
  %v2827 = vadd.f32 0.0, %v2826
  %v2828 = vpop.f32.mrb[0].mxu0
  %v2829 = vadd.f32 0.0, %v2828
  %2830 = vdwg.mxu0
  %2831 = vmatprep.subr.mxu0 %v2405
  %2832 = vmatpush1.msra.mxu0 %v2404
  %2833 = vmatprep.subr.mxu0 %v2409
  %2834 = vmatpush1.msra.mxu0 %v2408
  %2835 = vmatprep.subr.mxu0 0.0
  %2836 = vmatpush1.msra.mxu0 0.0
  %2837 = vmatprep.subr.mxu0 0.0
  %2838 = vmatpush1.msra.mxu0 0.0
  %2839 = vmatprep.subr.mxu0 0.0
  %2840 = vmatpush1.msra.mxu0 0.0
  %2841 = vmatprep.subr.mxu0 0.0
  %2842 = vmatpush1.msra.mxu0 0.0
  %2843 = vmatprep.subr.mxu0 0.0
  %2844 = vmatpush1.msra.mxu0 0.0
  %2845 = vmatprep.subr.mxu0 0.0
  %2846 = vmatpush1.msra.mxu0 0.0
  %2847 = vmatprep.subr.mxu0 0.0
  %2848 = vmatpush1.msra.mxu0 0.0
  %2849 = vmatprep.subr.mxu0 0.0
  %2850 = vmatpush1.msra.mxu0 0.0
  %2851 = vmatprep.subr.mxu0 0.0
  %2852 = vmatpush1.msra.mxu0 0.0
  %2853 = vmatprep.subr.mxu0 0.0
  %2854 = vmatpush1.msra.mxu0 0.0
  %2855 = vmatprep.subr.mxu0 0.0
  %2856 = vmatpush1.msra.mxu0 0.0
  %2857 = vmatprep.subr.mxu0 0.0
  %2858 = vmatpush1.msra.mxu0 0.0
  %2859 = vmatprep.subr.mxu0 0.0
  %2860 = vmatpush1.msra.mxu0 0.0
  %2861 = vmatprep.subr.mxu0 0.0
  %2862 = vmatpush1.msra.mxu0 0.0
  %2863 = vmatprep.subr.mxu0 0.0
  %2864 = vmatpush1.msra.mxu0 0.0
  %2865 = vmatprep.subr.mxu0 0.0
  %2866 = vmatpush1.msra.mxu0 0.0
  %2867 = vmatprep.subr.mxu0 0.0
  %2868 = vmatpush1.msra.mxu0 0.0
  %2869 = vmatprep.subr.mxu0 0.0
  %2870 = vmatpush1.msra.mxu0 0.0
  %2871 = vmatprep.subr.mxu0 0.0
  %2872 = vmatpush1.msra.mxu0 0.0
  %2873 = vmatprep.subr.mxu0 0.0
  %2874 = vmatpush1.msra.mxu0 0.0
  %2875 = vmatprep.subr.mxu0 0.0
  %2876 = vmatpush1.msra.mxu0 0.0
  %2877 = vmatprep.subr.mxu0 0.0
  %2878 = vmatpush1.msra.mxu0 0.0
  %2879 = vmatprep.subr.mxu0 0.0
  %2880 = vmatpush1.msra.mxu0 0.0
  %2881 = vmatprep.subr.mxu0 0.0
  %2882 = vmatpush1.msra.mxu0 0.0
  %2883 = vmatprep.subr.mxu0 0.0
  %2884 = vmatpush1.msra.mxu0 0.0
  %2885 = vmatprep.subr.mxu0 0.0
  %2886 = vmatpush1.msra.mxu0 0.0
  %2887 = vmatprep.subr.mxu0 0.0
  %2888 = vmatpush1.msra.mxu0 0.0
  %2889 = vmatprep.subr.mxu0 0.0
  %2890 = vmatpush1.msra.mxu0 0.0
  %2891 = vmatprep.subr.mxu0 0.0
  %2892 = vmatpush1.msra.mxu0 0.0
  %2893 = vmatprep.subr.mxu0 0.0
  %2894 = vmatpush1.msra.mxu0 0.0
  %2895 = vmatprep.mubr.f32.mxu0 0.0
  %2896 = vmatmul.mubr.f32.gmra.mrb[0].mxu0 %v2758
  %v2897 = vpop.f32.mrb[0].mxu0
  %v2898 = vadd.f32 0.0, %v2897
  %v2899 = vpop.f32.mrb[0].mxu0
  %v2900 = vadd.f32 0.0, %v2899
  %2901 = vdwg.mxu0
  %v2902 = vlaneseq
  %v2903 = vshrl.u32 %v2902, 7
  %v2904 = vsub.s32 2, %v2903
  %v2905 = vrot.slane %v2418, %v2904
  %v2906 = vlaneseq
  %v2907 = vshrl.u32 %v2906, 7
  %v2908 = vsub.s32 2, %v2907
  %v2909 = vrot.slane %v2419, %v2908
  %v2910 = vlaneseq
  %v2911 = vshrl.u32 %v2910, 7
  %v2912 = vsub.s32 2, %v2911
  %v2913 = vrot.slane %v2420, %v2912
  %v2914 = vlaneseq
  %v2915 = vshrl.u32 %v2914, 7
  %v2916 = vsub.s32 2, %v2915
  %v2917 = vrot.slane %v2421, %v2916
  %v2918 = vmul.f32 %v2827, %v2905
  %v2919 = vmul.f32 %v2829, %v2909
  %v2920 = vmul.f32 %v2898, %v2913
  %v2921 = vmul.f32 %v2900, %v2917
  %v2922 = vadd.f32 %v2753, %v2918
  %v2923 = vadd.f32 %v2754, %v2919
  %v2924 = vadd.f32 %v2755, %v2920
  %v2925 = vadd.f32 %v2756, %v2921
  %v2927 = vsel %vm2422, %v2413, 0
  %2929 = vmatprep.subr.mxu0 %v2403
  %2930 = vmatpush1.msra.mxu0 %v2402
  %2931 = vmatprep.subr.mxu0 %v2407
  %2932 = vmatpush1.msra.mxu0 %v2406
  %2933 = vmatprep.subr.mxu0 0.0
  %2934 = vmatpush1.msra.mxu0 0.0
  %2935 = vmatprep.subr.mxu0 0.0
  %2936 = vmatpush1.msra.mxu0 0.0
  %2937 = vmatprep.subr.mxu0 0.0
  %2938 = vmatpush1.msra.mxu0 0.0
  %2939 = vmatprep.subr.mxu0 0.0
  %2940 = vmatpush1.msra.mxu0 0.0
  %2941 = vmatprep.subr.mxu0 0.0
  %2942 = vmatpush1.msra.mxu0 0.0
  %2943 = vmatprep.subr.mxu0 0.0
  %2944 = vmatpush1.msra.mxu0 0.0
  %2945 = vmatprep.subr.mxu0 0.0
  %2946 = vmatpush1.msra.mxu0 0.0
  %2947 = vmatprep.subr.mxu0 0.0
  %2948 = vmatpush1.msra.mxu0 0.0
  %2949 = vmatprep.subr.mxu0 0.0
  %2950 = vmatpush1.msra.mxu0 0.0
  %2951 = vmatprep.subr.mxu0 0.0
  %2952 = vmatpush1.msra.mxu0 0.0
  %2953 = vmatprep.subr.mxu0 0.0
  %2954 = vmatpush1.msra.mxu0 0.0
  %2955 = vmatprep.subr.mxu0 0.0
  %2956 = vmatpush1.msra.mxu0 0.0
  %2957 = vmatprep.subr.mxu0 0.0
  %2958 = vmatpush1.msra.mxu0 0.0
  %2959 = vmatprep.subr.mxu0 0.0
  %2960 = vmatpush1.msra.mxu0 0.0
  %2961 = vmatprep.subr.mxu0 0.0
  %2962 = vmatpush1.msra.mxu0 0.0
  %2963 = vmatprep.subr.mxu0 0.0
  %2964 = vmatpush1.msra.mxu0 0.0
  %2965 = vmatprep.subr.mxu0 0.0
  %2966 = vmatpush1.msra.mxu0 0.0
  %2967 = vmatprep.subr.mxu0 0.0
  %2968 = vmatpush1.msra.mxu0 0.0
  %2969 = vmatprep.subr.mxu0 0.0
  %2970 = vmatpush1.msra.mxu0 0.0
  %2971 = vmatprep.subr.mxu0 0.0
  %2972 = vmatpush1.msra.mxu0 0.0
  %2973 = vmatprep.subr.mxu0 0.0
  %2974 = vmatpush1.msra.mxu0 0.0
  %2975 = vmatprep.subr.mxu0 0.0
  %2976 = vmatpush1.msra.mxu0 0.0
  %2977 = vmatprep.subr.mxu0 0.0
  %2978 = vmatpush1.msra.mxu0 0.0
  %2979 = vmatprep.subr.mxu0 0.0
  %2980 = vmatpush1.msra.mxu0 0.0
  %2981 = vmatprep.subr.mxu0 0.0
  %2982 = vmatpush1.msra.mxu0 0.0
  %2983 = vmatprep.subr.mxu0 0.0
  %2984 = vmatpush1.msra.mxu0 0.0
  %2985 = vmatprep.subr.mxu0 0.0
  %2986 = vmatpush1.msra.mxu0 0.0
  %2987 = vmatprep.subr.mxu0 0.0
  %2988 = vmatpush1.msra.mxu0 0.0
  %2989 = vmatprep.subr.mxu0 0.0
  %2990 = vmatpush1.msra.mxu0 0.0
  %2991 = vmatprep.subr.mxu0 0.0
  %2992 = vmatpush1.msra.mxu0 0.0
  %2993 = vmatprep.mubr.f32.mxu0 0.0
  %2994 = vmatmul.mubr.f32.gmra.mrb[0].mxu0 %v2927
  %v2995 = vpop.f32.mrb[0].mxu0
  %v2996 = vadd.f32 0.0, %v2995
  %v2997 = vpop.f32.mrb[0].mxu0
  %v2998 = vadd.f32 0.0, %v2997
  %2999 = vdwg.mxu0
  %3000 = vmatprep.subr.mxu0 %v2405
  %3001 = vmatpush1.msra.mxu0 %v2404
  %3002 = vmatprep.subr.mxu0 %v2409
  %3003 = vmatpush1.msra.mxu0 %v2408
  %3004 = vmatprep.subr.mxu0 0.0
  %3005 = vmatpush1.msra.mxu0 0.0
  %3006 = vmatprep.subr.mxu0 0.0
  %3007 = vmatpush1.msra.mxu0 0.0
  %3008 = vmatprep.subr.mxu0 0.0
  %3009 = vmatpush1.msra.mxu0 0.0
  %3010 = vmatprep.subr.mxu0 0.0
  %3011 = vmatpush1.msra.mxu0 0.0
  %3012 = vmatprep.subr.mxu0 0.0
  %3013 = vmatpush1.msra.mxu0 0.0
  %3014 = vmatprep.subr.mxu0 0.0
  %3015 = vmatpush1.msra.mxu0 0.0
  %3016 = vmatprep.subr.mxu0 0.0
  %3017 = vmatpush1.msra.mxu0 0.0
  %3018 = vmatprep.subr.mxu0 0.0
  %3019 = vmatpush1.msra.mxu0 0.0
  %3020 = vmatprep.subr.mxu0 0.0
  %3021 = vmatpush1.msra.mxu0 0.0
  %3022 = vmatprep.subr.mxu0 0.0
  %3023 = vmatpush1.msra.mxu0 0.0
  %3024 = vmatprep.subr.mxu0 0.0
  %3025 = vmatpush1.msra.mxu0 0.0
  %3026 = vmatprep.subr.mxu0 0.0
  %3027 = vmatpush1.msra.mxu0 0.0
  %3028 = vmatprep.subr.mxu0 0.0
  %3029 = vmatpush1.msra.mxu0 0.0
  %3030 = vmatprep.subr.mxu0 0.0
  %3031 = vmatpush1.msra.mxu0 0.0
  %3032 = vmatprep.subr.mxu0 0.0
  %3033 = vmatpush1.msra.mxu0 0.0
  %3034 = vmatprep.subr.mxu0 0.0
  %3035 = vmatpush1.msra.mxu0 0.0
  %3036 = vmatprep.subr.mxu0 0.0
  %3037 = vmatpush1.msra.mxu0 0.0
  %3038 = vmatprep.subr.mxu0 0.0
  %3039 = vmatpush1.msra.mxu0 0.0
  %3040 = vmatprep.subr.mxu0 0.0
  %3041 = vmatpush1.msra.mxu0 0.0
  %3042 = vmatprep.subr.mxu0 0.0
  %3043 = vmatpush1.msra.mxu0 0.0
  %3044 = vmatprep.subr.mxu0 0.0
  %3045 = vmatpush1.msra.mxu0 0.0
  %3046 = vmatprep.subr.mxu0 0.0
  %3047 = vmatpush1.msra.mxu0 0.0
  %3048 = vmatprep.subr.mxu0 0.0
  %3049 = vmatpush1.msra.mxu0 0.0
  %3050 = vmatprep.subr.mxu0 0.0
  %3051 = vmatpush1.msra.mxu0 0.0
  %3052 = vmatprep.subr.mxu0 0.0
  %3053 = vmatpush1.msra.mxu0 0.0
  %3054 = vmatprep.subr.mxu0 0.0
  %3055 = vmatpush1.msra.mxu0 0.0
  %3056 = vmatprep.subr.mxu0 0.0
  %3057 = vmatpush1.msra.mxu0 0.0
  %3058 = vmatprep.subr.mxu0 0.0
  %3059 = vmatpush1.msra.mxu0 0.0
  %3060 = vmatprep.subr.mxu0 0.0
  %3061 = vmatpush1.msra.mxu0 0.0
  %3062 = vmatprep.subr.mxu0 0.0
  %3063 = vmatpush1.msra.mxu0 0.0
  %3064 = vmatprep.mubr.f32.mxu0 0.0
  %3065 = vmatmul.mubr.f32.gmra.mrb[0].mxu0 %v2927
  %v3066 = vpop.f32.mrb[0].mxu0
  %v3067 = vadd.f32 0.0, %v3066
  %v3068 = vpop.f32.mrb[0].mxu0
  %v3069 = vadd.f32 0.0, %v3068
  %3070 = vdwg.mxu0
  %v3071 = vlaneseq
  %v3072 = vshrl.u32 %v3071, 7
  %v3073 = vsub.s32 3, %v3072
  %v3074 = vrot.slane %v2418, %v3073
  %v3075 = vlaneseq
  %v3076 = vshrl.u32 %v3075, 7
  %v3077 = vsub.s32 3, %v3076
  %v3078 = vrot.slane %v2419, %v3077
  %v3079 = vlaneseq
  %v3080 = vshrl.u32 %v3079, 7
  %v3081 = vsub.s32 3, %v3080
  %v3082 = vrot.slane %v2420, %v3081
  %v3083 = vlaneseq
  %v3084 = vshrl.u32 %v3083, 7
  %v3085 = vsub.s32 3, %v3084
  %v3086 = vrot.slane %v2421, %v3085
  %v3087 = vmul.f32 %v2996, %v3074
  %v3088 = vmul.f32 %v2998, %v3078
  %v3089 = vmul.f32 %v3067, %v3082
  %v3090 = vmul.f32 %v3069, %v3086
  %v3091 = vadd.f32 %v2922, %v3087
  %v3092 = vadd.f32 %v2923, %v3088
  %v3093 = vadd.f32 %v2924, %v3089
  %v3094 = vadd.f32 %v2925, %v3090
  %v3096 = vsel %vm2422, %v2414, 0
  %3098 = vmatprep.subr.mxu0 %v2403
  %3099 = vmatpush1.msra.mxu0 %v2402
  %3100 = vmatprep.subr.mxu0 %v2407
  %3101 = vmatpush1.msra.mxu0 %v2406
  %3102 = vmatprep.subr.mxu0 0.0
  %3103 = vmatpush1.msra.mxu0 0.0
  %3104 = vmatprep.subr.mxu0 0.0
  %3105 = vmatpush1.msra.mxu0 0.0
  %3106 = vmatprep.subr.mxu0 0.0
  %3107 = vmatpush1.msra.mxu0 0.0
  %3108 = vmatprep.subr.mxu0 0.0
  %3109 = vmatpush1.msra.mxu0 0.0
  %3110 = vmatprep.subr.mxu0 0.0
  %3111 = vmatpush1.msra.mxu0 0.0
  %3112 = vmatprep.subr.mxu0 0.0
  %3113 = vmatpush1.msra.mxu0 0.0
  %3114 = vmatprep.subr.mxu0 0.0
  %3115 = vmatpush1.msra.mxu0 0.0
  %3116 = vmatprep.subr.mxu0 0.0
  %3117 = vmatpush1.msra.mxu0 0.0
  %3118 = vmatprep.subr.mxu0 0.0
  %3119 = vmatpush1.msra.mxu0 0.0
  %3120 = vmatprep.subr.mxu0 0.0
  %3121 = vmatpush1.msra.mxu0 0.0
  %3122 = vmatprep.subr.mxu0 0.0
  %3123 = vmatpush1.msra.mxu0 0.0
  %3124 = vmatprep.subr.mxu0 0.0
  %3125 = vmatpush1.msra.mxu0 0.0
  %3126 = vmatprep.subr.mxu0 0.0
  %3127 = vmatpush1.msra.mxu0 0.0
  %3128 = vmatprep.subr.mxu0 0.0
  %3129 = vmatpush1.msra.mxu0 0.0
  %3130 = vmatprep.subr.mxu0 0.0
  %3131 = vmatpush1.msra.mxu0 0.0
  %3132 = vmatprep.subr.mxu0 0.0
  %3133 = vmatpush1.msra.mxu0 0.0
  %3134 = vmatprep.subr.mxu0 0.0
  %3135 = vmatpush1.msra.mxu0 0.0
  %3136 = vmatprep.subr.mxu0 0.0
  %3137 = vmatpush1.msra.mxu0 0.0
  %3138 = vmatprep.subr.mxu0 0.0
  %3139 = vmatpush1.msra.mxu0 0.0
  %3140 = vmatprep.subr.mxu0 0.0
  %3141 = vmatpush1.msra.mxu0 0.0
  %3142 = vmatprep.subr.mxu0 0.0
  %3143 = vmatpush1.msra.mxu0 0.0
  %3144 = vmatprep.subr.mxu0 0.0
  %3145 = vmatpush1.msra.mxu0 0.0
  %3146 = vmatprep.subr.mxu0 0.0
  %3147 = vmatpush1.msra.mxu0 0.0
  %3148 = vmatprep.subr.mxu0 0.0
  %3149 = vmatpush1.msra.mxu0 0.0
  %3150 = vmatprep.subr.mxu0 0.0
  %3151 = vmatpush1.msra.mxu0 0.0
  %3152 = vmatprep.subr.mxu0 0.0
  %3153 = vmatpush1.msra.mxu0 0.0
  %3154 = vmatprep.subr.mxu0 0.0
  %3155 = vmatpush1.msra.mxu0 0.0
  %3156 = vmatprep.subr.mxu0 0.0
  %3157 = vmatpush1.msra.mxu0 0.0
  %3158 = vmatprep.subr.mxu0 0.0
  %3159 = vmatpush1.msra.mxu0 0.0
  %3160 = vmatprep.subr.mxu0 0.0
  %3161 = vmatpush1.msra.mxu0 0.0
  %3162 = vmatprep.mubr.f32.mxu0 0.0
  %3163 = vmatmul.mubr.f32.gmra.mrb[0].mxu0 %v3096
  %v3164 = vpop.f32.mrb[0].mxu0
  %v3165 = vadd.f32 0.0, %v3164
  %v3166 = vpop.f32.mrb[0].mxu0
  %v3167 = vadd.f32 0.0, %v3166
  %3168 = vdwg.mxu0
  %3169 = vmatprep.subr.mxu0 %v2405
  %3170 = vmatpush1.msra.mxu0 %v2404
  %3171 = vmatprep.subr.mxu0 %v2409
  %3172 = vmatpush1.msra.mxu0 %v2408
  %3173 = vmatprep.subr.mxu0 0.0
  %3174 = vmatpush1.msra.mxu0 0.0
  %3175 = vmatprep.subr.mxu0 0.0
  %3176 = vmatpush1.msra.mxu0 0.0
  %3177 = vmatprep.subr.mxu0 0.0
  %3178 = vmatpush1.msra.mxu0 0.0
  %3179 = vmatprep.subr.mxu0 0.0
  %3180 = vmatpush1.msra.mxu0 0.0
  %3181 = vmatprep.subr.mxu0 0.0
  %3182 = vmatpush1.msra.mxu0 0.0
  %3183 = vmatprep.subr.mxu0 0.0
  %3184 = vmatpush1.msra.mxu0 0.0
  %3185 = vmatprep.subr.mxu0 0.0
  %3186 = vmatpush1.msra.mxu0 0.0
  %3187 = vmatprep.subr.mxu0 0.0
  %3188 = vmatpush1.msra.mxu0 0.0
  %3189 = vmatprep.subr.mxu0 0.0
  %3190 = vmatpush1.msra.mxu0 0.0
  %3191 = vmatprep.subr.mxu0 0.0
  %3192 = vmatpush1.msra.mxu0 0.0
  %3193 = vmatprep.subr.mxu0 0.0
  %3194 = vmatpush1.msra.mxu0 0.0
  %3195 = vmatprep.subr.mxu0 0.0
  %3196 = vmatpush1.msra.mxu0 0.0
  %3197 = vmatprep.subr.mxu0 0.0
  %3198 = vmatpush1.msra.mxu0 0.0
  %3199 = vmatprep.subr.mxu0 0.0
  %3200 = vmatpush1.msra.mxu0 0.0
  %3201 = vmatprep.subr.mxu0 0.0
  %3202 = vmatpush1.msra.mxu0 0.0
  %3203 = vmatprep.subr.mxu0 0.0
  %3204 = vmatpush1.msra.mxu0 0.0
  %3205 = vmatprep.subr.mxu0 0.0
  %3206 = vmatpush1.msra.mxu0 0.0
  %3207 = vmatprep.subr.mxu0 0.0
  %3208 = vmatpush1.msra.mxu0 0.0
  %3209 = vmatprep.subr.mxu0 0.0
  %3210 = vmatpush1.msra.mxu0 0.0
  %3211 = vmatprep.subr.mxu0 0.0
  %3212 = vmatpush1.msra.mxu0 0.0
  %3213 = vmatprep.subr.mxu0 0.0
  %3214 = vmatpush1.msra.mxu0 0.0
  %3215 = vmatprep.subr.mxu0 0.0
  %3216 = vmatpush1.msra.mxu0 0.0
  %3217 = vmatprep.subr.mxu0 0.0
  %3218 = vmatpush1.msra.mxu0 0.0
  %3219 = vmatprep.subr.mxu0 0.0
  %3220 = vmatpush1.msra.mxu0 0.0
  %3221 = vmatprep.subr.mxu0 0.0
  %3222 = vmatpush1.msra.mxu0 0.0
  %3223 = vmatprep.subr.mxu0 0.0
  %3224 = vmatpush1.msra.mxu0 0.0
  %3225 = vmatprep.subr.mxu0 0.0
  %3226 = vmatpush1.msra.mxu0 0.0
  %3227 = vmatprep.subr.mxu0 0.0
  %3228 = vmatpush1.msra.mxu0 0.0
  %3229 = vmatprep.subr.mxu0 0.0
  %3230 = vmatpush1.msra.mxu0 0.0
  %3231 = vmatprep.subr.mxu0 0.0
  %3232 = vmatpush1.msra.mxu0 0.0
  %3233 = vmatprep.mubr.f32.mxu0 0.0
  %3234 = vmatmul.mubr.f32.gmra.mrb[0].mxu0 %v3096
  %v3235 = vpop.f32.mrb[0].mxu0
  %v3236 = vadd.f32 0.0, %v3235
  %v3237 = vpop.f32.mrb[0].mxu0
  %v3238 = vadd.f32 0.0, %v3237
  %3239 = vdwg.mxu0
  %v3240 = vlaneseq
  %v3241 = vshrl.u32 %v3240, 7
  %v3242 = vsub.s32 4, %v3241
  %v3243 = vrot.slane %v2418, %v3242
  %v3244 = vlaneseq
  %v3245 = vshrl.u32 %v3244, 7
  %v3246 = vsub.s32 4, %v3245
  %v3247 = vrot.slane %v2419, %v3246
  %v3248 = vlaneseq
  %v3249 = vshrl.u32 %v3248, 7
  %v3250 = vsub.s32 4, %v3249
  %v3251 = vrot.slane %v2420, %v3250
  %v3252 = vlaneseq
  %v3253 = vshrl.u32 %v3252, 7
  %v3254 = vsub.s32 4, %v3253
  %v3255 = vrot.slane %v2421, %v3254
  %v3256 = vmul.f32 %v3165, %v3243
  %v3257 = vmul.f32 %v3167, %v3247
  %v3258 = vmul.f32 %v3236, %v3251
  %v3259 = vmul.f32 %v3238, %v3255
  %v3260 = vadd.f32 %v3091, %v3256
  %v3261 = vadd.f32 %v3092, %v3257
  %v3262 = vadd.f32 %v3093, %v3258
  %v3263 = vadd.f32 %v3094, %v3259
  %v3265 = vsel %vm2422, %v2415, 0
  %3267 = vmatprep.subr.mxu0 %v2403
  %3268 = vmatpush1.msra.mxu0 %v2402
  %3269 = vmatprep.subr.mxu0 %v2407
  %3270 = vmatpush1.msra.mxu0 %v2406
  %3271 = vmatprep.subr.mxu0 0.0
  %3272 = vmatpush1.msra.mxu0 0.0
  %3273 = vmatprep.subr.mxu0 0.0
  %3274 = vmatpush1.msra.mxu0 0.0
  %3275 = vmatprep.subr.mxu0 0.0
  %3276 = vmatpush1.msra.mxu0 0.0
  %3277 = vmatprep.subr.mxu0 0.0
  %3278 = vmatpush1.msra.mxu0 0.0
  %3279 = vmatprep.subr.mxu0 0.0
  %3280 = vmatpush1.msra.mxu0 0.0
  %3281 = vmatprep.subr.mxu0 0.0
  %3282 = vmatpush1.msra.mxu0 0.0
  %3283 = vmatprep.subr.mxu0 0.0
  %3284 = vmatpush1.msra.mxu0 0.0
  %3285 = vmatprep.subr.mxu0 0.0
  %3286 = vmatpush1.msra.mxu0 0.0
  %3287 = vmatprep.subr.mxu0 0.0
  %3288 = vmatpush1.msra.mxu0 0.0
  %3289 = vmatprep.subr.mxu0 0.0
  %3290 = vmatpush1.msra.mxu0 0.0
  %3291 = vmatprep.subr.mxu0 0.0
  %3292 = vmatpush1.msra.mxu0 0.0
  %3293 = vmatprep.subr.mxu0 0.0
  %3294 = vmatpush1.msra.mxu0 0.0
  %3295 = vmatprep.subr.mxu0 0.0
  %3296 = vmatpush1.msra.mxu0 0.0
  %3297 = vmatprep.subr.mxu0 0.0
  %3298 = vmatpush1.msra.mxu0 0.0
  %3299 = vmatprep.subr.mxu0 0.0
  %3300 = vmatpush1.msra.mxu0 0.0
  %3301 = vmatprep.subr.mxu0 0.0
  %3302 = vmatpush1.msra.mxu0 0.0
  %3303 = vmatprep.subr.mxu0 0.0
  %3304 = vmatpush1.msra.mxu0 0.0
  %3305 = vmatprep.subr.mxu0 0.0
  %3306 = vmatpush1.msra.mxu0 0.0
  %3307 = vmatprep.subr.mxu0 0.0
  %3308 = vmatpush1.msra.mxu0 0.0
  %3309 = vmatprep.subr.mxu0 0.0
  %3310 = vmatpush1.msra.mxu0 0.0
  %3311 = vmatprep.subr.mxu0 0.0
  %3312 = vmatpush1.msra.mxu0 0.0
  %3313 = vmatprep.subr.mxu0 0.0
  %3314 = vmatpush1.msra.mxu0 0.0
  %3315 = vmatprep.subr.mxu0 0.0
  %3316 = vmatpush1.msra.mxu0 0.0
  %3317 = vmatprep.subr.mxu0 0.0
  %3318 = vmatpush1.msra.mxu0 0.0
  %3319 = vmatprep.subr.mxu0 0.0
  %3320 = vmatpush1.msra.mxu0 0.0
  %3321 = vmatprep.subr.mxu0 0.0
  %3322 = vmatpush1.msra.mxu0 0.0
  %3323 = vmatprep.subr.mxu0 0.0
  %3324 = vmatpush1.msra.mxu0 0.0
  %3325 = vmatprep.subr.mxu0 0.0
  %3326 = vmatpush1.msra.mxu0 0.0
  %3327 = vmatprep.subr.mxu0 0.0
  %3328 = vmatpush1.msra.mxu0 0.0
  %3329 = vmatprep.subr.mxu0 0.0
  %3330 = vmatpush1.msra.mxu0 0.0
  %3331 = vmatprep.mubr.f32.mxu0 0.0
  %3332 = vmatmul.mubr.f32.gmra.mrb[0].mxu0 %v3265
  %v3333 = vpop.f32.mrb[0].mxu0
  %v3334 = vadd.f32 0.0, %v3333
  %v3335 = vpop.f32.mrb[0].mxu0
  %v3336 = vadd.f32 0.0, %v3335
  %3337 = vdwg.mxu0
  %3338 = vmatprep.subr.mxu0 %v2405
  %3339 = vmatpush1.msra.mxu0 %v2404
  %3340 = vmatprep.subr.mxu0 %v2409
  %3341 = vmatpush1.msra.mxu0 %v2408
  %3342 = vmatprep.subr.mxu0 0.0
  %3343 = vmatpush1.msra.mxu0 0.0
  %3344 = vmatprep.subr.mxu0 0.0
  %3345 = vmatpush1.msra.mxu0 0.0
  %3346 = vmatprep.subr.mxu0 0.0
  %3347 = vmatpush1.msra.mxu0 0.0
  %3348 = vmatprep.subr.mxu0 0.0
  %3349 = vmatpush1.msra.mxu0 0.0
  %3350 = vmatprep.subr.mxu0 0.0
  %3351 = vmatpush1.msra.mxu0 0.0
  %3352 = vmatprep.subr.mxu0 0.0
  %3353 = vmatpush1.msra.mxu0 0.0
  %3354 = vmatprep.subr.mxu0 0.0
  %3355 = vmatpush1.msra.mxu0 0.0
  %3356 = vmatprep.subr.mxu0 0.0
  %3357 = vmatpush1.msra.mxu0 0.0
  %3358 = vmatprep.subr.mxu0 0.0
  %3359 = vmatpush1.msra.mxu0 0.0
  %3360 = vmatprep.subr.mxu0 0.0
  %3361 = vmatpush1.msra.mxu0 0.0
  %3362 = vmatprep.subr.mxu0 0.0
  %3363 = vmatpush1.msra.mxu0 0.0
  %3364 = vmatprep.subr.mxu0 0.0
  %3365 = vmatpush1.msra.mxu0 0.0
  %3366 = vmatprep.subr.mxu0 0.0
  %3367 = vmatpush1.msra.mxu0 0.0
  %3368 = vmatprep.subr.mxu0 0.0
  %3369 = vmatpush1.msra.mxu0 0.0
  %3370 = vmatprep.subr.mxu0 0.0
  %3371 = vmatpush1.msra.mxu0 0.0
  %3372 = vmatprep.subr.mxu0 0.0
  %3373 = vmatpush1.msra.mxu0 0.0
  %3374 = vmatprep.subr.mxu0 0.0
  %3375 = vmatpush1.msra.mxu0 0.0
  %3376 = vmatprep.subr.mxu0 0.0
  %3377 = vmatpush1.msra.mxu0 0.0
  %3378 = vmatprep.subr.mxu0 0.0
  %3379 = vmatpush1.msra.mxu0 0.0
  %3380 = vmatprep.subr.mxu0 0.0
  %3381 = vmatpush1.msra.mxu0 0.0
  %3382 = vmatprep.subr.mxu0 0.0
  %3383 = vmatpush1.msra.mxu0 0.0
  %3384 = vmatprep.subr.mxu0 0.0
  %3385 = vmatpush1.msra.mxu0 0.0
  %3386 = vmatprep.subr.mxu0 0.0
  %3387 = vmatpush1.msra.mxu0 0.0
  %3388 = vmatprep.subr.mxu0 0.0
  %3389 = vmatpush1.msra.mxu0 0.0
  %3390 = vmatprep.subr.mxu0 0.0
  %3391 = vmatpush1.msra.mxu0 0.0
  %3392 = vmatprep.subr.mxu0 0.0
  %3393 = vmatpush1.msra.mxu0 0.0
  %3394 = vmatprep.subr.mxu0 0.0
  %3395 = vmatpush1.msra.mxu0 0.0
  %3396 = vmatprep.subr.mxu0 0.0
  %3397 = vmatpush1.msra.mxu0 0.0
  %3398 = vmatprep.subr.mxu0 0.0
  %3399 = vmatpush1.msra.mxu0 0.0
  %3400 = vmatprep.subr.mxu0 0.0
  %3401 = vmatpush1.msra.mxu0 0.0
  %3402 = vmatprep.mubr.f32.mxu0 0.0
  %3403 = vmatmul.mubr.f32.gmra.mrb[0].mxu0 %v3265
  %v3404 = vpop.f32.mrb[0].mxu0
  %v3405 = vadd.f32 0.0, %v3404
  %v3406 = vpop.f32.mrb[0].mxu0
  %v3407 = vadd.f32 0.0, %v3406
  %3408 = vdwg.mxu0
  %v3409 = vlaneseq
  %v3410 = vshrl.u32 %v3409, 7
  %v3411 = vsub.s32 5, %v3410
  %v3412 = vrot.slane %v2418, %v3411
  %v3413 = vlaneseq
  %v3414 = vshrl.u32 %v3413, 7
  %v3415 = vsub.s32 5, %v3414
  %v3416 = vrot.slane %v2419, %v3415
  %v3417 = vlaneseq
  %v3418 = vshrl.u32 %v3417, 7
  %v3419 = vsub.s32 5, %v3418
  %v3420 = vrot.slane %v2420, %v3419
  %v3421 = vlaneseq
  %v3422 = vshrl.u32 %v3421, 7
  %v3423 = vsub.s32 5, %v3422
  %v3424 = vrot.slane %v2421, %v3423
  %v3425 = vmul.f32 %v3334, %v3412
  %v3426 = vmul.f32 %v3336, %v3416
  %v3427 = vmul.f32 %v3405, %v3420
  %v3428 = vmul.f32 %v3407, %v3424
  %v3429 = vadd.f32 %v3260, %v3425
  %v3430 = vadd.f32 %v3261, %v3426
  %v3431 = vadd.f32 %v3262, %v3427
  %v3432 = vadd.f32 %v3263, %v3428
  %v3434 = vsel %vm2422, %v2416, 0
  %3436 = vmatprep.subr.mxu0 %v2403
  %3437 = vmatpush1.msra.mxu0 %v2402
  %3438 = vmatprep.subr.mxu0 %v2407
  %3439 = vmatpush1.msra.mxu0 %v2406
  %3440 = vmatprep.subr.mxu0 0.0
  %3441 = vmatpush1.msra.mxu0 0.0
  %3442 = vmatprep.subr.mxu0 0.0
  %3443 = vmatpush1.msra.mxu0 0.0
  %3444 = vmatprep.subr.mxu0 0.0
  %3445 = vmatpush1.msra.mxu0 0.0
  %3446 = vmatprep.subr.mxu0 0.0
  %3447 = vmatpush1.msra.mxu0 0.0
  %3448 = vmatprep.subr.mxu0 0.0
  %3449 = vmatpush1.msra.mxu0 0.0
  %3450 = vmatprep.subr.mxu0 0.0
  %3451 = vmatpush1.msra.mxu0 0.0
  %3452 = vmatprep.subr.mxu0 0.0
  %3453 = vmatpush1.msra.mxu0 0.0
  %3454 = vmatprep.subr.mxu0 0.0
  %3455 = vmatpush1.msra.mxu0 0.0
  %3456 = vmatprep.subr.mxu0 0.0
  %3457 = vmatpush1.msra.mxu0 0.0
  %3458 = vmatprep.subr.mxu0 0.0
  %3459 = vmatpush1.msra.mxu0 0.0
  %3460 = vmatprep.subr.mxu0 0.0
  %3461 = vmatpush1.msra.mxu0 0.0
  %3462 = vmatprep.subr.mxu0 0.0
  %3463 = vmatpush1.msra.mxu0 0.0
  %3464 = vmatprep.subr.mxu0 0.0
  %3465 = vmatpush1.msra.mxu0 0.0
  %3466 = vmatprep.subr.mxu0 0.0
  %3467 = vmatpush1.msra.mxu0 0.0
  %3468 = vmatprep.subr.mxu0 0.0
  %3469 = vmatpush1.msra.mxu0 0.0
  %3470 = vmatprep.subr.mxu0 0.0
  %3471 = vmatpush1.msra.mxu0 0.0
  %3472 = vmatprep.subr.mxu0 0.0
  %3473 = vmatpush1.msra.mxu0 0.0
  %3474 = vmatprep.subr.mxu0 0.0
  %3475 = vmatpush1.msra.mxu0 0.0
  %3476 = vmatprep.subr.mxu0 0.0
  %3477 = vmatpush1.msra.mxu0 0.0
  %3478 = vmatprep.subr.mxu0 0.0
  %3479 = vmatpush1.msra.mxu0 0.0
  %3480 = vmatprep.subr.mxu0 0.0
  %3481 = vmatpush1.msra.mxu0 0.0
  %3482 = vmatprep.subr.mxu0 0.0
  %3483 = vmatpush1.msra.mxu0 0.0
  %3484 = vmatprep.subr.mxu0 0.0
  %3485 = vmatpush1.msra.mxu0 0.0
  %3486 = vmatprep.subr.mxu0 0.0
  %3487 = vmatpush1.msra.mxu0 0.0
  %3488 = vmatprep.subr.mxu0 0.0
  %3489 = vmatpush1.msra.mxu0 0.0
  %3490 = vmatprep.subr.mxu0 0.0
  %3491 = vmatpush1.msra.mxu0 0.0
  %3492 = vmatprep.subr.mxu0 0.0
  %3493 = vmatpush1.msra.mxu0 0.0
  %3494 = vmatprep.subr.mxu0 0.0
  %3495 = vmatpush1.msra.mxu0 0.0
  %3496 = vmatprep.subr.mxu0 0.0
  %3497 = vmatpush1.msra.mxu0 0.0
  %3498 = vmatprep.subr.mxu0 0.0
  %3499 = vmatpush1.msra.mxu0 0.0
  %3500 = vmatprep.mubr.f32.mxu0 0.0
  %3501 = vmatmul.mubr.f32.gmra.mrb[0].mxu0 %v3434
  %v3502 = vpop.f32.mrb[0].mxu0
  %v3503 = vadd.f32 0.0, %v3502
  %v3504 = vpop.f32.mrb[0].mxu0
  %v3505 = vadd.f32 0.0, %v3504
  %3506 = vdwg.mxu0
  %3507 = vmatprep.subr.mxu0 %v2405
  %3508 = vmatpush1.msra.mxu0 %v2404
  %3509 = vmatprep.subr.mxu0 %v2409
  %3510 = vmatpush1.msra.mxu0 %v2408
  %3511 = vmatprep.subr.mxu0 0.0
  %3512 = vmatpush1.msra.mxu0 0.0
  %3513 = vmatprep.subr.mxu0 0.0
  %3514 = vmatpush1.msra.mxu0 0.0
  %3515 = vmatprep.subr.mxu0 0.0
  %3516 = vmatpush1.msra.mxu0 0.0
  %3517 = vmatprep.subr.mxu0 0.0
  %3518 = vmatpush1.msra.mxu0 0.0
  %3519 = vmatprep.subr.mxu0 0.0
  %3520 = vmatpush1.msra.mxu0 0.0
  %3521 = vmatprep.subr.mxu0 0.0
  %3522 = vmatpush1.msra.mxu0 0.0
  %3523 = vmatprep.subr.mxu0 0.0
  %3524 = vmatpush1.msra.mxu0 0.0
  %3525 = vmatprep.subr.mxu0 0.0
  %3526 = vmatpush1.msra.mxu0 0.0
  %3527 = vmatprep.subr.mxu0 0.0
  %3528 = vmatpush1.msra.mxu0 0.0
  %3529 = vmatprep.subr.mxu0 0.0
  %3530 = vmatpush1.msra.mxu0 0.0
  %3531 = vmatprep.subr.mxu0 0.0
  %3532 = vmatpush1.msra.mxu0 0.0
  %3533 = vmatprep.subr.mxu0 0.0
  %3534 = vmatpush1.msra.mxu0 0.0
  %3535 = vmatprep.subr.mxu0 0.0
  %3536 = vmatpush1.msra.mxu0 0.0
  %3537 = vmatprep.subr.mxu0 0.0
  %3538 = vmatpush1.msra.mxu0 0.0
  %3539 = vmatprep.subr.mxu0 0.0
  %3540 = vmatpush1.msra.mxu0 0.0
  %3541 = vmatprep.subr.mxu0 0.0
  %3542 = vmatpush1.msra.mxu0 0.0
  %3543 = vmatprep.subr.mxu0 0.0
  %3544 = vmatpush1.msra.mxu0 0.0
  %3545 = vmatprep.subr.mxu0 0.0
  %3546 = vmatpush1.msra.mxu0 0.0
  %3547 = vmatprep.subr.mxu0 0.0
  %3548 = vmatpush1.msra.mxu0 0.0
  %3549 = vmatprep.subr.mxu0 0.0
  %3550 = vmatpush1.msra.mxu0 0.0
  %3551 = vmatprep.subr.mxu0 0.0
  %3552 = vmatpush1.msra.mxu0 0.0
  %3553 = vmatprep.subr.mxu0 0.0
  %3554 = vmatpush1.msra.mxu0 0.0
  %3555 = vmatprep.subr.mxu0 0.0
  %3556 = vmatpush1.msra.mxu0 0.0
  %3557 = vmatprep.subr.mxu0 0.0
  %3558 = vmatpush1.msra.mxu0 0.0
  %3559 = vmatprep.subr.mxu0 0.0
  %3560 = vmatpush1.msra.mxu0 0.0
  %3561 = vmatprep.subr.mxu0 0.0
  %3562 = vmatpush1.msra.mxu0 0.0
  %3563 = vmatprep.subr.mxu0 0.0
  %3564 = vmatpush1.msra.mxu0 0.0
  %3565 = vmatprep.subr.mxu0 0.0
  %3566 = vmatpush1.msra.mxu0 0.0
  %3567 = vmatprep.subr.mxu0 0.0
  %3568 = vmatpush1.msra.mxu0 0.0
  %3569 = vmatprep.subr.mxu0 0.0
  %3570 = vmatpush1.msra.mxu0 0.0
  %3571 = vmatprep.mubr.f32.mxu0 0.0
  %3572 = vmatmul.mubr.f32.gmra.mrb[0].mxu0 %v3434
  %v3573 = vpop.f32.mrb[0].mxu0
  %v3574 = vadd.f32 0.0, %v3573
  %v3575 = vpop.f32.mrb[0].mxu0
  %v3576 = vadd.f32 0.0, %v3575
  %3577 = vdwg.mxu0
  %v3578 = vlaneseq
  %v3579 = vshrl.u32 %v3578, 7
  %v3580 = vsub.s32 6, %v3579
  %v3581 = vrot.slane %v2418, %v3580
  %v3582 = vlaneseq
  %v3583 = vshrl.u32 %v3582, 7
  %v3584 = vsub.s32 6, %v3583
  %v3585 = vrot.slane %v2419, %v3584
  %v3586 = vlaneseq
  %v3587 = vshrl.u32 %v3586, 7
  %v3588 = vsub.s32 6, %v3587
  %v3589 = vrot.slane %v2420, %v3588
  %v3590 = vlaneseq
  %v3591 = vshrl.u32 %v3590, 7
  %v3592 = vsub.s32 6, %v3591
  %v3593 = vrot.slane %v2421, %v3592
  %v3594 = vmul.f32 %v3503, %v3581
  %v3595 = vmul.f32 %v3505, %v3585
  %v3596 = vmul.f32 %v3574, %v3589
  %v3597 = vmul.f32 %v3576, %v3593
  %v3598 = vadd.f32 %v3429, %v3594
  %v3599 = vadd.f32 %v3430, %v3595
  %v3600 = vadd.f32 %v3431, %v3596
  %v3601 = vadd.f32 %v3432, %v3597
  %v3603 = vsel %vm2422, %v2417, 0
  %3605 = vmatprep.subr.mxu0 %v2403
  %3606 = vmatpush1.msra.mxu0 %v2402
  %3607 = vmatprep.subr.mxu0 %v2407
  %3608 = vmatpush1.msra.mxu0 %v2406
  %3609 = vmatprep.subr.mxu0 0.0
  %3610 = vmatpush1.msra.mxu0 0.0
  %3611 = vmatprep.subr.mxu0 0.0
  %3612 = vmatpush1.msra.mxu0 0.0
  %3613 = vmatprep.subr.mxu0 0.0
  %3614 = vmatpush1.msra.mxu0 0.0
  %3615 = vmatprep.subr.mxu0 0.0
  %3616 = vmatpush1.msra.mxu0 0.0
  %3617 = vmatprep.subr.mxu0 0.0
  %3618 = vmatpush1.msra.mxu0 0.0
  %3619 = vmatprep.subr.mxu0 0.0
  %3620 = vmatpush1.msra.mxu0 0.0
  %3621 = vmatprep.subr.mxu0 0.0
  %3622 = vmatpush1.msra.mxu0 0.0
  %3623 = vmatprep.subr.mxu0 0.0
  %3624 = vmatpush1.msra.mxu0 0.0
  %3625 = vmatprep.subr.mxu0 0.0
  %3626 = vmatpush1.msra.mxu0 0.0
  %3627 = vmatprep.subr.mxu0 0.0
  %3628 = vmatpush1.msra.mxu0 0.0
  %3629 = vmatprep.subr.mxu0 0.0
  %3630 = vmatpush1.msra.mxu0 0.0
  %3631 = vmatprep.subr.mxu0 0.0
  %3632 = vmatpush1.msra.mxu0 0.0
  %3633 = vmatprep.subr.mxu0 0.0
  %3634 = vmatpush1.msra.mxu0 0.0
  %3635 = vmatprep.subr.mxu0 0.0
  %3636 = vmatpush1.msra.mxu0 0.0
  %3637 = vmatprep.subr.mxu0 0.0
  %3638 = vmatpush1.msra.mxu0 0.0
  %3639 = vmatprep.subr.mxu0 0.0
  %3640 = vmatpush1.msra.mxu0 0.0
  %3641 = vmatprep.subr.mxu0 0.0
  %3642 = vmatpush1.msra.mxu0 0.0
  %3643 = vmatprep.subr.mxu0 0.0
  %3644 = vmatpush1.msra.mxu0 0.0
  %3645 = vmatprep.subr.mxu0 0.0
  %3646 = vmatpush1.msra.mxu0 0.0
  %3647 = vmatprep.subr.mxu0 0.0
  %3648 = vmatpush1.msra.mxu0 0.0
  %3649 = vmatprep.subr.mxu0 0.0
  %3650 = vmatpush1.msra.mxu0 0.0
  %3651 = vmatprep.subr.mxu0 0.0
  %3652 = vmatpush1.msra.mxu0 0.0
  %3653 = vmatprep.subr.mxu0 0.0
  %3654 = vmatpush1.msra.mxu0 0.0
  %3655 = vmatprep.subr.mxu0 0.0
  %3656 = vmatpush1.msra.mxu0 0.0
  %3657 = vmatprep.subr.mxu0 0.0
  %3658 = vmatpush1.msra.mxu0 0.0
  %3659 = vmatprep.subr.mxu0 0.0
  %3660 = vmatpush1.msra.mxu0 0.0
  %3661 = vmatprep.subr.mxu0 0.0
  %3662 = vmatpush1.msra.mxu0 0.0
  %3663 = vmatprep.subr.mxu0 0.0
  %3664 = vmatpush1.msra.mxu0 0.0
  %3665 = vmatprep.subr.mxu0 0.0
  %3666 = vmatpush1.msra.mxu0 0.0
  %3667 = vmatprep.subr.mxu0 0.0
  %3668 = vmatpush1.msra.mxu0 0.0
  %3669 = vmatprep.mubr.f32.mxu0 0.0
  %3670 = vmatmul.mubr.f32.gmra.mrb[0].mxu0 %v3603
  %v3671 = vpop.f32.mrb[0].mxu0
  %v3672 = vadd.f32 0.0, %v3671
  %v3673 = vpop.f32.mrb[0].mxu0
  %v3674 = vadd.f32 0.0, %v3673
  %3675 = vdwg.mxu0
  %3676 = vmatprep.subr.mxu0 %v2405
  %3677 = vmatpush1.msra.mxu0 %v2404
  %3678 = vmatprep.subr.mxu0 %v2409
  %3679 = vmatpush1.msra.mxu0 %v2408
  %3680 = vmatprep.subr.mxu0 0.0
  %3681 = vmatpush1.msra.mxu0 0.0
  %3682 = vmatprep.subr.mxu0 0.0
  %3683 = vmatpush1.msra.mxu0 0.0
  %3684 = vmatprep.subr.mxu0 0.0
  %3685 = vmatpush1.msra.mxu0 0.0
  %3686 = vmatprep.subr.mxu0 0.0
  %3687 = vmatpush1.msra.mxu0 0.0
  %3688 = vmatprep.subr.mxu0 0.0
  %3689 = vmatpush1.msra.mxu0 0.0
  %3690 = vmatprep.subr.mxu0 0.0
  %3691 = vmatpush1.msra.mxu0 0.0
  %3692 = vmatprep.subr.mxu0 0.0
  %3693 = vmatpush1.msra.mxu0 0.0
  %3694 = vmatprep.subr.mxu0 0.0
  %3695 = vmatpush1.msra.mxu0 0.0
  %3696 = vmatprep.subr.mxu0 0.0
  %3697 = vmatpush1.msra.mxu0 0.0
  %3698 = vmatprep.subr.mxu0 0.0
  %3699 = vmatpush1.msra.mxu0 0.0
  %3700 = vmatprep.subr.mxu0 0.0
  %3701 = vmatpush1.msra.mxu0 0.0
  %3702 = vmatprep.subr.mxu0 0.0
  %3703 = vmatpush1.msra.mxu0 0.0
  %3704 = vmatprep.subr.mxu0 0.0
  %3705 = vmatpush1.msra.mxu0 0.0
  %3706 = vmatprep.subr.mxu0 0.0
  %3707 = vmatpush1.msra.mxu0 0.0
  %3708 = vmatprep.subr.mxu0 0.0
  %3709 = vmatpush1.msra.mxu0 0.0
  %3710 = vmatprep.subr.mxu0 0.0
  %3711 = vmatpush1.msra.mxu0 0.0
  %3712 = vmatprep.subr.mxu0 0.0
  %3713 = vmatpush1.msra.mxu0 0.0
  %3714 = vmatprep.subr.mxu0 0.0
  %3715 = vmatpush1.msra.mxu0 0.0
  %3716 = vmatprep.subr.mxu0 0.0
  %3717 = vmatpush1.msra.mxu0 0.0
  %3718 = vmatprep.subr.mxu0 0.0
  %3719 = vmatpush1.msra.mxu0 0.0
  %3720 = vmatprep.subr.mxu0 0.0
  %3721 = vmatpush1.msra.mxu0 0.0
  %3722 = vmatprep.subr.mxu0 0.0
  %3723 = vmatpush1.msra.mxu0 0.0
  %3724 = vmatprep.subr.mxu0 0.0
  %3725 = vmatpush1.msra.mxu0 0.0
  %3726 = vmatprep.subr.mxu0 0.0
  %3727 = vmatpush1.msra.mxu0 0.0
  %3728 = vmatprep.subr.mxu0 0.0
  %3729 = vmatpush1.msra.mxu0 0.0
  %3730 = vmatprep.subr.mxu0 0.0
  %3731 = vmatpush1.msra.mxu0 0.0
  %3732 = vmatprep.subr.mxu0 0.0
  %3733 = vmatpush1.msra.mxu0 0.0
  %3734 = vmatprep.subr.mxu0 0.0
  %3735 = vmatpush1.msra.mxu0 0.0
  %3736 = vmatprep.subr.mxu0 0.0
  %3737 = vmatpush1.msra.mxu0 0.0
  %3738 = vmatprep.subr.mxu0 0.0
  %3739 = vmatpush1.msra.mxu0 0.0
  %3740 = vmatprep.mubr.f32.mxu0 0.0
  %3741 = vmatmul.mubr.f32.gmra.mrb[0].mxu0 %v3603
  %v3742 = vpop.f32.mrb[0].mxu0
  %v3743 = vadd.f32 0.0, %v3742
  %v3744 = vpop.f32.mrb[0].mxu0
  %v3745 = vadd.f32 0.0, %v3744
  %3746 = vdwg.mxu0
  %v3747 = vlaneseq
  %v3748 = vshrl.u32 %v3747, 7
  %v3749 = vsub.s32 7, %v3748
  %v3750 = vrot.slane %v2418, %v3749
  %v3751 = vlaneseq
  %v3752 = vshrl.u32 %v3751, 7
  %v3753 = vsub.s32 7, %v3752
  %v3754 = vrot.slane %v2419, %v3753
  %v3755 = vlaneseq
  %v3756 = vshrl.u32 %v3755, 7
  %v3757 = vsub.s32 7, %v3756
  %v3758 = vrot.slane %v2420, %v3757
  %v3759 = vlaneseq
  %v3760 = vshrl.u32 %v3759, 7
  %v3761 = vsub.s32 7, %v3760
  %v3762 = vrot.slane %v2421, %v3761
  %v3763 = vmul.f32 %v3672, %v3750
  %v3764 = vmul.f32 %v3674, %v3754
  %v3765 = vmul.f32 %v3743, %v3758
  %v3766 = vmul.f32 %v3745, %v3762
  %v3767 = vadd.f32 %v3598, %v3763
  %v3768 = vadd.f32 %v3599, %v3764
  %v3769 = vadd.f32 %v3600, %v3765
  %v3770 = vadd.f32 %v3601, %v3766
  %v3771 = vld [vmem:[%s11] sm:$0xff]
  %v3772 = vld [vmem:[%s11 + $0x8] sm:$0xff]
  %v3773 = vld [vmem:[%s11 + $0x10] sm:$0xff]
  %v3774 = vld [vmem:[%s11 + $0x18] sm:$0xff]
  %v3775 = vld [vmem:[%s11 + $0x20] sm:$0xff]
  %v3776 = vld [vmem:[%s11 + $0x28] sm:$0xff]
  %v3777 = vld [vmem:[%s11 + $0x30] sm:$0xff]
  %v3778 = vld [vmem:[%s11 + $0x38] sm:$0xff]
  %v3779 = vld [vmem:[%s11 + $0x40] sm:$0xff]
  %v3780 = vld [vmem:[%s11 + $0x48] sm:$0xff]
  %v3781 = vld [vmem:[%s11 + $0x50] sm:$0xff]
  %v3782 = vld [vmem:[%s11 + $0x58] sm:$0xff]
  %v3783 = vld [vmem:[%s11 + $0x60] sm:$0xff]
  %v3784 = vld [vmem:[%s11 + $0x68] sm:$0xff]
  %v3785 = vld [vmem:[%s11 + $0x70] sm:$0xff]
  %v3786 = vld [vmem:[%s11 + $0x78] sm:$0xff]
  %v3787 = vld [vmem:[%s11 + $0x80] sm:$0xff]
  %v3788 = vld [vmem:[%s11 + $0x88] sm:$0xff]
  %v3789 = vld [vmem:[%s11 + $0x90] sm:$0xff]
  %v3790 = vld [vmem:[%s11 + $0x98] sm:$0xff]
  %v3791 = vld [vmem:[%s11 + $0xa0] sm:$0xff]
  %v3792 = vld [vmem:[%s11 + $0xa8] sm:$0xff]
  %v3793 = vld [vmem:[%s11 + $0xb0] sm:$0xff]
  %v3794 = vld [vmem:[%s11 + $0xb8] sm:$0xff]
  %v3795 = vld [vmem:[%s11 + $0xc0] sm:$0xff]
  %v3796 = vld [vmem:[%s11 + $0xc8] sm:$0xff]
  %v3797 = vld [vmem:[%s11 + $0xd0] sm:$0xff]
  %v3798 = vld [vmem:[%s11 + $0xd8] sm:$0xff]
  %v3799 = vld [vmem:[%s11 + $0xe0] sm:$0xff]
  %v3800 = vld [vmem:[%s11 + $0xe8] sm:$0xff]
  %v3801 = vld [vmem:[%s11 + $0xf0] sm:$0xff]
  %v3802 = vld [vmem:[%s11 + $0xf8] sm:$0xff]
  %v3803 = vld [vmem:[%s11 + $0x100] sm:$0xff]
  %v3804 = vld [vmem:[%s11 + $0x108] sm:$0xff]
  %v3805 = vld [vmem:[%s11 + $0x110] sm:$0xff]
  %v3806 = vld [vmem:[%s11 + $0x118] sm:$0xff]
  %v3807 = vld [vmem:[%s11 + $0x120] sm:$0xff]
  %v3808 = vld [vmem:[%s11 + $0x128] sm:$0xff]
  %v3809 = vld [vmem:[%s11 + $0x130] sm:$0xff]
  %v3810 = vld [vmem:[%s11 + $0x138] sm:$0xff]
  %v3811 = vld [vmem:[%s11 + $0x140] sm:$0xff]
  %v3812 = vld [vmem:[%s11 + $0x148] sm:$0xff]
  %v3813 = vld [vmem:[%s11 + $0x150] sm:$0xff]
  %v3814 = vld [vmem:[%s11 + $0x158] sm:$0xff]
  %v3815 = vld [vmem:[%s11 + $0x160] sm:$0xff]
  %v3816 = vld [vmem:[%s11 + $0x168] sm:$0xff]
  %v3817 = vld [vmem:[%s11 + $0x170] sm:$0xff]
  %v3818 = vld [vmem:[%s11 + $0x178] sm:$0xff]
  %v3819 = vld [vmem:[%s11 + $0x180] sm:$0xff]
  %v3820 = vld [vmem:[%s11 + $0x188] sm:$0xff]
  %v3821 = vld [vmem:[%s11 + $0x190] sm:$0xff]
  %v3822 = vld [vmem:[%s11 + $0x198] sm:$0xff]
  %v3823 = vld [vmem:[%s11 + $0x1a0] sm:$0xff]
  %v3824 = vld [vmem:[%s11 + $0x1a8] sm:$0xff]
  %v3825 = vld [vmem:[%s11 + $0x1b0] sm:$0xff]
  %v3826 = vld [vmem:[%s11 + $0x1b8] sm:$0xff]
  %v3827 = vld [vmem:[%s11 + $0x1c0] sm:$0xff]
  %v3828 = vld [vmem:[%s11 + $0x1c8] sm:$0xff]
  %v3829 = vld [vmem:[%s11 + $0x1d0] sm:$0xff]
  %v3830 = vld [vmem:[%s11 + $0x1d8] sm:$0xff]
  %v3831 = vld [vmem:[%s11 + $0x1e0] sm:$0xff]
  %v3832 = vld [vmem:[%s11 + $0x1e8] sm:$0xff]
  %v3833 = vld [vmem:[%s11 + $0x1f0] sm:$0xff]
  %v3834 = vld [vmem:[%s11 + $0x1f8] sm:$0xff]
  %v3835 = vld [vmem:[%s11 + $0x200] sm:$0xff]
  %v3836 = vld [vmem:[%s11 + $0x208] sm:$0xff]
  %v3837 = vld [vmem:[%s11 + $0x210] sm:$0xff]
  %v3838 = vld [vmem:[%s11 + $0x218] sm:$0xff]
  %v3839 = vld [vmem:[%s11 + $0x220] sm:$0xff]
  %v3840 = vld [vmem:[%s11 + $0x228] sm:$0xff]
  %v3841 = vld [vmem:[%s11 + $0x230] sm:$0xff]
  %v3842 = vld [vmem:[%s11 + $0x238] sm:$0xff]
  %v3843 = vld [vmem:[%s11 + $0x240] sm:$0xff]
  %v3844 = vld [vmem:[%s11 + $0x248] sm:$0xff]
  %v3845 = vld [vmem:[%s11 + $0x250] sm:$0xff]
  %v3846 = vld [vmem:[%s11 + $0x258] sm:$0xff]
  %v3847 = vld [vmem:[%s11 + $0x260] sm:$0xff]
  %v3848 = vld [vmem:[%s11 + $0x268] sm:$0xff]
  %v3849 = vld [vmem:[%s11 + $0x270] sm:$0xff]
  %v3850 = vld [vmem:[%s11 + $0x278] sm:$0xff]
  %v3851 = vld [vmem:[%s11 + $0x280] sm:$0xff]
  %v3852 = vld [vmem:[%s11 + $0x288] sm:$0xff]
  %v3853 = vld [vmem:[%s11 + $0x290] sm:$0xff]
  %v3854 = vld [vmem:[%s11 + $0x298] sm:$0xff]
  %v3855 = vld [vmem:[%s11 + $0x2a0] sm:$0xff]
  %v3856 = vld [vmem:[%s11 + $0x2a8] sm:$0xff]
  %v3857 = vld [vmem:[%s11 + $0x2b0] sm:$0xff]
  %v3858 = vld [vmem:[%s11 + $0x2b8] sm:$0xff]
  %v3859 = vld [vmem:[%s11 + $0x2c0] sm:$0xff]
  %v3860 = vld [vmem:[%s11 + $0x2c8] sm:$0xff]
  %v3861 = vld [vmem:[%s11 + $0x2d0] sm:$0xff]
  %v3862 = vld [vmem:[%s11 + $0x2d8] sm:$0xff]
  %v3863 = vld [vmem:[%s11 + $0x2e0] sm:$0xff]
  %v3864 = vld [vmem:[%s11 + $0x2e8] sm:$0xff]
  %v3865 = vld [vmem:[%s11 + $0x2f0] sm:$0xff]
  %v3866 = vld [vmem:[%s11 + $0x2f8] sm:$0xff]
  %v3867 = vld [vmem:[%s11 + $0x300] sm:$0xff]
  %v3868 = vld [vmem:[%s11 + $0x308] sm:$0xff]
  %v3869 = vld [vmem:[%s11 + $0x310] sm:$0xff]
  %v3870 = vld [vmem:[%s11 + $0x318] sm:$0xff]
  %v3871 = vld [vmem:[%s11 + $0x320] sm:$0xff]
  %v3872 = vld [vmem:[%s11 + $0x328] sm:$0xff]
  %v3873 = vld [vmem:[%s11 + $0x330] sm:$0xff]
  %v3874 = vld [vmem:[%s11 + $0x338] sm:$0xff]
  %v3875 = vld [vmem:[%s11 + $0x340] sm:$0xff]
  %v3876 = vld [vmem:[%s11 + $0x348] sm:$0xff]
  %v3877 = vld [vmem:[%s11 + $0x350] sm:$0xff]
  %v3878 = vld [vmem:[%s11 + $0x358] sm:$0xff]
  %v3879 = vld [vmem:[%s11 + $0x360] sm:$0xff]
  %v3880 = vld [vmem:[%s11 + $0x368] sm:$0xff]
  %v3881 = vld [vmem:[%s11 + $0x370] sm:$0xff]
  %v3882 = vld [vmem:[%s11 + $0x378] sm:$0xff]
  %v3883 = vld [vmem:[%s11 + $0x380] sm:$0xff]
  %v3884 = vld [vmem:[%s11 + $0x388] sm:$0xff]
  %v3885 = vld [vmem:[%s11 + $0x390] sm:$0xff]
  %v3886 = vld [vmem:[%s11 + $0x398] sm:$0xff]
  %v3887 = vld [vmem:[%s11 + $0x3a0] sm:$0xff]
  %v3888 = vld [vmem:[%s11 + $0x3a8] sm:$0xff]
  %v3889 = vld [vmem:[%s11 + $0x3b0] sm:$0xff]
  %v3890 = vld [vmem:[%s11 + $0x3b8] sm:$0xff]
  %v3891 = vld [vmem:[%s11 + $0x3c0] sm:$0xff]
  %v3892 = vld [vmem:[%s11 + $0x3c8] sm:$0xff]
  %v3893 = vld [vmem:[%s11 + $0x3d0] sm:$0xff]
  %v3894 = vld [vmem:[%s11 + $0x3d8] sm:$0xff]
  %v3895 = vld [vmem:[%s11 + $0x3e0] sm:$0xff]
  %v3896 = vld [vmem:[%s11 + $0x3e8] sm:$0xff]
  %v3897 = vld [vmem:[%s11 + $0x3f0] sm:$0xff]
  %v3898 = vld [vmem:[%s11 + $0x3f8] sm:$0xff]
  %v3899 = vld [vmem:[%s11 + $0x400] sm:$0xff]
  %v3900 = vld [vmem:[%s11 + $0x408] sm:$0xff]
  %v3901 = vld [vmem:[%s11 + $0x410] sm:$0xff]
  %v3902 = vld [vmem:[%s11 + $0x418] sm:$0xff]
  %v3903 = vld [vmem:[%s11 + $0x420] sm:$0xff]
  %v3904 = vld [vmem:[%s11 + $0x428] sm:$0xff]
  %v3905 = vld [vmem:[%s11 + $0x430] sm:$0xff]
  %v3906 = vld [vmem:[%s11 + $0x438] sm:$0xff]
  %v3907 = vld [vmem:[%s11 + $0x440] sm:$0xff]
  %v3908 = vld [vmem:[%s11 + $0x448] sm:$0xff]
  %v3909 = vld [vmem:[%s11 + $0x450] sm:$0xff]
  %v3910 = vld [vmem:[%s11 + $0x458] sm:$0xff]
  %v3911 = vld [vmem:[%s11 + $0x460] sm:$0xff]
  %v3912 = vld [vmem:[%s11 + $0x468] sm:$0xff]
  %v3913 = vld [vmem:[%s11 + $0x470] sm:$0xff]
  %v3914 = vld [vmem:[%s11 + $0x478] sm:$0xff]
  %v3915 = vld [vmem:[%s11 + $0x480] sm:$0xff]
  %v3916 = vld [vmem:[%s11 + $0x488] sm:$0xff]
  %v3917 = vld [vmem:[%s11 + $0x490] sm:$0xff]
  %v3918 = vld [vmem:[%s11 + $0x498] sm:$0xff]
  %v3919 = vld [vmem:[%s11 + $0x4a0] sm:$0xff]
  %v3920 = vld [vmem:[%s11 + $0x4a8] sm:$0xff]
  %v3921 = vld [vmem:[%s11 + $0x4b0] sm:$0xff]
  %v3922 = vld [vmem:[%s11 + $0x4b8] sm:$0xff]
  %v3923 = vld [vmem:[%s11 + $0x4c0] sm:$0xff]
  %v3924 = vld [vmem:[%s11 + $0x4c8] sm:$0xff]
  %v3925 = vld [vmem:[%s11 + $0x4d0] sm:$0xff]
  %v3926 = vld [vmem:[%s11 + $0x4d8] sm:$0xff]
  %v3927 = vld [vmem:[%s11 + $0x4e0] sm:$0xff]
  %v3928 = vld [vmem:[%s11 + $0x4e8] sm:$0xff]
  %v3929 = vld [vmem:[%s11 + $0x4f0] sm:$0xff]
  %v3930 = vld [vmem:[%s11 + $0x4f8] sm:$0xff]
  %v3931 = vld [vmem:[%s11 + $0x500] sm:$0xff]
  %v3932 = vld [vmem:[%s11 + $0x508] sm:$0xff]
  %v3933 = vld [vmem:[%s11 + $0x510] sm:$0xff]
  %v3934 = vld [vmem:[%s11 + $0x518] sm:$0xff]
  %v3935 = vld [vmem:[%s11 + $0x520] sm:$0xff]
  %v3936 = vld [vmem:[%s11 + $0x528] sm:$0xff]
  %v3937 = vld [vmem:[%s11 + $0x530] sm:$0xff]
  %v3938 = vld [vmem:[%s11 + $0x538] sm:$0xff]
  %v3939 = vld [vmem:[%s11 + $0x540] sm:$0xff]
  %v3940 = vld [vmem:[%s11 + $0x548] sm:$0xff]
  %v3941 = vld [vmem:[%s11 + $0x550] sm:$0xff]
  %v3942 = vld [vmem:[%s11 + $0x558] sm:$0xff]
  %v3943 = vld [vmem:[%s11 + $0x560] sm:$0xff]
  %v3944 = vld [vmem:[%s11 + $0x568] sm:$0xff]
  %v3945 = vld [vmem:[%s11 + $0x570] sm:$0xff]
  %v3946 = vld [vmem:[%s11 + $0x578] sm:$0xff]
  %v3947 = vld [vmem:[%s11 + $0x580] sm:$0xff]
  %v3948 = vld [vmem:[%s11 + $0x588] sm:$0xff]
  %v3949 = vld [vmem:[%s11 + $0x590] sm:$0xff]
  %v3950 = vld [vmem:[%s11 + $0x598] sm:$0xff]
  %v3951 = vld [vmem:[%s11 + $0x5a0] sm:$0xff]
  %v3952 = vld [vmem:[%s11 + $0x5a8] sm:$0xff]
  %v3953 = vld [vmem:[%s11 + $0x5b0] sm:$0xff]
  %v3954 = vld [vmem:[%s11 + $0x5b8] sm:$0xff]
  %v3955 = vld [vmem:[%s11 + $0x5c0] sm:$0xff]
  %v3956 = vld [vmem:[%s11 + $0x5c8] sm:$0xff]
  %v3957 = vld [vmem:[%s11 + $0x5d0] sm:$0xff]
  %v3958 = vld [vmem:[%s11 + $0x5d8] sm:$0xff]
  %v3959 = vld [vmem:[%s11 + $0x5e0] sm:$0xff]
  %v3960 = vld [vmem:[%s11 + $0x5e8] sm:$0xff]
  %v3961 = vld [vmem:[%s11 + $0x5f0] sm:$0xff]
  %v3962 = vld [vmem:[%s11 + $0x5f8] sm:$0xff]
  %v3963 = vld [vmem:[%s11 + $0x600] sm:$0xff]
  %v3964 = vld [vmem:[%s11 + $0x608] sm:$0xff]
  %v3965 = vld [vmem:[%s11 + $0x610] sm:$0xff]
  %v3966 = vld [vmem:[%s11 + $0x618] sm:$0xff]
  %v3967 = vld [vmem:[%s11 + $0x620] sm:$0xff]
  %v3968 = vld [vmem:[%s11 + $0x628] sm:$0xff]
  %v3969 = vld [vmem:[%s11 + $0x630] sm:$0xff]
  %v3970 = vld [vmem:[%s11 + $0x638] sm:$0xff]
  %v3971 = vld [vmem:[%s11 + $0x640] sm:$0xff]
  %v3972 = vld [vmem:[%s11 + $0x648] sm:$0xff]
  %v3973 = vld [vmem:[%s11 + $0x650] sm:$0xff]
  %v3974 = vld [vmem:[%s11 + $0x658] sm:$0xff]
  %v3975 = vld [vmem:[%s11 + $0x660] sm:$0xff]
  %v3976 = vld [vmem:[%s11 + $0x668] sm:$0xff]
  %v3977 = vld [vmem:[%s11 + $0x670] sm:$0xff]
  %v3978 = vld [vmem:[%s11 + $0x678] sm:$0xff]
  %v3979 = vld [vmem:[%s11 + $0x680] sm:$0xff]
  %v3980 = vld [vmem:[%s11 + $0x688] sm:$0xff]
  %v3981 = vld [vmem:[%s11 + $0x690] sm:$0xff]
  %v3982 = vld [vmem:[%s11 + $0x698] sm:$0xff]
  %v3983 = vld [vmem:[%s11 + $0x6a0] sm:$0xff]
  %v3984 = vld [vmem:[%s11 + $0x6a8] sm:$0xff]
  %v3985 = vld [vmem:[%s11 + $0x6b0] sm:$0xff]
  %v3986 = vld [vmem:[%s11 + $0x6b8] sm:$0xff]
  %v3987 = vld [vmem:[%s11 + $0x6c0] sm:$0xff]
  %v3988 = vld [vmem:[%s11 + $0x6c8] sm:$0xff]
  %v3989 = vld [vmem:[%s11 + $0x6d0] sm:$0xff]
  %v3990 = vld [vmem:[%s11 + $0x6d8] sm:$0xff]
  %v3991 = vld [vmem:[%s11 + $0x6e0] sm:$0xff]
  %v3992 = vld [vmem:[%s11 + $0x6e8] sm:$0xff]
  %v3993 = vld [vmem:[%s11 + $0x6f0] sm:$0xff]
  %v3994 = vld [vmem:[%s11 + $0x6f8] sm:$0xff]
  %v3995 = vld [vmem:[%s11 + $0x700] sm:$0xff]
  %v3996 = vld [vmem:[%s11 + $0x708] sm:$0xff]
  %v3997 = vld [vmem:[%s11 + $0x710] sm:$0xff]
  %v3998 = vld [vmem:[%s11 + $0x718] sm:$0xff]
  %v3999 = vld [vmem:[%s11 + $0x720] sm:$0xff]
  %v4000 = vld [vmem:[%s11 + $0x728] sm:$0xff]
  %v4001 = vld [vmem:[%s11 + $0x730] sm:$0xff]
  %v4002 = vld [vmem:[%s11 + $0x738] sm:$0xff]
  %v4003 = vld [vmem:[%s11 + $0x740] sm:$0xff]
  %v4004 = vld [vmem:[%s11 + $0x748] sm:$0xff]
  %v4005 = vld [vmem:[%s11 + $0x750] sm:$0xff]
  %v4006 = vld [vmem:[%s11 + $0x758] sm:$0xff]
  %v4007 = vld [vmem:[%s11 + $0x760] sm:$0xff]
  %v4008 = vld [vmem:[%s11 + $0x768] sm:$0xff]
  %v4009 = vld [vmem:[%s11 + $0x770] sm:$0xff]
  %v4010 = vld [vmem:[%s11 + $0x778] sm:$0xff]
  %v4011 = vld [vmem:[%s11 + $0x780] sm:$0xff]
  %v4012 = vld [vmem:[%s11 + $0x788] sm:$0xff]
  %v4013 = vld [vmem:[%s11 + $0x790] sm:$0xff]
  %v4014 = vld [vmem:[%s11 + $0x798] sm:$0xff]
  %v4015 = vld [vmem:[%s11 + $0x7a0] sm:$0xff]
  %v4016 = vld [vmem:[%s11 + $0x7a8] sm:$0xff]
  %v4017 = vld [vmem:[%s11 + $0x7b0] sm:$0xff]
  %v4018 = vld [vmem:[%s11 + $0x7b8] sm:$0xff]
  %v4019 = vld [vmem:[%s11 + $0x7c0] sm:$0xff]
  %v4020 = vld [vmem:[%s11 + $0x7c8] sm:$0xff]
  %v4021 = vld [vmem:[%s11 + $0x7d0] sm:$0xff]
  %v4022 = vld [vmem:[%s11 + $0x7d8] sm:$0xff]
  %v4023 = vld [vmem:[%s11 + $0x7e0] sm:$0xff]
  %v4024 = vld [vmem:[%s11 + $0x7e8] sm:$0xff]
  %v4025 = vld [vmem:[%s11 + $0x7f0] sm:$0xff]
  %v4026 = vld [vmem:[%s11 + $0x7f8] sm:$0xff]
  %v4027 = vld [vmem:[%s11 + $0x800] sm:$0xff]
  %v4028 = vld [vmem:[%s11 + $0x808] sm:$0xff]
  %v4029 = vld [vmem:[%s11 + $0x810] sm:$0xff]
  %v4030 = vld [vmem:[%s11 + $0x818] sm:$0xff]
  %v4031 = vld [vmem:[%s11 + $0x820] sm:$0xff]
  %v4032 = vld [vmem:[%s11 + $0x828] sm:$0xff]
  %v4033 = vld [vmem:[%s11 + $0x830] sm:$0xff]
  %v4034 = vld [vmem:[%s11 + $0x838] sm:$0xff]
  %v4035 = vld [vmem:[%s11 + $0x840] sm:$0xff]
  %v4036 = vld [vmem:[%s11 + $0x848] sm:$0xff]
  %v4037 = vld [vmem:[%s11 + $0x850] sm:$0xff]
  %v4038 = vld [vmem:[%s11 + $0x858] sm:$0xff]
  %v4039 = vld [vmem:[%s11 + $0x860] sm:$0xff]
  %v4040 = vld [vmem:[%s11 + $0x868] sm:$0xff]
  %v4041 = vld [vmem:[%s11 + $0x870] sm:$0xff]
  %v4042 = vld [vmem:[%s11 + $0x878] sm:$0xff]
  %v4043 = vld [vmem:[%s11 + $0x880] sm:$0xff]
  %v4044 = vld [vmem:[%s11 + $0x888] sm:$0xff]
  %v4045 = vld [vmem:[%s11 + $0x890] sm:$0xff]
  %v4046 = vld [vmem:[%s11 + $0x898] sm:$0xff]
  %v4047 = vld [vmem:[%s11 + $0x8a0] sm:$0xff]
  %v4048 = vld [vmem:[%s11 + $0x8a8] sm:$0xff]
  %v4049 = vld [vmem:[%s11 + $0x8b0] sm:$0xff]
  %v4050 = vld [vmem:[%s11 + $0x8b8] sm:$0xff]
  %v4051 = vld [vmem:[%s11 + $0x8c0] sm:$0xff]
  %v4052 = vld [vmem:[%s11 + $0x8c8] sm:$0xff]
  %v4053 = vld [vmem:[%s11 + $0x8d0] sm:$0xff]
  %v4054 = vld [vmem:[%s11 + $0x8d8] sm:$0xff]
  %v4055 = vld [vmem:[%s11 + $0x8e0] sm:$0xff]
  %v4056 = vld [vmem:[%s11 + $0x8e8] sm:$0xff]
  %v4057 = vld [vmem:[%s11 + $0x8f0] sm:$0xff]
  %v4058 = vld [vmem:[%s11 + $0x8f8] sm:$0xff]
  %v4059 = vld [vmem:[%s11 + $0x900] sm:$0xff]
  %v4060 = vld [vmem:[%s11 + $0x908] sm:$0xff]
  %v4061 = vld [vmem:[%s11 + $0x910] sm:$0xff]
  %v4062 = vld [vmem:[%s11 + $0x918] sm:$0xff]
  %v4063 = vld [vmem:[%s11 + $0x920] sm:$0xff]
  %v4064 = vld [vmem:[%s11 + $0x928] sm:$0xff]
  %v4065 = vld [vmem:[%s11 + $0x930] sm:$0xff]
  %v4066 = vld [vmem:[%s11 + $0x938] sm:$0xff]
  %v4067 = vld [vmem:[%s11 + $0x940] sm:$0xff]
  %v4068 = vld [vmem:[%s11 + $0x948] sm:$0xff]
  %v4069 = vld [vmem:[%s11 + $0x950] sm:$0xff]
  %v4070 = vld [vmem:[%s11 + $0x958] sm:$0xff]
  %v4071 = vld [vmem:[%s11 + $0x960] sm:$0xff]
  %v4072 = vld [vmem:[%s11 + $0x968] sm:$0xff]
  %v4073 = vld [vmem:[%s11 + $0x970] sm:$0xff]
  %v4074 = vld [vmem:[%s11 + $0x978] sm:$0xff]
  %v4075 = vld [vmem:[%s11 + $0x980] sm:$0xff]
  %v4076 = vld [vmem:[%s11 + $0x988] sm:$0xff]
  %v4077 = vld [vmem:[%s11 + $0x990] sm:$0xff]
  %v4078 = vld [vmem:[%s11 + $0x998] sm:$0xff]
  %v4079 = vld [vmem:[%s11 + $0x9a0] sm:$0xff]
  %v4080 = vld [vmem:[%s11 + $0x9a8] sm:$0xff]
  %v4081 = vld [vmem:[%s11 + $0x9b0] sm:$0xff]
  %v4082 = vld [vmem:[%s11 + $0x9b8] sm:$0xff]
  %v4083 = vld [vmem:[%s11 + $0x9c0] sm:$0xff]
  %v4084 = vld [vmem:[%s11 + $0x9c8] sm:$0xff]
  %v4085 = vld [vmem:[%s11 + $0x9d0] sm:$0xff]
  %v4086 = vld [vmem:[%s11 + $0x9d8] sm:$0xff]
  %v4087 = vld [vmem:[%s11 + $0x9e0] sm:$0xff]
  %v4088 = vld [vmem:[%s11 + $0x9e8] sm:$0xff]
  %v4089 = vld [vmem:[%s11 + $0x9f0] sm:$0xff]
  %v4090 = vld [vmem:[%s11 + $0x9f8] sm:$0xff]
  %v4091 = vld [vmem:[%s11 + $0xa00] sm:$0xff]
  %v4092 = vld [vmem:[%s11 + $0xa08] sm:$0xff]
  %v4093 = vld [vmem:[%s11 + $0xa10] sm:$0xff]
  %v4094 = vld [vmem:[%s11 + $0xa18] sm:$0xff]
  %v4095 = vld [vmem:[%s11 + $0xa20] sm:$0xff]
  %v4096 = vld [vmem:[%s11 + $0xa28] sm:$0xff]
  %v4097 = vld [vmem:[%s11 + $0xa30] sm:$0xff]
  %v4098 = vld [vmem:[%s11 + $0xa38] sm:$0xff]
  %v4099 = vld [vmem:[%s11 + $0xa40] sm:$0xff]
  %v4100 = vld [vmem:[%s11 + $0xa48] sm:$0xff]
  %v4101 = vld [vmem:[%s11 + $0xa50] sm:$0xff]
  %v4102 = vld [vmem:[%s11 + $0xa58] sm:$0xff]
  %v4103 = vld [vmem:[%s11 + $0xa60] sm:$0xff]
  %v4104 = vld [vmem:[%s11 + $0xa68] sm:$0xff]
  %v4105 = vld [vmem:[%s11 + $0xa70] sm:$0xff]
  %v4106 = vld [vmem:[%s11 + $0xa78] sm:$0xff]
  %v4107 = vld [vmem:[%s11 + $0xa80] sm:$0xff]
  %v4108 = vld [vmem:[%s11 + $0xa88] sm:$0xff]
  %v4109 = vld [vmem:[%s11 + $0xa90] sm:$0xff]
  %v4110 = vld [vmem:[%s11 + $0xa98] sm:$0xff]
  %v4111 = vld [vmem:[%s11 + $0xaa0] sm:$0xff]
  %v4112 = vld [vmem:[%s11 + $0xaa8] sm:$0xff]
  %v4113 = vld [vmem:[%s11 + $0xab0] sm:$0xff]
  %v4114 = vld [vmem:[%s11 + $0xab8] sm:$0xff]
  %v4115 = vld [vmem:[%s11 + $0xac0] sm:$0xff]
  %v4116 = vld [vmem:[%s11 + $0xac8] sm:$0xff]
  %v4117 = vld [vmem:[%s11 + $0xad0] sm:$0xff]
  %v4118 = vld [vmem:[%s11 + $0xad8] sm:$0xff]
  %v4119 = vld [vmem:[%s11 + $0xae0] sm:$0xff]
  %v4120 = vld [vmem:[%s11 + $0xae8] sm:$0xff]
  %v4121 = vld [vmem:[%s11 + $0xaf0] sm:$0xff]
  %v4122 = vld [vmem:[%s11 + $0xaf8] sm:$0xff]
  %v4123 = vld [vmem:[%s11 + $0xb00] sm:$0xff]
  %v4124 = vld [vmem:[%s11 + $0xb08] sm:$0xff]
  %v4125 = vld [vmem:[%s11 + $0xb10] sm:$0xff]
  %v4126 = vld [vmem:[%s11 + $0xb18] sm:$0xff]
  %v4127 = vld [vmem:[%s11 + $0xb20] sm:$0xff]
  %v4128 = vld [vmem:[%s11 + $0xb28] sm:$0xff]
  %v4129 = vld [vmem:[%s11 + $0xb30] sm:$0xff]
  %v4130 = vld [vmem:[%s11 + $0xb38] sm:$0xff]
  %v4131 = vld [vmem:[%s11 + $0xb40] sm:$0xff]
  %v4132 = vld [vmem:[%s11 + $0xb48] sm:$0xff]
  %v4133 = vld [vmem:[%s11 + $0xb50] sm:$0xff]
  %v4134 = vld [vmem:[%s11 + $0xb58] sm:$0xff]
  %v4135 = vld [vmem:[%s11 + $0xb60] sm:$0xff]
  %v4136 = vld [vmem:[%s11 + $0xb68] sm:$0xff]
  %v4137 = vld [vmem:[%s11 + $0xb70] sm:$0xff]
  %v4138 = vld [vmem:[%s11 + $0xb78] sm:$0xff]
  %v4139 = vld [vmem:[%s11 + $0xb80] sm:$0xff]
  %v4140 = vld [vmem:[%s11 + $0xb88] sm:$0xff]
  %v4141 = vld [vmem:[%s11 + $0xb90] sm:$0xff]
  %v4142 = vld [vmem:[%s11 + $0xb98] sm:$0xff]
  %v4143 = vld [vmem:[%s11 + $0xba0] sm:$0xff]
  %v4144 = vld [vmem:[%s11 + $0xba8] sm:$0xff]
  %v4145 = vld [vmem:[%s11 + $0xbb0] sm:$0xff]
  %v4146 = vld [vmem:[%s11 + $0xbb8] sm:$0xff]
  %v4147 = vld [vmem:[%s11 + $0xbc0] sm:$0xff]
  %v4148 = vld [vmem:[%s11 + $0xbc8] sm:$0xff]
  %v4149 = vld [vmem:[%s11 + $0xbd0] sm:$0xff]
  %v4150 = vld [vmem:[%s11 + $0xbd8] sm:$0xff]
  %v4151 = vld [vmem:[%s11 + $0xbe0] sm:$0xff]
  %v4152 = vld [vmem:[%s11 + $0xbe8] sm:$0xff]
  %v4153 = vld [vmem:[%s11 + $0xbf0] sm:$0xff]
  %v4154 = vld [vmem:[%s11 + $0xbf8] sm:$0xff]
  %v4155 = vld [vmem:[%s11 + $0xc00] sm:$0xff]
  %v4156 = vld [vmem:[%s11 + $0xc08] sm:$0xff]
  %v4157 = vld [vmem:[%s11 + $0xc10] sm:$0xff]
  %v4158 = vld [vmem:[%s11 + $0xc18] sm:$0xff]
  %v4159 = vld [vmem:[%s11 + $0xc20] sm:$0xff]
  %v4160 = vld [vmem:[%s11 + $0xc28] sm:$0xff]
  %v4161 = vld [vmem:[%s11 + $0xc30] sm:$0xff]
  %v4162 = vld [vmem:[%s11 + $0xc38] sm:$0xff]
  %v4163 = vld [vmem:[%s11 + $0xc40] sm:$0xff]
  %v4164 = vld [vmem:[%s11 + $0xc48] sm:$0xff]
  %v4165 = vld [vmem:[%s11 + $0xc50] sm:$0xff]
  %v4166 = vld [vmem:[%s11 + $0xc58] sm:$0xff]
  %v4167 = vld [vmem:[%s11 + $0xc60] sm:$0xff]
  %v4168 = vld [vmem:[%s11 + $0xc68] sm:$0xff]
  %v4169 = vld [vmem:[%s11 + $0xc70] sm:$0xff]
  %v4170 = vld [vmem:[%s11 + $0xc78] sm:$0xff]
  %v4171 = vld [vmem:[%s11 + $0xc80] sm:$0xff]
  %v4172 = vld [vmem:[%s11 + $0xc88] sm:$0xff]
  %v4173 = vld [vmem:[%s11 + $0xc90] sm:$0xff]
  %v4174 = vld [vmem:[%s11 + $0xc98] sm:$0xff]
  %v4175 = vld [vmem:[%s11 + $0xca0] sm:$0xff]
  %v4176 = vld [vmem:[%s11 + $0xca8] sm:$0xff]
  %v4177 = vld [vmem:[%s11 + $0xcb0] sm:$0xff]
  %v4178 = vld [vmem:[%s11 + $0xcb8] sm:$0xff]
  %v4179 = vld [vmem:[%s11 + $0xcc0] sm:$0xff]
  %v4180 = vld [vmem:[%s11 + $0xcc8] sm:$0xff]
  %v4181 = vld [vmem:[%s11 + $0xcd0] sm:$0xff]
  %v4182 = vld [vmem:[%s11 + $0xcd8] sm:$0xff]
  %v4183 = vld [vmem:[%s11 + $0xce0] sm:$0xff]
  %v4184 = vld [vmem:[%s11 + $0xce8] sm:$0xff]
  %v4185 = vld [vmem:[%s11 + $0xcf0] sm:$0xff]
  %v4186 = vld [vmem:[%s11 + $0xcf8] sm:$0xff]
  %v4187 = vld [vmem:[%s11 + $0xd00] sm:$0xff]
  %v4188 = vld [vmem:[%s11 + $0xd08] sm:$0xff]
  %v4189 = vld [vmem:[%s11 + $0xd10] sm:$0xff]
  %v4190 = vld [vmem:[%s11 + $0xd18] sm:$0xff]
  %v4191 = vld [vmem:[%s11 + $0xd20] sm:$0xff]
  %v4192 = vld [vmem:[%s11 + $0xd28] sm:$0xff]
  %v4193 = vld [vmem:[%s11 + $0xd30] sm:$0xff]
  %v4194 = vld [vmem:[%s11 + $0xd38] sm:$0xff]
  %v4195 = vld [vmem:[%s11 + $0xd40] sm:$0xff]
  %v4196 = vld [vmem:[%s11 + $0xd48] sm:$0xff]
  %v4197 = vld [vmem:[%s11 + $0xd50] sm:$0xff]
  %v4198 = vld [vmem:[%s11 + $0xd58] sm:$0xff]
  %v4199 = vld [vmem:[%s11 + $0xd60] sm:$0xff]
  %v4200 = vld [vmem:[%s11 + $0xd68] sm:$0xff]
  %v4201 = vld [vmem:[%s11 + $0xd70] sm:$0xff]
  %v4202 = vld [vmem:[%s11 + $0xd78] sm:$0xff]
  %v4203 = vld [vmem:[%s11 + $0xd80] sm:$0xff]
  %v4204 = vld [vmem:[%s11 + $0xd88] sm:$0xff]
  %v4205 = vld [vmem:[%s11 + $0xd90] sm:$0xff]
  %v4206 = vld [vmem:[%s11 + $0xd98] sm:$0xff]
  %v4207 = vld [vmem:[%s11 + $0xda0] sm:$0xff]
  %v4208 = vld [vmem:[%s11 + $0xda8] sm:$0xff]
  %v4209 = vld [vmem:[%s11 + $0xdb0] sm:$0xff]
  %v4210 = vld [vmem:[%s11 + $0xdb8] sm:$0xff]
  %v4211 = vld [vmem:[%s11 + $0xdc0] sm:$0xff]
  %v4212 = vld [vmem:[%s11 + $0xdc8] sm:$0xff]
  %v4213 = vld [vmem:[%s11 + $0xdd0] sm:$0xff]
  %v4214 = vld [vmem:[%s11 + $0xdd8] sm:$0xff]
  %v4215 = vld [vmem:[%s11 + $0xde0] sm:$0xff]
  %v4216 = vld [vmem:[%s11 + $0xde8] sm:$0xff]
  %v4217 = vld [vmem:[%s11 + $0xdf0] sm:$0xff]
  %v4218 = vld [vmem:[%s11 + $0xdf8] sm:$0xff]
  %v4219 = vld [vmem:[%s11 + $0xe00] sm:$0xff]
  %v4220 = vld [vmem:[%s11 + $0xe08] sm:$0xff]
  %v4221 = vld [vmem:[%s11 + $0xe10] sm:$0xff]
  %v4222 = vld [vmem:[%s11 + $0xe18] sm:$0xff]
  %v4223 = vld [vmem:[%s11 + $0xe20] sm:$0xff]
  %v4224 = vld [vmem:[%s11 + $0xe28] sm:$0xff]
  %v4225 = vld [vmem:[%s11 + $0xe30] sm:$0xff]
  %v4226 = vld [vmem:[%s11 + $0xe38] sm:$0xff]
  %v4227 = vld [vmem:[%s11 + $0xe40] sm:$0xff]
  %v4228 = vld [vmem:[%s11 + $0xe48] sm:$0xff]
  %v4229 = vld [vmem:[%s11 + $0xe50] sm:$0xff]
  %v4230 = vld [vmem:[%s11 + $0xe58] sm:$0xff]
  %v4231 = vld [vmem:[%s11 + $0xe60] sm:$0xff]
  %v4232 = vld [vmem:[%s11 + $0xe68] sm:$0xff]
  %v4233 = vld [vmem:[%s11 + $0xe70] sm:$0xff]
  %v4234 = vld [vmem:[%s11 + $0xe78] sm:$0xff]
  %v4235 = vld [vmem:[%s11 + $0xe80] sm:$0xff]
  %v4236 = vld [vmem:[%s11 + $0xe88] sm:$0xff]
  %v4237 = vld [vmem:[%s11 + $0xe90] sm:$0xff]
  %v4238 = vld [vmem:[%s11 + $0xe98] sm:$0xff]
  %v4239 = vld [vmem:[%s11 + $0xea0] sm:$0xff]
  %v4240 = vld [vmem:[%s11 + $0xea8] sm:$0xff]
  %v4241 = vld [vmem:[%s11 + $0xeb0] sm:$0xff]
  %v4242 = vld [vmem:[%s11 + $0xeb8] sm:$0xff]
  %v4243 = vld [vmem:[%s11 + $0xec0] sm:$0xff]
  %v4244 = vld [vmem:[%s11 + $0xec8] sm:$0xff]
  %v4245 = vld [vmem:[%s11 + $0xed0] sm:$0xff]
  %v4246 = vld [vmem:[%s11 + $0xed8] sm:$0xff]
  %v4247 = vld [vmem:[%s11 + $0xee0] sm:$0xff]
  %v4248 = vld [vmem:[%s11 + $0xee8] sm:$0xff]
  %v4249 = vld [vmem:[%s11 + $0xef0] sm:$0xff]
  %v4250 = vld [vmem:[%s11 + $0xef8] sm:$0xff]
  %v4251 = vld [vmem:[%s11 + $0xf00] sm:$0xff]
  %v4252 = vld [vmem:[%s11 + $0xf08] sm:$0xff]
  %v4253 = vld [vmem:[%s11 + $0xf10] sm:$0xff]
  %v4254 = vld [vmem:[%s11 + $0xf18] sm:$0xff]
  %v4255 = vld [vmem:[%s11 + $0xf20] sm:$0xff]
  %v4256 = vld [vmem:[%s11 + $0xf28] sm:$0xff]
  %v4257 = vld [vmem:[%s11 + $0xf30] sm:$0xff]
  %v4258 = vld [vmem:[%s11 + $0xf38] sm:$0xff]
  %v4259 = vld [vmem:[%s11 + $0xf40] sm:$0xff]
  %v4260 = vld [vmem:[%s11 + $0xf48] sm:$0xff]
  %v4261 = vld [vmem:[%s11 + $0xf50] sm:$0xff]
  %v4262 = vld [vmem:[%s11 + $0xf58] sm:$0xff]
  %v4263 = vld [vmem:[%s11 + $0xf60] sm:$0xff]
  %v4264 = vld [vmem:[%s11 + $0xf68] sm:$0xff]
  %v4265 = vld [vmem:[%s11 + $0xf70] sm:$0xff]
  %v4266 = vld [vmem:[%s11 + $0xf78] sm:$0xff]
  %v4267 = vld [vmem:[%s11 + $0xf80] sm:$0xff]
  %v4268 = vld [vmem:[%s11 + $0xf88] sm:$0xff]
  %v4269 = vld [vmem:[%s11 + $0xf90] sm:$0xff]
  %v4270 = vld [vmem:[%s11 + $0xf98] sm:$0xff]
  %v4271 = vld [vmem:[%s11 + $0xfa0] sm:$0xff]
  %v4272 = vld [vmem:[%s11 + $0xfa8] sm:$0xff]
  %v4273 = vld [vmem:[%s11 + $0xfb0] sm:$0xff]
  %v4274 = vld [vmem:[%s11 + $0xfb8] sm:$0xff]
  %v4275 = vld [vmem:[%s11 + $0xfc0] sm:$0xff]
  %v4276 = vld [vmem:[%s11 + $0xfc8] sm:$0xff]
  %v4277 = vld [vmem:[%s11 + $0xfd0] sm:$0xff]
  %v4278 = vld [vmem:[%s11 + $0xfd8] sm:$0xff]
  %v4279 = vld [vmem:[%s11 + $0xfe0] sm:$0xff]
  %v4280 = vld [vmem:[%s11 + $0xfe8] sm:$0xff]
  %v4281 = vld [vmem:[%s11 + $0xff0] sm:$0xff]
  %v4282 = vld [vmem:[%s11 + $0xff8] sm:$0xff]
  %v4283 = vld [vmem:[%s12] sm:$0xff]
  %v4285 = vlaneseq
  %v4286 = vshrl.u32 %v4285, 7
  %v4287 = vsub.s32 0, %v4286
  %v4288 = vrot.slane %v4283, %v4287
  %v4289 = vlaneseq
  %v4290 = vshrl.u32 %v4289, 7
  %v4291 = vsub.s32 1, %v4290
  %v4292 = vrot.slane %v4283, %v4291
  %v4293 = vlaneseq
  %v4294 = vshrl.u32 %v4293, 7
  %v4295 = vsub.s32 2, %v4294
  %v4296 = vrot.slane %v4283, %v4295
  %v4297 = vlaneseq
  %v4298 = vshrl.u32 %v4297, 7
  %v4299 = vsub.s32 3, %v4298
  %v4300 = vrot.slane %v4283, %v4299
  %v4301 = vlaneseq
  %v4302 = vshrl.u32 %v4301, 7
  %v4303 = vsub.s32 4, %v4302
  %v4304 = vrot.slane %v4283, %v4303
  %v4305 = vlaneseq
  %v4306 = vshrl.u32 %v4305, 7
  %v4307 = vsub.s32 5, %v4306
  %v4308 = vrot.slane %v4283, %v4307
  %v4309 = vlaneseq
  %v4310 = vshrl.u32 %v4309, 7
  %v4311 = vsub.s32 6, %v4310
  %v4312 = vrot.slane %v4283, %v4311
  %v4313 = vlaneseq
  %v4314 = vshrl.u32 %v4313, 7
  %v4315 = vsub.s32 7, %v4314
  %v4316 = vrot.slane %v4283, %v4315
  %4325 = vmatprep.subr.mxu0 %v3772
  %4326 = vmatpush1.msra.mxu0 %v3771
  %4327 = vmatprep.subr.mxu0 %v3780
  %4328 = vmatpush1.msra.mxu0 %v3779
  %4329 = vmatprep.subr.mxu0 %v3788
  %4330 = vmatpush1.msra.mxu0 %v3787
  %4331 = vmatprep.subr.mxu0 %v3796
  %4332 = vmatpush1.msra.mxu0 %v3795
  %4333 = vmatprep.subr.mxu0 %v3804
  %4334 = vmatpush1.msra.mxu0 %v3803
  %4335 = vmatprep.subr.mxu0 %v3812
  %4336 = vmatpush1.msra.mxu0 %v3811
  %4337 = vmatprep.subr.mxu0 %v3820
  %4338 = vmatpush1.msra.mxu0 %v3819
  %4339 = vmatprep.subr.mxu0 %v3828
  %4340 = vmatpush1.msra.mxu0 %v3827
  %4341 = vmatprep.subr.mxu0 %v3836
  %4342 = vmatpush1.msra.mxu0 %v3835
  %4343 = vmatprep.subr.mxu0 %v3844
  %4344 = vmatpush1.msra.mxu0 %v3843
  %4345 = vmatprep.subr.mxu0 %v3852
  %4346 = vmatpush1.msra.mxu0 %v3851
  %4347 = vmatprep.subr.mxu0 %v3860
  %4348 = vmatpush1.msra.mxu0 %v3859
  %4349 = vmatprep.subr.mxu0 %v3868
  %4350 = vmatpush1.msra.mxu0 %v3867
  %4351 = vmatprep.subr.mxu0 %v3876
  %4352 = vmatpush1.msra.mxu0 %v3875
  %4353 = vmatprep.subr.mxu0 %v3884
  %4354 = vmatpush1.msra.mxu0 %v3883
  %4355 = vmatprep.subr.mxu0 %v3892
  %4356 = vmatpush1.msra.mxu0 %v3891
  %4357 = vmatprep.subr.mxu0 %v3900
  %4358 = vmatpush1.msra.mxu0 %v3899
  %4359 = vmatprep.subr.mxu0 %v3908
  %4360 = vmatpush1.msra.mxu0 %v3907
  %4361 = vmatprep.subr.mxu0 %v3916
  %4362 = vmatpush1.msra.mxu0 %v3915
  %4363 = vmatprep.subr.mxu0 %v3924
  %4364 = vmatpush1.msra.mxu0 %v3923
  %4365 = vmatprep.subr.mxu0 %v3932
  %4366 = vmatpush1.msra.mxu0 %v3931
  %4367 = vmatprep.subr.mxu0 %v3940
  %4368 = vmatpush1.msra.mxu0 %v3939
  %4369 = vmatprep.subr.mxu0 %v3948
  %4370 = vmatpush1.msra.mxu0 %v3947
  %4371 = vmatprep.subr.mxu0 %v3956
  %4372 = vmatpush1.msra.mxu0 %v3955
  %4373 = vmatprep.subr.mxu0 %v3964
  %4374 = vmatpush1.msra.mxu0 %v3963
  %4375 = vmatprep.subr.mxu0 %v3972
  %4376 = vmatpush1.msra.mxu0 %v3971
  %4377 = vmatprep.subr.mxu0 %v3980
  %4378 = vmatpush1.msra.mxu0 %v3979
  %4379 = vmatprep.subr.mxu0 %v3988
  %4380 = vmatpush1.msra.mxu0 %v3987
  %4381 = vmatprep.subr.mxu0 %v3996
  %4382 = vmatpush1.msra.mxu0 %v3995
  %4383 = vmatprep.subr.mxu0 %v4004
  %4384 = vmatpush1.msra.mxu0 %v4003
  %4385 = vmatprep.subr.mxu0 %v4012
  %4386 = vmatpush1.msra.mxu0 %v4011
  %4387 = vmatprep.subr.mxu0 %v4020
  %4388 = vmatpush1.msra.mxu0 %v4019
  %4389 = vmatprep.mubr.f32.mxu0 %v3768
  %4390 = vmatmul.mubr.f32.gmra.mrb[0].mxu0 %v3767
  %v4391 = vpop.f32.mrb[0].mxu0
  %v4392 = vadd.f32 %v4288, %v4391
  %v4393 = vpop.f32.mrb[0].mxu0
  %v4394 = vadd.f32 %v4292, %v4393
  %4395 = vdwg.mxu0
  %4396 = vmatprep.subr.mxu0 %v4028
  %4397 = vmatpush1.msra.mxu0 %v4027
  %4398 = vmatprep.subr.mxu0 %v4036
  %4399 = vmatpush1.msra.mxu0 %v4035
  %4400 = vmatprep.subr.mxu0 %v4044
  %4401 = vmatpush1.msra.mxu0 %v4043
  %4402 = vmatprep.subr.mxu0 %v4052
  %4403 = vmatpush1.msra.mxu0 %v4051
  %4404 = vmatprep.subr.mxu0 %v4060
  %4405 = vmatpush1.msra.mxu0 %v4059
  %4406 = vmatprep.subr.mxu0 %v4068
  %4407 = vmatpush1.msra.mxu0 %v4067
  %4408 = vmatprep.subr.mxu0 %v4076
  %4409 = vmatpush1.msra.mxu0 %v4075
  %4410 = vmatprep.subr.mxu0 %v4084
  %4411 = vmatpush1.msra.mxu0 %v4083
  %4412 = vmatprep.subr.mxu0 %v4092
  %4413 = vmatpush1.msra.mxu0 %v4091
  %4414 = vmatprep.subr.mxu0 %v4100
  %4415 = vmatpush1.msra.mxu0 %v4099
  %4416 = vmatprep.subr.mxu0 %v4108
  %4417 = vmatpush1.msra.mxu0 %v4107
  %4418 = vmatprep.subr.mxu0 %v4116
  %4419 = vmatpush1.msra.mxu0 %v4115
  %4420 = vmatprep.subr.mxu0 %v4124
  %4421 = vmatpush1.msra.mxu0 %v4123
  %4422 = vmatprep.subr.mxu0 %v4132
  %4423 = vmatpush1.msra.mxu0 %v4131
  %4424 = vmatprep.subr.mxu0 %v4140
  %4425 = vmatpush1.msra.mxu0 %v4139
  %4426 = vmatprep.subr.mxu0 %v4148
  %4427 = vmatpush1.msra.mxu0 %v4147
  %4428 = vmatprep.subr.mxu0 %v4156
  %4429 = vmatpush1.msra.mxu0 %v4155
  %4430 = vmatprep.subr.mxu0 %v4164
  %4431 = vmatpush1.msra.mxu0 %v4163
  %4432 = vmatprep.subr.mxu0 %v4172
  %4433 = vmatpush1.msra.mxu0 %v4171
  %4434 = vmatprep.subr.mxu0 %v4180
  %4435 = vmatpush1.msra.mxu0 %v4179
  %4436 = vmatprep.subr.mxu0 %v4188
  %4437 = vmatpush1.msra.mxu0 %v4187
  %4438 = vmatprep.subr.mxu0 %v4196
  %4439 = vmatpush1.msra.mxu0 %v4195
  %4440 = vmatprep.subr.mxu0 %v4204
  %4441 = vmatpush1.msra.mxu0 %v4203
  %4442 = vmatprep.subr.mxu0 %v4212
  %4443 = vmatpush1.msra.mxu0 %v4211
  %4444 = vmatprep.subr.mxu0 %v4220
  %4445 = vmatpush1.msra.mxu0 %v4219
  %4446 = vmatprep.subr.mxu0 %v4228
  %4447 = vmatpush1.msra.mxu0 %v4227
  %4448 = vmatprep.subr.mxu0 %v4236
  %4449 = vmatpush1.msra.mxu0 %v4235
  %4450 = vmatprep.subr.mxu0 %v4244
  %4451 = vmatpush1.msra.mxu0 %v4243
  %4452 = vmatprep.subr.mxu0 %v4252
  %4453 = vmatpush1.msra.mxu0 %v4251
  %4454 = vmatprep.subr.mxu0 %v4260
  %4455 = vmatpush1.msra.mxu0 %v4259
  %4456 = vmatprep.subr.mxu0 %v4268
  %4457 = vmatpush1.msra.mxu0 %v4267
  %4458 = vmatprep.subr.mxu0 %v4276
  %4459 = vmatpush1.msra.mxu0 %v4275
  %4460 = vmatprep.mubr.f32.mxu0 %v3770
  %4461 = vmatmul.mubr.f32.gmra.mrb[0].mxu0 %v3769
  %v4462 = vpop.f32.mrb[0].mxu0
  %v4463 = vadd.f32 %v4392, %v4462
  %v4464 = vpop.f32.mrb[0].mxu0
  %v4465 = vadd.f32 %v4394, %v4464
  %4466 = vdwg.mxu0
  %4467 = vmatprep.subr.mxu0 %v3774
  %4468 = vmatpush1.msra.mxu0 %v3773
  %4469 = vmatprep.subr.mxu0 %v3782
  %4470 = vmatpush1.msra.mxu0 %v3781
  %4471 = vmatprep.subr.mxu0 %v3790
  %4472 = vmatpush1.msra.mxu0 %v3789
  %4473 = vmatprep.subr.mxu0 %v3798
  %4474 = vmatpush1.msra.mxu0 %v3797
  %4475 = vmatprep.subr.mxu0 %v3806
  %4476 = vmatpush1.msra.mxu0 %v3805
  %4477 = vmatprep.subr.mxu0 %v3814
  %4478 = vmatpush1.msra.mxu0 %v3813
  %4479 = vmatprep.subr.mxu0 %v3822
  %4480 = vmatpush1.msra.mxu0 %v3821
  %4481 = vmatprep.subr.mxu0 %v3830
  %4482 = vmatpush1.msra.mxu0 %v3829
  %4483 = vmatprep.subr.mxu0 %v3838
  %4484 = vmatpush1.msra.mxu0 %v3837
  %4485 = vmatprep.subr.mxu0 %v3846
  %4486 = vmatpush1.msra.mxu0 %v3845
  %4487 = vmatprep.subr.mxu0 %v3854
  %4488 = vmatpush1.msra.mxu0 %v3853
  %4489 = vmatprep.subr.mxu0 %v3862
  %4490 = vmatpush1.msra.mxu0 %v3861
  %4491 = vmatprep.subr.mxu0 %v3870
  %4492 = vmatpush1.msra.mxu0 %v3869
  %4493 = vmatprep.subr.mxu0 %v3878
  %4494 = vmatpush1.msra.mxu0 %v3877
  %4495 = vmatprep.subr.mxu0 %v3886
  %4496 = vmatpush1.msra.mxu0 %v3885
  %4497 = vmatprep.subr.mxu0 %v3894
  %4498 = vmatpush1.msra.mxu0 %v3893
  %4499 = vmatprep.subr.mxu0 %v3902
  %4500 = vmatpush1.msra.mxu0 %v3901
  %4501 = vmatprep.subr.mxu0 %v3910
  %4502 = vmatpush1.msra.mxu0 %v3909
  %4503 = vmatprep.subr.mxu0 %v3918
  %4504 = vmatpush1.msra.mxu0 %v3917
  %4505 = vmatprep.subr.mxu0 %v3926
  %4506 = vmatpush1.msra.mxu0 %v3925
  %4507 = vmatprep.subr.mxu0 %v3934
  %4508 = vmatpush1.msra.mxu0 %v3933
  %4509 = vmatprep.subr.mxu0 %v3942
  %4510 = vmatpush1.msra.mxu0 %v3941
  %4511 = vmatprep.subr.mxu0 %v3950
  %4512 = vmatpush1.msra.mxu0 %v3949
  %4513 = vmatprep.subr.mxu0 %v3958
  %4514 = vmatpush1.msra.mxu0 %v3957
  %4515 = vmatprep.subr.mxu0 %v3966
  %4516 = vmatpush1.msra.mxu0 %v3965
  %4517 = vmatprep.subr.mxu0 %v3974
  %4518 = vmatpush1.msra.mxu0 %v3973
  %4519 = vmatprep.subr.mxu0 %v3982
  %4520 = vmatpush1.msra.mxu0 %v3981
  %4521 = vmatprep.subr.mxu0 %v3990
  %4522 = vmatpush1.msra.mxu0 %v3989
  %4523 = vmatprep.subr.mxu0 %v3998
  %4524 = vmatpush1.msra.mxu0 %v3997
  %4525 = vmatprep.subr.mxu0 %v4006
  %4526 = vmatpush1.msra.mxu0 %v4005
  %4527 = vmatprep.subr.mxu0 %v4014
  %4528 = vmatpush1.msra.mxu0 %v4013
  %4529 = vmatprep.subr.mxu0 %v4022
  %4530 = vmatpush1.msra.mxu0 %v4021
  %4531 = vmatprep.mubr.f32.mxu0 %v3768
  %4532 = vmatmul.mubr.f32.gmra.mrb[0].mxu0 %v3767
  %v4533 = vpop.f32.mrb[0].mxu0
  %v4534 = vadd.f32 %v4296, %v4533
  %v4535 = vpop.f32.mrb[0].mxu0
  %v4536 = vadd.f32 %v4300, %v4535
  %4537 = vdwg.mxu0
  %4538 = vmatprep.subr.mxu0 %v4030
  %4539 = vmatpush1.msra.mxu0 %v4029
  %4540 = vmatprep.subr.mxu0 %v4038
  %4541 = vmatpush1.msra.mxu0 %v4037
  %4542 = vmatprep.subr.mxu0 %v4046
  %4543 = vmatpush1.msra.mxu0 %v4045
  %4544 = vmatprep.subr.mxu0 %v4054
  %4545 = vmatpush1.msra.mxu0 %v4053
  %4546 = vmatprep.subr.mxu0 %v4062
  %4547 = vmatpush1.msra.mxu0 %v4061
  %4548 = vmatprep.subr.mxu0 %v4070
  %4549 = vmatpush1.msra.mxu0 %v4069
  %4550 = vmatprep.subr.mxu0 %v4078
  %4551 = vmatpush1.msra.mxu0 %v4077
  %4552 = vmatprep.subr.mxu0 %v4086
  %4553 = vmatpush1.msra.mxu0 %v4085
  %4554 = vmatprep.subr.mxu0 %v4094
  %4555 = vmatpush1.msra.mxu0 %v4093
  %4556 = vmatprep.subr.mxu0 %v4102
  %4557 = vmatpush1.msra.mxu0 %v4101
  %4558 = vmatprep.subr.mxu0 %v4110
  %4559 = vmatpush1.msra.mxu0 %v4109
  %4560 = vmatprep.subr.mxu0 %v4118
  %4561 = vmatpush1.msra.mxu0 %v4117
  %4562 = vmatprep.subr.mxu0 %v4126
  %4563 = vmatpush1.msra.mxu0 %v4125
  %4564 = vmatprep.subr.mxu0 %v4134
  %4565 = vmatpush1.msra.mxu0 %v4133
  %4566 = vmatprep.subr.mxu0 %v4142
  %4567 = vmatpush1.msra.mxu0 %v4141
  %4568 = vmatprep.subr.mxu0 %v4150
  %4569 = vmatpush1.msra.mxu0 %v4149
  %4570 = vmatprep.subr.mxu0 %v4158
  %4571 = vmatpush1.msra.mxu0 %v4157
  %4572 = vmatprep.subr.mxu0 %v4166
  %4573 = vmatpush1.msra.mxu0 %v4165
  %4574 = vmatprep.subr.mxu0 %v4174
  %4575 = vmatpush1.msra.mxu0 %v4173
  %4576 = vmatprep.subr.mxu0 %v4182
  %4577 = vmatpush1.msra.mxu0 %v4181
  %4578 = vmatprep.subr.mxu0 %v4190
  %4579 = vmatpush1.msra.mxu0 %v4189
  %4580 = vmatprep.subr.mxu0 %v4198
  %4581 = vmatpush1.msra.mxu0 %v4197
  %4582 = vmatprep.subr.mxu0 %v4206
  %4583 = vmatpush1.msra.mxu0 %v4205
  %4584 = vmatprep.subr.mxu0 %v4214
  %4585 = vmatpush1.msra.mxu0 %v4213
  %4586 = vmatprep.subr.mxu0 %v4222
  %4587 = vmatpush1.msra.mxu0 %v4221
  %4588 = vmatprep.subr.mxu0 %v4230
  %4589 = vmatpush1.msra.mxu0 %v4229
  %4590 = vmatprep.subr.mxu0 %v4238
  %4591 = vmatpush1.msra.mxu0 %v4237
  %4592 = vmatprep.subr.mxu0 %v4246
  %4593 = vmatpush1.msra.mxu0 %v4245
  %4594 = vmatprep.subr.mxu0 %v4254
  %4595 = vmatpush1.msra.mxu0 %v4253
  %4596 = vmatprep.subr.mxu0 %v4262
  %4597 = vmatpush1.msra.mxu0 %v4261
  %4598 = vmatprep.subr.mxu0 %v4270
  %4599 = vmatpush1.msra.mxu0 %v4269
  %4600 = vmatprep.subr.mxu0 %v4278
  %4601 = vmatpush1.msra.mxu0 %v4277
  %4602 = vmatprep.mubr.f32.mxu0 %v3770
  %4603 = vmatmul.mubr.f32.gmra.mrb[0].mxu0 %v3769
  %v4604 = vpop.f32.mrb[0].mxu0
  %v4605 = vadd.f32 %v4534, %v4604
  %v4606 = vpop.f32.mrb[0].mxu0
  %v4607 = vadd.f32 %v4536, %v4606
  %4608 = vdwg.mxu0
  %4609 = vmatprep.subr.mxu0 %v3776
  %4610 = vmatpush1.msra.mxu0 %v3775
  %4611 = vmatprep.subr.mxu0 %v3784
  %4612 = vmatpush1.msra.mxu0 %v3783
  %4613 = vmatprep.subr.mxu0 %v3792
  %4614 = vmatpush1.msra.mxu0 %v3791
  %4615 = vmatprep.subr.mxu0 %v3800
  %4616 = vmatpush1.msra.mxu0 %v3799
  %4617 = vmatprep.subr.mxu0 %v3808
  %4618 = vmatpush1.msra.mxu0 %v3807
  %4619 = vmatprep.subr.mxu0 %v3816
  %4620 = vmatpush1.msra.mxu0 %v3815
  %4621 = vmatprep.subr.mxu0 %v3824
  %4622 = vmatpush1.msra.mxu0 %v3823
  %4623 = vmatprep.subr.mxu0 %v3832
  %4624 = vmatpush1.msra.mxu0 %v3831
  %4625 = vmatprep.subr.mxu0 %v3840
  %4626 = vmatpush1.msra.mxu0 %v3839
  %4627 = vmatprep.subr.mxu0 %v3848
  %4628 = vmatpush1.msra.mxu0 %v3847
  %4629 = vmatprep.subr.mxu0 %v3856
  %4630 = vmatpush1.msra.mxu0 %v3855
  %4631 = vmatprep.subr.mxu0 %v3864
  %4632 = vmatpush1.msra.mxu0 %v3863
  %4633 = vmatprep.subr.mxu0 %v3872
  %4634 = vmatpush1.msra.mxu0 %v3871
  %4635 = vmatprep.subr.mxu0 %v3880
  %4636 = vmatpush1.msra.mxu0 %v3879
  %4637 = vmatprep.subr.mxu0 %v3888
  %4638 = vmatpush1.msra.mxu0 %v3887
  %4639 = vmatprep.subr.mxu0 %v3896
  %4640 = vmatpush1.msra.mxu0 %v3895
  %4641 = vmatprep.subr.mxu0 %v3904
  %4642 = vmatpush1.msra.mxu0 %v3903
  %4643 = vmatprep.subr.mxu0 %v3912
  %4644 = vmatpush1.msra.mxu0 %v3911
  %4645 = vmatprep.subr.mxu0 %v3920
  %4646 = vmatpush1.msra.mxu0 %v3919
  %4647 = vmatprep.subr.mxu0 %v3928
  %4648 = vmatpush1.msra.mxu0 %v3927
  %4649 = vmatprep.subr.mxu0 %v3936
  %4650 = vmatpush1.msra.mxu0 %v3935
  %4651 = vmatprep.subr.mxu0 %v3944
  %4652 = vmatpush1.msra.mxu0 %v3943
  %4653 = vmatprep.subr.mxu0 %v3952
  %4654 = vmatpush1.msra.mxu0 %v3951
  %4655 = vmatprep.subr.mxu0 %v3960
  %4656 = vmatpush1.msra.mxu0 %v3959
  %4657 = vmatprep.subr.mxu0 %v3968
  %4658 = vmatpush1.msra.mxu0 %v3967
  %4659 = vmatprep.subr.mxu0 %v3976
  %4660 = vmatpush1.msra.mxu0 %v3975
  %4661 = vmatprep.subr.mxu0 %v3984
  %4662 = vmatpush1.msra.mxu0 %v3983
  %4663 = vmatprep.subr.mxu0 %v3992
  %4664 = vmatpush1.msra.mxu0 %v3991
  %4665 = vmatprep.subr.mxu0 %v4000
  %4666 = vmatpush1.msra.mxu0 %v3999
  %4667 = vmatprep.subr.mxu0 %v4008
  %4668 = vmatpush1.msra.mxu0 %v4007
  %4669 = vmatprep.subr.mxu0 %v4016
  %4670 = vmatpush1.msra.mxu0 %v4015
  %4671 = vmatprep.subr.mxu0 %v4024
  %4672 = vmatpush1.msra.mxu0 %v4023
  %4673 = vmatprep.mubr.f32.mxu0 %v3768
  %4674 = vmatmul.mubr.f32.gmra.mrb[0].mxu0 %v3767
  %v4675 = vpop.f32.mrb[0].mxu0
  %v4676 = vadd.f32 %v4304, %v4675
  %v4677 = vpop.f32.mrb[0].mxu0
  %v4678 = vadd.f32 %v4308, %v4677
  %4679 = vdwg.mxu0
  %4680 = vmatprep.subr.mxu0 %v4032
  %4681 = vmatpush1.msra.mxu0 %v4031
  %4682 = vmatprep.subr.mxu0 %v4040
  %4683 = vmatpush1.msra.mxu0 %v4039
  %4684 = vmatprep.subr.mxu0 %v4048
  %4685 = vmatpush1.msra.mxu0 %v4047
  %4686 = vmatprep.subr.mxu0 %v4056
  %4687 = vmatpush1.msra.mxu0 %v4055
  %4688 = vmatprep.subr.mxu0 %v4064
  %4689 = vmatpush1.msra.mxu0 %v4063
  %4690 = vmatprep.subr.mxu0 %v4072
  %4691 = vmatpush1.msra.mxu0 %v4071
  %4692 = vmatprep.subr.mxu0 %v4080
  %4693 = vmatpush1.msra.mxu0 %v4079
  %4694 = vmatprep.subr.mxu0 %v4088
  %4695 = vmatpush1.msra.mxu0 %v4087
  %4696 = vmatprep.subr.mxu0 %v4096
  %4697 = vmatpush1.msra.mxu0 %v4095
  %4698 = vmatprep.subr.mxu0 %v4104
  %4699 = vmatpush1.msra.mxu0 %v4103
  %4700 = vmatprep.subr.mxu0 %v4112
  %4701 = vmatpush1.msra.mxu0 %v4111
  %4702 = vmatprep.subr.mxu0 %v4120
  %4703 = vmatpush1.msra.mxu0 %v4119
  %4704 = vmatprep.subr.mxu0 %v4128
  %4705 = vmatpush1.msra.mxu0 %v4127
  %4706 = vmatprep.subr.mxu0 %v4136
  %4707 = vmatpush1.msra.mxu0 %v4135
  %4708 = vmatprep.subr.mxu0 %v4144
  %4709 = vmatpush1.msra.mxu0 %v4143
  %4710 = vmatprep.subr.mxu0 %v4152
  %4711 = vmatpush1.msra.mxu0 %v4151
  %4712 = vmatprep.subr.mxu0 %v4160
  %4713 = vmatpush1.msra.mxu0 %v4159
  %4714 = vmatprep.subr.mxu0 %v4168
  %4715 = vmatpush1.msra.mxu0 %v4167
  %4716 = vmatprep.subr.mxu0 %v4176
  %4717 = vmatpush1.msra.mxu0 %v4175
  %4718 = vmatprep.subr.mxu0 %v4184
  %4719 = vmatpush1.msra.mxu0 %v4183
  %4720 = vmatprep.subr.mxu0 %v4192
  %4721 = vmatpush1.msra.mxu0 %v4191
  %4722 = vmatprep.subr.mxu0 %v4200
  %4723 = vmatpush1.msra.mxu0 %v4199
  %4724 = vmatprep.subr.mxu0 %v4208
  %4725 = vmatpush1.msra.mxu0 %v4207
  %4726 = vmatprep.subr.mxu0 %v4216
  %4727 = vmatpush1.msra.mxu0 %v4215
  %4728 = vmatprep.subr.mxu0 %v4224
  %4729 = vmatpush1.msra.mxu0 %v4223
  %4730 = vmatprep.subr.mxu0 %v4232
  %4731 = vmatpush1.msra.mxu0 %v4231
  %4732 = vmatprep.subr.mxu0 %v4240
  %4733 = vmatpush1.msra.mxu0 %v4239
  %4734 = vmatprep.subr.mxu0 %v4248
  %4735 = vmatpush1.msra.mxu0 %v4247
  %4736 = vmatprep.subr.mxu0 %v4256
  %4737 = vmatpush1.msra.mxu0 %v4255
  %4738 = vmatprep.subr.mxu0 %v4264
  %4739 = vmatpush1.msra.mxu0 %v4263
  %4740 = vmatprep.subr.mxu0 %v4272
  %4741 = vmatpush1.msra.mxu0 %v4271
  %4742 = vmatprep.subr.mxu0 %v4280
  %4743 = vmatpush1.msra.mxu0 %v4279
  %4744 = vmatprep.mubr.f32.mxu0 %v3770
  %4745 = vmatmul.mubr.f32.gmra.mrb[0].mxu0 %v3769
  %v4746 = vpop.f32.mrb[0].mxu0
  %v4747 = vadd.f32 %v4676, %v4746
  %v4748 = vpop.f32.mrb[0].mxu0
  %v4749 = vadd.f32 %v4678, %v4748
  %4750 = vdwg.mxu0
  %4751 = vmatprep.subr.mxu0 %v3778
  %4752 = vmatpush1.msra.mxu0 %v3777
  %4753 = vmatprep.subr.mxu0 %v3786
  %4754 = vmatpush1.msra.mxu0 %v3785
  %4755 = vmatprep.subr.mxu0 %v3794
  %4756 = vmatpush1.msra.mxu0 %v3793
  %4757 = vmatprep.subr.mxu0 %v3802
  %4758 = vmatpush1.msra.mxu0 %v3801
  %4759 = vmatprep.subr.mxu0 %v3810
  %4760 = vmatpush1.msra.mxu0 %v3809
  %4761 = vmatprep.subr.mxu0 %v3818
  %4762 = vmatpush1.msra.mxu0 %v3817
  %4763 = vmatprep.subr.mxu0 %v3826
  %4764 = vmatpush1.msra.mxu0 %v3825
  %4765 = vmatprep.subr.mxu0 %v3834
  %4766 = vmatpush1.msra.mxu0 %v3833
  %4767 = vmatprep.subr.mxu0 %v3842
  %4768 = vmatpush1.msra.mxu0 %v3841
  %4769 = vmatprep.subr.mxu0 %v3850
  %4770 = vmatpush1.msra.mxu0 %v3849
  %4771 = vmatprep.subr.mxu0 %v3858
  %4772 = vmatpush1.msra.mxu0 %v3857
  %4773 = vmatprep.subr.mxu0 %v3866
  %4774 = vmatpush1.msra.mxu0 %v3865
  %4775 = vmatprep.subr.mxu0 %v3874
  %4776 = vmatpush1.msra.mxu0 %v3873
  %4777 = vmatprep.subr.mxu0 %v3882
  %4778 = vmatpush1.msra.mxu0 %v3881
  %4779 = vmatprep.subr.mxu0 %v3890
  %4780 = vmatpush1.msra.mxu0 %v3889
  %4781 = vmatprep.subr.mxu0 %v3898
  %4782 = vmatpush1.msra.mxu0 %v3897
  %4783 = vmatprep.subr.mxu0 %v3906
  %4784 = vmatpush1.msra.mxu0 %v3905
  %4785 = vmatprep.subr.mxu0 %v3914
  %4786 = vmatpush1.msra.mxu0 %v3913
  %4787 = vmatprep.subr.mxu0 %v3922
  %4788 = vmatpush1.msra.mxu0 %v3921
  %4789 = vmatprep.subr.mxu0 %v3930
  %4790 = vmatpush1.msra.mxu0 %v3929
  %4791 = vmatprep.subr.mxu0 %v3938
  %4792 = vmatpush1.msra.mxu0 %v3937
  %4793 = vmatprep.subr.mxu0 %v3946
  %4794 = vmatpush1.msra.mxu0 %v3945
  %4795 = vmatprep.subr.mxu0 %v3954
  %4796 = vmatpush1.msra.mxu0 %v3953
  %4797 = vmatprep.subr.mxu0 %v3962
  %4798 = vmatpush1.msra.mxu0 %v3961
  %4799 = vmatprep.subr.mxu0 %v3970
  %4800 = vmatpush1.msra.mxu0 %v3969
  %4801 = vmatprep.subr.mxu0 %v3978
  %4802 = vmatpush1.msra.mxu0 %v3977
  %4803 = vmatprep.subr.mxu0 %v3986
  %4804 = vmatpush1.msra.mxu0 %v3985
  %4805 = vmatprep.subr.mxu0 %v3994
  %4806 = vmatpush1.msra.mxu0 %v3993
  %4807 = vmatprep.subr.mxu0 %v4002
  %4808 = vmatpush1.msra.mxu0 %v4001
  %4809 = vmatprep.subr.mxu0 %v4010
  %4810 = vmatpush1.msra.mxu0 %v4009
  %4811 = vmatprep.subr.mxu0 %v4018
  %4812 = vmatpush1.msra.mxu0 %v4017
  %4813 = vmatprep.subr.mxu0 %v4026
  %4814 = vmatpush1.msra.mxu0 %v4025
  %4815 = vmatprep.mubr.f32.mxu0 %v3768
  %4816 = vmatmul.mubr.f32.gmra.mrb[0].mxu0 %v3767
  %v4817 = vpop.f32.mrb[0].mxu0
  %v4818 = vadd.f32 %v4312, %v4817
  %v4819 = vpop.f32.mrb[0].mxu0
  %v4820 = vadd.f32 %v4316, %v4819
  %4821 = vdwg.mxu0
  %4822 = vmatprep.subr.mxu0 %v4034
  %4823 = vmatpush1.msra.mxu0 %v4033
  %4824 = vmatprep.subr.mxu0 %v4042
  %4825 = vmatpush1.msra.mxu0 %v4041
  %4826 = vmatprep.subr.mxu0 %v4050
  %4827 = vmatpush1.msra.mxu0 %v4049
  %4828 = vmatprep.subr.mxu0 %v4058
  %4829 = vmatpush1.msra.mxu0 %v4057
  %4830 = vmatprep.subr.mxu0 %v4066
  %4831 = vmatpush1.msra.mxu0 %v4065
  %4832 = vmatprep.subr.mxu0 %v4074
  %4833 = vmatpush1.msra.mxu0 %v4073
  %4834 = vmatprep.subr.mxu0 %v4082
  %4835 = vmatpush1.msra.mxu0 %v4081
  %4836 = vmatprep.subr.mxu0 %v4090
  %4837 = vmatpush1.msra.mxu0 %v4089
  %4838 = vmatprep.subr.mxu0 %v4098
  %4839 = vmatpush1.msra.mxu0 %v4097
  %4840 = vmatprep.subr.mxu0 %v4106
  %4841 = vmatpush1.msra.mxu0 %v4105
  %4842 = vmatprep.subr.mxu0 %v4114
  %4843 = vmatpush1.msra.mxu0 %v4113
  %4844 = vmatprep.subr.mxu0 %v4122
  %4845 = vmatpush1.msra.mxu0 %v4121
  %4846 = vmatprep.subr.mxu0 %v4130
  %4847 = vmatpush1.msra.mxu0 %v4129
  %4848 = vmatprep.subr.mxu0 %v4138
  %4849 = vmatpush1.msra.mxu0 %v4137
  %4850 = vmatprep.subr.mxu0 %v4146
  %4851 = vmatpush1.msra.mxu0 %v4145
  %4852 = vmatprep.subr.mxu0 %v4154
  %4853 = vmatpush1.msra.mxu0 %v4153
  %4854 = vmatprep.subr.mxu0 %v4162
  %4855 = vmatpush1.msra.mxu0 %v4161
  %4856 = vmatprep.subr.mxu0 %v4170
  %4857 = vmatpush1.msra.mxu0 %v4169
  %4858 = vmatprep.subr.mxu0 %v4178
  %4859 = vmatpush1.msra.mxu0 %v4177
  %4860 = vmatprep.subr.mxu0 %v4186
  %4861 = vmatpush1.msra.mxu0 %v4185
  %4862 = vmatprep.subr.mxu0 %v4194
  %4863 = vmatpush1.msra.mxu0 %v4193
  %4864 = vmatprep.subr.mxu0 %v4202
  %4865 = vmatpush1.msra.mxu0 %v4201
  %4866 = vmatprep.subr.mxu0 %v4210
  %4867 = vmatpush1.msra.mxu0 %v4209
  %4868 = vmatprep.subr.mxu0 %v4218
  %4869 = vmatpush1.msra.mxu0 %v4217
  %4870 = vmatprep.subr.mxu0 %v4226
  %4871 = vmatpush1.msra.mxu0 %v4225
  %4872 = vmatprep.subr.mxu0 %v4234
  %4873 = vmatpush1.msra.mxu0 %v4233
  %4874 = vmatprep.subr.mxu0 %v4242
  %4875 = vmatpush1.msra.mxu0 %v4241
  %4876 = vmatprep.subr.mxu0 %v4250
  %4877 = vmatpush1.msra.mxu0 %v4249
  %4878 = vmatprep.subr.mxu0 %v4258
  %4879 = vmatpush1.msra.mxu0 %v4257
  %4880 = vmatprep.subr.mxu0 %v4266
  %4881 = vmatpush1.msra.mxu0 %v4265
  %4882 = vmatprep.subr.mxu0 %v4274
  %4883 = vmatpush1.msra.mxu0 %v4273
  %4884 = vmatprep.subr.mxu0 %v4282
  %4885 = vmatpush1.msra.mxu0 %v4281
  %4886 = vmatprep.mubr.f32.mxu0 %v3770
  %4887 = vmatmul.mubr.f32.gmra.mrb[0].mxu0 %v3769
  %v4888 = vpop.f32.mrb[0].mxu0
  %v4889 = vadd.f32 %v4818, %v4888
  %v4890 = vpop.f32.mrb[0].mxu0
  %v4891 = vadd.f32 %v4820, %v4890
  %4892 = vdwg.mxu0
  %v4893 = vmax.f32 %v4463, 0.0
  %v4894 = vmax.f32 %v4465, 0.0
  %v4895 = vmax.f32 %v4605, 0.0
  %v4896 = vmax.f32 %v4607, 0.0
  %v4897 = vmax.f32 %v4747, 0.0
  %v4898 = vmax.f32 %v4749, 0.0
  %v4899 = vmax.f32 %v4889, 0.0
  %v4900 = vmax.f32 %v4891, 0.0
  %v4909 = vcombine.low %v4893, %v4894
  %v4910 = vcombine.low %v4895, %v4896
  %v4911 = vcombine.low %v4897, %v4898
  %v4912 = vcombine.low %v4899, %v4900
  %4917 = vst [vmem:[%s13] sm:$0xff] %v4909
  %4918 = vst [vmem:[%s13 + $0x8] sm:$0xff] %v4910
  %4919 = vst [vmem:[%s13 + $0x10] sm:$0xff] %v4911
  %4920 = vst [vmem:[%s13 + $0x18] sm:$0xff] %v4912
  // Predicated region
  $region54: #{classifier_forward.2} parent=0 // pred_check
    _
  $region55: #{classifier_forward.2} parent=0 // pred_check_branch
    %4922 = sbr.rel (0) target = $region57
  $region56: #{classifier_forward.2} parent=0 // pred_region
    _
  $region57: #{classifier_forward.2} parent=0 // pred_fallthru
    _
  // Predicated region
  $region58: #{classifier_forward.2} parent=0 // pred_check
    _
  $region59: #{classifier_forward.2} parent=0 // pred_check_branch
    %4924 = sbr.rel (0) target = $region61
  $region60: #{classifier_forward.2} parent=0 // pred_region
    _
  $region61: #{classifier_forward.2} parent=0 // pred_fallthru
    _

</llo_original>
